<compile_context>
chip_gen: v5e
topology: v5e:2x2
jax: 0.10.0
libtpu: 0.0.40
codegen_flags: <defaults>
</compile_context>

<pallas_src>
import functools

import jax
import jax.numpy as jnp
from jax.experimental import pallas as pl
from jax.experimental.pallas import tpu as pltpu


# ---------------------------------------------------------------------------
# Tile selection: largest divisor of `dim` that is a multiple of `align` and
# <= limit; falls back to the full dim (a full-extent block is always legal).
# ---------------------------------------------------------------------------
def _pick_tile(dim, limit, align):
    if dim <= limit:
        return dim
    best = dim
    for cand in range(align, limit + 1, align):
        if dim % cand == 0:
            best = cand
    return best


# ---------------------------------------------------------------------------
# Pallas GEMM: out = act(A @ B [+ bias]); bf16 operands, f32 accumulation.
# The f32 output block is resident across the k grid axis, so we accumulate
# directly into o_ref (no VMEM scratch, no extra copy).
# ---------------------------------------------------------------------------
def _gemm_kernel(*refs, act, has_bias, single_k):
    if has_bias:
        a_ref, b_ref, bias_ref, o_ref = refs
    else:
        a_ref, b_ref, o_ref = refs
        bias_ref = None

    def epilogue(y):
        if has_bias:
            y = y + bias_ref[...]
        if act == "leaky_relu":
            y = jnp.where(y > 0, y, 0.2 * y)
        return y

    if single_k:
        y = jnp.dot(a_ref[...], b_ref[...], preferred_element_type=jnp.float32)
        o_ref[...] = epilogue(y)
    else:
        k = pl.program_id(2)

        @pl.when(k == 0)
        def _():
            o_ref[...] = jnp.zeros_like(o_ref)

        o_ref[...] += jnp.dot(a_ref[...], b_ref[...],
                              preferred_element_type=jnp.float32)

        if has_bias or act != "none":
            @pl.when(k == pl.num_programs(2) - 1)
            def _():
                o_ref[...] = epilogue(o_ref[...])


def pallas_matmul(a, b, bias=None, act="none", tm=None, tn=None, tk=None):
    """act(a @ b [+ bias]); a:(M,K) bf16, b:(K,N) bf16, out:(M,N) f32."""
    M, K = a.shape
    Kb, N = b.shape
    assert K == Kb
    tm = _pick_tile(M, 256, 16) if tm is None else tm    # bf16 sublane align
    tn = _pick_tile(N, 512, 128) if tn is None else tn
    tk = _pick_tile(K, 1024, 128) if tk is None else tk
    assert M % tm == 0 and N % tn == 0 and K % tk == 0
    gm, gn, gk = M // tm, N // tn, K // tk
    has_bias = bias is not None

    in_specs = [pl.BlockSpec((tm, tk), lambda i, j, k: (i, k)),
                pl.BlockSpec((tk, tn), lambda i, j, k: (k, j))]
    args = [a, b]
    if has_bias:
        in_specs.append(pl.BlockSpec((1, tn), lambda i, j, k: (0, j)))
        args.append(bias.reshape(1, N).astype(jnp.float32))

    return pl.pallas_call(
        functools.partial(_gemm_kernel, act=act, has_bias=has_bias,
                          single_k=(gk == 1)),
        out_shape=jax.ShapeDtypeStruct((M, N), jnp.float32),
        grid_spec=pltpu.PrefetchScalarGridSpec(
            num_scalar_prefetch=0,
            grid=(gm, gn, gk),
            in_specs=in_specs,
            out_specs=pl.BlockSpec((tm, tn), lambda i, j, k: (i, j)),
        ),
        compiler_params=pltpu.CompilerParams(
            dimension_semantics=("parallel", "parallel", "arbitrary")),
    )(*args)


# ---------------------------------------------------------------------------
# BatchNorm (training-mode batch stats, biased var, eps=1e-5) + LeakyReLU(0.2).
# x: (R, C); stats over rows, per column.  Column-tiled (independent per col).
# ---------------------------------------------------------------------------
def _bn_lrelu_kernel(x_ref, g_ref, b_ref, o_ref, *, eps):
    x = x_ref[...]
    mean = jnp.mean(x, axis=0, keepdims=True)
    var = jnp.mean((x - mean) ** 2, axis=0, keepdims=True)     # biased variance
    y = (x - mean) * jax.lax.rsqrt(var + eps)
    y = y * g_ref[...] + b_ref[...]
    o_ref[...] = jnp.where(y > 0, y, 0.2 * y)


def pallas_bn_lrelu(x, gamma, beta, eps=1e-5, tc=128):
    R, C = x.shape
    assert C % tc == 0
    return pl.pallas_call(
        functools.partial(_bn_lrelu_kernel, eps=eps),
        out_shape=jax.ShapeDtypeStruct((R, C), jnp.float32),
        grid=(C // tc,),
        in_specs=[pl.BlockSpec((R, tc), lambda j: (0, j)),
                  pl.BlockSpec((1, tc), lambda j: (0, j)),
                  pl.BlockSpec((1, tc), lambda j: (0, j))],
        out_specs=pl.BlockSpec((R, tc), lambda j: (0, j)),
        compiler_params=pltpu.CompilerParams(dimension_semantics=("parallel",)),
    )(x, gamma.reshape(1, C).astype(jnp.float32),
      beta.reshape(1, C).astype(jnp.float32))


# ---------------------------------------------------------------------------
# Fused BatchNorm1d + LeakyReLU(0.2) + Linear(1024->1) + Sigmoid.
# x: (N, 1024) -> (N, 1).  Tiny problem; one block, one call.
# ---------------------------------------------------------------------------
def _bn_lrelu_dc_sigmoid_kernel(x_ref, g_ref, b_ref, w_ref, db_ref, o_ref, *, eps):
    x = x_ref[...]
    mean = jnp.mean(x, axis=0, keepdims=True)
    var = jnp.mean((x - mean) ** 2, axis=0, keepdims=True)
    y = (x - mean) * jax.lax.rsqrt(var + eps)
    y = y * g_ref[...] + b_ref[...]
    y = jnp.where(y > 0, y, 0.2 * y)
    d = jnp.sum(y * w_ref[...], axis=1, keepdims=True) + db_ref[...]
    o_ref[...] = 0.5 * (jnp.tanh(0.5 * d) + 1.0)     # numerically stable sigmoid


def pallas_bn_lrelu_dc_sigmoid(x, gamma, beta, dc_w, dc_b, eps=1e-5):
    R, C = x.shape
    return pl.pallas_call(
        functools.partial(_bn_lrelu_dc_sigmoid_kernel, eps=eps),
        out_shape=jax.ShapeDtypeStruct((R, 1), jnp.float32),
        grid=(1,),
        in_specs=[pl.BlockSpec((R, C), lambda i: (0, 0)),
                  pl.BlockSpec((1, C), lambda i: (0, 0)),
                  pl.BlockSpec((1, C), lambda i: (0, 0)),
                  pl.BlockSpec((1, C), lambda i: (0, 0)),
                  pl.BlockSpec((1, 1), lambda i: (0, 0))],
        out_specs=pl.BlockSpec((R, 1), lambda i: (0, 0)),
    )(x, gamma.reshape(1, C).astype(jnp.float32),
      beta.reshape(1, C).astype(jnp.float32),
      dc_w.reshape(1, C).astype(jnp.float32),
      dc_b.reshape(1, 1).astype(jnp.float32))


# ---------------------------------------------------------------------------
# im2col glue (pure JAX), NHWC: k=4, s=2, p=1 conv -> GEMM operand.
# Rows ordered (n, h_out, w_out); columns ordered (kh, kw, c_in).
# ---------------------------------------------------------------------------
def im2col_nhwc(x, k=4, s=2, p=1):
    N, H, W, C = x.shape
    Ho = (H + 2 * p - k) // s + 1
    Wo = (W + 2 * p - k) // s + 1
    xp = jnp.pad(x, ((0, 0), (p, p), (p, p), (0, 0)))
    cols = []
    for i in range(k):
        for j in range(k):
            cols.append(xp[:, i:i + s * Ho:s, j:j + s * Wo:s, :])   # (N,Ho,Wo,C)
    patches = jnp.stack(cols, axis=3)                 # (N, Ho, Wo, k*k, C)
    a = patches.reshape(N * Ho * Wo, k * k * C)
    return a, Ho, Wo


# ---------------------------------------------------------------------------
# Parameters: PyTorch-style init (N(0, 0.02) conv/linear weights, zero biases,
# default BatchNorm gamma=1/beta=0), then a one-time kernel-ready prep step
# (reorder / transpose / bf16 cast) so nothing is rearranged per forward.
# ---------------------------------------------------------------------------
def init_params(key):
    ks = jax.random.split(key, 4)
    std = 0.02
    return {
        "conv1_w": jax.random.normal(ks[0], (64, 1, 4, 4), jnp.float32) * std,
        "conv1_b": jnp.zeros((64,), jnp.float32),
        "conv2_w": jax.random.normal(ks[1], (128, 64, 4, 4), jnp.float32) * std,
        "conv2_b": jnp.zeros((128,), jnp.float32),      # cancelled by BN2d
        "bn2_gamma": jnp.ones((128,), jnp.float32),
        "bn2_beta": jnp.zeros((128,), jnp.float32),
        "fc1_w": jax.random.normal(ks[2], (1024, 128 * 7 * 7), jnp.float32) * std,
        "fc1_b": jnp.zeros((1024,), jnp.float32),       # cancelled by BN1d
        "bn3_gamma": jnp.ones((1024,), jnp.float32),
        "bn3_beta": jnp.zeros((1024,), jnp.float32),
        "dc_w": jax.random.normal(ks[3], (1, 1024), jnp.float32) * std,
        "dc_b": jnp.zeros((1,), jnp.float32),
    }


def prepare_params(p):
    k = 4
    # Conv weights -> GEMM B with rows ordered (kh, kw, c_in), bf16.
    w1 = p["conv1_w"].transpose(2, 3, 1, 0).reshape(k * k * 1, 64)
    w2 = p["conv2_w"].transpose(2, 3, 1, 0).reshape(k * k * 64, 128)
    # fc1 weight: columns are ordered (c, h, w) in PyTorch's flatten; permute
    # rows of the transposed weight to (h, w, c) so the NHWC activation can be
    # flattened without a transpose.
    fc1 = (p["fc1_w"].reshape(1024, 128, 7, 7)
           .transpose(2, 3, 1, 0).reshape(7 * 7 * 128, 1024))
    # NOTE: conv2_b / fc1_b are exactly cancelled by the following training-mode
    # BatchNorm mean subtraction, so they are intentionally not carried.
    return {
        "w1": w1.astype(jnp.bfloat16),
        "b1": p["conv1_b"].astype(jnp.float32),
        "w2": w2.astype(jnp.bfloat16),
        "bn2_g": p["bn2_gamma"], "bn2_b": p["bn2_beta"],
        "fc1_w": fc1.astype(jnp.bfloat16),
        "bn3_g": p["bn3_gamma"], "bn3_b": p["bn3_beta"],
        "dc_w": p["dc_w"].astype(jnp.float32),
        "dc_b": p["dc_b"].astype(jnp.float32),
    }


# ---------------------------------------------------------------------------
# Forward pass
# ---------------------------------------------------------------------------
def discriminator_forward(x_nchw, kp):
    N = x_nchw.shape[0]
    x = jnp.transpose(x_nchw, (0, 2, 3, 1))                    # NHWC, once

    # conv1: Conv2d(1, 64, 4, 2, 1) + LeakyReLU(0.2)  -> (N*196, 64)
    a1, h1, w1o = im2col_nhwc(x, 4, 2, 1)                      # (N*196, 16)
    y1 = pallas_matmul(a1.astype(jnp.bfloat16), kp["w1"],
                       bias=kp["b1"], act="leaky_relu")
    x1 = y1.reshape(N, h1, w1o, 64)                            # NHWC, no transpose

    # conv2: Conv2d(64, 128, 4, 2, 1) + BatchNorm2d(128) + LeakyReLU(0.2)
    a2, h2, w2o = im2col_nhwc(x1, 4, 2, 1)                     # (N*49, 1024)
    y2 = pallas_matmul(a2.astype(jnp.bfloat16), kp["w2"], act="none")
    y2 = pallas_bn_lrelu(y2, kp["bn2_g"], kp["bn2_b"])         # stats over (N,H,W)

    # flatten (h, w, c) -> matches the (h,w,c)-permuted fc1 weight rows
    flat = y2.reshape(N, h2 * w2o * 128).astype(jnp.bfloat16)

    # fc1: Linear(6272, 1024)  (bias folded into BN) -> grid (1, 2, 7)
    y3 = pallas_matmul(flat, kp["fc1_w"], act="none", tn=512, tk=896)

    # BatchNorm1d(1024) + LeakyReLU(0.2) + Linear(1024,1) + Sigmoid, fused
    d = pallas_bn_lrelu_dc_sigmoid(y3, kp["bn3_g"], kp["bn3_b"],
                                   kp["dc_w"], kp["dc_b"])
    return d                                                    # (N, 1)


if __name__ == "__main__":
    key = jax.random.PRNGKey(0)
    pkey, xkey = jax.random.split(key)
    params = init_params(pkey)
    kparams = prepare_params(params)

    # MNIST-shaped input (architecture hardcodes 28x28); small batch of 8.
    x = jax.random.normal(xkey, (8, 1, 28, 28), jnp.float32)

    fwd = jax.jit(discriminator_forward)
    d = fwd(x, kparams)
    d = jax.block_until_ready(d)

    assert d.shape == (8, 1)
    assert bool(jnp.all(jnp.isfinite(d)))
    assert bool(jnp.all((d >= 0.0) & (d <= 1.0)))
    print("KERNEL_OK")
</pallas_src>

<mosaic_0001>
module attributes {stable_mosaic.version = 11 : i64} {
  func.func @_gemm_kernel(%arg0: i32, %arg1: i32, %arg2: i32, %arg3: memref<224x16xbf16, #tpu.memory_space<vmem>>, %arg4: memref<16x64xbf16, #tpu.memory_space<vmem>>, %arg5: memref<1x64xf32, #tpu.memory_space<vmem>>, %arg6: memref<224x64xf32, #tpu.memory_space<vmem>>) attributes {dimension_semantics = [#tpu.dimension_semantics<parallel>, #tpu.dimension_semantics<parallel>, #tpu.dimension_semantics<arbitrary>], iteration_bounds = array<i64: 7, 1, 1>, scalar_prefetch = 0 : i64, scratch_operands = 0 : i64, tpu.core_type = #tpu.core_type<tc>, window_params = [{transform_indices = @transform_0, window_bounds = array<i64: 224, 16>}, {transform_indices = @transform_1, window_bounds = array<i64: 16, 64>}, {transform_indices = @transform_2, window_bounds = array<i64: 1, 64>}, {transform_indices = @transform_3, window_bounds = array<i64: 224, 64>}]} {
    %c0 = arith.constant 0 : index
    %c0_0 = arith.constant 0 : index
    %0 = vector.load %arg3[%c0, %c0_0] : memref<224x16xbf16, #tpu.memory_space<vmem>>, vector<224x16xbf16>
    %c0_1 = arith.constant 0 : index
    %c0_2 = arith.constant 0 : index
    %1 = vector.load %arg4[%c0_1, %c0_2] : memref<16x64xbf16, #tpu.memory_space<vmem>>, vector<16x64xbf16>
    %cst = arith.constant dense<0.000000e+00> : vector<224x64xf32>
    %2 = tpu.matmul %0, %1, %cst {dimension_numbers = #tpu.dot_dimension_numbers<[1], [0], [0], [1], [0, 0, 1, 1], [], []>} : vector<224x16xbf16>, vector<16x64xbf16>, vector<224x64xf32> -> vector<224x64xf32>
    %c0_3 = arith.constant 0 : index
    %c0_4 = arith.constant 0 : index
    %3 = vector.load %arg5[%c0_3, %c0_4] : memref<1x64xf32, #tpu.memory_space<vmem>>, vector<1x64xf32>
    %4 = vector.broadcast %3 : vector<1x64xf32> to vector<224x64xf32>
    %5 = arith.addf %2, %4 : vector<224x64xf32>
    %cst_5 = arith.constant 0.000000e+00 : f32
    %6 = vector.broadcast %cst_5 : f32 to vector<224x64xf32>
    %7 = arith.cmpf ogt, %5, %6 : vector<224x64xf32>
    %cst_6 = arith.constant 2.000000e-01 : f32
    %8 = vector.broadcast %cst_6 : f32 to vector<224x64xf32>
    %9 = arith.mulf %8, %5 : vector<224x64xf32>
    %10 = arith.select %7, %5, %9 : vector<224x64xi1>, vector<224x64xf32>
    %c0_7 = arith.constant 0 : index
    %c0_8 = arith.constant 0 : index
    %11 = vector.load %arg6[%c0_7, %c0_8] : memref<224x64xf32, #tpu.memory_space<vmem>>, vector<224x64xf32>
    tpu.vector_store %arg6[%c0_7, %c0_8], %10 {strides = array<i32>} : memref<224x64xf32, #tpu.memory_space<vmem>>, vector<224x64xf32>,
    return
  }
  func.func @transform_0(%arg0: i32, %arg1: i32, %arg2: i32) -> (i32, i32) {
    %c0_i32 = arith.constant 0 : i32
    return %arg0, %arg2 : i32, i32
  }
  func.func @transform_1(%arg0: i32, %arg1: i32, %arg2: i32) -> (i32, i32) {
    %c0_i32 = arith.constant 0 : i32
    return %arg2, %arg1 : i32, i32
  }
  func.func @transform_2(%arg0: i32, %arg1: i32, %arg2: i32) -> (i32, i32) {
    %c0_i32 = arith.constant 0 : i32
    %c0_i32_0 = arith.constant 0 : i32
    return %c0_i32, %arg1 : i32, i32
  }
  func.func @transform_3(%arg0: i32, %arg1: i32, %arg2: i32) -> (i32, i32) {
    %c0_i32 = arith.constant 0 : i32
    return %arg0, %arg1 : i32, i32
  }
}

module attributes {stable_mosaic.version = 11 : i64} {
  func.func @_bn_lrelu_kernel(%arg0: i32, %arg1: memref<392x128xf32, #tpu.memory_space<vmem>>, %arg2: memref<1x128xf32, #tpu.memory_space<vmem>>, %arg3: memref<1x128xf32, #tpu.memory_space<vmem>>, %arg4: memref<392x128xf32, #tpu.memory_space<vmem>>) attributes {dimension_semantics = [#tpu.dimension_semantics<parallel>], iteration_bounds = array<i64: 1>, scalar_prefetch = 0 : i64, scratch_operands = 0 : i64, tpu.core_type = #tpu.core_type<tc>, window_params = [{transform_indices = @transform_0, window_bounds = array<i64: 392, 128>}, {transform_indices = @transform_1, window_bounds = array<i64: 1, 128>}, {transform_indices = @transform_2, window_bounds = array<i64: 1, 128>}, {transform_indices = @transform_3, window_bounds = array<i64: 392, 128>}]} {
    %c0 = arith.constant 0 : index
    %c0_0 = arith.constant 0 : index
    %0 = vector.load %arg1[%c0, %c0_0] : memref<392x128xf32, #tpu.memory_space<vmem>>, vector<392x128xf32>
    %cst = arith.constant dense<0.000000e+00> : vector<128xf32>
    %1 = vector.multi_reduction <add>, %0, %cst [0] : vector<392x128xf32> to vector<128xf32>
    %2 = vector.shape_cast %1 : vector<128xf32> to vector<1x128xf32>
    %cst_1 = arith.constant 3.920000e+02 : f32
    %3 = vector.broadcast %cst_1 : f32 to vector<1x128xf32>
    %4 = arith.divf %2, %3 : vector<1x128xf32>
    %5 = vector.broadcast %4 : vector<1x128xf32> to vector<392x128xf32>
    %6 = arith.subf %0, %5 : vector<392x128xf32>
    %7 = arith.mulf %6, %6 : vector<392x128xf32>
    %cst_2 = arith.constant dense<0.000000e+00> : vector<128xf32>
    %8 = vector.multi_reduction <add>, %7, %cst_2 [0] : vector<392x128xf32> to vector<128xf32>
    %9 = vector.shape_cast %8 : vector<128xf32> to vector<1x128xf32>
    %cst_3 = arith.constant 3.920000e+02 : f32
    %10 = vector.broadcast %cst_3 : f32 to vector<1x128xf32>
    %11 = arith.divf %9, %10 : vector<1x128xf32>
    %12 = vector.broadcast %4 : vector<1x128xf32> to vector<392x128xf32>
    %13 = arith.subf %0, %12 : vector<392x128xf32>
    %cst_4 = arith.constant 9.99999974E-6 : f32
    %14 = vector.broadcast %cst_4 : f32 to vector<1x128xf32>
    %15 = arith.addf %11, %14 : vector<1x128xf32>
    %16 = math.rsqrt %15 : vector<1x128xf32>
    %17 = vector.broadcast %16 : vector<1x128xf32> to vector<392x128xf32>
    %18 = arith.mulf %13, %17 : vector<392x128xf32>
    %c0_5 = arith.constant 0 : index
    %c0_6 = arith.constant 0 : index
    %19 = vector.load %arg2[%c0_5, %c0_6] : memref<1x128xf32, #tpu.memory_space<vmem>>, vector<1x128xf32>
    %20 = vector.broadcast %19 : vector<1x128xf32> to vector<392x128xf32>
    %21 = arith.mulf %18, %20 : vector<392x128xf32>
    %c0_7 = arith.constant 0 : index
    %c0_8 = arith.constant 0 : index
    %22 = vector.load %arg3[%c0_7, %c0_8] : memref<1x128xf32, #tpu.memory_space<vmem>>, vector<1x128xf32>
    %23 = vector.broadcast %22 : vector<1x128xf32> to vector<392x128xf32>
    %24 = arith.addf %21, %23 : vector<392x128xf32>
    %cst_9 = arith.constant 0.000000e+00 : f32
    %25 = vector.broadcast %cst_9 : f32 to vector<392x128xf32>
    %26 = arith.cmpf ogt, %24, %25 : vector<392x128xf32>
    %cst_10 = arith.constant 2.000000e-01 : f32
    %27 = vector.broadcast %cst_10 : f32 to vector<392x128xf32>
    %28 = arith.mulf %27, %24 : vector<392x128xf32>
    %29 = arith.select %26, %24, %28 : vector<392x128xi1>, vector<392x128xf32>
    %c0_11 = arith.constant 0 : index
    %c0_12 = arith.constant 0 : index
    %30 = vector.load %arg4[%c0_11, %c0_12] : memref<392x128xf32, #tpu.memory_space<vmem>>, vector<392x128xf32>
    tpu.vector_store %arg4[%c0_11, %c0_12], %29 {strides = array<i32>} : memref<392x128xf32, #tpu.memory_space<vmem>>, vector<392x128xf32>,
    return
  }
  func.func @transform_0(%arg0: i32) -> (i32, i32) {
    %c0_i32 = arith.constant 0 : i32
    %c0_i32_0 = arith.constant 0 : i32
    return %c0_i32, %arg0 : i32, i32
  }
  func.func @transform_1(%arg0: i32) -> (i32, i32) {
    %c0_i32 = arith.constant 0 : i32
    %c0_i32_0 = arith.constant 0 : i32
    return %c0_i32, %arg0 : i32, i32
  }
  func.func @transform_2(%arg0: i32) -> (i32, i32) {
    %c0_i32 = arith.constant 0 : i32
    %c0_i32_0 = arith.constant 0 : i32
    return %c0_i32, %arg0 : i32, i32
  }
  func.func @transform_3(%arg0: i32) -> (i32, i32) {
    %c0_i32 = arith.constant 0 : i32
    %c0_i32_0 = arith.constant 0 : i32
    return %c0_i32, %arg0 : i32, i32
  }
}

module attributes {stable_mosaic.version = 11 : i64} {
  func.func @_gemm_kernel(%arg0: i32, %arg1: i32, %arg2: i32, %arg3: memref<392x1024xbf16, #tpu.memory_space<vmem>>, %arg4: memref<1024x128xbf16, #tpu.memory_space<vmem>>, %arg5: memref<392x128xf32, #tpu.memory_space<vmem>>) attributes {dimension_semantics = [#tpu.dimension_semantics<parallel>, #tpu.dimension_semantics<parallel>, #tpu.dimension_semantics<arbitrary>], iteration_bounds = array<i64: 1, 1, 1>, scalar_prefetch = 0 : i64, scratch_operands = 0 : i64, tpu.core_type = #tpu.core_type<tc>, window_params = [{transform_indices = @transform_0, window_bounds = array<i64: 392, 1024>}, {transform_indices = @transform_1, window_bounds = array<i64: 1024, 128>}, {transform_indices = @transform_2, window_bounds = array<i64: 392, 128>}]} {
    %c0 = arith.constant 0 : index
    %c0_0 = arith.constant 0 : index
    %0 = vector.load %arg3[%c0, %c0_0] : memref<392x1024xbf16, #tpu.memory_space<vmem>>, vector<392x1024xbf16>
    %c0_1 = arith.constant 0 : index
    %c0_2 = arith.constant 0 : index
    %1 = vector.load %arg4[%c0_1, %c0_2] : memref<1024x128xbf16, #tpu.memory_space<vmem>>, vector<1024x128xbf16>
    %cst = arith.constant dense<0.000000e+00> : vector<392x128xf32>
    %2 = tpu.matmul %0, %1, %cst {dimension_numbers = #tpu.dot_dimension_numbers<[1], [0], [0], [1], [0, 0, 1, 1], [], []>} : vector<392x1024xbf16>, vector<1024x128xbf16>, vector<392x128xf32> -> vector<392x128xf32>
    %c0_3 = arith.constant 0 : index
    %c0_4 = arith.constant 0 : index
    %3 = vector.load %arg5[%c0_3, %c0_4] : memref<392x128xf32, #tpu.memory_space<vmem>>, vector<392x128xf32>
    tpu.vector_store %arg5[%c0_3, %c0_4], %2 {strides = array<i32>} : memref<392x128xf32, #tpu.memory_space<vmem>>, vector<392x128xf32>,
    return
  }
  func.func @transform_0(%arg0: i32, %arg1: i32, %arg2: i32) -> (i32, i32) {
    %c0_i32 = arith.constant 0 : i32
    return %arg0, %arg2 : i32, i32
  }
  func.func @transform_1(%arg0: i32, %arg1: i32, %arg2: i32) -> (i32, i32) {
    %c0_i32 = arith.constant 0 : i32
    return %arg2, %arg1 : i32, i32
  }
  func.func @transform_2(%arg0: i32, %arg1: i32, %arg2: i32) -> (i32, i32) {
    %c0_i32 = arith.constant 0 : i32
    return %arg0, %arg1 : i32, i32
  }
}

module attributes {stable_mosaic.version = 11 : i64} {
  func.func @_gemm_kernel(%arg0: i32, %arg1: i32, %arg2: i32, %arg3: memref<8x896xbf16, #tpu.memory_space<vmem>>, %arg4: memref<896x512xbf16, #tpu.memory_space<vmem>>, %arg5: memref<8x512xf32, #tpu.memory_space<vmem>>) attributes {dimension_semantics = [#tpu.dimension_semantics<parallel>, #tpu.dimension_semantics<parallel>, #tpu.dimension_semantics<arbitrary>], iteration_bounds = array<i64: 1, 2, 7>, scalar_prefetch = 0 : i64, scratch_operands = 0 : i64, tpu.core_type = #tpu.core_type<tc>, window_params = [{transform_indices = @transform_0, window_bounds = array<i64: 8, 896>}, {transform_indices = @transform_1, window_bounds = array<i64: 896, 512>}, {transform_indices = @transform_2, window_bounds = array<i64: 8, 512>}]} {
    %c0_i32 = arith.constant 0 : i32
    %0 = arith.cmpi eq, %arg2, %c0_i32 : i32
    %1 = arith.extui %0 : i1 to i32
    %c0_i32_0 = arith.constant 0 : i32
    %2 = arith.cmpi ne, %1, %c0_i32_0 : i32
    scf.if %2 {
      %cst_8 = arith.constant 0.000000e+00 : f32
      %9 = vector.broadcast %cst_8 : f32 to vector<8x512xf32>
      %c0_9 = arith.constant 0 : index
      %c0_10 = arith.constant 0 : index
      %10 = vector.load %arg5[%c0_9, %c0_10] : memref<8x512xf32, #tpu.memory_space<vmem>>, vector<8x512xf32>
      tpu.vector_store %arg5[%c0_9, %c0_10], %9 {strides = array<i32>} : memref<8x512xf32, #tpu.memory_space<vmem>>, vector<8x512xf32>,
    } else {
    }
    %c0 = arith.constant 0 : index
    %c0_1 = arith.constant 0 : index
    %3 = vector.load %arg5[%c0, %c0_1] : memref<8x512xf32, #tpu.memory_space<vmem>>, vector<8x512xf32>
    %c0_2 = arith.constant 0 : index
    %c0_3 = arith.constant 0 : index
    %4 = vector.load %arg3[%c0_2, %c0_3] : memref<8x896xbf16, #tpu.memory_space<vmem>>, vector<8x896xbf16>
    %c0_4 = arith.constant 0 : index
    %c0_5 = arith.constant 0 : index
    %5 = vector.load %arg4[%c0_4, %c0_5] : memref<896x512xbf16, #tpu.memory_space<vmem>>, vector<896x512xbf16>
    %cst = arith.constant dense<0.000000e+00> : vector<8x512xf32>
    %6 = tpu.matmul %4, %5, %cst {dimension_numbers = #tpu.dot_dimension_numbers<[1], [0], [0], [1], [0, 0, 1, 1], [], []>} : vector<8x896xbf16>, vector<896x512xbf16>, vector<8x512xf32> -> vector<8x512xf32>
    %7 = arith.addf %3, %6 : vector<8x512xf32>
    %c0_6 = arith.constant 0 : index
    %c0_7 = arith.constant 0 : index
    %8 = vector.load %arg5[%c0_6, %c0_7] : memref<8x512xf32, #tpu.memory_space<vmem>>, vector<8x512xf32>
    tpu.vector_store %arg5[%c0_6, %c0_7], %7 {strides = array<i32>} : memref<8x512xf32, #tpu.memory_space<vmem>>, vector<8x512xf32>,
    return
  }
  func.func @transform_0(%arg0: i32, %arg1: i32, %arg2: i32) -> (i32, i32) {
    %c0_i32 = arith.constant 0 : i32
    return %arg0, %arg2 : i32, i32
  }
  func.func @transform_1(%arg0: i32, %arg1: i32, %arg2: i32) -> (i32, i32) {
    %c0_i32 = arith.constant 0 : i32
    return %arg2, %arg1 : i32, i32
  }
  func.func @transform_2(%arg0: i32, %arg1: i32, %arg2: i32) -> (i32, i32) {
    %c0_i32 = arith.constant 0 : i32
    return %arg0, %arg1 : i32, i32
  }
}

module attributes {stable_mosaic.version = 11 : i64} {
  func.func @_bn_lrelu_dc_sigmoid_kernel(%arg0: i32, %arg1: memref<8x1024xf32, #tpu.memory_space<vmem>>, %arg2: memref<1x1024xf32, #tpu.memory_space<vmem>>, %arg3: memref<1x1024xf32, #tpu.memory_space<vmem>>, %arg4: memref<1x1024xf32, #tpu.memory_space<vmem>>, %arg5: memref<1x1xf32, #tpu.memory_space<vmem>>, %arg6: memref<8x1xf32, #tpu.memory_space<vmem>>) attributes {dimension_semantics = [#tpu.dimension_semantics<arbitrary>], iteration_bounds = array<i64: 1>, scalar_prefetch = 0 : i64, scratch_operands = 0 : i64, tpu.core_type = #tpu.core_type<tc>, window_params = [{pipeline_mode = #tpu.pipeline_mode<synchronous>, transform_indices = @transform_0, window_bounds = array<i64: 8, 1024>}, {pipeline_mode = #tpu.pipeline_mode<synchronous>, transform_indices = @transform_1, window_bounds = array<i64: 1, 1024>}, {pipeline_mode = #tpu.pipeline_mode<synchronous>, transform_indices = @transform_2, window_bounds = array<i64: 1, 1024>}, {pipeline_mode = #tpu.pipeline_mode<synchronous>, transform_indices = @transform_3, window_bounds = array<i64: 1, 1024>}, {pipeline_mode = #tpu.pipeline_mode<synchronous>, transform_indices = @transform_4, window_bounds = array<i64: 1, 1>}, {pipeline_mode = #tpu.pipeline_mode<synchronous>, transform_indices = @transform_5, window_bounds = array<i64: 8, 1>}]} {
    %c0 = arith.constant 0 : index
    %c0_0 = arith.constant 0 : index
    %0 = vector.load %arg1[%c0, %c0_0] : memref<8x1024xf32, #tpu.memory_space<vmem>>, vector<8x1024xf32>
    %cst = arith.constant dense<0.000000e+00> : vector<1024xf32>
    %1 = vector.multi_reduction <add>, %0, %cst [0] : vector<8x1024xf32> to vector<1024xf32>
    %2 = vector.shape_cast %1 : vector<1024xf32> to vector<1x1024xf32>
    %cst_1 = arith.constant 8.000000e+00 : f32
    %3 = vector.broadcast %cst_1 : f32 to vector<1x1024xf32>
    %4 = arith.divf %2, %3 : vector<1x1024xf32>
    %5 = vector.broadcast %4 : vector<1x1024xf32> to vector<8x1024xf32>
    %6 = arith.subf %0, %5 : vector<8x1024xf32>
    %7 = arith.mulf %6, %6 : vector<8x1024xf32>
    %cst_2 = arith.constant dense<0.000000e+00> : vector<1024xf32>
    %8 = vector.multi_reduction <add>, %7, %cst_2 [0] : vector<8x1024xf32> to vector<1024xf32>
    %9 = vector.shape_cast %8 : vector<1024xf32> to vector<1x1024xf32>
    %cst_3 = arith.constant 8.000000e+00 : f32
    %10 = vector.broadcast %cst_3 : f32 to vector<1x1024xf32>
    %11 = arith.divf %9, %10 : vector<1x1024xf32>
    %12 = vector.broadcast %4 : vector<1x1024xf32> to vector<8x1024xf32>
    %13 = arith.subf %0, %12 : vector<8x1024xf32>
    %cst_4 = arith.constant 9.99999974E-6 : f32
    %14 = vector.broadcast %cst_4 : f32 to vector<1x1024xf32>
    %15 = arith.addf %11, %14 : vector<1x1024xf32>
    %16 = math.rsqrt %15 : vector<1x1024xf32>
    %17 = vector.broadcast %16 : vector<1x1024xf32> to vector<8x1024xf32>
    %18 = arith.mulf %13, %17 : vector<8x1024xf32>
    %c0_5 = arith.constant 0 : index
    %c0_6 = arith.constant 0 : index
    %19 = vector.load %arg2[%c0_5, %c0_6] : memref<1x1024xf32, #tpu.memory_space<vmem>>, vector<1x1024xf32>
    %20 = vector.broadcast %19 : vector<1x1024xf32> to vector<8x1024xf32>
    %21 = arith.mulf %18, %20 : vector<8x1024xf32>
    %c0_7 = arith.constant 0 : index
    %c0_8 = arith.constant 0 : index
    %22 = vector.load %arg3[%c0_7, %c0_8] : memref<1x1024xf32, #tpu.memory_space<vmem>>, vector<1x1024xf32>
    %23 = vector.broadcast %22 : vector<1x1024xf32> to vector<8x1024xf32>
    %24 = arith.addf %21, %23 : vector<8x1024xf32>
    %cst_9 = arith.constant 0.000000e+00 : f32
    %25 = vector.broadcast %cst_9 : f32 to vector<8x1024xf32>
    %26 = arith.cmpf ogt, %24, %25 : vector<8x1024xf32>
    %cst_10 = arith.constant 2.000000e-01 : f32
    %27 = vector.broadcast %cst_10 : f32 to vector<8x1024xf32>
    %28 = arith.mulf %27, %24 : vector<8x1024xf32>
    %29 = arith.select %26, %24, %28 : vector<8x1024xi1>, vector<8x1024xf32>
    %c0_11 = arith.constant 0 : index
    %c0_12 = arith.constant 0 : index
    %30 = vector.load %arg4[%c0_11, %c0_12] : memref<1x1024xf32, #tpu.memory_space<vmem>>, vector<1x1024xf32>
    %31 = vector.broadcast %30 : vector<1x1024xf32> to vector<8x1024xf32>
    %32 = arith.mulf %29, %31 : vector<8x1024xf32>
    %cst_13 = arith.constant dense<0.000000e+00> : vector<8xf32>
    %33 = vector.multi_reduction <add>, %32, %cst_13 [1] : vector<8x1024xf32> to vector<8xf32>
    %34 = vector.shape_cast %33 : vector<8xf32> to vector<8x1xf32>
    %c0_14 = arith.constant 0 : index
    %c0_15 = arith.constant 0 : index
    %35 = vector.load %arg5[%c0_14, %c0_15] : memref<1x1xf32, #tpu.memory_space<vmem>>, vector<1x1xf32>
    %36 = vector.broadcast %35 : vector<1x1xf32> to vector<8x1xf32>
    %37 = arith.addf %34, %36 : vector<8x1xf32>
    %cst_16 = arith.constant 5.000000e-01 : f32
    %38 = vector.broadcast %cst_16 : f32 to vector<8x1xf32>
    %39 = arith.mulf %38, %37 : vector<8x1xf32>
    %40 = math.tanh %39 : vector<8x1xf32>
    %cst_17 = arith.constant 1.000000e+00 : f32
    %41 = vector.broadcast %cst_17 : f32 to vector<8x1xf32>
    %42 = arith.addf %40, %41 : vector<8x1xf32>
    %cst_18 = arith.constant 5.000000e-01 : f32
    %43 = vector.broadcast %cst_18 : f32 to vector<8x1xf32>
    %44 = arith.mulf %43, %42 : vector<8x1xf32>
    %c0_19 = arith.constant 0 : index
    %c0_20 = arith.constant 0 : index
    %45 = vector.load %arg6[%c0_19, %c0_20] : memref<8x1xf32, #tpu.memory_space<vmem>>, vector<8x1xf32>
    tpu.vector_store %arg6[%c0_19, %c0_20], %44 {strides = array<i32>} : memref<8x1xf32, #tpu.memory_space<vmem>>, vector<8x1xf32>,
    return
  }
  func.func @transform_0(%arg0: i32) -> (i32, i32) {
    %c0_i32 = arith.constant 0 : i32
    %c0_i32_0 = arith.constant 0 : i32
    %c0_i32_1 = arith.constant 0 : i32
    return %c0_i32, %c0_i32_0 : i32, i32
  }
  func.func @transform_1(%arg0: i32) -> (i32, i32) {
    %c0_i32 = arith.constant 0 : i32
    %c0_i32_0 = arith.constant 0 : i32
    %c0_i32_1 = arith.constant 0 : i32
    return %c0_i32, %c0_i32_0 : i32, i32
  }
  func.func @transform_2(%arg0: i32) -> (i32, i32) {
    %c0_i32 = arith.constant 0 : i32
    %c0_i32_0 = arith.constant 0 : i32
    %c0_i32_1 = arith.constant 0 : i32
    return %c0_i32, %c0_i32_0 : i32, i32
  }
  func.func @transform_3(%arg0: i32) -> (i32, i32) {
    %c0_i32 = arith.constant 0 : i32
    %c0_i32_0 = arith.constant 0 : i32
    %c0_i32_1 = arith.constant 0 : i32
    return %c0_i32, %c0_i32_0 : i32, i32
  }
  func.func @transform_4(%arg0: i32) -> (i32, i32) {
    %c0_i32 = arith.constant 0 : i32
    %c0_i32_0 = arith.constant 0 : i32
    %c0_i32_1 = arith.constant 0 : i32
    return %c0_i32, %c0_i32_0 : i32, i32
  }
  func.func @transform_5(%arg0: i32) -> (i32, i32) {
    %c0_i32 = arith.constant 0 : i32
    %c0_i32_0 = arith.constant 0 : i32
    %c0_i32_1 = arith.constant 0 : i32
    return %c0_i32, %c0_i32_0 : i32, i32
  }
}

</mosaic_0001>

<llo_original>
// kernel: discriminator_forward.5
$region0: #{discriminator_forward.5}
  #allocation0 [shape = 'u32[]', space=smem, size = 0x4, offset = 0x4, fixed_abs, tag = 'smem constant byte address 0x4 - core index']
  #allocation1 [shape = 'u32[72,128]{1,0:T(1,128)}', space=vmem, size = 0x9000, scoped, tag = 'internal scratch']
  %s0 = inlined_call_operand.vmem [shape: bf16[1568,16], index: 0, kind: input, shape index: {}]
  %s1 = inlined_call_operand.vmem [shape: bf16[16,64], index: 1, kind: input, shape index: {}]
  %s2 = inlined_call_operand.vmem [shape: f32[1,64], index: 2, kind: input, shape index: {}]
  %s3 = inlined_call_operand.vmem [shape: f32[1568,64], index: 3, kind: output, shape index: {}]
  %s4 = sld [smem:[#allocation0]]
  $region45: #{discriminator_forward.5} parent=0
    _
  %s6 = ssub.s32 1, %s4
  %s7 = scalar_select 0, %s6, %s4
  loop: start=0, step=1, limit=9
  $region2: #{discriminator_forward.5} parent=0 // loop_pre_header
    _
  $region3: #{discriminator_forward.5} parent=0 // loop_header
    %s9 = sphi 0, %s13
    %p10 = scmp.ge.s32.totalorder %s9, 9
    %s16 = sphi 0, %s35
    %s17 = sphi 0, %s31
    %s18 = sphi 0, %s27
    %s19 = sphi 0, %s16
    %s20 = sphi 0, %s17
    %s21 = sphi 0, %s18
    %s22 = sphi 0, %s19
    %s23 = sphi 0, %s20
    %s24 = sphi 0, %s21
    %s40 = sphi 0, %s42
    %s43 = sphi 0, %s40
    %s44 = sphi 0, %s43
    %s60 = sphi 0, %s44
    %s68 = sphi 0, %s70
    %s71 = sphi 0, %s68
    %s72 = sphi 0, %s71
    %s88 = sphi 0, %s72
    %s94 = sphi 0, %s96
    %s97 = sphi 0, %s94
    %s98 = sphi 0, %s97
    %s114 = sphi 0, %s98
    %s122 = sphi 0, %s124
    %s125 = sphi 0, %s122
    %s126 = sphi 0, %s125
    %s142 = sphi 0, %s126
  $region4: #{discriminator_forward.5} parent=0 // loop_header_branch
    %12 = sbr.rel (%p10) target = $region8
  $region5: #{discriminator_forward.5} parent=0 // loop_body
    %s14 = ssub.s32 %s9, 1
    %s15 = ssub.s32 %s9, 2
    %s25 = sadd.s32 1, %s18
    %p26 = scmp.ge.s32.totalorder %s25, 1
    %s27 = scalar_select %p26, 0, %s25
    %s28 = sadd.s32 1, %s17
    %s29 = scalar_select %p26, %s28, %s17
    %p30 = scmp.ge.s32.totalorder %s29, 1
    %s31 = scalar_select %p30, 0, %s29
    %s32 = sadd.s32 1, %s16
    %s33 = scalar_select %p30, %s32, %s16
    %p34 = scmp.ge.s32.totalorder %s33, 7
    %s35 = scalar_select %p34, 0, %s33
    %s36 = ssub.s32 %s16, %s35
    %s37 = ssub.s32 %s18, %s27
    %s38 = sor.u32 %s36, %s37
    %p39 = scmp.eq.s32.totalorder %s38, 0
    %s41 = sadd.s32 %s40, 1
    %s42 = scalar_select %p39, %s40, %s41
    %p45 = pneg %p39
    %p46 = scmp.eq.s32.totalorder %s9, 6
    %p47 = por %p45, %p46
    %p48 = scmp.ne.s32.totalorder %s40, %s43
    %p49 = scmp.eq.s32.totalorder %s9, 0
    %p50 = por %p48, %p49
    %p51 = scmp.ne.s32.totalorder %s40, %s43
    %p52 = scmp.eq.s32.totalorder %s14, 6
    %p53 = por %p51, %p52
    %p54 = scmp.ne.s32.totalorder %s43, %s44
    %p55 = scmp.eq.s32.totalorder %s14, 0
    %p56 = por %p54, %p55
    %p57 = scmp.ne.s32.totalorder %s43, %s44
    %p58 = scmp.eq.s32.totalorder %s15, 6
    %p59 = por %p57, %p58
    %p61 = scmp.ne.s32.totalorder %s44, %s60
    %p62 = scmp.eq.s32.totalorder %s15, 0
    %p63 = por %p61, %p62
    %s64 = ssub.s32 %s18, %s27
    %s65 = ssub.s32 %s17, %s31
    %s66 = sor.u32 %s64, %s65
    %p67 = scmp.eq.s32.totalorder %s66, 0
    %s69 = sadd.s32 %s68, 1
    %s70 = scalar_select %p67, %s68, %s69
    %p73 = pneg %p67
    %p74 = scmp.eq.s32.totalorder %s9, 6
    %p75 = por %p73, %p74
    %p76 = scmp.ne.s32.totalorder %s68, %s71
    %p77 = scmp.eq.s32.totalorder %s9, 0
    %p78 = por %p76, %p77
    %p79 = scmp.ne.s32.totalorder %s68, %s71
    %p80 = scmp.eq.s32.totalorder %s14, 6
    %p81 = por %p79, %p80
    %p82 = scmp.ne.s32.totalorder %s71, %s72
    %p83 = scmp.eq.s32.totalorder %s14, 0
    %p84 = por %p82, %p83
    %p85 = scmp.ne.s32.totalorder %s71, %s72
    %p86 = scmp.eq.s32.totalorder %s15, 6
    %p87 = por %p85, %p86
    %p89 = scmp.ne.s32.totalorder %s72, %s88
    %p90 = scmp.eq.s32.totalorder %s15, 0
    %p91 = por %p89, %p90
    %s92 = ssub.s32 %s17, %s31
    %p93 = scmp.eq.s32.totalorder %s92, 0
    %s95 = sadd.s32 %s94, 1
    %s96 = scalar_select %p93, %s94, %s95
    %p99 = pneg %p93
    %p100 = scmp.eq.s32.totalorder %s9, 6
    %p101 = por %p99, %p100
    %p102 = scmp.ne.s32.totalorder %s94, %s97
    %p103 = scmp.eq.s32.totalorder %s9, 0
    %p104 = por %p102, %p103
    %p105 = scmp.ne.s32.totalorder %s94, %s97
    %p106 = scmp.eq.s32.totalorder %s14, 6
    %p107 = por %p105, %p106
    %p108 = scmp.ne.s32.totalorder %s97, %s98
    %p109 = scmp.eq.s32.totalorder %s14, 0
    %p110 = por %p108, %p109
    %p111 = scmp.ne.s32.totalorder %s97, %s98
    %p112 = scmp.eq.s32.totalorder %s15, 6
    %p113 = por %p111, %p112
    %p115 = scmp.ne.s32.totalorder %s98, %s114
    %p116 = scmp.eq.s32.totalorder %s15, 0
    %p117 = por %p115, %p116
    %s118 = ssub.s32 %s16, %s35
    %s119 = ssub.s32 %s17, %s31
    %s120 = sor.u32 %s118, %s119
    %p121 = scmp.eq.s32.totalorder %s120, 0
    %s123 = sadd.s32 %s122, 1
    %s124 = scalar_select %p121, %s122, %s123
    %p127 = pneg %p121
    %p128 = scmp.eq.s32.totalorder %s9, 6
    %p129 = por %p127, %p128
    %p130 = scmp.ne.s32.totalorder %s122, %s125
    %p131 = scmp.eq.s32.totalorder %s9, 0
    %p132 = por %p130, %p131
    %p133 = scmp.ne.s32.totalorder %s122, %s125
    %p134 = scmp.eq.s32.totalorder %s14, 6
    %p135 = por %p133, %p134
    %p136 = scmp.ne.s32.totalorder %s125, %s126
    %p137 = scmp.eq.s32.totalorder %s14, 0
    %p138 = por %p136, %p137
    %p139 = scmp.ne.s32.totalorder %s125, %s126
    %p140 = scmp.eq.s32.totalorder %s15, 6
    %p141 = por %p139, %p140
    %p143 = scmp.ne.s32.totalorder %s126, %s142
    %p144 = scmp.eq.s32.totalorder %s15, 0
    %p145 = por %p143, %p144
    %p146 = scmp.le.s32.totalorder 1, %s9
    %p147 = scmp.lt.s32.totalorder %s9, 8
    %p148 = pnand %p146, %p147
    %p149 = pneg %p148
    // Predicated region
    $region9: #{discriminator_forward.5} parent=5 // pred_check
      _
    $region10: #{discriminator_forward.5} parent=5 // pred_check_branch
      %151 = sbr.rel (%p148) target = $region12
    $region11: #{discriminator_forward.5} parent=5 // pred_region
      %s152 = ssub.s32 %s9, 1
      // Predicated region
      $region13: #{discriminator_forward.5} parent=11 // pred_check
        %p153 = pneg %p84
      $region14: #{discriminator_forward.5} parent=11 // pred_check_branch
        %155 = sbr.rel (%p153) target = $region16
      $region15: #{discriminator_forward.5} parent=11 // pred_region
        %s156 = smul.u32 2, %s21
        %p157 = scmp.lt.s32.totalorder %s156, 1
        %s158 = scalar_select %p157, %s156, 1
        %p159 = scmp.lt.s32.totalorder %s20, 0
        %s160 = scalar_select %p159, %s20, 0
        %s161 = sadd.s32 %s160, %s158
        %s162 = smul.addr %s161, 4
        %s163 = scalar_lea.vmem %s1, %s162
        %s164 = smul.u32 2, %s21
      $region16: #{discriminator_forward.5} parent=11 // pred_fallthru
        _
      // Predicated region
      $region17: #{discriminator_forward.5} parent=11 // pred_check
        %p165 = pneg %p110
      $region18: #{discriminator_forward.5} parent=11 // pred_check_branch
        %167 = sbr.rel (%p165) target = $region20
      $region19: #{discriminator_forward.5} parent=11 // pred_region
        %p168 = scmp.lt.s32.totalorder %s20, 0
        %s169 = scalar_select %p168, %s20, 0
        %s170 = scalar_lea.vmem %s2, %s169
      $region20: #{discriminator_forward.5} parent=11 // pred_fallthru
        _
    $region12: #{discriminator_forward.5} parent=5 // pred_fallthru
      _
    %p171 = scmp.lt.s32.totalorder %s9, 7
    // Predicated region
    $region21: #{discriminator_forward.5} parent=5 // pred_check
      %p172 = pneg %p171
    $region22: #{discriminator_forward.5} parent=5 // pred_check_branch
      %174 = sbr.rel (%p172) target = $region24
    $region23: #{discriminator_forward.5} parent=5 // pred_region
      // Predicated region
      $region25: #{discriminator_forward.5} parent=23 // pred_check
        %p175 = pneg %p50
      $region26: #{discriminator_forward.5} parent=23 // pred_check_branch
        %177 = sbr.rel (%p175) target = $region28
      $region27: #{discriminator_forward.5} parent=23 // pred_region
        %s178 = smul.u32 28, %s16
        %p179 = scmp.lt.s32.totalorder %s178, 195
        %s180 = scalar_select %p179, %s178, 195
        %p181 = scmp.lt.s32.totalorder %s18, 0
        %s182 = scalar_select %p181, %s18, 0
        %s183 = sadd.s32 %s182, %s180
        %s184 = smul.addr %s183, 4
        %s185 = scalar_lea.vmem %s0, %s184
        %s186 = smul.u32 28, %s16
      $region28: #{discriminator_forward.5} parent=23 // pred_fallthru
        _
    $region24: #{discriminator_forward.5} parent=5 // pred_fallthru
      _
    %p187 = scmp.le.s32.totalorder 1, %s9
    %p188 = scmp.lt.s32.totalorder %s9, 8
    %p189 = pnand %p187, %p188
    %p190 = pneg %p189
    // Predicated region
    $region29: #{discriminator_forward.5} parent=5 // pred_check
      _
    $region30: #{discriminator_forward.5} parent=5 // pred_check_branch
      %192 = sbr.rel (%p189) target = $region32
    $region31: #{discriminator_forward.5} parent=5 // pred_region
      %s193 = ssub.s32 %s9, 1
      %s194 = smul.u32 28, %s19
      %p195 = scmp.lt.s32.totalorder %s194, 195
      %s196 = scalar_select %p195, %s194, 195
      %p197 = scmp.lt.s32.totalorder %s21, 0
      %s198 = scalar_select %p197, %s21, 0
      %s199 = sadd.s32 %s198, %s196
      %s200 = smul.addr %s199, 4
      %s201 = scalar_lea.vmem %s0, %s200
      %p202 = pneg %p56
      %p203 = pneg %p53
      %s204 = smul.u32 2, %s21
      %p205 = scmp.lt.s32.totalorder %s204, 1
      %s206 = scalar_select %p205, %s204, 1
      %p207 = scmp.lt.s32.totalorder %s20, 0
      %s208 = scalar_select %p207, %s20, 0
      %s209 = sadd.s32 %s208, %s206
      %s210 = smul.addr %s209, 4
      %s211 = scalar_lea.vmem %s1, %s210
      %p212 = pneg %p84
      %p213 = pneg %p81
      %p214 = scmp.lt.s32.totalorder %s20, 0
      %s215 = scalar_select %p214, %s20, 0
      %s216 = scalar_lea.vmem %s2, %s215
      %p217 = pneg %p110
      %p218 = pneg %p107
      %p219 = pneg %p138
      %p220 = pneg %p135
      %s221 = smul.u32 28, %s19
      %p222 = scmp.lt.s32.totalorder %s221, 195
      %s223 = scalar_select %p222, %s221, 195
      %p224 = scmp.lt.s32.totalorder %s20, 0
      %s225 = scalar_select %p224, %s20, 0
      %s226 = sadd.s32 %s225, %s223
      %s227 = smul.addr %s226, 8
      %s228 = scalar_lea.vmem %s3, %s227
      %s229 = smul.u32 28, %s19
      %p230 = scmp.lt.s32.totalorder %s229, 195
      %s231 = scalar_select %p230, %s229, 195
      %p232 = scmp.lt.s32.totalorder %s21, 0
      %s233 = scalar_select %p232, %s21, 0
      %s234 = sadd.s32 %s233, %s231
      %s235 = smul.addr %s234, 4
      %s236 = scalar_lea.vmem %s0, %s235
      %s237 = smul.u32 28, %s19
      %s238 = smul.u32 2, %s21
      %p239 = scmp.lt.s32.totalorder %s238, 1
      %s240 = scalar_select %p239, %s238, 1
      %p241 = scmp.lt.s32.totalorder %s20, 0
      %s242 = scalar_select %p241, %s20, 0
      %s243 = sadd.s32 %s242, %s240
      %s244 = smul.addr %s243, 4
      %s245 = scalar_lea.vmem %s1, %s244
      %s246 = smul.u32 2, %s21
      %p247 = scmp.lt.s32.totalorder %s20, 0
      %s248 = scalar_select %p247, %s20, 0
      %s249 = scalar_lea.vmem %s2, %s248
      %s250 = smul.u32 28, %s19
      %p251 = scmp.lt.s32.totalorder %s250, 195
      %s252 = scalar_select %p251, %s250, 195
      %p253 = scmp.lt.s32.totalorder %s20, 0
      %s254 = scalar_select %p253, %s20, 0
      %s255 = sadd.s32 %s254, %s252
      %s256 = smul.addr %s255, 8
      %s257 = scalar_lea.vmem %s3, %s256
      %s258 = smul.u32 28, %s19
      %v260 = vld [vmem:[%s236] sm:$0xf]
      %v261 = vld [vmem:[%s236 + $0x4] sm:$0xf]
      %v262 = vld [vmem:[%s236 + $0x8] sm:$0xf]
      %v263 = vld [vmem:[%s236 + $0xc] sm:$0xf]
      %v264 = vld [vmem:[%s236 + $0x10] sm:$0xf]
      %v265 = vld [vmem:[%s236 + $0x14] sm:$0xf]
      %v266 = vld [vmem:[%s236 + $0x18] sm:$0xf]
      %v267 = vld [vmem:[%s236 + $0x1c] sm:$0xf]
      %v268 = vld [vmem:[%s236 + $0x20] sm:$0xf]
      %v269 = vld [vmem:[%s236 + $0x24] sm:$0xf]
      %v270 = vld [vmem:[%s236 + $0x28] sm:$0xf]
      %v271 = vld [vmem:[%s236 + $0x2c] sm:$0xf]
      %v272 = vld [vmem:[%s236 + $0x30] sm:$0xf]
      %v273 = vld [vmem:[%s236 + $0x34] sm:$0xf]
      %v274 = vld [vmem:[%s236 + $0x38] sm:$0xf]
      %v275 = vld [vmem:[%s236 + $0x3c] sm:$0xf]
      %v276 = vld [vmem:[%s236 + $0x40] sm:$0xf]
      %v277 = vld [vmem:[%s236 + $0x44] sm:$0xf]
      %v278 = vld [vmem:[%s236 + $0x48] sm:$0xf]
      %v279 = vld [vmem:[%s236 + $0x4c] sm:$0xf]
      %v280 = vld [vmem:[%s236 + $0x50] sm:$0xf]
      %v281 = vld [vmem:[%s236 + $0x54] sm:$0xf]
      %v282 = vld [vmem:[%s236 + $0x58] sm:$0xf]
      %v283 = vld [vmem:[%s236 + $0x5c] sm:$0xf]
      %v284 = vld [vmem:[%s236 + $0x60] sm:$0xf]
      %v285 = vld [vmem:[%s236 + $0x64] sm:$0xf]
      %v286 = vld [vmem:[%s236 + $0x68] sm:$0xf]
      %v287 = vld [vmem:[%s236 + $0x6c] sm:$0xf]
      %v288 = vld [vmem:[%s245] sm:$0xf]
      %v289 = vld [vmem:[%s245 + $0x4] sm:$0xf]
      %v290 = vld [vmem:[%s249] sm:$0x1]
      %v292 = vperm.slane %v290, 0
      %v322 = vunpack.c.l.b16 %v260
      %v323 = vunpack.c.l.b16 %v261
      %v324 = vunpack.c.l.b16 %v262
      %v325 = vunpack.c.l.b16 %v263
      %v326 = vunpack.c.l.b16 %v264
      %v327 = vunpack.c.l.b16 %v265
      %v328 = vunpack.c.l.b16 %v266
      %v329 = vunpack.c.l.b16 %v267
      %v330 = vunpack.c.l.b16 %v268
      %v331 = vunpack.c.l.b16 %v269
      %v332 = vunpack.c.l.b16 %v270
      %v333 = vunpack.c.l.b16 %v271
      %v334 = vunpack.c.l.b16 %v272
      %v335 = vunpack.c.l.b16 %v273
      %v336 = vunpack.c.l.b16 %v274
      %v337 = vunpack.c.l.b16 %v275
      %v338 = vunpack.c.l.b16 %v276
      %v339 = vunpack.c.l.b16 %v277
      %v340 = vunpack.c.l.b16 %v278
      %v341 = vunpack.c.l.b16 %v279
      %v342 = vunpack.c.l.b16 %v280
      %v343 = vunpack.c.l.b16 %v281
      %v344 = vunpack.c.l.b16 %v282
      %v345 = vunpack.c.l.b16 %v283
      %v346 = vunpack.c.l.b16 %v284
      %v347 = vunpack.c.l.b16 %v285
      %v348 = vunpack.c.l.b16 %v286
      %v349 = vunpack.c.l.b16 %v287
      %v350 = vpack.c.b16 %v323, %v322
      %v351 = vpack.c.b16 %v325, %v324
      %v352 = vpack.c.b16 %v327, %v326
      %v353 = vpack.c.b16 %v329, %v328
      %v354 = vpack.c.b16 %v331, %v330
      %v355 = vpack.c.b16 %v333, %v332
      %v356 = vpack.c.b16 %v335, %v334
      %v357 = vpack.c.b16 %v337, %v336
      %v358 = vpack.c.b16 %v339, %v338
      %v359 = vpack.c.b16 %v341, %v340
      %v360 = vpack.c.b16 %v343, %v342
      %v361 = vpack.c.b16 %v345, %v344
      %v362 = vpack.c.b16 %v347, %v346
      %v363 = vpack.c.b16 %v349, %v348
      %v366 = vunpack.c.l.b16 %v288
      %v367 = vunpack.c.l.b16 %v289
      %v368 = vpack.c.b16 %v367, %v366
      %vm370 = vcmask 130048
      %v372 = vsel %vm370, %v350, 0
      %v375 = vsel %vm370, %v351, 0
      %v378 = vsel %vm370, %v352, 0
      %v381 = vsel %vm370, %v353, 0
      %v384 = vsel %vm370, %v354, 0
      %v387 = vsel %vm370, %v355, 0
      %v390 = vsel %vm370, %v356, 0
      %v393 = vsel %vm370, %v357, 0
      %v396 = vsel %vm370, %v358, 0
      %v399 = vsel %vm370, %v359, 0
      %v402 = vsel %vm370, %v360, 0
      %v405 = vsel %vm370, %v361, 0
      %v408 = vsel %vm370, %v362, 0
      %v411 = vsel %vm370, %v363, 0
      %413 = vmatpush.bf16.msra.mxu0 0
      %414 = vmatpush.bf16.msra.mxu0 0
      %415 = vmatpush.bf16.msra.mxu0 0
      %416 = vmatpush.bf16.msra.mxu0 0
      %417 = vmatpush.bf16.msra.mxu0 0
      %418 = vmatpush.bf16.msra.mxu0 0
      %419 = vmatpush.bf16.msra.mxu0 0
      %420 = vmatpush.bf16.msra.mxu0 %v368
      %421 = vmatmul.bf16.gmra.mxu0 %v372
      %v422 = vpop.f32.mrf.mxu0
      %v423 = vadd.f32 %v292, %v422
      %v424 = vpop.f32.mrf.mxu0
      %v425 = vadd.f32 %v292, %v424
      %426 = vmatmul.bf16.gmra.mxu0 %v375
      %v427 = vpop.f32.mrf.mxu0
      %v428 = vadd.f32 %v292, %v427
      %v429 = vpop.f32.mrf.mxu0
      %v430 = vadd.f32 %v292, %v429
      %431 = vmatmul.bf16.gmra.mxu0 %v378
      %v432 = vpop.f32.mrf.mxu0
      %v433 = vadd.f32 %v292, %v432
      %v434 = vpop.f32.mrf.mxu0
      %v435 = vadd.f32 %v292, %v434
      %436 = vmatmul.bf16.gmra.mxu0 %v381
      %v437 = vpop.f32.mrf.mxu0
      %v438 = vadd.f32 %v292, %v437
      %v439 = vpop.f32.mrf.mxu0
      %v440 = vadd.f32 %v292, %v439
      %441 = vmatmul.bf16.gmra.mxu0 %v384
      %v442 = vpop.f32.mrf.mxu0
      %v443 = vadd.f32 %v292, %v442
      %v444 = vpop.f32.mrf.mxu0
      %v445 = vadd.f32 %v292, %v444
      %446 = vmatmul.bf16.gmra.mxu0 %v387
      %v447 = vpop.f32.mrf.mxu0
      %v448 = vadd.f32 %v292, %v447
      %v449 = vpop.f32.mrf.mxu0
      %v450 = vadd.f32 %v292, %v449
      %451 = vmatmul.bf16.gmra.mxu0 %v390
      %v452 = vpop.f32.mrf.mxu0
      %v453 = vadd.f32 %v292, %v452
      %v454 = vpop.f32.mrf.mxu0
      %v455 = vadd.f32 %v292, %v454
      %456 = vmatmul.bf16.gmra.mxu0 %v393
      %v457 = vpop.f32.mrf.mxu0
      %v458 = vadd.f32 %v292, %v457
      %v459 = vpop.f32.mrf.mxu0
      %v460 = vadd.f32 %v292, %v459
      %461 = vmatmul.bf16.gmra.mxu0 %v396
      %v462 = vpop.f32.mrf.mxu0
      %v463 = vadd.f32 %v292, %v462
      %v464 = vpop.f32.mrf.mxu0
      %v465 = vadd.f32 %v292, %v464
      %466 = vmatmul.bf16.gmra.mxu0 %v399
      %v467 = vpop.f32.mrf.mxu0
      %v468 = vadd.f32 %v292, %v467
      %v469 = vpop.f32.mrf.mxu0
      %v470 = vadd.f32 %v292, %v469
      %471 = vmatmul.bf16.gmra.mxu0 %v402
      %v472 = vpop.f32.mrf.mxu0
      %v473 = vadd.f32 %v292, %v472
      %v474 = vpop.f32.mrf.mxu0
      %v475 = vadd.f32 %v292, %v474
      %476 = vmatmul.bf16.gmra.mxu0 %v405
      %v477 = vpop.f32.mrf.mxu0
      %v478 = vadd.f32 %v292, %v477
      %v479 = vpop.f32.mrf.mxu0
      %v480 = vadd.f32 %v292, %v479
      %481 = vmatmul.bf16.gmra.mxu0 %v408
      %v482 = vpop.f32.mrf.mxu0
      %v483 = vadd.f32 %v292, %v482
      %v484 = vpop.f32.mrf.mxu0
      %v485 = vadd.f32 %v292, %v484
      %486 = vmatmul.bf16.gmra.mxu0 %v411
      %v487 = vpop.f32.mrf.mxu0
      %v488 = vadd.f32 %v292, %v487
      %v489 = vpop.f32.mrf.mxu0
      %v490 = vadd.f32 %v292, %v489
      %491 = vdwg.mxu0
      %vm492 = vcmp.gt.f32.partialorder %v423, 0.0
      %vm493 = vcmp.gt.f32.partialorder %v425, 0.0
      %vm494 = vcmp.gt.f32.partialorder %v428, 0.0
      %vm495 = vcmp.gt.f32.partialorder %v430, 0.0
      %vm496 = vcmp.gt.f32.partialorder %v433, 0.0
      %vm497 = vcmp.gt.f32.partialorder %v435, 0.0
      %vm498 = vcmp.gt.f32.partialorder %v438, 0.0
      %vm499 = vcmp.gt.f32.partialorder %v440, 0.0
      %vm500 = vcmp.gt.f32.partialorder %v443, 0.0
      %vm501 = vcmp.gt.f32.partialorder %v445, 0.0
      %vm502 = vcmp.gt.f32.partialorder %v448, 0.0
      %vm503 = vcmp.gt.f32.partialorder %v450, 0.0
      %vm504 = vcmp.gt.f32.partialorder %v453, 0.0
      %vm505 = vcmp.gt.f32.partialorder %v455, 0.0
      %vm506 = vcmp.gt.f32.partialorder %v458, 0.0
      %vm507 = vcmp.gt.f32.partialorder %v460, 0.0
      %vm508 = vcmp.gt.f32.partialorder %v463, 0.0
      %vm509 = vcmp.gt.f32.partialorder %v465, 0.0
      %vm510 = vcmp.gt.f32.partialorder %v468, 0.0
      %vm511 = vcmp.gt.f32.partialorder %v470, 0.0
      %vm512 = vcmp.gt.f32.partialorder %v473, 0.0
      %vm513 = vcmp.gt.f32.partialorder %v475, 0.0
      %vm514 = vcmp.gt.f32.partialorder %v478, 0.0
      %vm515 = vcmp.gt.f32.partialorder %v480, 0.0
      %vm516 = vcmp.gt.f32.partialorder %v483, 0.0
      %vm517 = vcmp.gt.f32.partialorder %v485, 0.0
      %vm518 = vcmp.gt.f32.partialorder %v488, 0.0
      %vm519 = vcmp.gt.f32.partialorder %v490, 0.0
      %v520 = vmul.f32 %v423, 0.2
      %v521 = vmul.f32 %v425, 0.2
      %v522 = vmul.f32 %v428, 0.2
      %v523 = vmul.f32 %v430, 0.2
      %v524 = vmul.f32 %v433, 0.2
      %v525 = vmul.f32 %v435, 0.2
      %v526 = vmul.f32 %v438, 0.2
      %v527 = vmul.f32 %v440, 0.2
      %v528 = vmul.f32 %v443, 0.2
      %v529 = vmul.f32 %v445, 0.2
      %v530 = vmul.f32 %v448, 0.2
      %v531 = vmul.f32 %v450, 0.2
      %v532 = vmul.f32 %v453, 0.2
      %v533 = vmul.f32 %v455, 0.2
      %v534 = vmul.f32 %v458, 0.2
      %v535 = vmul.f32 %v460, 0.2
      %v536 = vmul.f32 %v463, 0.2
      %v537 = vmul.f32 %v465, 0.2
      %v538 = vmul.f32 %v468, 0.2
      %v539 = vmul.f32 %v470, 0.2
      %v540 = vmul.f32 %v473, 0.2
      %v541 = vmul.f32 %v475, 0.2
      %v542 = vmul.f32 %v478, 0.2
      %v543 = vmul.f32 %v480, 0.2
      %v544 = vmul.f32 %v483, 0.2
      %v545 = vmul.f32 %v485, 0.2
      %v546 = vmul.f32 %v488, 0.2
      %v547 = vmul.f32 %v490, 0.2
      %v548 = vsel %vm492, %v423, %v520
      %v549 = vsel %vm493, %v425, %v521
      %v550 = vsel %vm494, %v428, %v522
      %v551 = vsel %vm495, %v430, %v523
      %v552 = vsel %vm496, %v433, %v524
      %v553 = vsel %vm497, %v435, %v525
      %v554 = vsel %vm498, %v438, %v526
      %v555 = vsel %vm499, %v440, %v527
      %v556 = vsel %vm500, %v443, %v528
      %v557 = vsel %vm501, %v445, %v529
      %v558 = vsel %vm502, %v448, %v530
      %v559 = vsel %vm503, %v450, %v531
      %v560 = vsel %vm504, %v453, %v532
      %v561 = vsel %vm505, %v455, %v533
      %v562 = vsel %vm506, %v458, %v534
      %v563 = vsel %vm507, %v460, %v535
      %v564 = vsel %vm508, %v463, %v536
      %v565 = vsel %vm509, %v465, %v537
      %v566 = vsel %vm510, %v468, %v538
      %v567 = vsel %vm511, %v470, %v539
      %v568 = vsel %vm512, %v473, %v540
      %v569 = vsel %vm513, %v475, %v541
      %v570 = vsel %vm514, %v478, %v542
      %v571 = vsel %vm515, %v480, %v543
      %v572 = vsel %vm516, %v483, %v544
      %v573 = vsel %vm517, %v485, %v545
      %v574 = vsel %vm518, %v488, %v546
      %v575 = vsel %vm519, %v490, %v547
      %vm576 = vcmask 523264
      %577 = vst.msk [vmem:[%s257] sm:$0xff] %vm576, %v548
      %578 = vst.msk [vmem:[%s257 + $0x8] sm:$0xff] %vm576, %v549
      %579 = vst.msk [vmem:[%s257 + $0x10] sm:$0xff] %vm576, %v550
      %580 = vst.msk [vmem:[%s257 + $0x18] sm:$0xff] %vm576, %v551
      %581 = vst.msk [vmem:[%s257 + $0x20] sm:$0xff] %vm576, %v552
      %582 = vst.msk [vmem:[%s257 + $0x28] sm:$0xff] %vm576, %v553
      %583 = vst.msk [vmem:[%s257 + $0x30] sm:$0xff] %vm576, %v554
      %584 = vst.msk [vmem:[%s257 + $0x38] sm:$0xff] %vm576, %v555
      %585 = vst.msk [vmem:[%s257 + $0x40] sm:$0xff] %vm576, %v556
      %586 = vst.msk [vmem:[%s257 + $0x48] sm:$0xff] %vm576, %v557
      %587 = vst.msk [vmem:[%s257 + $0x50] sm:$0xff] %vm576, %v558
      %588 = vst.msk [vmem:[%s257 + $0x58] sm:$0xff] %vm576, %v559
      %589 = vst.msk [vmem:[%s257 + $0x60] sm:$0xff] %vm576, %v560
      %590 = vst.msk [vmem:[%s257 + $0x68] sm:$0xff] %vm576, %v561
      %591 = vst.msk [vmem:[%s257 + $0x70] sm:$0xff] %vm576, %v562
      %592 = vst.msk [vmem:[%s257 + $0x78] sm:$0xff] %vm576, %v563
      %593 = vst.msk [vmem:[%s257 + $0x80] sm:$0xff] %vm576, %v564
      %594 = vst.msk [vmem:[%s257 + $0x88] sm:$0xff] %vm576, %v565
      %595 = vst.msk [vmem:[%s257 + $0x90] sm:$0xff] %vm576, %v566
      %596 = vst.msk [vmem:[%s257 + $0x98] sm:$0xff] %vm576, %v567
      %597 = vst.msk [vmem:[%s257 + $0xa0] sm:$0xff] %vm576, %v568
      %598 = vst.msk [vmem:[%s257 + $0xa8] sm:$0xff] %vm576, %v569
      %599 = vst.msk [vmem:[%s257 + $0xb0] sm:$0xff] %vm576, %v570
      %600 = vst.msk [vmem:[%s257 + $0xb8] sm:$0xff] %vm576, %v571
      %601 = vst.msk [vmem:[%s257 + $0xc0] sm:$0xff] %vm576, %v572
      %602 = vst.msk [vmem:[%s257 + $0xc8] sm:$0xff] %vm576, %v573
      %603 = vst.msk [vmem:[%s257 + $0xd0] sm:$0xff] %vm576, %v574
      %604 = vst.msk [vmem:[%s257 + $0xd8] sm:$0xff] %vm576, %v575
      %s605 = smul.u32 28, %s19
      %p606 = scmp.lt.s32.totalorder %s605, 195
      %s607 = scalar_select %p606, %s605, 195
      %p608 = scmp.lt.s32.totalorder %s20, 0
      %s609 = scalar_select %p608, %s20, 0
      %s610 = sadd.s32 %s609, %s607
      %s611 = smul.addr %s610, 8
      %s612 = scalar_lea.vmem %s3, %s611
      // Predicated region
      $region33: #{discriminator_forward.5} parent=31 // pred_check
        %p613 = pneg %p135
      $region34: #{discriminator_forward.5} parent=31 // pred_check_branch
        %615 = sbr.rel (%p613) target = $region36
      $region35: #{discriminator_forward.5} parent=31 // pred_region
        %s616 = smul.u32 28, %s19
      $region36: #{discriminator_forward.5} parent=31 // pred_fallthru
        _
    $region32: #{discriminator_forward.5} parent=5 // pred_fallthru
      _
    %p617 = scmp.le.s32.totalorder 2, %s9
    // Predicated region
    $region37: #{discriminator_forward.5} parent=5 // pred_check
      %p618 = pneg %p617
    $region38: #{discriminator_forward.5} parent=5 // pred_check_branch
      %620 = sbr.rel (%p618) target = $region40
    $region39: #{discriminator_forward.5} parent=5 // pred_region
      %s621 = ssub.s32 %s9, 2
      // Predicated region
      $region41: #{discriminator_forward.5} parent=39 // pred_check
        %p622 = pneg %p141
      $region42: #{discriminator_forward.5} parent=39 // pred_check_branch
        %624 = sbr.rel (%p622) target = $region44
      $region43: #{discriminator_forward.5} parent=39 // pred_region
        %s625 = smul.u32 28, %s22
        %p626 = scmp.lt.s32.totalorder %s625, 195
        %s627 = scalar_select %p626, %s625, 195
        %p628 = scmp.lt.s32.totalorder %s23, 0
        %s629 = scalar_select %p628, %s23, 0
        %s630 = sadd.s32 %s629, %s627
        %s631 = smul.addr %s630, 8
        %s632 = scalar_lea.vmem %s3, %s631
      $region44: #{discriminator_forward.5} parent=39 // pred_fallthru
        _
    $region40: #{discriminator_forward.5} parent=5 // pred_fallthru
      _
  $region6: #{discriminator_forward.5} parent=0 // loop_footer
    %s13 = sadd.s32 1, %s9
  $region7: #{discriminator_forward.5} parent=0 // loop_footer_branch
    %8 = sbr.rel target = $region3
  $region8: #{discriminator_forward.5} parent=0 // loop_exit
    _

// kernel: discriminator_forward.7
$region0: #{discriminator_forward.7}
  #allocation0 [shape = 'u32[]', space=smem, size = 0x4, offset = 0x4, fixed_abs, tag = 'smem constant byte address 0x4 - core index']
  #allocation1 [shape = 'u32[72,128]{1,0:T(1,128)}', space=vmem, size = 0x9000, scoped, tag = 'internal scratch']
  %s0 = inlined_call_operand.vmem [shape: f32[392,128], index: 0, kind: input, shape index: {}]
  %s1 = inlined_call_operand.vmem [shape: f32[1,128], index: 1, kind: input, shape index: {}]
  %s2 = inlined_call_operand.vmem [shape: f32[1,128], index: 2, kind: input, shape index: {}]
  %s3 = inlined_call_operand.vmem [shape: f32[392,128], index: 3, kind: output, shape index: {}]
  %s4 = sld [smem:[#allocation0]]
  $region22: #{discriminator_forward.7} parent=0
    _
  %s6 = ssub.s32 1, %s4
  %s7 = scalar_select 0, %s6, %s4
  // Predicated region
  $region2: #{discriminator_forward.7} parent=0 // pred_check
    _
  $region3: #{discriminator_forward.7} parent=0 // pred_check_branch
    %9 = sbr.rel (0) target = $region5
  $region4: #{discriminator_forward.7} parent=0 // pred_region
    _
  $region5: #{discriminator_forward.7} parent=0 // pred_fallthru
    _
  // Predicated region
  $region6: #{discriminator_forward.7} parent=0 // pred_check
    _
  $region7: #{discriminator_forward.7} parent=0 // pred_check_branch
    %11 = sbr.rel (0) target = $region9
  $region8: #{discriminator_forward.7} parent=0 // pred_region
    _
  $region9: #{discriminator_forward.7} parent=0 // pred_fallthru
    _
  // Predicated region
  $region10: #{discriminator_forward.7} parent=0 // pred_check
    _
  $region11: #{discriminator_forward.7} parent=0 // pred_check_branch
    %13 = sbr.rel (0) target = $region13
  $region12: #{discriminator_forward.7} parent=0 // pred_region
    _
  $region13: #{discriminator_forward.7} parent=0 // pred_fallthru
    _
  %v14 = vld [vmem:[%s0] sm:$0xff]
  %v15 = vld [vmem:[%s0 + $0x8] sm:$0xff]
  %v16 = vld [vmem:[%s0 + $0x10] sm:$0xff]
  %v17 = vld [vmem:[%s0 + $0x18] sm:$0xff]
  %v18 = vld [vmem:[%s0 + $0x20] sm:$0xff]
  %v19 = vld [vmem:[%s0 + $0x28] sm:$0xff]
  %v20 = vld [vmem:[%s0 + $0x30] sm:$0xff]
  %v21 = vld [vmem:[%s0 + $0x38] sm:$0xff]
  %v22 = vld [vmem:[%s0 + $0x40] sm:$0xff]
  %v23 = vld [vmem:[%s0 + $0x48] sm:$0xff]
  %v24 = vld [vmem:[%s0 + $0x50] sm:$0xff]
  %v25 = vld [vmem:[%s0 + $0x58] sm:$0xff]
  %v26 = vld [vmem:[%s0 + $0x60] sm:$0xff]
  %v27 = vld [vmem:[%s0 + $0x68] sm:$0xff]
  %v28 = vld [vmem:[%s0 + $0x70] sm:$0xff]
  %v29 = vld [vmem:[%s0 + $0x78] sm:$0xff]
  %v30 = vld [vmem:[%s0 + $0x80] sm:$0xff]
  %v31 = vld [vmem:[%s0 + $0x88] sm:$0xff]
  %v32 = vld [vmem:[%s0 + $0x90] sm:$0xff]
  %v33 = vld [vmem:[%s0 + $0x98] sm:$0xff]
  %v34 = vld [vmem:[%s0 + $0xa0] sm:$0xff]
  %v35 = vld [vmem:[%s0 + $0xa8] sm:$0xff]
  %v36 = vld [vmem:[%s0 + $0xb0] sm:$0xff]
  %v37 = vld [vmem:[%s0 + $0xb8] sm:$0xff]
  %v38 = vld [vmem:[%s0 + $0xc0] sm:$0xff]
  %v39 = vld [vmem:[%s0 + $0xc8] sm:$0xff]
  %v40 = vld [vmem:[%s0 + $0xd0] sm:$0xff]
  %v41 = vld [vmem:[%s0 + $0xd8] sm:$0xff]
  %v42 = vld [vmem:[%s0 + $0xe0] sm:$0xff]
  %v43 = vld [vmem:[%s0 + $0xe8] sm:$0xff]
  %v44 = vld [vmem:[%s0 + $0xf0] sm:$0xff]
  %v45 = vld [vmem:[%s0 + $0xf8] sm:$0xff]
  %v46 = vld [vmem:[%s0 + $0x100] sm:$0xff]
  %v47 = vld [vmem:[%s0 + $0x108] sm:$0xff]
  %v48 = vld [vmem:[%s0 + $0x110] sm:$0xff]
  %v49 = vld [vmem:[%s0 + $0x118] sm:$0xff]
  %v50 = vld [vmem:[%s0 + $0x120] sm:$0xff]
  %v51 = vld [vmem:[%s0 + $0x128] sm:$0xff]
  %v52 = vld [vmem:[%s0 + $0x130] sm:$0xff]
  %v53 = vld [vmem:[%s0 + $0x138] sm:$0xff]
  %v54 = vld [vmem:[%s0 + $0x140] sm:$0xff]
  %v55 = vld [vmem:[%s0 + $0x148] sm:$0xff]
  %v56 = vld [vmem:[%s0 + $0x150] sm:$0xff]
  %v57 = vld [vmem:[%s0 + $0x158] sm:$0xff]
  %v58 = vld [vmem:[%s0 + $0x160] sm:$0xff]
  %v59 = vld [vmem:[%s0 + $0x168] sm:$0xff]
  %v60 = vld [vmem:[%s0 + $0x170] sm:$0xff]
  %v61 = vld [vmem:[%s0 + $0x178] sm:$0xff]
  %v62 = vld [vmem:[%s0 + $0x180] sm:$0xff]
  %v63 = vadd.f32 %v14, %v15
  %v64 = vadd.f32 %v63, %v16
  %v65 = vadd.f32 %v64, %v17
  %v66 = vadd.f32 %v65, %v18
  %v67 = vadd.f32 %v66, %v19
  %v68 = vadd.f32 %v67, %v20
  %v69 = vadd.f32 %v68, %v21
  %v70 = vadd.f32 %v69, %v22
  %v71 = vadd.f32 %v70, %v23
  %v72 = vadd.f32 %v71, %v24
  %v73 = vadd.f32 %v72, %v25
  %v74 = vadd.f32 %v73, %v26
  %v75 = vadd.f32 %v74, %v27
  %v76 = vadd.f32 %v75, %v28
  %v77 = vadd.f32 %v76, %v29
  %v78 = vadd.f32 %v77, %v30
  %v79 = vadd.f32 %v78, %v31
  %v80 = vadd.f32 %v79, %v32
  %v81 = vadd.f32 %v80, %v33
  %v82 = vadd.f32 %v81, %v34
  %v83 = vadd.f32 %v82, %v35
  %v84 = vadd.f32 %v83, %v36
  %v85 = vadd.f32 %v84, %v37
  %v86 = vadd.f32 %v85, %v38
  %v87 = vadd.f32 %v86, %v39
  %v88 = vadd.f32 %v87, %v40
  %v89 = vadd.f32 %v88, %v41
  %v90 = vadd.f32 %v89, %v42
  %v91 = vadd.f32 %v90, %v43
  %v92 = vadd.f32 %v91, %v44
  %v93 = vadd.f32 %v92, %v45
  %v94 = vadd.f32 %v93, %v46
  %v95 = vadd.f32 %v94, %v47
  %v96 = vadd.f32 %v95, %v48
  %v97 = vadd.f32 %v96, %v49
  %v98 = vadd.f32 %v97, %v50
  %v99 = vadd.f32 %v98, %v51
  %v100 = vadd.f32 %v99, %v52
  %v101 = vadd.f32 %v100, %v53
  %v102 = vadd.f32 %v101, %v54
  %v103 = vadd.f32 %v102, %v55
  %v104 = vadd.f32 %v103, %v56
  %v105 = vadd.f32 %v104, %v57
  %v106 = vadd.f32 %v105, %v58
  %v107 = vadd.f32 %v106, %v59
  %v108 = vadd.f32 %v107, %v60
  %v109 = vadd.f32 %v108, %v61
  %v110 = vadd.f32 %v109, %v62
  %v111 = vrot.slane %v110, 4
  %v112 = vadd.f32 %v110, %v111
  %v113 = vrot.slane %v112, 2
  %v114 = vadd.f32 %v112, %v113
  %v115 = vrot.slane %v114, 1
  %v116 = vadd.f32 %v114, %v115
  %v117 = vrcp.pop 392.0
  %v118 = vmul.f32 392.0, %v117
  %v119 = vsub.f32 1.0, %v118
  %v120 = vmul.f32 %v117, %v119
  %v121 = vadd.f32 %v117, %v120
  %vm122 = vweird.f32 %v117
  %v123 = vsel %vm122, %v117, %v121
  %v124 = vmul.f32 %v116, %v123
  %v125 = vsub.f32 %v14, %v124
  %v126 = vsub.f32 %v15, %v124
  %v127 = vsub.f32 %v16, %v124
  %v128 = vsub.f32 %v17, %v124
  %v129 = vsub.f32 %v18, %v124
  %v130 = vsub.f32 %v19, %v124
  %v131 = vsub.f32 %v20, %v124
  %v132 = vsub.f32 %v21, %v124
  %v133 = vsub.f32 %v22, %v124
  %v134 = vsub.f32 %v23, %v124
  %v135 = vsub.f32 %v24, %v124
  %v136 = vsub.f32 %v25, %v124
  %v137 = vsub.f32 %v26, %v124
  %v138 = vsub.f32 %v27, %v124
  %v139 = vsub.f32 %v28, %v124
  %v140 = vsub.f32 %v29, %v124
  %v141 = vsub.f32 %v30, %v124
  %v142 = vsub.f32 %v31, %v124
  %v143 = vsub.f32 %v32, %v124
  %v144 = vsub.f32 %v33, %v124
  %v145 = vsub.f32 %v34, %v124
  %v146 = vsub.f32 %v35, %v124
  %v147 = vsub.f32 %v36, %v124
  %v148 = vsub.f32 %v37, %v124
  %v149 = vsub.f32 %v38, %v124
  %v150 = vsub.f32 %v39, %v124
  %v151 = vsub.f32 %v40, %v124
  %v152 = vsub.f32 %v41, %v124
  %v153 = vsub.f32 %v42, %v124
  %v154 = vsub.f32 %v43, %v124
  %v155 = vsub.f32 %v44, %v124
  %v156 = vsub.f32 %v45, %v124
  %v157 = vsub.f32 %v46, %v124
  %v158 = vsub.f32 %v47, %v124
  %v159 = vsub.f32 %v48, %v124
  %v160 = vsub.f32 %v49, %v124
  %v161 = vsub.f32 %v50, %v124
  %v162 = vsub.f32 %v51, %v124
  %v163 = vsub.f32 %v52, %v124
  %v164 = vsub.f32 %v53, %v124
  %v165 = vsub.f32 %v54, %v124
  %v166 = vsub.f32 %v55, %v124
  %v167 = vsub.f32 %v56, %v124
  %v168 = vsub.f32 %v57, %v124
  %v169 = vsub.f32 %v58, %v124
  %v170 = vsub.f32 %v59, %v124
  %v171 = vsub.f32 %v60, %v124
  %v172 = vsub.f32 %v61, %v124
  %v173 = vsub.f32 %v62, %v124
  %v174 = vmul.f32 %v125, %v125
  %v175 = vmul.f32 %v126, %v126
  %v176 = vmul.f32 %v127, %v127
  %v177 = vmul.f32 %v128, %v128
  %v178 = vmul.f32 %v129, %v129
  %v179 = vmul.f32 %v130, %v130
  %v180 = vmul.f32 %v131, %v131
  %v181 = vmul.f32 %v132, %v132
  %v182 = vmul.f32 %v133, %v133
  %v183 = vmul.f32 %v134, %v134
  %v184 = vmul.f32 %v135, %v135
  %v185 = vmul.f32 %v136, %v136
  %v186 = vmul.f32 %v137, %v137
  %v187 = vmul.f32 %v138, %v138
  %v188 = vmul.f32 %v139, %v139
  %v189 = vmul.f32 %v140, %v140
  %v190 = vmul.f32 %v141, %v141
  %v191 = vmul.f32 %v142, %v142
  %v192 = vmul.f32 %v143, %v143
  %v193 = vmul.f32 %v144, %v144
  %v194 = vmul.f32 %v145, %v145
  %v195 = vmul.f32 %v146, %v146
  %v196 = vmul.f32 %v147, %v147
  %v197 = vmul.f32 %v148, %v148
  %v198 = vmul.f32 %v149, %v149
  %v199 = vmul.f32 %v150, %v150
  %v200 = vmul.f32 %v151, %v151
  %v201 = vmul.f32 %v152, %v152
  %v202 = vmul.f32 %v153, %v153
  %v203 = vmul.f32 %v154, %v154
  %v204 = vmul.f32 %v155, %v155
  %v205 = vmul.f32 %v156, %v156
  %v206 = vmul.f32 %v157, %v157
  %v207 = vmul.f32 %v158, %v158
  %v208 = vmul.f32 %v159, %v159
  %v209 = vmul.f32 %v160, %v160
  %v210 = vmul.f32 %v161, %v161
  %v211 = vmul.f32 %v162, %v162
  %v212 = vmul.f32 %v163, %v163
  %v213 = vmul.f32 %v164, %v164
  %v214 = vmul.f32 %v165, %v165
  %v215 = vmul.f32 %v166, %v166
  %v216 = vmul.f32 %v167, %v167
  %v217 = vmul.f32 %v168, %v168
  %v218 = vmul.f32 %v169, %v169
  %v219 = vmul.f32 %v170, %v170
  %v220 = vmul.f32 %v171, %v171
  %v221 = vmul.f32 %v172, %v172
  %v222 = vmul.f32 %v173, %v173
  %v223 = vadd.f32 %v174, %v175
  %v224 = vadd.f32 %v223, %v176
  %v225 = vadd.f32 %v224, %v177
  %v226 = vadd.f32 %v225, %v178
  %v227 = vadd.f32 %v226, %v179
  %v228 = vadd.f32 %v227, %v180
  %v229 = vadd.f32 %v228, %v181
  %v230 = vadd.f32 %v229, %v182
  %v231 = vadd.f32 %v230, %v183
  %v232 = vadd.f32 %v231, %v184
  %v233 = vadd.f32 %v232, %v185
  %v234 = vadd.f32 %v233, %v186
  %v235 = vadd.f32 %v234, %v187
  %v236 = vadd.f32 %v235, %v188
  %v237 = vadd.f32 %v236, %v189
  %v238 = vadd.f32 %v237, %v190
  %v239 = vadd.f32 %v238, %v191
  %v240 = vadd.f32 %v239, %v192
  %v241 = vadd.f32 %v240, %v193
  %v242 = vadd.f32 %v241, %v194
  %v243 = vadd.f32 %v242, %v195
  %v244 = vadd.f32 %v243, %v196
  %v245 = vadd.f32 %v244, %v197
  %v246 = vadd.f32 %v245, %v198
  %v247 = vadd.f32 %v246, %v199
  %v248 = vadd.f32 %v247, %v200
  %v249 = vadd.f32 %v248, %v201
  %v250 = vadd.f32 %v249, %v202
  %v251 = vadd.f32 %v250, %v203
  %v252 = vadd.f32 %v251, %v204
  %v253 = vadd.f32 %v252, %v205
  %v254 = vadd.f32 %v253, %v206
  %v255 = vadd.f32 %v254, %v207
  %v256 = vadd.f32 %v255, %v208
  %v257 = vadd.f32 %v256, %v209
  %v258 = vadd.f32 %v257, %v210
  %v259 = vadd.f32 %v258, %v211
  %v260 = vadd.f32 %v259, %v212
  %v261 = vadd.f32 %v260, %v213
  %v262 = vadd.f32 %v261, %v214
  %v263 = vadd.f32 %v262, %v215
  %v264 = vadd.f32 %v263, %v216
  %v265 = vadd.f32 %v264, %v217
  %v266 = vadd.f32 %v265, %v218
  %v267 = vadd.f32 %v266, %v219
  %v268 = vadd.f32 %v267, %v220
  %v269 = vadd.f32 %v268, %v221
  %v270 = vadd.f32 %v269, %v222
  %v271 = vrot.slane %v270, 4
  %v272 = vadd.f32 %v270, %v271
  %v273 = vrot.slane %v272, 2
  %v274 = vadd.f32 %v272, %v273
  %v275 = vrot.slane %v274, 1
  %v276 = vadd.f32 %v274, %v275
  %v277 = vmul.f32 %v276, %v123
  %v278 = vadd.f32 %v277, 1e-05
  %v279 = vrsqrt.pop %v278
  %v280 = vmul.f32 %v279, %v278
  %v281 = vmul.f32 %v280, %v279
  %v282 = vmul.f32 0.5, %v281
  %v283 = vsub.f32 1.5, %v282
  %v284 = vmul.f32 %v279, %v283
  %vm285 = vweird.f32 %v278
  %vm286 = vweird.f32 %v279
  %vm287 = vmor %vm285, %vm286
  %v288 = vsel %vm287, %v279, %v284
  %v289 = vmul.f32 %v125, %v288
  %v290 = vmul.f32 %v126, %v288
  %v291 = vmul.f32 %v127, %v288
  %v292 = vmul.f32 %v128, %v288
  %v293 = vmul.f32 %v129, %v288
  %v294 = vmul.f32 %v130, %v288
  %v295 = vmul.f32 %v131, %v288
  %v296 = vmul.f32 %v132, %v288
  %v297 = vmul.f32 %v133, %v288
  %v298 = vmul.f32 %v134, %v288
  %v299 = vmul.f32 %v135, %v288
  %v300 = vmul.f32 %v136, %v288
  %v301 = vmul.f32 %v137, %v288
  %v302 = vmul.f32 %v138, %v288
  %v303 = vmul.f32 %v139, %v288
  %v304 = vmul.f32 %v140, %v288
  %v305 = vmul.f32 %v141, %v288
  %v306 = vmul.f32 %v142, %v288
  %v307 = vmul.f32 %v143, %v288
  %v308 = vmul.f32 %v144, %v288
  %v309 = vmul.f32 %v145, %v288
  %v310 = vmul.f32 %v146, %v288
  %v311 = vmul.f32 %v147, %v288
  %v312 = vmul.f32 %v148, %v288
  %v313 = vmul.f32 %v149, %v288
  %v314 = vmul.f32 %v150, %v288
  %v315 = vmul.f32 %v151, %v288
  %v316 = vmul.f32 %v152, %v288
  %v317 = vmul.f32 %v153, %v288
  %v318 = vmul.f32 %v154, %v288
  %v319 = vmul.f32 %v155, %v288
  %v320 = vmul.f32 %v156, %v288
  %v321 = vmul.f32 %v157, %v288
  %v322 = vmul.f32 %v158, %v288
  %v323 = vmul.f32 %v159, %v288
  %v324 = vmul.f32 %v160, %v288
  %v325 = vmul.f32 %v161, %v288
  %v326 = vmul.f32 %v162, %v288
  %v327 = vmul.f32 %v163, %v288
  %v328 = vmul.f32 %v164, %v288
  %v329 = vmul.f32 %v165, %v288
  %v330 = vmul.f32 %v166, %v288
  %v331 = vmul.f32 %v167, %v288
  %v332 = vmul.f32 %v168, %v288
  %v333 = vmul.f32 %v169, %v288
  %v334 = vmul.f32 %v170, %v288
  %v335 = vmul.f32 %v171, %v288
  %v336 = vmul.f32 %v172, %v288
  %v337 = vmul.f32 %v173, %v288
  %v338 = vld [vmem:[%s1] sm:$0x1]
  %v340 = vperm.slane %v338, 0
  %v342 = vmul.f32 %v289, %v340
  %v343 = vmul.f32 %v290, %v340
  %v344 = vmul.f32 %v291, %v340
  %v345 = vmul.f32 %v292, %v340
  %v346 = vmul.f32 %v293, %v340
  %v347 = vmul.f32 %v294, %v340
  %v348 = vmul.f32 %v295, %v340
  %v349 = vmul.f32 %v296, %v340
  %v350 = vmul.f32 %v297, %v340
  %v351 = vmul.f32 %v298, %v340
  %v352 = vmul.f32 %v299, %v340
  %v353 = vmul.f32 %v300, %v340
  %v354 = vmul.f32 %v301, %v340
  %v355 = vmul.f32 %v302, %v340
  %v356 = vmul.f32 %v303, %v340
  %v357 = vmul.f32 %v304, %v340
  %v358 = vmul.f32 %v305, %v340
  %v359 = vmul.f32 %v306, %v340
  %v360 = vmul.f32 %v307, %v340
  %v361 = vmul.f32 %v308, %v340
  %v362 = vmul.f32 %v309, %v340
  %v363 = vmul.f32 %v310, %v340
  %v364 = vmul.f32 %v311, %v340
  %v365 = vmul.f32 %v312, %v340
  %v366 = vmul.f32 %v313, %v340
  %v367 = vmul.f32 %v314, %v340
  %v368 = vmul.f32 %v315, %v340
  %v369 = vmul.f32 %v316, %v340
  %v370 = vmul.f32 %v317, %v340
  %v371 = vmul.f32 %v318, %v340
  %v372 = vmul.f32 %v319, %v340
  %v373 = vmul.f32 %v320, %v340
  %v374 = vmul.f32 %v321, %v340
  %v375 = vmul.f32 %v322, %v340
  %v376 = vmul.f32 %v323, %v340
  %v377 = vmul.f32 %v324, %v340
  %v378 = vmul.f32 %v325, %v340
  %v379 = vmul.f32 %v326, %v340
  %v380 = vmul.f32 %v327, %v340
  %v381 = vmul.f32 %v328, %v340
  %v382 = vmul.f32 %v329, %v340
  %v383 = vmul.f32 %v330, %v340
  %v384 = vmul.f32 %v331, %v340
  %v385 = vmul.f32 %v332, %v340
  %v386 = vmul.f32 %v333, %v340
  %v387 = vmul.f32 %v334, %v340
  %v388 = vmul.f32 %v335, %v340
  %v389 = vmul.f32 %v336, %v340
  %v390 = vmul.f32 %v337, %v340
  %v391 = vld [vmem:[%s2] sm:$0x1]
  %v393 = vperm.slane %v391, 0
  %v395 = vadd.f32 %v342, %v393
  %v396 = vadd.f32 %v343, %v393
  %v397 = vadd.f32 %v344, %v393
  %v398 = vadd.f32 %v345, %v393
  %v399 = vadd.f32 %v346, %v393
  %v400 = vadd.f32 %v347, %v393
  %v401 = vadd.f32 %v348, %v393
  %v402 = vadd.f32 %v349, %v393
  %v403 = vadd.f32 %v350, %v393
  %v404 = vadd.f32 %v351, %v393
  %v405 = vadd.f32 %v352, %v393
  %v406 = vadd.f32 %v353, %v393
  %v407 = vadd.f32 %v354, %v393
  %v408 = vadd.f32 %v355, %v393
  %v409 = vadd.f32 %v356, %v393
  %v410 = vadd.f32 %v357, %v393
  %v411 = vadd.f32 %v358, %v393
  %v412 = vadd.f32 %v359, %v393
  %v413 = vadd.f32 %v360, %v393
  %v414 = vadd.f32 %v361, %v393
  %v415 = vadd.f32 %v362, %v393
  %v416 = vadd.f32 %v363, %v393
  %v417 = vadd.f32 %v364, %v393
  %v418 = vadd.f32 %v365, %v393
  %v419 = vadd.f32 %v366, %v393
  %v420 = vadd.f32 %v367, %v393
  %v421 = vadd.f32 %v368, %v393
  %v422 = vadd.f32 %v369, %v393
  %v423 = vadd.f32 %v370, %v393
  %v424 = vadd.f32 %v371, %v393
  %v425 = vadd.f32 %v372, %v393
  %v426 = vadd.f32 %v373, %v393
  %v427 = vadd.f32 %v374, %v393
  %v428 = vadd.f32 %v375, %v393
  %v429 = vadd.f32 %v376, %v393
  %v430 = vadd.f32 %v377, %v393
  %v431 = vadd.f32 %v378, %v393
  %v432 = vadd.f32 %v379, %v393
  %v433 = vadd.f32 %v380, %v393
  %v434 = vadd.f32 %v381, %v393
  %v435 = vadd.f32 %v382, %v393
  %v436 = vadd.f32 %v383, %v393
  %v437 = vadd.f32 %v384, %v393
  %v438 = vadd.f32 %v385, %v393
  %v439 = vadd.f32 %v386, %v393
  %v440 = vadd.f32 %v387, %v393
  %v441 = vadd.f32 %v388, %v393
  %v442 = vadd.f32 %v389, %v393
  %v443 = vadd.f32 %v390, %v393
  %vm444 = vcmp.gt.f32.partialorder %v395, 0.0
  %vm445 = vcmp.gt.f32.partialorder %v396, 0.0
  %vm446 = vcmp.gt.f32.partialorder %v397, 0.0
  %vm447 = vcmp.gt.f32.partialorder %v398, 0.0
  %vm448 = vcmp.gt.f32.partialorder %v399, 0.0
  %vm449 = vcmp.gt.f32.partialorder %v400, 0.0
  %vm450 = vcmp.gt.f32.partialorder %v401, 0.0
  %vm451 = vcmp.gt.f32.partialorder %v402, 0.0
  %vm452 = vcmp.gt.f32.partialorder %v403, 0.0
  %vm453 = vcmp.gt.f32.partialorder %v404, 0.0
  %vm454 = vcmp.gt.f32.partialorder %v405, 0.0
  %vm455 = vcmp.gt.f32.partialorder %v406, 0.0
  %vm456 = vcmp.gt.f32.partialorder %v407, 0.0
  %vm457 = vcmp.gt.f32.partialorder %v408, 0.0
  %vm458 = vcmp.gt.f32.partialorder %v409, 0.0
  %vm459 = vcmp.gt.f32.partialorder %v410, 0.0
  %vm460 = vcmp.gt.f32.partialorder %v411, 0.0
  %vm461 = vcmp.gt.f32.partialorder %v412, 0.0
  %vm462 = vcmp.gt.f32.partialorder %v413, 0.0
  %vm463 = vcmp.gt.f32.partialorder %v414, 0.0
  %vm464 = vcmp.gt.f32.partialorder %v415, 0.0
  %vm465 = vcmp.gt.f32.partialorder %v416, 0.0
  %vm466 = vcmp.gt.f32.partialorder %v417, 0.0
  %vm467 = vcmp.gt.f32.partialorder %v418, 0.0
  %vm468 = vcmp.gt.f32.partialorder %v419, 0.0
  %vm469 = vcmp.gt.f32.partialorder %v420, 0.0
  %vm470 = vcmp.gt.f32.partialorder %v421, 0.0
  %vm471 = vcmp.gt.f32.partialorder %v422, 0.0
  %vm472 = vcmp.gt.f32.partialorder %v423, 0.0
  %vm473 = vcmp.gt.f32.partialorder %v424, 0.0
  %vm474 = vcmp.gt.f32.partialorder %v425, 0.0
  %vm475 = vcmp.gt.f32.partialorder %v426, 0.0
  %vm476 = vcmp.gt.f32.partialorder %v427, 0.0
  %vm477 = vcmp.gt.f32.partialorder %v428, 0.0
  %vm478 = vcmp.gt.f32.partialorder %v429, 0.0
  %vm479 = vcmp.gt.f32.partialorder %v430, 0.0
  %vm480 = vcmp.gt.f32.partialorder %v431, 0.0
  %vm481 = vcmp.gt.f32.partialorder %v432, 0.0
  %vm482 = vcmp.gt.f32.partialorder %v433, 0.0
  %vm483 = vcmp.gt.f32.partialorder %v434, 0.0
  %vm484 = vcmp.gt.f32.partialorder %v435, 0.0
  %vm485 = vcmp.gt.f32.partialorder %v436, 0.0
  %vm486 = vcmp.gt.f32.partialorder %v437, 0.0
  %vm487 = vcmp.gt.f32.partialorder %v438, 0.0
  %vm488 = vcmp.gt.f32.partialorder %v439, 0.0
  %vm489 = vcmp.gt.f32.partialorder %v440, 0.0
  %vm490 = vcmp.gt.f32.partialorder %v441, 0.0
  %vm491 = vcmp.gt.f32.partialorder %v442, 0.0
  %vm492 = vcmp.gt.f32.partialorder %v443, 0.0
  %v493 = vmul.f32 %v395, 0.2
  %v494 = vmul.f32 %v396, 0.2
  %v495 = vmul.f32 %v397, 0.2
  %v496 = vmul.f32 %v398, 0.2
  %v497 = vmul.f32 %v399, 0.2
  %v498 = vmul.f32 %v400, 0.2
  %v499 = vmul.f32 %v401, 0.2
  %v500 = vmul.f32 %v402, 0.2
  %v501 = vmul.f32 %v403, 0.2
  %v502 = vmul.f32 %v404, 0.2
  %v503 = vmul.f32 %v405, 0.2
  %v504 = vmul.f32 %v406, 0.2
  %v505 = vmul.f32 %v407, 0.2
  %v506 = vmul.f32 %v408, 0.2
  %v507 = vmul.f32 %v409, 0.2
  %v508 = vmul.f32 %v410, 0.2
  %v509 = vmul.f32 %v411, 0.2
  %v510 = vmul.f32 %v412, 0.2
  %v511 = vmul.f32 %v413, 0.2
  %v512 = vmul.f32 %v414, 0.2
  %v513 = vmul.f32 %v415, 0.2
  %v514 = vmul.f32 %v416, 0.2
  %v515 = vmul.f32 %v417, 0.2
  %v516 = vmul.f32 %v418, 0.2
  %v517 = vmul.f32 %v419, 0.2
  %v518 = vmul.f32 %v420, 0.2
  %v519 = vmul.f32 %v421, 0.2
  %v520 = vmul.f32 %v422, 0.2
  %v521 = vmul.f32 %v423, 0.2
  %v522 = vmul.f32 %v424, 0.2
  %v523 = vmul.f32 %v425, 0.2
  %v524 = vmul.f32 %v426, 0.2
  %v525 = vmul.f32 %v427, 0.2
  %v526 = vmul.f32 %v428, 0.2
  %v527 = vmul.f32 %v429, 0.2
  %v528 = vmul.f32 %v430, 0.2
  %v529 = vmul.f32 %v431, 0.2
  %v530 = vmul.f32 %v432, 0.2
  %v531 = vmul.f32 %v433, 0.2
  %v532 = vmul.f32 %v434, 0.2
  %v533 = vmul.f32 %v435, 0.2
  %v534 = vmul.f32 %v436, 0.2
  %v535 = vmul.f32 %v437, 0.2
  %v536 = vmul.f32 %v438, 0.2
  %v537 = vmul.f32 %v439, 0.2
  %v538 = vmul.f32 %v440, 0.2
  %v539 = vmul.f32 %v441, 0.2
  %v540 = vmul.f32 %v442, 0.2
  %v541 = vmul.f32 %v443, 0.2
  %v542 = vsel %vm444, %v395, %v493
  %v543 = vsel %vm445, %v396, %v494
  %v544 = vsel %vm446, %v397, %v495
  %v545 = vsel %vm447, %v398, %v496
  %v546 = vsel %vm448, %v399, %v497
  %v547 = vsel %vm449, %v400, %v498
  %v548 = vsel %vm450, %v401, %v499
  %v549 = vsel %vm451, %v402, %v500
  %v550 = vsel %vm452, %v403, %v501
  %v551 = vsel %vm453, %v404, %v502
  %v552 = vsel %vm454, %v405, %v503
  %v553 = vsel %vm455, %v406, %v504
  %v554 = vsel %vm456, %v407, %v505
  %v555 = vsel %vm457, %v408, %v506
  %v556 = vsel %vm458, %v409, %v507
  %v557 = vsel %vm459, %v410, %v508
  %v558 = vsel %vm460, %v411, %v509
  %v559 = vsel %vm461, %v412, %v510
  %v560 = vsel %vm462, %v413, %v511
  %v561 = vsel %vm463, %v414, %v512
  %v562 = vsel %vm464, %v415, %v513
  %v563 = vsel %vm465, %v416, %v514
  %v564 = vsel %vm466, %v417, %v515
  %v565 = vsel %vm467, %v418, %v516
  %v566 = vsel %vm468, %v419, %v517
  %v567 = vsel %vm469, %v420, %v518
  %v568 = vsel %vm470, %v421, %v519
  %v569 = vsel %vm471, %v422, %v520
  %v570 = vsel %vm472, %v423, %v521
  %v571 = vsel %vm473, %v424, %v522
  %v572 = vsel %vm474, %v425, %v523
  %v573 = vsel %vm475, %v426, %v524
  %v574 = vsel %vm476, %v427, %v525
  %v575 = vsel %vm477, %v428, %v526
  %v576 = vsel %vm478, %v429, %v527
  %v577 = vsel %vm479, %v430, %v528
  %v578 = vsel %vm480, %v431, %v529
  %v579 = vsel %vm481, %v432, %v530
  %v580 = vsel %vm482, %v433, %v531
  %v581 = vsel %vm483, %v434, %v532
  %v582 = vsel %vm484, %v435, %v533
  %v583 = vsel %vm485, %v436, %v534
  %v584 = vsel %vm486, %v437, %v535
  %v585 = vsel %vm487, %v438, %v536
  %v586 = vsel %vm488, %v439, %v537
  %v587 = vsel %vm489, %v440, %v538
  %v588 = vsel %vm490, %v441, %v539
  %v589 = vsel %vm491, %v442, %v540
  %v590 = vsel %vm492, %v443, %v541
  %591 = vst [vmem:[%s3] sm:$0xff] %v542
  %592 = vst [vmem:[%s3 + $0x8] sm:$0xff] %v543
  %593 = vst [vmem:[%s3 + $0x10] sm:$0xff] %v544
  %594 = vst [vmem:[%s3 + $0x18] sm:$0xff] %v545
  %595 = vst [vmem:[%s3 + $0x20] sm:$0xff] %v546
  %596 = vst [vmem:[%s3 + $0x28] sm:$0xff] %v547
  %597 = vst [vmem:[%s3 + $0x30] sm:$0xff] %v548
  %598 = vst [vmem:[%s3 + $0x38] sm:$0xff] %v549
  %599 = vst [vmem:[%s3 + $0x40] sm:$0xff] %v550
  %600 = vst [vmem:[%s3 + $0x48] sm:$0xff] %v551
  %601 = vst [vmem:[%s3 + $0x50] sm:$0xff] %v552
  %602 = vst [vmem:[%s3 + $0x58] sm:$0xff] %v553
  %603 = vst [vmem:[%s3 + $0x60] sm:$0xff] %v554
  %604 = vst [vmem:[%s3 + $0x68] sm:$0xff] %v555
  %605 = vst [vmem:[%s3 + $0x70] sm:$0xff] %v556
  %606 = vst [vmem:[%s3 + $0x78] sm:$0xff] %v557
  %607 = vst [vmem:[%s3 + $0x80] sm:$0xff] %v558
  %608 = vst [vmem:[%s3 + $0x88] sm:$0xff] %v559
  %609 = vst [vmem:[%s3 + $0x90] sm:$0xff] %v560
  %610 = vst [vmem:[%s3 + $0x98] sm:$0xff] %v561
  %611 = vst [vmem:[%s3 + $0xa0] sm:$0xff] %v562
  %612 = vst [vmem:[%s3 + $0xa8] sm:$0xff] %v563
  %613 = vst [vmem:[%s3 + $0xb0] sm:$0xff] %v564
  %614 = vst [vmem:[%s3 + $0xb8] sm:$0xff] %v565
  %615 = vst [vmem:[%s3 + $0xc0] sm:$0xff] %v566
  %616 = vst [vmem:[%s3 + $0xc8] sm:$0xff] %v567
  %617 = vst [vmem:[%s3 + $0xd0] sm:$0xff] %v568
  %618 = vst [vmem:[%s3 + $0xd8] sm:$0xff] %v569
  %619 = vst [vmem:[%s3 + $0xe0] sm:$0xff] %v570
  %620 = vst [vmem:[%s3 + $0xe8] sm:$0xff] %v571
  %621 = vst [vmem:[%s3 + $0xf0] sm:$0xff] %v572
  %622 = vst [vmem:[%s3 + $0xf8] sm:$0xff] %v573
  %623 = vst [vmem:[%s3 + $0x100] sm:$0xff] %v574
  %624 = vst [vmem:[%s3 + $0x108] sm:$0xff] %v575
  %625 = vst [vmem:[%s3 + $0x110] sm:$0xff] %v576
  %626 = vst [vmem:[%s3 + $0x118] sm:$0xff] %v577
  %627 = vst [vmem:[%s3 + $0x120] sm:$0xff] %v578
  %628 = vst [vmem:[%s3 + $0x128] sm:$0xff] %v579
  %629 = vst [vmem:[%s3 + $0x130] sm:$0xff] %v580
  %630 = vst [vmem:[%s3 + $0x138] sm:$0xff] %v581
  %631 = vst [vmem:[%s3 + $0x140] sm:$0xff] %v582
  %632 = vst [vmem:[%s3 + $0x148] sm:$0xff] %v583
  %633 = vst [vmem:[%s3 + $0x150] sm:$0xff] %v584
  %634 = vst [vmem:[%s3 + $0x158] sm:$0xff] %v585
  %635 = vst [vmem:[%s3 + $0x160] sm:$0xff] %v586
  %636 = vst [vmem:[%s3 + $0x168] sm:$0xff] %v587
  %637 = vst [vmem:[%s3 + $0x170] sm:$0xff] %v588
  %638 = vst [vmem:[%s3 + $0x178] sm:$0xff] %v589
  %639 = vst [vmem:[%s3 + $0x180] sm:$0xff] %v590
  // Predicated region
  $region14: #{discriminator_forward.7} parent=0 // pred_check
    _
  $region15: #{discriminator_forward.7} parent=0 // pred_check_branch
    %641 = sbr.rel (0) target = $region17
  $region16: #{discriminator_forward.7} parent=0 // pred_region
    _
  $region17: #{discriminator_forward.7} parent=0 // pred_fallthru
    _
  // Predicated region
  $region18: #{discriminator_forward.7} parent=0 // pred_check
    _
  $region19: #{discriminator_forward.7} parent=0 // pred_check_branch
    %643 = sbr.rel (0) target = $region21
  $region20: #{discriminator_forward.7} parent=0 // pred_region
    _
  $region21: #{discriminator_forward.7} parent=0 // pred_fallthru
    _

// kernel: discriminator_forward.6
$region0: #{discriminator_forward.6}
  #allocation0 [shape = 'u32[]', space=smem, size = 0x4, offset = 0x4, fixed_abs, tag = 'smem constant byte address 0x4 - core index']
  #allocation1 [shape = 'u32[72,128]{1,0:T(1,128)}', space=vmem, size = 0x9000, scoped, tag = 'internal scratch']
  %s0 = inlined_call_operand.vmem [shape: bf16[392,1024], index: 0, kind: input, shape index: {}]
  %s1 = inlined_call_operand.vmem [shape: bf16[1024,128], index: 1, kind: input, shape index: {}]
  %s2 = inlined_call_operand.vmem [shape: f32[392,128], index: 2, kind: output, shape index: {}]
  %s3 = sld [smem:[#allocation0]]
  $region18: #{discriminator_forward.6} parent=0
    _
  %s5 = ssub.s32 1, %s3
  %s6 = scalar_select 0, %s5, %s3
  // Predicated region
  $region2: #{discriminator_forward.6} parent=0 // pred_check
    _
  $region3: #{discriminator_forward.6} parent=0 // pred_check_branch
    %8 = sbr.rel (0) target = $region5
  $region4: #{discriminator_forward.6} parent=0 // pred_region
    _
  $region5: #{discriminator_forward.6} parent=0 // pred_fallthru
    _
  // Predicated region
  $region6: #{discriminator_forward.6} parent=0 // pred_check
    _
  $region7: #{discriminator_forward.6} parent=0 // pred_check_branch
    %10 = sbr.rel (0) target = $region9
  $region8: #{discriminator_forward.6} parent=0 // pred_region
    _
  $region9: #{discriminator_forward.6} parent=0 // pred_fallthru
    _
  %v11 = vld [vmem:[%s0] sm:$0xff]
  %v12 = vld [vmem:[%s0 + $0x8] sm:$0xff]
  %v13 = vld [vmem:[%s0 + $0x10] sm:$0xff]
  %v14 = vld [vmem:[%s0 + $0x18] sm:$0xff]
  %v15 = vld [vmem:[%s0 + $0x20] sm:$0xff]
  %v16 = vld [vmem:[%s0 + $0x28] sm:$0xff]
  %v17 = vld [vmem:[%s0 + $0x30] sm:$0xff]
  %v18 = vld [vmem:[%s0 + $0x38] sm:$0xff]
  %v19 = vld [vmem:[%s0 + $0x40] sm:$0xff]
  %v20 = vld [vmem:[%s0 + $0x48] sm:$0xff]
  %v21 = vld [vmem:[%s0 + $0x50] sm:$0xff]
  %v22 = vld [vmem:[%s0 + $0x58] sm:$0xff]
  %v23 = vld [vmem:[%s0 + $0x60] sm:$0xff]
  %v24 = vld [vmem:[%s0 + $0x68] sm:$0xff]
  %v25 = vld [vmem:[%s0 + $0x70] sm:$0xff]
  %v26 = vld [vmem:[%s0 + $0x78] sm:$0xff]
  %v27 = vld [vmem:[%s0 + $0x80] sm:$0xff]
  %v28 = vld [vmem:[%s0 + $0x88] sm:$0xff]
  %v29 = vld [vmem:[%s0 + $0x90] sm:$0xff]
  %v30 = vld [vmem:[%s0 + $0x98] sm:$0xff]
  %v31 = vld [vmem:[%s0 + $0xa0] sm:$0xff]
  %v32 = vld [vmem:[%s0 + $0xa8] sm:$0xff]
  %v33 = vld [vmem:[%s0 + $0xb0] sm:$0xff]
  %v34 = vld [vmem:[%s0 + $0xb8] sm:$0xff]
  %v35 = vld [vmem:[%s0 + $0xc0] sm:$0xff]
  %v36 = vld [vmem:[%s0 + $0xc8] sm:$0xff]
  %v37 = vld [vmem:[%s0 + $0xd0] sm:$0xff]
  %v38 = vld [vmem:[%s0 + $0xd8] sm:$0xff]
  %v39 = vld [vmem:[%s0 + $0xe0] sm:$0xff]
  %v40 = vld [vmem:[%s0 + $0xe8] sm:$0xff]
  %v41 = vld [vmem:[%s0 + $0xf0] sm:$0xff]
  %v42 = vld [vmem:[%s0 + $0xf8] sm:$0xff]
  %v43 = vld [vmem:[%s0 + $0x100] sm:$0xff]
  %v44 = vld [vmem:[%s0 + $0x108] sm:$0xff]
  %v45 = vld [vmem:[%s0 + $0x110] sm:$0xff]
  %v46 = vld [vmem:[%s0 + $0x118] sm:$0xff]
  %v47 = vld [vmem:[%s0 + $0x120] sm:$0xff]
  %v48 = vld [vmem:[%s0 + $0x128] sm:$0xff]
  %v49 = vld [vmem:[%s0 + $0x130] sm:$0xff]
  %v50 = vld [vmem:[%s0 + $0x138] sm:$0xff]
  %v51 = vld [vmem:[%s0 + $0x140] sm:$0xff]
  %v52 = vld [vmem:[%s0 + $0x148] sm:$0xff]
  %v53 = vld [vmem:[%s0 + $0x150] sm:$0xff]
  %v54 = vld [vmem:[%s0 + $0x158] sm:$0xff]
  %v55 = vld [vmem:[%s0 + $0x160] sm:$0xff]
  %v56 = vld [vmem:[%s0 + $0x168] sm:$0xff]
  %v57 = vld [vmem:[%s0 + $0x170] sm:$0xff]
  %v58 = vld [vmem:[%s0 + $0x178] sm:$0xff]
  %v59 = vld [vmem:[%s0 + $0x180] sm:$0xff]
  %v60 = vld [vmem:[%s0 + $0x188] sm:$0xff]
  %v61 = vld [vmem:[%s0 + $0x190] sm:$0xff]
  %v62 = vld [vmem:[%s0 + $0x198] sm:$0xff]
  %v63 = vld [vmem:[%s0 + $0x1a0] sm:$0xff]
  %v64 = vld [vmem:[%s0 + $0x1a8] sm:$0xff]
  %v65 = vld [vmem:[%s0 + $0x1b0] sm:$0xff]
  %v66 = vld [vmem:[%s0 + $0x1b8] sm:$0xff]
  %v67 = vld [vmem:[%s0 + $0x1c0] sm:$0xff]
  %v68 = vld [vmem:[%s0 + $0x1c8] sm:$0xff]
  %v69 = vld [vmem:[%s0 + $0x1d0] sm:$0xff]
  %v70 = vld [vmem:[%s0 + $0x1d8] sm:$0xff]
  %v71 = vld [vmem:[%s0 + $0x1e0] sm:$0xff]
  %v72 = vld [vmem:[%s0 + $0x1e8] sm:$0xff]
  %v73 = vld [vmem:[%s0 + $0x1f0] sm:$0xff]
  %v74 = vld [vmem:[%s0 + $0x1f8] sm:$0xff]
  %v75 = vld [vmem:[%s0 + $0x200] sm:$0xff]
  %v76 = vld [vmem:[%s0 + $0x208] sm:$0xff]
  %v77 = vld [vmem:[%s0 + $0x210] sm:$0xff]
  %v78 = vld [vmem:[%s0 + $0x218] sm:$0xff]
  %v79 = vld [vmem:[%s0 + $0x220] sm:$0xff]
  %v80 = vld [vmem:[%s0 + $0x228] sm:$0xff]
  %v81 = vld [vmem:[%s0 + $0x230] sm:$0xff]
  %v82 = vld [vmem:[%s0 + $0x238] sm:$0xff]
  %v83 = vld [vmem:[%s0 + $0x240] sm:$0xff]
  %v84 = vld [vmem:[%s0 + $0x248] sm:$0xff]
  %v85 = vld [vmem:[%s0 + $0x250] sm:$0xff]
  %v86 = vld [vmem:[%s0 + $0x258] sm:$0xff]
  %v87 = vld [vmem:[%s0 + $0x260] sm:$0xff]
  %v88 = vld [vmem:[%s0 + $0x268] sm:$0xff]
  %v89 = vld [vmem:[%s0 + $0x270] sm:$0xff]
  %v90 = vld [vmem:[%s0 + $0x278] sm:$0xff]
  %v91 = vld [vmem:[%s0 + $0x280] sm:$0xff]
  %v92 = vld [vmem:[%s0 + $0x288] sm:$0xff]
  %v93 = vld [vmem:[%s0 + $0x290] sm:$0xff]
  %v94 = vld [vmem:[%s0 + $0x298] sm:$0xff]
  %v95 = vld [vmem:[%s0 + $0x2a0] sm:$0xff]
  %v96 = vld [vmem:[%s0 + $0x2a8] sm:$0xff]
  %v97 = vld [vmem:[%s0 + $0x2b0] sm:$0xff]
  %v98 = vld [vmem:[%s0 + $0x2b8] sm:$0xff]
  %v99 = vld [vmem:[%s0 + $0x2c0] sm:$0xff]
  %v100 = vld [vmem:[%s0 + $0x2c8] sm:$0xff]
  %v101 = vld [vmem:[%s0 + $0x2d0] sm:$0xff]
  %v102 = vld [vmem:[%s0 + $0x2d8] sm:$0xff]
  %v103 = vld [vmem:[%s0 + $0x2e0] sm:$0xff]
  %v104 = vld [vmem:[%s0 + $0x2e8] sm:$0xff]
  %v105 = vld [vmem:[%s0 + $0x2f0] sm:$0xff]
  %v106 = vld [vmem:[%s0 + $0x2f8] sm:$0xff]
  %v107 = vld [vmem:[%s0 + $0x300] sm:$0xff]
  %v108 = vld [vmem:[%s0 + $0x308] sm:$0xff]
  %v109 = vld [vmem:[%s0 + $0x310] sm:$0xff]
  %v110 = vld [vmem:[%s0 + $0x318] sm:$0xff]
  %v111 = vld [vmem:[%s0 + $0x320] sm:$0xff]
  %v112 = vld [vmem:[%s0 + $0x328] sm:$0xff]
  %v113 = vld [vmem:[%s0 + $0x330] sm:$0xff]
  %v114 = vld [vmem:[%s0 + $0x338] sm:$0xff]
  %v115 = vld [vmem:[%s0 + $0x340] sm:$0xff]
  %v116 = vld [vmem:[%s0 + $0x348] sm:$0xff]
  %v117 = vld [vmem:[%s0 + $0x350] sm:$0xff]
  %v118 = vld [vmem:[%s0 + $0x358] sm:$0xff]
  %v119 = vld [vmem:[%s0 + $0x360] sm:$0xff]
  %v120 = vld [vmem:[%s0 + $0x368] sm:$0xff]
  %v121 = vld [vmem:[%s0 + $0x370] sm:$0xff]
  %v122 = vld [vmem:[%s0 + $0x378] sm:$0xff]
  %v123 = vld [vmem:[%s0 + $0x380] sm:$0xff]
  %v124 = vld [vmem:[%s0 + $0x388] sm:$0xff]
  %v125 = vld [vmem:[%s0 + $0x390] sm:$0xff]
  %v126 = vld [vmem:[%s0 + $0x398] sm:$0xff]
  %v127 = vld [vmem:[%s0 + $0x3a0] sm:$0xff]
  %v128 = vld [vmem:[%s0 + $0x3a8] sm:$0xff]
  %v129 = vld [vmem:[%s0 + $0x3b0] sm:$0xff]
  %v130 = vld [vmem:[%s0 + $0x3b8] sm:$0xff]
  %v131 = vld [vmem:[%s0 + $0x3c0] sm:$0xff]
  %v132 = vld [vmem:[%s0 + $0x3c8] sm:$0xff]
  %v133 = vld [vmem:[%s0 + $0x3d0] sm:$0xff]
  %v134 = vld [vmem:[%s0 + $0x3d8] sm:$0xff]
  %v135 = vld [vmem:[%s0 + $0x3e0] sm:$0xff]
  %v136 = vld [vmem:[%s0 + $0x3e8] sm:$0xff]
  %v137 = vld [vmem:[%s0 + $0x3f0] sm:$0xff]
  %v138 = vld [vmem:[%s0 + $0x3f8] sm:$0xff]
  %v139 = vld [vmem:[%s0 + $0x400] sm:$0xff]
  %v140 = vld [vmem:[%s0 + $0x408] sm:$0xff]
  %v141 = vld [vmem:[%s0 + $0x410] sm:$0xff]
  %v142 = vld [vmem:[%s0 + $0x418] sm:$0xff]
  %v143 = vld [vmem:[%s0 + $0x420] sm:$0xff]
  %v144 = vld [vmem:[%s0 + $0x428] sm:$0xff]
  %v145 = vld [vmem:[%s0 + $0x430] sm:$0xff]
  %v146 = vld [vmem:[%s0 + $0x438] sm:$0xff]
  %v147 = vld [vmem:[%s0 + $0x440] sm:$0xff]
  %v148 = vld [vmem:[%s0 + $0x448] sm:$0xff]
  %v149 = vld [vmem:[%s0 + $0x450] sm:$0xff]
  %v150 = vld [vmem:[%s0 + $0x458] sm:$0xff]
  %v151 = vld [vmem:[%s0 + $0x460] sm:$0xff]
  %v152 = vld [vmem:[%s0 + $0x468] sm:$0xff]
  %v153 = vld [vmem:[%s0 + $0x470] sm:$0xff]
  %v154 = vld [vmem:[%s0 + $0x478] sm:$0xff]
  %v155 = vld [vmem:[%s0 + $0x480] sm:$0xff]
  %v156 = vld [vmem:[%s0 + $0x488] sm:$0xff]
  %v157 = vld [vmem:[%s0 + $0x490] sm:$0xff]
  %v158 = vld [vmem:[%s0 + $0x498] sm:$0xff]
  %v159 = vld [vmem:[%s0 + $0x4a0] sm:$0xff]
  %v160 = vld [vmem:[%s0 + $0x4a8] sm:$0xff]
  %v161 = vld [vmem:[%s0 + $0x4b0] sm:$0xff]
  %v162 = vld [vmem:[%s0 + $0x4b8] sm:$0xff]
  %v163 = vld [vmem:[%s0 + $0x4c0] sm:$0xff]
  %v164 = vld [vmem:[%s0 + $0x4c8] sm:$0xff]
  %v165 = vld [vmem:[%s0 + $0x4d0] sm:$0xff]
  %v166 = vld [vmem:[%s0 + $0x4d8] sm:$0xff]
  %v167 = vld [vmem:[%s0 + $0x4e0] sm:$0xff]
  %v168 = vld [vmem:[%s0 + $0x4e8] sm:$0xff]
  %v169 = vld [vmem:[%s0 + $0x4f0] sm:$0xff]
  %v170 = vld [vmem:[%s0 + $0x4f8] sm:$0xff]
  %v171 = vld [vmem:[%s0 + $0x500] sm:$0xff]
  %v172 = vld [vmem:[%s0 + $0x508] sm:$0xff]
  %v173 = vld [vmem:[%s0 + $0x510] sm:$0xff]
  %v174 = vld [vmem:[%s0 + $0x518] sm:$0xff]
  %v175 = vld [vmem:[%s0 + $0x520] sm:$0xff]
  %v176 = vld [vmem:[%s0 + $0x528] sm:$0xff]
  %v177 = vld [vmem:[%s0 + $0x530] sm:$0xff]
  %v178 = vld [vmem:[%s0 + $0x538] sm:$0xff]
  %v179 = vld [vmem:[%s0 + $0x540] sm:$0xff]
  %v180 = vld [vmem:[%s0 + $0x548] sm:$0xff]
  %v181 = vld [vmem:[%s0 + $0x550] sm:$0xff]
  %v182 = vld [vmem:[%s0 + $0x558] sm:$0xff]
  %v183 = vld [vmem:[%s0 + $0x560] sm:$0xff]
  %v184 = vld [vmem:[%s0 + $0x568] sm:$0xff]
  %v185 = vld [vmem:[%s0 + $0x570] sm:$0xff]
  %v186 = vld [vmem:[%s0 + $0x578] sm:$0xff]
  %v187 = vld [vmem:[%s0 + $0x580] sm:$0xff]
  %v188 = vld [vmem:[%s0 + $0x588] sm:$0xff]
  %v189 = vld [vmem:[%s0 + $0x590] sm:$0xff]
  %v190 = vld [vmem:[%s0 + $0x598] sm:$0xff]
  %v191 = vld [vmem:[%s0 + $0x5a0] sm:$0xff]
  %v192 = vld [vmem:[%s0 + $0x5a8] sm:$0xff]
  %v193 = vld [vmem:[%s0 + $0x5b0] sm:$0xff]
  %v194 = vld [vmem:[%s0 + $0x5b8] sm:$0xff]
  %v195 = vld [vmem:[%s0 + $0x5c0] sm:$0xff]
  %v196 = vld [vmem:[%s0 + $0x5c8] sm:$0xff]
  %v197 = vld [vmem:[%s0 + $0x5d0] sm:$0xff]
  %v198 = vld [vmem:[%s0 + $0x5d8] sm:$0xff]
  %v199 = vld [vmem:[%s0 + $0x5e0] sm:$0xff]
  %v200 = vld [vmem:[%s0 + $0x5e8] sm:$0xff]
  %v201 = vld [vmem:[%s0 + $0x5f0] sm:$0xff]
  %v202 = vld [vmem:[%s0 + $0x5f8] sm:$0xff]
  %v203 = vld [vmem:[%s0 + $0x600] sm:$0xff]
  %v204 = vld [vmem:[%s0 + $0x608] sm:$0xff]
  %v205 = vld [vmem:[%s0 + $0x610] sm:$0xff]
  %v206 = vld [vmem:[%s0 + $0x618] sm:$0xff]
  %v207 = vld [vmem:[%s1] sm:$0xf]
  %v208 = vld [vmem:[%s1 + $0x4] sm:$0xf]
  %v209 = vld [vmem:[%s1 + $0x8] sm:$0xf]
  %v210 = vld [vmem:[%s1 + $0xc] sm:$0xf]
  %v211 = vld [vmem:[%s1 + $0x10] sm:$0xf]
  %v212 = vld [vmem:[%s1 + $0x14] sm:$0xf]
  %v213 = vld [vmem:[%s1 + $0x18] sm:$0xf]
  %v214 = vld [vmem:[%s1 + $0x1c] sm:$0xf]
  %v215 = vld [vmem:[%s1 + $0x20] sm:$0xf]
  %v216 = vld [vmem:[%s1 + $0x24] sm:$0xf]
  %v217 = vld [vmem:[%s1 + $0x28] sm:$0xf]
  %v218 = vld [vmem:[%s1 + $0x2c] sm:$0xf]
  %v219 = vld [vmem:[%s1 + $0x30] sm:$0xf]
  %v220 = vld [vmem:[%s1 + $0x34] sm:$0xf]
  %v221 = vld [vmem:[%s1 + $0x38] sm:$0xf]
  %v222 = vld [vmem:[%s1 + $0x3c] sm:$0xf]
  %v223 = vld [vmem:[%s1 + $0x40] sm:$0xf]
  %v224 = vld [vmem:[%s1 + $0x44] sm:$0xf]
  %v225 = vld [vmem:[%s1 + $0x48] sm:$0xf]
  %v226 = vld [vmem:[%s1 + $0x4c] sm:$0xf]
  %v227 = vld [vmem:[%s1 + $0x50] sm:$0xf]
  %v228 = vld [vmem:[%s1 + $0x54] sm:$0xf]
  %v229 = vld [vmem:[%s1 + $0x58] sm:$0xf]
  %v230 = vld [vmem:[%s1 + $0x5c] sm:$0xf]
  %v231 = vld [vmem:[%s1 + $0x60] sm:$0xf]
  %v232 = vld [vmem:[%s1 + $0x64] sm:$0xf]
  %v233 = vld [vmem:[%s1 + $0x68] sm:$0xf]
  %v234 = vld [vmem:[%s1 + $0x6c] sm:$0xf]
  %v235 = vld [vmem:[%s1 + $0x70] sm:$0xf]
  %v236 = vld [vmem:[%s1 + $0x74] sm:$0xf]
  %v237 = vld [vmem:[%s1 + $0x78] sm:$0xf]
  %v238 = vld [vmem:[%s1 + $0x7c] sm:$0xf]
  %v239 = vld [vmem:[%s1 + $0x80] sm:$0xf]
  %v240 = vld [vmem:[%s1 + $0x84] sm:$0xf]
  %v241 = vld [vmem:[%s1 + $0x88] sm:$0xf]
  %v242 = vld [vmem:[%s1 + $0x8c] sm:$0xf]
  %v243 = vld [vmem:[%s1 + $0x90] sm:$0xf]
  %v244 = vld [vmem:[%s1 + $0x94] sm:$0xf]
  %v245 = vld [vmem:[%s1 + $0x98] sm:$0xf]
  %v246 = vld [vmem:[%s1 + $0x9c] sm:$0xf]
  %v247 = vld [vmem:[%s1 + $0xa0] sm:$0xf]
  %v248 = vld [vmem:[%s1 + $0xa4] sm:$0xf]
  %v249 = vld [vmem:[%s1 + $0xa8] sm:$0xf]
  %v250 = vld [vmem:[%s1 + $0xac] sm:$0xf]
  %v251 = vld [vmem:[%s1 + $0xb0] sm:$0xf]
  %v252 = vld [vmem:[%s1 + $0xb4] sm:$0xf]
  %v253 = vld [vmem:[%s1 + $0xb8] sm:$0xf]
  %v254 = vld [vmem:[%s1 + $0xbc] sm:$0xf]
  %v255 = vld [vmem:[%s1 + $0xc0] sm:$0xf]
  %v256 = vld [vmem:[%s1 + $0xc4] sm:$0xf]
  %v257 = vld [vmem:[%s1 + $0xc8] sm:$0xf]
  %v258 = vld [vmem:[%s1 + $0xcc] sm:$0xf]
  %v259 = vld [vmem:[%s1 + $0xd0] sm:$0xf]
  %v260 = vld [vmem:[%s1 + $0xd4] sm:$0xf]
  %v261 = vld [vmem:[%s1 + $0xd8] sm:$0xf]
  %v262 = vld [vmem:[%s1 + $0xdc] sm:$0xf]
  %v263 = vld [vmem:[%s1 + $0xe0] sm:$0xf]
  %v264 = vld [vmem:[%s1 + $0xe4] sm:$0xf]
  %v265 = vld [vmem:[%s1 + $0xe8] sm:$0xf]
  %v266 = vld [vmem:[%s1 + $0xec] sm:$0xf]
  %v267 = vld [vmem:[%s1 + $0xf0] sm:$0xf]
  %v268 = vld [vmem:[%s1 + $0xf4] sm:$0xf]
  %v269 = vld [vmem:[%s1 + $0xf8] sm:$0xf]
  %v270 = vld [vmem:[%s1 + $0xfc] sm:$0xf]
  %v271 = vld [vmem:[%s1 + $0x100] sm:$0xf]
  %v272 = vld [vmem:[%s1 + $0x104] sm:$0xf]
  %v273 = vld [vmem:[%s1 + $0x108] sm:$0xf]
  %v274 = vld [vmem:[%s1 + $0x10c] sm:$0xf]
  %v275 = vld [vmem:[%s1 + $0x110] sm:$0xf]
  %v276 = vld [vmem:[%s1 + $0x114] sm:$0xf]
  %v277 = vld [vmem:[%s1 + $0x118] sm:$0xf]
  %v278 = vld [vmem:[%s1 + $0x11c] sm:$0xf]
  %v279 = vld [vmem:[%s1 + $0x120] sm:$0xf]
  %v280 = vld [vmem:[%s1 + $0x124] sm:$0xf]
  %v281 = vld [vmem:[%s1 + $0x128] sm:$0xf]
  %v282 = vld [vmem:[%s1 + $0x12c] sm:$0xf]
  %v283 = vld [vmem:[%s1 + $0x130] sm:$0xf]
  %v284 = vld [vmem:[%s1 + $0x134] sm:$0xf]
  %v285 = vld [vmem:[%s1 + $0x138] sm:$0xf]
  %v286 = vld [vmem:[%s1 + $0x13c] sm:$0xf]
  %v287 = vld [vmem:[%s1 + $0x140] sm:$0xf]
  %v288 = vld [vmem:[%s1 + $0x144] sm:$0xf]
  %v289 = vld [vmem:[%s1 + $0x148] sm:$0xf]
  %v290 = vld [vmem:[%s1 + $0x14c] sm:$0xf]
  %v291 = vld [vmem:[%s1 + $0x150] sm:$0xf]
  %v292 = vld [vmem:[%s1 + $0x154] sm:$0xf]
  %v293 = vld [vmem:[%s1 + $0x158] sm:$0xf]
  %v294 = vld [vmem:[%s1 + $0x15c] sm:$0xf]
  %v295 = vld [vmem:[%s1 + $0x160] sm:$0xf]
  %v296 = vld [vmem:[%s1 + $0x164] sm:$0xf]
  %v297 = vld [vmem:[%s1 + $0x168] sm:$0xf]
  %v298 = vld [vmem:[%s1 + $0x16c] sm:$0xf]
  %v299 = vld [vmem:[%s1 + $0x170] sm:$0xf]
  %v300 = vld [vmem:[%s1 + $0x174] sm:$0xf]
  %v301 = vld [vmem:[%s1 + $0x178] sm:$0xf]
  %v302 = vld [vmem:[%s1 + $0x17c] sm:$0xf]
  %v303 = vld [vmem:[%s1 + $0x180] sm:$0xf]
  %v304 = vld [vmem:[%s1 + $0x184] sm:$0xf]
  %v305 = vld [vmem:[%s1 + $0x188] sm:$0xf]
  %v306 = vld [vmem:[%s1 + $0x18c] sm:$0xf]
  %v307 = vld [vmem:[%s1 + $0x190] sm:$0xf]
  %v308 = vld [vmem:[%s1 + $0x194] sm:$0xf]
  %v309 = vld [vmem:[%s1 + $0x198] sm:$0xf]
  %v310 = vld [vmem:[%s1 + $0x19c] sm:$0xf]
  %v311 = vld [vmem:[%s1 + $0x1a0] sm:$0xf]
  %v312 = vld [vmem:[%s1 + $0x1a4] sm:$0xf]
  %v313 = vld [vmem:[%s1 + $0x1a8] sm:$0xf]
  %v314 = vld [vmem:[%s1 + $0x1ac] sm:$0xf]
  %v315 = vld [vmem:[%s1 + $0x1b0] sm:$0xf]
  %v316 = vld [vmem:[%s1 + $0x1b4] sm:$0xf]
  %v317 = vld [vmem:[%s1 + $0x1b8] sm:$0xf]
  %v318 = vld [vmem:[%s1 + $0x1bc] sm:$0xf]
  %v319 = vld [vmem:[%s1 + $0x1c0] sm:$0xf]
  %v320 = vld [vmem:[%s1 + $0x1c4] sm:$0xf]
  %v321 = vld [vmem:[%s1 + $0x1c8] sm:$0xf]
  %v322 = vld [vmem:[%s1 + $0x1cc] sm:$0xf]
  %v323 = vld [vmem:[%s1 + $0x1d0] sm:$0xf]
  %v324 = vld [vmem:[%s1 + $0x1d4] sm:$0xf]
  %v325 = vld [vmem:[%s1 + $0x1d8] sm:$0xf]
  %v326 = vld [vmem:[%s1 + $0x1dc] sm:$0xf]
  %v327 = vld [vmem:[%s1 + $0x1e0] sm:$0xf]
  %v328 = vld [vmem:[%s1 + $0x1e4] sm:$0xf]
  %v329 = vld [vmem:[%s1 + $0x1e8] sm:$0xf]
  %v330 = vld [vmem:[%s1 + $0x1ec] sm:$0xf]
  %v331 = vld [vmem:[%s1 + $0x1f0] sm:$0xf]
  %v332 = vld [vmem:[%s1 + $0x1f4] sm:$0xf]
  %v333 = vld [vmem:[%s1 + $0x1f8] sm:$0xf]
  %v334 = vld [vmem:[%s1 + $0x1fc] sm:$0xf]
  %v531 = vunpack.c.l.b16 %v11
  %v532 = vunpack.c.h.b16 %v11
  %v533 = vunpack.c.l.b16 %v12
  %v534 = vunpack.c.h.b16 %v12
  %v535 = vunpack.c.l.b16 %v13
  %v536 = vunpack.c.h.b16 %v13
  %v537 = vunpack.c.l.b16 %v14
  %v538 = vunpack.c.h.b16 %v14
  %v539 = vunpack.c.l.b16 %v15
  %v540 = vunpack.c.h.b16 %v15
  %v541 = vunpack.c.l.b16 %v16
  %v542 = vunpack.c.h.b16 %v16
  %v543 = vunpack.c.l.b16 %v17
  %v544 = vunpack.c.h.b16 %v17
  %v545 = vunpack.c.l.b16 %v18
  %v546 = vunpack.c.h.b16 %v18
  %v547 = vunpack.c.l.b16 %v19
  %v548 = vunpack.c.h.b16 %v19
  %v549 = vunpack.c.l.b16 %v20
  %v550 = vunpack.c.h.b16 %v20
  %v551 = vunpack.c.l.b16 %v21
  %v552 = vunpack.c.h.b16 %v21
  %v553 = vunpack.c.l.b16 %v22
  %v554 = vunpack.c.h.b16 %v22
  %v555 = vunpack.c.l.b16 %v23
  %v556 = vunpack.c.h.b16 %v23
  %v557 = vunpack.c.l.b16 %v24
  %v558 = vunpack.c.h.b16 %v24
  %v559 = vunpack.c.l.b16 %v25
  %v560 = vunpack.c.h.b16 %v25
  %v561 = vunpack.c.l.b16 %v26
  %v562 = vunpack.c.h.b16 %v26
  %v563 = vunpack.c.l.b16 %v27
  %v564 = vunpack.c.h.b16 %v27
  %v565 = vunpack.c.l.b16 %v28
  %v566 = vunpack.c.h.b16 %v28
  %v567 = vunpack.c.l.b16 %v29
  %v568 = vunpack.c.h.b16 %v29
  %v569 = vunpack.c.l.b16 %v30
  %v570 = vunpack.c.h.b16 %v30
  %v571 = vunpack.c.l.b16 %v31
  %v572 = vunpack.c.h.b16 %v31
  %v573 = vunpack.c.l.b16 %v32
  %v574 = vunpack.c.h.b16 %v32
  %v575 = vunpack.c.l.b16 %v33
  %v576 = vunpack.c.h.b16 %v33
  %v577 = vunpack.c.l.b16 %v34
  %v578 = vunpack.c.h.b16 %v34
  %v579 = vunpack.c.l.b16 %v35
  %v580 = vunpack.c.h.b16 %v35
  %v581 = vunpack.c.l.b16 %v36
  %v582 = vunpack.c.h.b16 %v36
  %v583 = vunpack.c.l.b16 %v37
  %v584 = vunpack.c.h.b16 %v37
  %v585 = vunpack.c.l.b16 %v38
  %v586 = vunpack.c.h.b16 %v38
  %v587 = vunpack.c.l.b16 %v39
  %v588 = vunpack.c.h.b16 %v39
  %v589 = vunpack.c.l.b16 %v40
  %v590 = vunpack.c.h.b16 %v40
  %v591 = vunpack.c.l.b16 %v41
  %v592 = vunpack.c.h.b16 %v41
  %v593 = vunpack.c.l.b16 %v42
  %v594 = vunpack.c.h.b16 %v42
  %v595 = vunpack.c.l.b16 %v43
  %v596 = vunpack.c.h.b16 %v43
  %v597 = vunpack.c.l.b16 %v44
  %v598 = vunpack.c.h.b16 %v44
  %v599 = vunpack.c.l.b16 %v45
  %v600 = vunpack.c.h.b16 %v45
  %v601 = vunpack.c.l.b16 %v46
  %v602 = vunpack.c.h.b16 %v46
  %v603 = vunpack.c.l.b16 %v47
  %v604 = vunpack.c.h.b16 %v47
  %v605 = vunpack.c.l.b16 %v48
  %v606 = vunpack.c.h.b16 %v48
  %v607 = vunpack.c.l.b16 %v49
  %v608 = vunpack.c.h.b16 %v49
  %v609 = vunpack.c.l.b16 %v50
  %v610 = vunpack.c.h.b16 %v50
  %v611 = vunpack.c.l.b16 %v51
  %v612 = vunpack.c.h.b16 %v51
  %v613 = vunpack.c.l.b16 %v52
  %v614 = vunpack.c.h.b16 %v52
  %v615 = vunpack.c.l.b16 %v53
  %v616 = vunpack.c.h.b16 %v53
  %v617 = vunpack.c.l.b16 %v54
  %v618 = vunpack.c.h.b16 %v54
  %v619 = vunpack.c.l.b16 %v55
  %v620 = vunpack.c.h.b16 %v55
  %v621 = vunpack.c.l.b16 %v56
  %v622 = vunpack.c.h.b16 %v56
  %v623 = vunpack.c.l.b16 %v57
  %v624 = vunpack.c.h.b16 %v57
  %v625 = vunpack.c.l.b16 %v58
  %v626 = vunpack.c.h.b16 %v58
  %v627 = vunpack.c.l.b16 %v59
  %v628 = vunpack.c.h.b16 %v59
  %v629 = vunpack.c.l.b16 %v60
  %v630 = vunpack.c.h.b16 %v60
  %v631 = vunpack.c.l.b16 %v61
  %v632 = vunpack.c.h.b16 %v61
  %v633 = vunpack.c.l.b16 %v62
  %v634 = vunpack.c.h.b16 %v62
  %v635 = vunpack.c.l.b16 %v63
  %v636 = vunpack.c.h.b16 %v63
  %v637 = vunpack.c.l.b16 %v64
  %v638 = vunpack.c.h.b16 %v64
  %v639 = vunpack.c.l.b16 %v65
  %v640 = vunpack.c.h.b16 %v65
  %v641 = vunpack.c.l.b16 %v66
  %v642 = vunpack.c.h.b16 %v66
  %v643 = vunpack.c.l.b16 %v67
  %v644 = vunpack.c.h.b16 %v67
  %v645 = vunpack.c.l.b16 %v68
  %v646 = vunpack.c.h.b16 %v68
  %v647 = vunpack.c.l.b16 %v69
  %v648 = vunpack.c.h.b16 %v69
  %v649 = vunpack.c.l.b16 %v70
  %v650 = vunpack.c.h.b16 %v70
  %v651 = vunpack.c.l.b16 %v71
  %v652 = vunpack.c.h.b16 %v71
  %v653 = vunpack.c.l.b16 %v72
  %v654 = vunpack.c.h.b16 %v72
  %v655 = vunpack.c.l.b16 %v73
  %v656 = vunpack.c.h.b16 %v73
  %v657 = vunpack.c.l.b16 %v74
  %v658 = vunpack.c.h.b16 %v74
  %v659 = vunpack.c.l.b16 %v75
  %v660 = vunpack.c.h.b16 %v75
  %v661 = vunpack.c.l.b16 %v76
  %v662 = vunpack.c.h.b16 %v76
  %v663 = vunpack.c.l.b16 %v77
  %v664 = vunpack.c.h.b16 %v77
  %v665 = vunpack.c.l.b16 %v78
  %v666 = vunpack.c.h.b16 %v78
  %v667 = vunpack.c.l.b16 %v79
  %v668 = vunpack.c.h.b16 %v79
  %v669 = vunpack.c.l.b16 %v80
  %v670 = vunpack.c.h.b16 %v80
  %v671 = vunpack.c.l.b16 %v81
  %v672 = vunpack.c.h.b16 %v81
  %v673 = vunpack.c.l.b16 %v82
  %v674 = vunpack.c.h.b16 %v82
  %v675 = vunpack.c.l.b16 %v83
  %v676 = vunpack.c.h.b16 %v83
  %v677 = vunpack.c.l.b16 %v84
  %v678 = vunpack.c.h.b16 %v84
  %v679 = vunpack.c.l.b16 %v85
  %v680 = vunpack.c.h.b16 %v85
  %v681 = vunpack.c.l.b16 %v86
  %v682 = vunpack.c.h.b16 %v86
  %v683 = vunpack.c.l.b16 %v87
  %v684 = vunpack.c.h.b16 %v87
  %v685 = vunpack.c.l.b16 %v88
  %v686 = vunpack.c.h.b16 %v88
  %v687 = vunpack.c.l.b16 %v89
  %v688 = vunpack.c.h.b16 %v89
  %v689 = vunpack.c.l.b16 %v90
  %v690 = vunpack.c.h.b16 %v90
  %v691 = vunpack.c.l.b16 %v91
  %v692 = vunpack.c.h.b16 %v91
  %v693 = vunpack.c.l.b16 %v92
  %v694 = vunpack.c.h.b16 %v92
  %v695 = vunpack.c.l.b16 %v93
  %v696 = vunpack.c.h.b16 %v93
  %v697 = vunpack.c.l.b16 %v94
  %v698 = vunpack.c.h.b16 %v94
  %v699 = vunpack.c.l.b16 %v95
  %v700 = vunpack.c.h.b16 %v95
  %v701 = vunpack.c.l.b16 %v96
  %v702 = vunpack.c.h.b16 %v96
  %v703 = vunpack.c.l.b16 %v97
  %v704 = vunpack.c.h.b16 %v97
  %v705 = vunpack.c.l.b16 %v98
  %v706 = vunpack.c.h.b16 %v98
  %v707 = vunpack.c.l.b16 %v99
  %v708 = vunpack.c.h.b16 %v99
  %v709 = vunpack.c.l.b16 %v100
  %v710 = vunpack.c.h.b16 %v100
  %v711 = vunpack.c.l.b16 %v101
  %v712 = vunpack.c.h.b16 %v101
  %v713 = vunpack.c.l.b16 %v102
  %v714 = vunpack.c.h.b16 %v102
  %v715 = vunpack.c.l.b16 %v103
  %v716 = vunpack.c.h.b16 %v103
  %v717 = vunpack.c.l.b16 %v104
  %v718 = vunpack.c.h.b16 %v104
  %v719 = vunpack.c.l.b16 %v105
  %v720 = vunpack.c.h.b16 %v105
  %v721 = vunpack.c.l.b16 %v106
  %v722 = vunpack.c.h.b16 %v106
  %v723 = vunpack.c.l.b16 %v107
  %v724 = vunpack.c.h.b16 %v107
  %v725 = vunpack.c.l.b16 %v108
  %v726 = vunpack.c.h.b16 %v108
  %v727 = vunpack.c.l.b16 %v109
  %v728 = vunpack.c.h.b16 %v109
  %v729 = vunpack.c.l.b16 %v110
  %v730 = vunpack.c.h.b16 %v110
  %v731 = vunpack.c.l.b16 %v111
  %v732 = vunpack.c.h.b16 %v111
  %v733 = vunpack.c.l.b16 %v112
  %v734 = vunpack.c.h.b16 %v112
  %v735 = vunpack.c.l.b16 %v113
  %v736 = vunpack.c.h.b16 %v113
  %v737 = vunpack.c.l.b16 %v114
  %v738 = vunpack.c.h.b16 %v114
  %v739 = vunpack.c.l.b16 %v115
  %v740 = vunpack.c.h.b16 %v115
  %v741 = vunpack.c.l.b16 %v116
  %v742 = vunpack.c.h.b16 %v116
  %v743 = vunpack.c.l.b16 %v117
  %v744 = vunpack.c.h.b16 %v117
  %v745 = vunpack.c.l.b16 %v118
  %v746 = vunpack.c.h.b16 %v118
  %v747 = vunpack.c.l.b16 %v119
  %v748 = vunpack.c.h.b16 %v119
  %v749 = vunpack.c.l.b16 %v120
  %v750 = vunpack.c.h.b16 %v120
  %v751 = vunpack.c.l.b16 %v121
  %v752 = vunpack.c.h.b16 %v121
  %v753 = vunpack.c.l.b16 %v122
  %v754 = vunpack.c.h.b16 %v122
  %v755 = vunpack.c.l.b16 %v123
  %v756 = vunpack.c.h.b16 %v123
  %v757 = vunpack.c.l.b16 %v124
  %v758 = vunpack.c.h.b16 %v124
  %v759 = vunpack.c.l.b16 %v125
  %v760 = vunpack.c.h.b16 %v125
  %v761 = vunpack.c.l.b16 %v126
  %v762 = vunpack.c.h.b16 %v126
  %v763 = vunpack.c.l.b16 %v127
  %v764 = vunpack.c.h.b16 %v127
  %v765 = vunpack.c.l.b16 %v128
  %v766 = vunpack.c.h.b16 %v128
  %v767 = vunpack.c.l.b16 %v129
  %v768 = vunpack.c.h.b16 %v129
  %v769 = vunpack.c.l.b16 %v130
  %v770 = vunpack.c.h.b16 %v130
  %v771 = vunpack.c.l.b16 %v131
  %v772 = vunpack.c.h.b16 %v131
  %v773 = vunpack.c.l.b16 %v132
  %v774 = vunpack.c.h.b16 %v132
  %v775 = vunpack.c.l.b16 %v133
  %v776 = vunpack.c.h.b16 %v133
  %v777 = vunpack.c.l.b16 %v134
  %v778 = vunpack.c.h.b16 %v134
  %v779 = vunpack.c.l.b16 %v135
  %v780 = vunpack.c.h.b16 %v135
  %v781 = vunpack.c.l.b16 %v136
  %v782 = vunpack.c.h.b16 %v136
  %v783 = vunpack.c.l.b16 %v137
  %v784 = vunpack.c.h.b16 %v137
  %v785 = vunpack.c.l.b16 %v138
  %v786 = vunpack.c.h.b16 %v138
  %v787 = vunpack.c.l.b16 %v139
  %v788 = vunpack.c.h.b16 %v139
  %v789 = vunpack.c.l.b16 %v140
  %v790 = vunpack.c.h.b16 %v140
  %v791 = vunpack.c.l.b16 %v141
  %v792 = vunpack.c.h.b16 %v141
  %v793 = vunpack.c.l.b16 %v142
  %v794 = vunpack.c.h.b16 %v142
  %v795 = vunpack.c.l.b16 %v143
  %v796 = vunpack.c.h.b16 %v143
  %v797 = vunpack.c.l.b16 %v144
  %v798 = vunpack.c.h.b16 %v144
  %v799 = vunpack.c.l.b16 %v145
  %v800 = vunpack.c.h.b16 %v145
  %v801 = vunpack.c.l.b16 %v146
  %v802 = vunpack.c.h.b16 %v146
  %v803 = vunpack.c.l.b16 %v147
  %v804 = vunpack.c.h.b16 %v147
  %v805 = vunpack.c.l.b16 %v148
  %v806 = vunpack.c.h.b16 %v148
  %v807 = vunpack.c.l.b16 %v149
  %v808 = vunpack.c.h.b16 %v149
  %v809 = vunpack.c.l.b16 %v150
  %v810 = vunpack.c.h.b16 %v150
  %v811 = vunpack.c.l.b16 %v151
  %v812 = vunpack.c.h.b16 %v151
  %v813 = vunpack.c.l.b16 %v152
  %v814 = vunpack.c.h.b16 %v152
  %v815 = vunpack.c.l.b16 %v153
  %v816 = vunpack.c.h.b16 %v153
  %v817 = vunpack.c.l.b16 %v154
  %v818 = vunpack.c.h.b16 %v154
  %v819 = vunpack.c.l.b16 %v155
  %v820 = vunpack.c.h.b16 %v155
  %v821 = vunpack.c.l.b16 %v156
  %v822 = vunpack.c.h.b16 %v156
  %v823 = vunpack.c.l.b16 %v157
  %v824 = vunpack.c.h.b16 %v157
  %v825 = vunpack.c.l.b16 %v158
  %v826 = vunpack.c.h.b16 %v158
  %v827 = vunpack.c.l.b16 %v159
  %v828 = vunpack.c.h.b16 %v159
  %v829 = vunpack.c.l.b16 %v160
  %v830 = vunpack.c.h.b16 %v160
  %v831 = vunpack.c.l.b16 %v161
  %v832 = vunpack.c.h.b16 %v161
  %v833 = vunpack.c.l.b16 %v162
  %v834 = vunpack.c.h.b16 %v162
  %v835 = vunpack.c.l.b16 %v163
  %v836 = vunpack.c.h.b16 %v163
  %v837 = vunpack.c.l.b16 %v164
  %v838 = vunpack.c.h.b16 %v164
  %v839 = vunpack.c.l.b16 %v165
  %v840 = vunpack.c.h.b16 %v165
  %v841 = vunpack.c.l.b16 %v166
  %v842 = vunpack.c.h.b16 %v166
  %v843 = vunpack.c.l.b16 %v167
  %v844 = vunpack.c.h.b16 %v167
  %v845 = vunpack.c.l.b16 %v168
  %v846 = vunpack.c.h.b16 %v168
  %v847 = vunpack.c.l.b16 %v169
  %v848 = vunpack.c.h.b16 %v169
  %v849 = vunpack.c.l.b16 %v170
  %v850 = vunpack.c.h.b16 %v170
  %v851 = vunpack.c.l.b16 %v171
  %v852 = vunpack.c.h.b16 %v171
  %v853 = vunpack.c.l.b16 %v172
  %v854 = vunpack.c.h.b16 %v172
  %v855 = vunpack.c.l.b16 %v173
  %v856 = vunpack.c.h.b16 %v173
  %v857 = vunpack.c.l.b16 %v174
  %v858 = vunpack.c.h.b16 %v174
  %v859 = vunpack.c.l.b16 %v175
  %v860 = vunpack.c.h.b16 %v175
  %v861 = vunpack.c.l.b16 %v176
  %v862 = vunpack.c.h.b16 %v176
  %v863 = vunpack.c.l.b16 %v177
  %v864 = vunpack.c.h.b16 %v177
  %v865 = vunpack.c.l.b16 %v178
  %v866 = vunpack.c.h.b16 %v178
  %v867 = vunpack.c.l.b16 %v179
  %v868 = vunpack.c.h.b16 %v179
  %v869 = vunpack.c.l.b16 %v180
  %v870 = vunpack.c.h.b16 %v180
  %v871 = vunpack.c.l.b16 %v181
  %v872 = vunpack.c.h.b16 %v181
  %v873 = vunpack.c.l.b16 %v182
  %v874 = vunpack.c.h.b16 %v182
  %v875 = vunpack.c.l.b16 %v183
  %v876 = vunpack.c.h.b16 %v183
  %v877 = vunpack.c.l.b16 %v184
  %v878 = vunpack.c.h.b16 %v184
  %v879 = vunpack.c.l.b16 %v185
  %v880 = vunpack.c.h.b16 %v185
  %v881 = vunpack.c.l.b16 %v186
  %v882 = vunpack.c.h.b16 %v186
  %v883 = vunpack.c.l.b16 %v187
  %v884 = vunpack.c.h.b16 %v187
  %v885 = vunpack.c.l.b16 %v188
  %v886 = vunpack.c.h.b16 %v188
  %v887 = vunpack.c.l.b16 %v189
  %v888 = vunpack.c.h.b16 %v189
  %v889 = vunpack.c.l.b16 %v190
  %v890 = vunpack.c.h.b16 %v190
  %v891 = vunpack.c.l.b16 %v191
  %v892 = vunpack.c.h.b16 %v191
  %v893 = vunpack.c.l.b16 %v192
  %v894 = vunpack.c.h.b16 %v192
  %v895 = vunpack.c.l.b16 %v193
  %v896 = vunpack.c.h.b16 %v193
  %v897 = vunpack.c.l.b16 %v194
  %v898 = vunpack.c.h.b16 %v194
  %v899 = vunpack.c.l.b16 %v195
  %v900 = vunpack.c.h.b16 %v195
  %v901 = vunpack.c.l.b16 %v196
  %v902 = vunpack.c.h.b16 %v196
  %v903 = vunpack.c.l.b16 %v197
  %v904 = vunpack.c.h.b16 %v197
  %v905 = vunpack.c.l.b16 %v198
  %v906 = vunpack.c.h.b16 %v198
  %v907 = vunpack.c.l.b16 %v199
  %v908 = vunpack.c.h.b16 %v199
  %v909 = vunpack.c.l.b16 %v200
  %v910 = vunpack.c.h.b16 %v200
  %v911 = vunpack.c.l.b16 %v201
  %v912 = vunpack.c.h.b16 %v201
  %v913 = vunpack.c.l.b16 %v202
  %v914 = vunpack.c.h.b16 %v202
  %v915 = vunpack.c.l.b16 %v203
  %v916 = vunpack.c.h.b16 %v203
  %v917 = vunpack.c.l.b16 %v204
  %v918 = vunpack.c.h.b16 %v204
  %v919 = vunpack.c.l.b16 %v205
  %v920 = vunpack.c.h.b16 %v205
  %v921 = vunpack.c.l.b16 %v206
  %v922 = vunpack.c.h.b16 %v206
  %v923 = vpack.c.b16 %v539, %v531
  %v924 = vpack.c.b16 %v540, %v532
  %v925 = vpack.c.b16 %v541, %v533
  %v926 = vpack.c.b16 %v542, %v534
  %v927 = vpack.c.b16 %v543, %v535
  %v928 = vpack.c.b16 %v544, %v536
  %v929 = vpack.c.b16 %v545, %v537
  %v930 = vpack.c.b16 %v546, %v538
  %v931 = vpack.c.b16 %v555, %v547
  %v932 = vpack.c.b16 %v556, %v548
  %v933 = vpack.c.b16 %v557, %v549
  %v934 = vpack.c.b16 %v558, %v550
  %v935 = vpack.c.b16 %v559, %v551
  %v936 = vpack.c.b16 %v560, %v552
  %v937 = vpack.c.b16 %v561, %v553
  %v938 = vpack.c.b16 %v562, %v554
  %v939 = vpack.c.b16 %v571, %v563
  %v940 = vpack.c.b16 %v572, %v564
  %v941 = vpack.c.b16 %v573, %v565
  %v942 = vpack.c.b16 %v574, %v566
  %v943 = vpack.c.b16 %v575, %v567
  %v944 = vpack.c.b16 %v576, %v568
  %v945 = vpack.c.b16 %v577, %v569
  %v946 = vpack.c.b16 %v578, %v570
  %v947 = vpack.c.b16 %v587, %v579
  %v948 = vpack.c.b16 %v588, %v580
  %v949 = vpack.c.b16 %v589, %v581
  %v950 = vpack.c.b16 %v590, %v582
  %v951 = vpack.c.b16 %v591, %v583
  %v952 = vpack.c.b16 %v592, %v584
  %v953 = vpack.c.b16 %v593, %v585
  %v954 = vpack.c.b16 %v594, %v586
  %v955 = vpack.c.b16 %v603, %v595
  %v956 = vpack.c.b16 %v604, %v596
  %v957 = vpack.c.b16 %v605, %v597
  %v958 = vpack.c.b16 %v606, %v598
  %v959 = vpack.c.b16 %v607, %v599
  %v960 = vpack.c.b16 %v608, %v600
  %v961 = vpack.c.b16 %v609, %v601
  %v962 = vpack.c.b16 %v610, %v602
  %v963 = vpack.c.b16 %v619, %v611
  %v964 = vpack.c.b16 %v620, %v612
  %v965 = vpack.c.b16 %v621, %v613
  %v966 = vpack.c.b16 %v622, %v614
  %v967 = vpack.c.b16 %v623, %v615
  %v968 = vpack.c.b16 %v624, %v616
  %v969 = vpack.c.b16 %v625, %v617
  %v970 = vpack.c.b16 %v626, %v618
  %v971 = vpack.c.b16 %v635, %v627
  %v972 = vpack.c.b16 %v636, %v628
  %v973 = vpack.c.b16 %v637, %v629
  %v974 = vpack.c.b16 %v638, %v630
  %v975 = vpack.c.b16 %v639, %v631
  %v976 = vpack.c.b16 %v640, %v632
  %v977 = vpack.c.b16 %v641, %v633
  %v978 = vpack.c.b16 %v642, %v634
  %v979 = vpack.c.b16 %v651, %v643
  %v980 = vpack.c.b16 %v652, %v644
  %v981 = vpack.c.b16 %v653, %v645
  %v982 = vpack.c.b16 %v654, %v646
  %v983 = vpack.c.b16 %v655, %v647
  %v984 = vpack.c.b16 %v656, %v648
  %v985 = vpack.c.b16 %v657, %v649
  %v986 = vpack.c.b16 %v658, %v650
  %v987 = vpack.c.b16 %v667, %v659
  %v988 = vpack.c.b16 %v668, %v660
  %v989 = vpack.c.b16 %v669, %v661
  %v990 = vpack.c.b16 %v670, %v662
  %v991 = vpack.c.b16 %v671, %v663
  %v992 = vpack.c.b16 %v672, %v664
  %v993 = vpack.c.b16 %v673, %v665
  %v994 = vpack.c.b16 %v674, %v666
  %v995 = vpack.c.b16 %v683, %v675
  %v996 = vpack.c.b16 %v684, %v676
  %v997 = vpack.c.b16 %v685, %v677
  %v998 = vpack.c.b16 %v686, %v678
  %v999 = vpack.c.b16 %v687, %v679
  %v1000 = vpack.c.b16 %v688, %v680
  %v1001 = vpack.c.b16 %v689, %v681
  %v1002 = vpack.c.b16 %v690, %v682
  %v1003 = vpack.c.b16 %v699, %v691
  %v1004 = vpack.c.b16 %v700, %v692
  %v1005 = vpack.c.b16 %v701, %v693
  %v1006 = vpack.c.b16 %v702, %v694
  %v1007 = vpack.c.b16 %v703, %v695
  %v1008 = vpack.c.b16 %v704, %v696
  %v1009 = vpack.c.b16 %v705, %v697
  %v1010 = vpack.c.b16 %v706, %v698
  %v1011 = vpack.c.b16 %v715, %v707
  %v1012 = vpack.c.b16 %v716, %v708
  %v1013 = vpack.c.b16 %v717, %v709
  %v1014 = vpack.c.b16 %v718, %v710
  %v1015 = vpack.c.b16 %v719, %v711
  %v1016 = vpack.c.b16 %v720, %v712
  %v1017 = vpack.c.b16 %v721, %v713
  %v1018 = vpack.c.b16 %v722, %v714
  %v1019 = vpack.c.b16 %v731, %v723
  %v1020 = vpack.c.b16 %v732, %v724
  %v1021 = vpack.c.b16 %v733, %v725
  %v1022 = vpack.c.b16 %v734, %v726
  %v1023 = vpack.c.b16 %v735, %v727
  %v1024 = vpack.c.b16 %v736, %v728
  %v1025 = vpack.c.b16 %v737, %v729
  %v1026 = vpack.c.b16 %v738, %v730
  %v1027 = vpack.c.b16 %v747, %v739
  %v1028 = vpack.c.b16 %v748, %v740
  %v1029 = vpack.c.b16 %v749, %v741
  %v1030 = vpack.c.b16 %v750, %v742
  %v1031 = vpack.c.b16 %v751, %v743
  %v1032 = vpack.c.b16 %v752, %v744
  %v1033 = vpack.c.b16 %v753, %v745
  %v1034 = vpack.c.b16 %v754, %v746
  %v1035 = vpack.c.b16 %v763, %v755
  %v1036 = vpack.c.b16 %v764, %v756
  %v1037 = vpack.c.b16 %v765, %v757
  %v1038 = vpack.c.b16 %v766, %v758
  %v1039 = vpack.c.b16 %v767, %v759
  %v1040 = vpack.c.b16 %v768, %v760
  %v1041 = vpack.c.b16 %v769, %v761
  %v1042 = vpack.c.b16 %v770, %v762
  %v1043 = vpack.c.b16 %v779, %v771
  %v1044 = vpack.c.b16 %v780, %v772
  %v1045 = vpack.c.b16 %v781, %v773
  %v1046 = vpack.c.b16 %v782, %v774
  %v1047 = vpack.c.b16 %v783, %v775
  %v1048 = vpack.c.b16 %v784, %v776
  %v1049 = vpack.c.b16 %v785, %v777
  %v1050 = vpack.c.b16 %v786, %v778
  %v1051 = vpack.c.b16 %v795, %v787
  %v1052 = vpack.c.b16 %v796, %v788
  %v1053 = vpack.c.b16 %v797, %v789
  %v1054 = vpack.c.b16 %v798, %v790
  %v1055 = vpack.c.b16 %v799, %v791
  %v1056 = vpack.c.b16 %v800, %v792
  %v1057 = vpack.c.b16 %v801, %v793
  %v1058 = vpack.c.b16 %v802, %v794
  %v1059 = vpack.c.b16 %v811, %v803
  %v1060 = vpack.c.b16 %v812, %v804
  %v1061 = vpack.c.b16 %v813, %v805
  %v1062 = vpack.c.b16 %v814, %v806
  %v1063 = vpack.c.b16 %v815, %v807
  %v1064 = vpack.c.b16 %v816, %v808
  %v1065 = vpack.c.b16 %v817, %v809
  %v1066 = vpack.c.b16 %v818, %v810
  %v1067 = vpack.c.b16 %v827, %v819
  %v1068 = vpack.c.b16 %v828, %v820
  %v1069 = vpack.c.b16 %v829, %v821
  %v1070 = vpack.c.b16 %v830, %v822
  %v1071 = vpack.c.b16 %v831, %v823
  %v1072 = vpack.c.b16 %v832, %v824
  %v1073 = vpack.c.b16 %v833, %v825
  %v1074 = vpack.c.b16 %v834, %v826
  %v1075 = vpack.c.b16 %v843, %v835
  %v1076 = vpack.c.b16 %v844, %v836
  %v1077 = vpack.c.b16 %v845, %v837
  %v1078 = vpack.c.b16 %v846, %v838
  %v1079 = vpack.c.b16 %v847, %v839
  %v1080 = vpack.c.b16 %v848, %v840
  %v1081 = vpack.c.b16 %v849, %v841
  %v1082 = vpack.c.b16 %v850, %v842
  %v1083 = vpack.c.b16 %v859, %v851
  %v1084 = vpack.c.b16 %v860, %v852
  %v1085 = vpack.c.b16 %v861, %v853
  %v1086 = vpack.c.b16 %v862, %v854
  %v1087 = vpack.c.b16 %v863, %v855
  %v1088 = vpack.c.b16 %v864, %v856
  %v1089 = vpack.c.b16 %v865, %v857
  %v1090 = vpack.c.b16 %v866, %v858
  %v1091 = vpack.c.b16 %v875, %v867
  %v1092 = vpack.c.b16 %v876, %v868
  %v1093 = vpack.c.b16 %v877, %v869
  %v1094 = vpack.c.b16 %v878, %v870
  %v1095 = vpack.c.b16 %v879, %v871
  %v1096 = vpack.c.b16 %v880, %v872
  %v1097 = vpack.c.b16 %v881, %v873
  %v1098 = vpack.c.b16 %v882, %v874
  %v1099 = vpack.c.b16 %v891, %v883
  %v1100 = vpack.c.b16 %v892, %v884
  %v1101 = vpack.c.b16 %v893, %v885
  %v1102 = vpack.c.b16 %v894, %v886
  %v1103 = vpack.c.b16 %v895, %v887
  %v1104 = vpack.c.b16 %v896, %v888
  %v1105 = vpack.c.b16 %v897, %v889
  %v1106 = vpack.c.b16 %v898, %v890
  %v1107 = vpack.c.b16 %v907, %v899
  %v1108 = vpack.c.b16 %v908, %v900
  %v1109 = vpack.c.b16 %v909, %v901
  %v1110 = vpack.c.b16 %v910, %v902
  %v1111 = vpack.c.b16 %v911, %v903
  %v1112 = vpack.c.b16 %v912, %v904
  %v1113 = vpack.c.b16 %v913, %v905
  %v1114 = vpack.c.b16 %v914, %v906
  %v1115 = vpack.c.b16 %v915, %v915
  %v1116 = vpack.c.b16 %v916, %v916
  %v1117 = vpack.c.b16 %v917, %v917
  %v1118 = vpack.c.b16 %v918, %v918
  %v1119 = vpack.c.b16 %v919, %v919
  %v1120 = vpack.c.b16 %v920, %v920
  %v1121 = vpack.c.b16 %v921, %v921
  %v1122 = vpack.c.b16 %v922, %v922
  %v1451 = vunpack.c.l.b16 %v207
  %v1452 = vunpack.c.l.b16 %v208
  %v1453 = vunpack.c.l.b16 %v209
  %v1454 = vunpack.c.l.b16 %v210
  %v1455 = vunpack.c.l.b16 %v211
  %v1456 = vunpack.c.l.b16 %v212
  %v1457 = vunpack.c.l.b16 %v213
  %v1458 = vunpack.c.l.b16 %v214
  %v1459 = vunpack.c.l.b16 %v215
  %v1460 = vunpack.c.l.b16 %v216
  %v1461 = vunpack.c.l.b16 %v217
  %v1462 = vunpack.c.l.b16 %v218
  %v1463 = vunpack.c.l.b16 %v219
  %v1464 = vunpack.c.l.b16 %v220
  %v1465 = vunpack.c.l.b16 %v221
  %v1466 = vunpack.c.l.b16 %v222
  %v1467 = vunpack.c.l.b16 %v223
  %v1468 = vunpack.c.l.b16 %v224
  %v1469 = vunpack.c.l.b16 %v225
  %v1470 = vunpack.c.l.b16 %v226
  %v1471 = vunpack.c.l.b16 %v227
  %v1472 = vunpack.c.l.b16 %v228
  %v1473 = vunpack.c.l.b16 %v229
  %v1474 = vunpack.c.l.b16 %v230
  %v1475 = vunpack.c.l.b16 %v231
  %v1476 = vunpack.c.l.b16 %v232
  %v1477 = vunpack.c.l.b16 %v233
  %v1478 = vunpack.c.l.b16 %v234
  %v1479 = vunpack.c.l.b16 %v235
  %v1480 = vunpack.c.l.b16 %v236
  %v1481 = vunpack.c.l.b16 %v237
  %v1482 = vunpack.c.l.b16 %v238
  %v1483 = vunpack.c.l.b16 %v239
  %v1484 = vunpack.c.l.b16 %v240
  %v1485 = vunpack.c.l.b16 %v241
  %v1486 = vunpack.c.l.b16 %v242
  %v1487 = vunpack.c.l.b16 %v243
  %v1488 = vunpack.c.l.b16 %v244
  %v1489 = vunpack.c.l.b16 %v245
  %v1490 = vunpack.c.l.b16 %v246
  %v1491 = vunpack.c.l.b16 %v247
  %v1492 = vunpack.c.l.b16 %v248
  %v1493 = vunpack.c.l.b16 %v249
  %v1494 = vunpack.c.l.b16 %v250
  %v1495 = vunpack.c.l.b16 %v251
  %v1496 = vunpack.c.l.b16 %v252
  %v1497 = vunpack.c.l.b16 %v253
  %v1498 = vunpack.c.l.b16 %v254
  %v1499 = vunpack.c.l.b16 %v255
  %v1500 = vunpack.c.l.b16 %v256
  %v1501 = vunpack.c.l.b16 %v257
  %v1502 = vunpack.c.l.b16 %v258
  %v1503 = vunpack.c.l.b16 %v259
  %v1504 = vunpack.c.l.b16 %v260
  %v1505 = vunpack.c.l.b16 %v261
  %v1506 = vunpack.c.l.b16 %v262
  %v1507 = vunpack.c.l.b16 %v263
  %v1508 = vunpack.c.l.b16 %v264
  %v1509 = vunpack.c.l.b16 %v265
  %v1510 = vunpack.c.l.b16 %v266
  %v1511 = vunpack.c.l.b16 %v267
  %v1512 = vunpack.c.l.b16 %v268
  %v1513 = vunpack.c.l.b16 %v269
  %v1514 = vunpack.c.l.b16 %v270
  %v1515 = vunpack.c.l.b16 %v271
  %v1516 = vunpack.c.l.b16 %v272
  %v1517 = vunpack.c.l.b16 %v273
  %v1518 = vunpack.c.l.b16 %v274
  %v1519 = vunpack.c.l.b16 %v275
  %v1520 = vunpack.c.l.b16 %v276
  %v1521 = vunpack.c.l.b16 %v277
  %v1522 = vunpack.c.l.b16 %v278
  %v1523 = vunpack.c.l.b16 %v279
  %v1524 = vunpack.c.l.b16 %v280
  %v1525 = vunpack.c.l.b16 %v281
  %v1526 = vunpack.c.l.b16 %v282
  %v1527 = vunpack.c.l.b16 %v283
  %v1528 = vunpack.c.l.b16 %v284
  %v1529 = vunpack.c.l.b16 %v285
  %v1530 = vunpack.c.l.b16 %v286
  %v1531 = vunpack.c.l.b16 %v287
  %v1532 = vunpack.c.l.b16 %v288
  %v1533 = vunpack.c.l.b16 %v289
  %v1534 = vunpack.c.l.b16 %v290
  %v1535 = vunpack.c.l.b16 %v291
  %v1536 = vunpack.c.l.b16 %v292
  %v1537 = vunpack.c.l.b16 %v293
  %v1538 = vunpack.c.l.b16 %v294
  %v1539 = vunpack.c.l.b16 %v295
  %v1540 = vunpack.c.l.b16 %v296
  %v1541 = vunpack.c.l.b16 %v297
  %v1542 = vunpack.c.l.b16 %v298
  %v1543 = vunpack.c.l.b16 %v299
  %v1544 = vunpack.c.l.b16 %v300
  %v1545 = vunpack.c.l.b16 %v301
  %v1546 = vunpack.c.l.b16 %v302
  %v1547 = vunpack.c.l.b16 %v303
  %v1548 = vunpack.c.l.b16 %v304
  %v1549 = vunpack.c.l.b16 %v305
  %v1550 = vunpack.c.l.b16 %v306
  %v1551 = vunpack.c.l.b16 %v307
  %v1552 = vunpack.c.l.b16 %v308
  %v1553 = vunpack.c.l.b16 %v309
  %v1554 = vunpack.c.l.b16 %v310
  %v1555 = vunpack.c.l.b16 %v311
  %v1556 = vunpack.c.l.b16 %v312
  %v1557 = vunpack.c.l.b16 %v313
  %v1558 = vunpack.c.l.b16 %v314
  %v1559 = vunpack.c.l.b16 %v315
  %v1560 = vunpack.c.l.b16 %v316
  %v1561 = vunpack.c.l.b16 %v317
  %v1562 = vunpack.c.l.b16 %v318
  %v1563 = vunpack.c.l.b16 %v319
  %v1564 = vunpack.c.l.b16 %v320
  %v1565 = vunpack.c.l.b16 %v321
  %v1566 = vunpack.c.l.b16 %v322
  %v1567 = vunpack.c.l.b16 %v323
  %v1568 = vunpack.c.l.b16 %v324
  %v1569 = vunpack.c.l.b16 %v325
  %v1570 = vunpack.c.l.b16 %v326
  %v1571 = vunpack.c.l.b16 %v327
  %v1572 = vunpack.c.l.b16 %v328
  %v1573 = vunpack.c.l.b16 %v329
  %v1574 = vunpack.c.l.b16 %v330
  %v1575 = vunpack.c.l.b16 %v331
  %v1576 = vunpack.c.l.b16 %v332
  %v1577 = vunpack.c.l.b16 %v333
  %v1578 = vunpack.c.l.b16 %v334
  %v1579 = vpack.c.b16 %v1452, %v1451
  %v1580 = vpack.c.b16 %v1454, %v1453
  %v1581 = vpack.c.b16 %v1456, %v1455
  %v1582 = vpack.c.b16 %v1458, %v1457
  %v1583 = vpack.c.b16 %v1460, %v1459
  %v1584 = vpack.c.b16 %v1462, %v1461
  %v1585 = vpack.c.b16 %v1464, %v1463
  %v1586 = vpack.c.b16 %v1466, %v1465
  %v1587 = vpack.c.b16 %v1468, %v1467
  %v1588 = vpack.c.b16 %v1470, %v1469
  %v1589 = vpack.c.b16 %v1472, %v1471
  %v1590 = vpack.c.b16 %v1474, %v1473
  %v1591 = vpack.c.b16 %v1476, %v1475
  %v1592 = vpack.c.b16 %v1478, %v1477
  %v1593 = vpack.c.b16 %v1480, %v1479
  %v1594 = vpack.c.b16 %v1482, %v1481
  %v1595 = vpack.c.b16 %v1484, %v1483
  %v1596 = vpack.c.b16 %v1486, %v1485
  %v1597 = vpack.c.b16 %v1488, %v1487
  %v1598 = vpack.c.b16 %v1490, %v1489
  %v1599 = vpack.c.b16 %v1492, %v1491
  %v1600 = vpack.c.b16 %v1494, %v1493
  %v1601 = vpack.c.b16 %v1496, %v1495
  %v1602 = vpack.c.b16 %v1498, %v1497
  %v1603 = vpack.c.b16 %v1500, %v1499
  %v1604 = vpack.c.b16 %v1502, %v1501
  %v1605 = vpack.c.b16 %v1504, %v1503
  %v1606 = vpack.c.b16 %v1506, %v1505
  %v1607 = vpack.c.b16 %v1508, %v1507
  %v1608 = vpack.c.b16 %v1510, %v1509
  %v1609 = vpack.c.b16 %v1512, %v1511
  %v1610 = vpack.c.b16 %v1514, %v1513
  %v1611 = vpack.c.b16 %v1516, %v1515
  %v1612 = vpack.c.b16 %v1518, %v1517
  %v1613 = vpack.c.b16 %v1520, %v1519
  %v1614 = vpack.c.b16 %v1522, %v1521
  %v1615 = vpack.c.b16 %v1524, %v1523
  %v1616 = vpack.c.b16 %v1526, %v1525
  %v1617 = vpack.c.b16 %v1528, %v1527
  %v1618 = vpack.c.b16 %v1530, %v1529
  %v1619 = vpack.c.b16 %v1532, %v1531
  %v1620 = vpack.c.b16 %v1534, %v1533
  %v1621 = vpack.c.b16 %v1536, %v1535
  %v1622 = vpack.c.b16 %v1538, %v1537
  %v1623 = vpack.c.b16 %v1540, %v1539
  %v1624 = vpack.c.b16 %v1542, %v1541
  %v1625 = vpack.c.b16 %v1544, %v1543
  %v1626 = vpack.c.b16 %v1546, %v1545
  %v1627 = vpack.c.b16 %v1548, %v1547
  %v1628 = vpack.c.b16 %v1550, %v1549
  %v1629 = vpack.c.b16 %v1552, %v1551
  %v1630 = vpack.c.b16 %v1554, %v1553
  %v1631 = vpack.c.b16 %v1556, %v1555
  %v1632 = vpack.c.b16 %v1558, %v1557
  %v1633 = vpack.c.b16 %v1560, %v1559
  %v1634 = vpack.c.b16 %v1562, %v1561
  %v1635 = vpack.c.b16 %v1564, %v1563
  %v1636 = vpack.c.b16 %v1566, %v1565
  %v1637 = vpack.c.b16 %v1568, %v1567
  %v1638 = vpack.c.b16 %v1570, %v1569
  %v1639 = vpack.c.b16 %v1572, %v1571
  %v1640 = vpack.c.b16 %v1574, %v1573
  %v1641 = vpack.c.b16 %v1576, %v1575
  %v1642 = vpack.c.b16 %v1578, %v1577
  %1707 = vmatpush.bf16.msra.mxu0 %v1586
  %1708 = vmatpush.bf16.msra.mxu0 %v1585
  %1709 = vmatpush.bf16.msra.mxu0 %v1584
  %1710 = vmatpush.bf16.msra.mxu0 %v1583
  %1711 = vmatpush.bf16.msra.mxu0 %v1582
  %1712 = vmatpush.bf16.msra.mxu0 %v1581
  %1713 = vmatpush.bf16.msra.mxu0 %v1580
  %1714 = vmatpush.bf16.msra.mxu0 %v1579
  %1715 = vmatmul.bf16.gmra.mxu0 %v923
  %v1716 = vpop.f32.mrf.mxu0
  %v1717 = vadd.f32 0.0, %v1716
  %v1718 = vpop.f32.mrf.mxu0
  %v1719 = vadd.f32 0.0, %v1718
  %1720 = vmatmul.bf16.gmra.mxu0 %v931
  %v1721 = vpop.f32.mrf.mxu0
  %v1722 = vadd.f32 0.0, %v1721
  %v1723 = vpop.f32.mrf.mxu0
  %v1724 = vadd.f32 0.0, %v1723
  %1725 = vmatmul.bf16.gmra.mxu0 %v939
  %v1726 = vpop.f32.mrf.mxu0
  %v1727 = vadd.f32 0.0, %v1726
  %v1728 = vpop.f32.mrf.mxu0
  %v1729 = vadd.f32 0.0, %v1728
  %1730 = vmatmul.bf16.gmra.mxu0 %v947
  %v1731 = vpop.f32.mrf.mxu0
  %v1732 = vadd.f32 0.0, %v1731
  %v1733 = vpop.f32.mrf.mxu0
  %v1734 = vadd.f32 0.0, %v1733
  %1735 = vmatmul.bf16.gmra.mxu0 %v955
  %v1736 = vpop.f32.mrf.mxu0
  %v1737 = vadd.f32 0.0, %v1736
  %v1738 = vpop.f32.mrf.mxu0
  %v1739 = vadd.f32 0.0, %v1738
  %1740 = vmatmul.bf16.gmra.mxu0 %v963
  %v1741 = vpop.f32.mrf.mxu0
  %v1742 = vadd.f32 0.0, %v1741
  %v1743 = vpop.f32.mrf.mxu0
  %v1744 = vadd.f32 0.0, %v1743
  %1745 = vmatmul.bf16.gmra.mxu0 %v971
  %v1746 = vpop.f32.mrf.mxu0
  %v1747 = vadd.f32 0.0, %v1746
  %v1748 = vpop.f32.mrf.mxu0
  %v1749 = vadd.f32 0.0, %v1748
  %1750 = vmatmul.bf16.gmra.mxu0 %v979
  %v1751 = vpop.f32.mrf.mxu0
  %v1752 = vadd.f32 0.0, %v1751
  %v1753 = vpop.f32.mrf.mxu0
  %v1754 = vadd.f32 0.0, %v1753
  %1755 = vmatmul.bf16.gmra.mxu0 %v987
  %v1756 = vpop.f32.mrf.mxu0
  %v1757 = vadd.f32 0.0, %v1756
  %v1758 = vpop.f32.mrf.mxu0
  %v1759 = vadd.f32 0.0, %v1758
  %1760 = vmatmul.bf16.gmra.mxu0 %v995
  %v1761 = vpop.f32.mrf.mxu0
  %v1762 = vadd.f32 0.0, %v1761
  %v1763 = vpop.f32.mrf.mxu0
  %v1764 = vadd.f32 0.0, %v1763
  %1765 = vmatmul.bf16.gmra.mxu0 %v1003
  %v1766 = vpop.f32.mrf.mxu0
  %v1767 = vadd.f32 0.0, %v1766
  %v1768 = vpop.f32.mrf.mxu0
  %v1769 = vadd.f32 0.0, %v1768
  %1770 = vmatmul.bf16.gmra.mxu0 %v1011
  %v1771 = vpop.f32.mrf.mxu0
  %v1772 = vadd.f32 0.0, %v1771
  %v1773 = vpop.f32.mrf.mxu0
  %v1774 = vadd.f32 0.0, %v1773
  %1775 = vmatmul.bf16.gmra.mxu0 %v1019
  %v1776 = vpop.f32.mrf.mxu0
  %v1777 = vadd.f32 0.0, %v1776
  %v1778 = vpop.f32.mrf.mxu0
  %v1779 = vadd.f32 0.0, %v1778
  %1780 = vmatmul.bf16.gmra.mxu0 %v1027
  %v1781 = vpop.f32.mrf.mxu0
  %v1782 = vadd.f32 0.0, %v1781
  %v1783 = vpop.f32.mrf.mxu0
  %v1784 = vadd.f32 0.0, %v1783
  %1785 = vmatmul.bf16.gmra.mxu0 %v1035
  %v1786 = vpop.f32.mrf.mxu0
  %v1787 = vadd.f32 0.0, %v1786
  %v1788 = vpop.f32.mrf.mxu0
  %v1789 = vadd.f32 0.0, %v1788
  %1790 = vmatmul.bf16.gmra.mxu0 %v1043
  %v1791 = vpop.f32.mrf.mxu0
  %v1792 = vadd.f32 0.0, %v1791
  %v1793 = vpop.f32.mrf.mxu0
  %v1794 = vadd.f32 0.0, %v1793
  %1795 = vmatmul.bf16.gmra.mxu0 %v1051
  %v1796 = vpop.f32.mrf.mxu0
  %v1797 = vadd.f32 0.0, %v1796
  %v1798 = vpop.f32.mrf.mxu0
  %v1799 = vadd.f32 0.0, %v1798
  %1800 = vmatmul.bf16.gmra.mxu0 %v1059
  %v1801 = vpop.f32.mrf.mxu0
  %v1802 = vadd.f32 0.0, %v1801
  %v1803 = vpop.f32.mrf.mxu0
  %v1804 = vadd.f32 0.0, %v1803
  %1805 = vmatmul.bf16.gmra.mxu0 %v1067
  %v1806 = vpop.f32.mrf.mxu0
  %v1807 = vadd.f32 0.0, %v1806
  %v1808 = vpop.f32.mrf.mxu0
  %v1809 = vadd.f32 0.0, %v1808
  %1810 = vmatmul.bf16.gmra.mxu0 %v1075
  %v1811 = vpop.f32.mrf.mxu0
  %v1812 = vadd.f32 0.0, %v1811
  %v1813 = vpop.f32.mrf.mxu0
  %v1814 = vadd.f32 0.0, %v1813
  %1815 = vmatmul.bf16.gmra.mxu0 %v1083
  %v1816 = vpop.f32.mrf.mxu0
  %v1817 = vadd.f32 0.0, %v1816
  %v1818 = vpop.f32.mrf.mxu0
  %v1819 = vadd.f32 0.0, %v1818
  %1820 = vmatmul.bf16.gmra.mxu0 %v1091
  %v1821 = vpop.f32.mrf.mxu0
  %v1822 = vadd.f32 0.0, %v1821
  %v1823 = vpop.f32.mrf.mxu0
  %v1824 = vadd.f32 0.0, %v1823
  %1825 = vmatmul.bf16.gmra.mxu0 %v1099
  %v1826 = vpop.f32.mrf.mxu0
  %v1827 = vadd.f32 0.0, %v1826
  %v1828 = vpop.f32.mrf.mxu0
  %v1829 = vadd.f32 0.0, %v1828
  %1830 = vmatmul.bf16.gmra.mxu0 %v1107
  %v1831 = vpop.f32.mrf.mxu0
  %v1832 = vadd.f32 0.0, %v1831
  %v1833 = vpop.f32.mrf.mxu0
  %v1834 = vadd.f32 0.0, %v1833
  %1835 = vmatmul.bf16.gmra.mxu0 %v1115
  %v1836 = vpop.f32.mrf.mxu0
  %v1837 = vadd.f32 0.0, %v1836
  %v1838 = vpop.f32.mrf.mxu0
  %1839 = vdwg.mxu0
  %1840 = vmatpush.bf16.msra.mxu0 %v1594
  %1841 = vmatpush.bf16.msra.mxu0 %v1593
  %1842 = vmatpush.bf16.msra.mxu0 %v1592
  %1843 = vmatpush.bf16.msra.mxu0 %v1591
  %1844 = vmatpush.bf16.msra.mxu0 %v1590
  %1845 = vmatpush.bf16.msra.mxu0 %v1589
  %1846 = vmatpush.bf16.msra.mxu0 %v1588
  %1847 = vmatpush.bf16.msra.mxu0 %v1587
  %1848 = vmatmul.bf16.gmra.mxu0 %v924
  %v1849 = vpop.f32.mrf.mxu0
  %v1850 = vadd.f32 %v1717, %v1849
  %v1851 = vpop.f32.mrf.mxu0
  %v1852 = vadd.f32 %v1719, %v1851
  %1853 = vmatmul.bf16.gmra.mxu0 %v932
  %v1854 = vpop.f32.mrf.mxu0
  %v1855 = vadd.f32 %v1722, %v1854
  %v1856 = vpop.f32.mrf.mxu0
  %v1857 = vadd.f32 %v1724, %v1856
  %1858 = vmatmul.bf16.gmra.mxu0 %v940
  %v1859 = vpop.f32.mrf.mxu0
  %v1860 = vadd.f32 %v1727, %v1859
  %v1861 = vpop.f32.mrf.mxu0
  %v1862 = vadd.f32 %v1729, %v1861
  %1863 = vmatmul.bf16.gmra.mxu0 %v948
  %v1864 = vpop.f32.mrf.mxu0
  %v1865 = vadd.f32 %v1732, %v1864
  %v1866 = vpop.f32.mrf.mxu0
  %v1867 = vadd.f32 %v1734, %v1866
  %1868 = vmatmul.bf16.gmra.mxu0 %v956
  %v1869 = vpop.f32.mrf.mxu0
  %v1870 = vadd.f32 %v1737, %v1869
  %v1871 = vpop.f32.mrf.mxu0
  %v1872 = vadd.f32 %v1739, %v1871
  %1873 = vmatmul.bf16.gmra.mxu0 %v964
  %v1874 = vpop.f32.mrf.mxu0
  %v1875 = vadd.f32 %v1742, %v1874
  %v1876 = vpop.f32.mrf.mxu0
  %v1877 = vadd.f32 %v1744, %v1876
  %1878 = vmatmul.bf16.gmra.mxu0 %v972
  %v1879 = vpop.f32.mrf.mxu0
  %v1880 = vadd.f32 %v1747, %v1879
  %v1881 = vpop.f32.mrf.mxu0
  %v1882 = vadd.f32 %v1749, %v1881
  %1883 = vmatmul.bf16.gmra.mxu0 %v980
  %v1884 = vpop.f32.mrf.mxu0
  %v1885 = vadd.f32 %v1752, %v1884
  %v1886 = vpop.f32.mrf.mxu0
  %v1887 = vadd.f32 %v1754, %v1886
  %1888 = vmatmul.bf16.gmra.mxu0 %v988
  %v1889 = vpop.f32.mrf.mxu0
  %v1890 = vadd.f32 %v1757, %v1889
  %v1891 = vpop.f32.mrf.mxu0
  %v1892 = vadd.f32 %v1759, %v1891
  %1893 = vmatmul.bf16.gmra.mxu0 %v996
  %v1894 = vpop.f32.mrf.mxu0
  %v1895 = vadd.f32 %v1762, %v1894
  %v1896 = vpop.f32.mrf.mxu0
  %v1897 = vadd.f32 %v1764, %v1896
  %1898 = vmatmul.bf16.gmra.mxu0 %v1004
  %v1899 = vpop.f32.mrf.mxu0
  %v1900 = vadd.f32 %v1767, %v1899
  %v1901 = vpop.f32.mrf.mxu0
  %v1902 = vadd.f32 %v1769, %v1901
  %1903 = vmatmul.bf16.gmra.mxu0 %v1012
  %v1904 = vpop.f32.mrf.mxu0
  %v1905 = vadd.f32 %v1772, %v1904
  %v1906 = vpop.f32.mrf.mxu0
  %v1907 = vadd.f32 %v1774, %v1906
  %1908 = vmatmul.bf16.gmra.mxu0 %v1020
  %v1909 = vpop.f32.mrf.mxu0
  %v1910 = vadd.f32 %v1777, %v1909
  %v1911 = vpop.f32.mrf.mxu0
  %v1912 = vadd.f32 %v1779, %v1911
  %1913 = vmatmul.bf16.gmra.mxu0 %v1028
  %v1914 = vpop.f32.mrf.mxu0
  %v1915 = vadd.f32 %v1782, %v1914
  %v1916 = vpop.f32.mrf.mxu0
  %v1917 = vadd.f32 %v1784, %v1916
  %1918 = vmatmul.bf16.gmra.mxu0 %v1036
  %v1919 = vpop.f32.mrf.mxu0
  %v1920 = vadd.f32 %v1787, %v1919
  %v1921 = vpop.f32.mrf.mxu0
  %v1922 = vadd.f32 %v1789, %v1921
  %1923 = vmatmul.bf16.gmra.mxu0 %v1044
  %v1924 = vpop.f32.mrf.mxu0
  %v1925 = vadd.f32 %v1792, %v1924
  %v1926 = vpop.f32.mrf.mxu0
  %v1927 = vadd.f32 %v1794, %v1926
  %1928 = vmatmul.bf16.gmra.mxu0 %v1052
  %v1929 = vpop.f32.mrf.mxu0
  %v1930 = vadd.f32 %v1797, %v1929
  %v1931 = vpop.f32.mrf.mxu0
  %v1932 = vadd.f32 %v1799, %v1931
  %1933 = vmatmul.bf16.gmra.mxu0 %v1060
  %v1934 = vpop.f32.mrf.mxu0
  %v1935 = vadd.f32 %v1802, %v1934
  %v1936 = vpop.f32.mrf.mxu0
  %v1937 = vadd.f32 %v1804, %v1936
  %1938 = vmatmul.bf16.gmra.mxu0 %v1068
  %v1939 = vpop.f32.mrf.mxu0
  %v1940 = vadd.f32 %v1807, %v1939
  %v1941 = vpop.f32.mrf.mxu0
  %v1942 = vadd.f32 %v1809, %v1941
  %1943 = vmatmul.bf16.gmra.mxu0 %v1076
  %v1944 = vpop.f32.mrf.mxu0
  %v1945 = vadd.f32 %v1812, %v1944
  %v1946 = vpop.f32.mrf.mxu0
  %v1947 = vadd.f32 %v1814, %v1946
  %1948 = vmatmul.bf16.gmra.mxu0 %v1084
  %v1949 = vpop.f32.mrf.mxu0
  %v1950 = vadd.f32 %v1817, %v1949
  %v1951 = vpop.f32.mrf.mxu0
  %v1952 = vadd.f32 %v1819, %v1951
  %1953 = vmatmul.bf16.gmra.mxu0 %v1092
  %v1954 = vpop.f32.mrf.mxu0
  %v1955 = vadd.f32 %v1822, %v1954
  %v1956 = vpop.f32.mrf.mxu0
  %v1957 = vadd.f32 %v1824, %v1956
  %1958 = vmatmul.bf16.gmra.mxu0 %v1100
  %v1959 = vpop.f32.mrf.mxu0
  %v1960 = vadd.f32 %v1827, %v1959
  %v1961 = vpop.f32.mrf.mxu0
  %v1962 = vadd.f32 %v1829, %v1961
  %1963 = vmatmul.bf16.gmra.mxu0 %v1108
  %v1964 = vpop.f32.mrf.mxu0
  %v1965 = vadd.f32 %v1832, %v1964
  %v1966 = vpop.f32.mrf.mxu0
  %v1967 = vadd.f32 %v1834, %v1966
  %1968 = vmatmul.bf16.gmra.mxu0 %v1116
  %v1969 = vpop.f32.mrf.mxu0
  %v1970 = vadd.f32 %v1837, %v1969
  %v1971 = vpop.f32.mrf.mxu0
  %1972 = vdwg.mxu0
  %1973 = vmatpush.bf16.msra.mxu0 %v1602
  %1974 = vmatpush.bf16.msra.mxu0 %v1601
  %1975 = vmatpush.bf16.msra.mxu0 %v1600
  %1976 = vmatpush.bf16.msra.mxu0 %v1599
  %1977 = vmatpush.bf16.msra.mxu0 %v1598
  %1978 = vmatpush.bf16.msra.mxu0 %v1597
  %1979 = vmatpush.bf16.msra.mxu0 %v1596
  %1980 = vmatpush.bf16.msra.mxu0 %v1595
  %1981 = vmatmul.bf16.gmra.mxu0 %v925
  %v1982 = vpop.f32.mrf.mxu0
  %v1983 = vadd.f32 %v1850, %v1982
  %v1984 = vpop.f32.mrf.mxu0
  %v1985 = vadd.f32 %v1852, %v1984
  %1986 = vmatmul.bf16.gmra.mxu0 %v933
  %v1987 = vpop.f32.mrf.mxu0
  %v1988 = vadd.f32 %v1855, %v1987
  %v1989 = vpop.f32.mrf.mxu0
  %v1990 = vadd.f32 %v1857, %v1989
  %1991 = vmatmul.bf16.gmra.mxu0 %v941
  %v1992 = vpop.f32.mrf.mxu0
  %v1993 = vadd.f32 %v1860, %v1992
  %v1994 = vpop.f32.mrf.mxu0
  %v1995 = vadd.f32 %v1862, %v1994
  %1996 = vmatmul.bf16.gmra.mxu0 %v949
  %v1997 = vpop.f32.mrf.mxu0
  %v1998 = vadd.f32 %v1865, %v1997
  %v1999 = vpop.f32.mrf.mxu0
  %v2000 = vadd.f32 %v1867, %v1999
  %2001 = vmatmul.bf16.gmra.mxu0 %v957
  %v2002 = vpop.f32.mrf.mxu0
  %v2003 = vadd.f32 %v1870, %v2002
  %v2004 = vpop.f32.mrf.mxu0
  %v2005 = vadd.f32 %v1872, %v2004
  %2006 = vmatmul.bf16.gmra.mxu0 %v965
  %v2007 = vpop.f32.mrf.mxu0
  %v2008 = vadd.f32 %v1875, %v2007
  %v2009 = vpop.f32.mrf.mxu0
  %v2010 = vadd.f32 %v1877, %v2009
  %2011 = vmatmul.bf16.gmra.mxu0 %v973
  %v2012 = vpop.f32.mrf.mxu0
  %v2013 = vadd.f32 %v1880, %v2012
  %v2014 = vpop.f32.mrf.mxu0
  %v2015 = vadd.f32 %v1882, %v2014
  %2016 = vmatmul.bf16.gmra.mxu0 %v981
  %v2017 = vpop.f32.mrf.mxu0
  %v2018 = vadd.f32 %v1885, %v2017
  %v2019 = vpop.f32.mrf.mxu0
  %v2020 = vadd.f32 %v1887, %v2019
  %2021 = vmatmul.bf16.gmra.mxu0 %v989
  %v2022 = vpop.f32.mrf.mxu0
  %v2023 = vadd.f32 %v1890, %v2022
  %v2024 = vpop.f32.mrf.mxu0
  %v2025 = vadd.f32 %v1892, %v2024
  %2026 = vmatmul.bf16.gmra.mxu0 %v997
  %v2027 = vpop.f32.mrf.mxu0
  %v2028 = vadd.f32 %v1895, %v2027
  %v2029 = vpop.f32.mrf.mxu0
  %v2030 = vadd.f32 %v1897, %v2029
  %2031 = vmatmul.bf16.gmra.mxu0 %v1005
  %v2032 = vpop.f32.mrf.mxu0
  %v2033 = vadd.f32 %v1900, %v2032
  %v2034 = vpop.f32.mrf.mxu0
  %v2035 = vadd.f32 %v1902, %v2034
  %2036 = vmatmul.bf16.gmra.mxu0 %v1013
  %v2037 = vpop.f32.mrf.mxu0
  %v2038 = vadd.f32 %v1905, %v2037
  %v2039 = vpop.f32.mrf.mxu0
  %v2040 = vadd.f32 %v1907, %v2039
  %2041 = vmatmul.bf16.gmra.mxu0 %v1021
  %v2042 = vpop.f32.mrf.mxu0
  %v2043 = vadd.f32 %v1910, %v2042
  %v2044 = vpop.f32.mrf.mxu0
  %v2045 = vadd.f32 %v1912, %v2044
  %2046 = vmatmul.bf16.gmra.mxu0 %v1029
  %v2047 = vpop.f32.mrf.mxu0
  %v2048 = vadd.f32 %v1915, %v2047
  %v2049 = vpop.f32.mrf.mxu0
  %v2050 = vadd.f32 %v1917, %v2049
  %2051 = vmatmul.bf16.gmra.mxu0 %v1037
  %v2052 = vpop.f32.mrf.mxu0
  %v2053 = vadd.f32 %v1920, %v2052
  %v2054 = vpop.f32.mrf.mxu0
  %v2055 = vadd.f32 %v1922, %v2054
  %2056 = vmatmul.bf16.gmra.mxu0 %v1045
  %v2057 = vpop.f32.mrf.mxu0
  %v2058 = vadd.f32 %v1925, %v2057
  %v2059 = vpop.f32.mrf.mxu0
  %v2060 = vadd.f32 %v1927, %v2059
  %2061 = vmatmul.bf16.gmra.mxu0 %v1053
  %v2062 = vpop.f32.mrf.mxu0
  %v2063 = vadd.f32 %v1930, %v2062
  %v2064 = vpop.f32.mrf.mxu0
  %v2065 = vadd.f32 %v1932, %v2064
  %2066 = vmatmul.bf16.gmra.mxu0 %v1061
  %v2067 = vpop.f32.mrf.mxu0
  %v2068 = vadd.f32 %v1935, %v2067
  %v2069 = vpop.f32.mrf.mxu0
  %v2070 = vadd.f32 %v1937, %v2069
  %2071 = vmatmul.bf16.gmra.mxu0 %v1069
  %v2072 = vpop.f32.mrf.mxu0
  %v2073 = vadd.f32 %v1940, %v2072
  %v2074 = vpop.f32.mrf.mxu0
  %v2075 = vadd.f32 %v1942, %v2074
  %2076 = vmatmul.bf16.gmra.mxu0 %v1077
  %v2077 = vpop.f32.mrf.mxu0
  %v2078 = vadd.f32 %v1945, %v2077
  %v2079 = vpop.f32.mrf.mxu0
  %v2080 = vadd.f32 %v1947, %v2079
  %2081 = vmatmul.bf16.gmra.mxu0 %v1085
  %v2082 = vpop.f32.mrf.mxu0
  %v2083 = vadd.f32 %v1950, %v2082
  %v2084 = vpop.f32.mrf.mxu0
  %v2085 = vadd.f32 %v1952, %v2084
  %2086 = vmatmul.bf16.gmra.mxu0 %v1093
  %v2087 = vpop.f32.mrf.mxu0
  %v2088 = vadd.f32 %v1955, %v2087
  %v2089 = vpop.f32.mrf.mxu0
  %v2090 = vadd.f32 %v1957, %v2089
  %2091 = vmatmul.bf16.gmra.mxu0 %v1101
  %v2092 = vpop.f32.mrf.mxu0
  %v2093 = vadd.f32 %v1960, %v2092
  %v2094 = vpop.f32.mrf.mxu0
  %v2095 = vadd.f32 %v1962, %v2094
  %2096 = vmatmul.bf16.gmra.mxu0 %v1109
  %v2097 = vpop.f32.mrf.mxu0
  %v2098 = vadd.f32 %v1965, %v2097
  %v2099 = vpop.f32.mrf.mxu0
  %v2100 = vadd.f32 %v1967, %v2099
  %2101 = vmatmul.bf16.gmra.mxu0 %v1117
  %v2102 = vpop.f32.mrf.mxu0
  %v2103 = vadd.f32 %v1970, %v2102
  %v2104 = vpop.f32.mrf.mxu0
  %2105 = vdwg.mxu0
  %2106 = vmatpush.bf16.msra.mxu0 %v1610
  %2107 = vmatpush.bf16.msra.mxu0 %v1609
  %2108 = vmatpush.bf16.msra.mxu0 %v1608
  %2109 = vmatpush.bf16.msra.mxu0 %v1607
  %2110 = vmatpush.bf16.msra.mxu0 %v1606
  %2111 = vmatpush.bf16.msra.mxu0 %v1605
  %2112 = vmatpush.bf16.msra.mxu0 %v1604
  %2113 = vmatpush.bf16.msra.mxu0 %v1603
  %2114 = vmatmul.bf16.gmra.mxu0 %v926
  %v2115 = vpop.f32.mrf.mxu0
  %v2116 = vadd.f32 %v1983, %v2115
  %v2117 = vpop.f32.mrf.mxu0
  %v2118 = vadd.f32 %v1985, %v2117
  %2119 = vmatmul.bf16.gmra.mxu0 %v934
  %v2120 = vpop.f32.mrf.mxu0
  %v2121 = vadd.f32 %v1988, %v2120
  %v2122 = vpop.f32.mrf.mxu0
  %v2123 = vadd.f32 %v1990, %v2122
  %2124 = vmatmul.bf16.gmra.mxu0 %v942
  %v2125 = vpop.f32.mrf.mxu0
  %v2126 = vadd.f32 %v1993, %v2125
  %v2127 = vpop.f32.mrf.mxu0
  %v2128 = vadd.f32 %v1995, %v2127
  %2129 = vmatmul.bf16.gmra.mxu0 %v950
  %v2130 = vpop.f32.mrf.mxu0
  %v2131 = vadd.f32 %v1998, %v2130
  %v2132 = vpop.f32.mrf.mxu0
  %v2133 = vadd.f32 %v2000, %v2132
  %2134 = vmatmul.bf16.gmra.mxu0 %v958
  %v2135 = vpop.f32.mrf.mxu0
  %v2136 = vadd.f32 %v2003, %v2135
  %v2137 = vpop.f32.mrf.mxu0
  %v2138 = vadd.f32 %v2005, %v2137
  %2139 = vmatmul.bf16.gmra.mxu0 %v966
  %v2140 = vpop.f32.mrf.mxu0
  %v2141 = vadd.f32 %v2008, %v2140
  %v2142 = vpop.f32.mrf.mxu0
  %v2143 = vadd.f32 %v2010, %v2142
  %2144 = vmatmul.bf16.gmra.mxu0 %v974
  %v2145 = vpop.f32.mrf.mxu0
  %v2146 = vadd.f32 %v2013, %v2145
  %v2147 = vpop.f32.mrf.mxu0
  %v2148 = vadd.f32 %v2015, %v2147
  %2149 = vmatmul.bf16.gmra.mxu0 %v982
  %v2150 = vpop.f32.mrf.mxu0
  %v2151 = vadd.f32 %v2018, %v2150
  %v2152 = vpop.f32.mrf.mxu0
  %v2153 = vadd.f32 %v2020, %v2152
  %2154 = vmatmul.bf16.gmra.mxu0 %v990
  %v2155 = vpop.f32.mrf.mxu0
  %v2156 = vadd.f32 %v2023, %v2155
  %v2157 = vpop.f32.mrf.mxu0
  %v2158 = vadd.f32 %v2025, %v2157
  %2159 = vmatmul.bf16.gmra.mxu0 %v998
  %v2160 = vpop.f32.mrf.mxu0
  %v2161 = vadd.f32 %v2028, %v2160
  %v2162 = vpop.f32.mrf.mxu0
  %v2163 = vadd.f32 %v2030, %v2162
  %2164 = vmatmul.bf16.gmra.mxu0 %v1006
  %v2165 = vpop.f32.mrf.mxu0
  %v2166 = vadd.f32 %v2033, %v2165
  %v2167 = vpop.f32.mrf.mxu0
  %v2168 = vadd.f32 %v2035, %v2167
  %2169 = vmatmul.bf16.gmra.mxu0 %v1014
  %v2170 = vpop.f32.mrf.mxu0
  %v2171 = vadd.f32 %v2038, %v2170
  %v2172 = vpop.f32.mrf.mxu0
  %v2173 = vadd.f32 %v2040, %v2172
  %2174 = vmatmul.bf16.gmra.mxu0 %v1022
  %v2175 = vpop.f32.mrf.mxu0
  %v2176 = vadd.f32 %v2043, %v2175
  %v2177 = vpop.f32.mrf.mxu0
  %v2178 = vadd.f32 %v2045, %v2177
  %2179 = vmatmul.bf16.gmra.mxu0 %v1030
  %v2180 = vpop.f32.mrf.mxu0
  %v2181 = vadd.f32 %v2048, %v2180
  %v2182 = vpop.f32.mrf.mxu0
  %v2183 = vadd.f32 %v2050, %v2182
  %2184 = vmatmul.bf16.gmra.mxu0 %v1038
  %v2185 = vpop.f32.mrf.mxu0
  %v2186 = vadd.f32 %v2053, %v2185
  %v2187 = vpop.f32.mrf.mxu0
  %v2188 = vadd.f32 %v2055, %v2187
  %2189 = vmatmul.bf16.gmra.mxu0 %v1046
  %v2190 = vpop.f32.mrf.mxu0
  %v2191 = vadd.f32 %v2058, %v2190
  %v2192 = vpop.f32.mrf.mxu0
  %v2193 = vadd.f32 %v2060, %v2192
  %2194 = vmatmul.bf16.gmra.mxu0 %v1054
  %v2195 = vpop.f32.mrf.mxu0
  %v2196 = vadd.f32 %v2063, %v2195
  %v2197 = vpop.f32.mrf.mxu0
  %v2198 = vadd.f32 %v2065, %v2197
  %2199 = vmatmul.bf16.gmra.mxu0 %v1062
  %v2200 = vpop.f32.mrf.mxu0
  %v2201 = vadd.f32 %v2068, %v2200
  %v2202 = vpop.f32.mrf.mxu0
  %v2203 = vadd.f32 %v2070, %v2202
  %2204 = vmatmul.bf16.gmra.mxu0 %v1070
  %v2205 = vpop.f32.mrf.mxu0
  %v2206 = vadd.f32 %v2073, %v2205
  %v2207 = vpop.f32.mrf.mxu0
  %v2208 = vadd.f32 %v2075, %v2207
  %2209 = vmatmul.bf16.gmra.mxu0 %v1078
  %v2210 = vpop.f32.mrf.mxu0
  %v2211 = vadd.f32 %v2078, %v2210
  %v2212 = vpop.f32.mrf.mxu0
  %v2213 = vadd.f32 %v2080, %v2212
  %2214 = vmatmul.bf16.gmra.mxu0 %v1086
  %v2215 = vpop.f32.mrf.mxu0
  %v2216 = vadd.f32 %v2083, %v2215
  %v2217 = vpop.f32.mrf.mxu0
  %v2218 = vadd.f32 %v2085, %v2217
  %2219 = vmatmul.bf16.gmra.mxu0 %v1094
  %v2220 = vpop.f32.mrf.mxu0
  %v2221 = vadd.f32 %v2088, %v2220
  %v2222 = vpop.f32.mrf.mxu0
  %v2223 = vadd.f32 %v2090, %v2222
  %2224 = vmatmul.bf16.gmra.mxu0 %v1102
  %v2225 = vpop.f32.mrf.mxu0
  %v2226 = vadd.f32 %v2093, %v2225
  %v2227 = vpop.f32.mrf.mxu0
  %v2228 = vadd.f32 %v2095, %v2227
  %2229 = vmatmul.bf16.gmra.mxu0 %v1110
  %v2230 = vpop.f32.mrf.mxu0
  %v2231 = vadd.f32 %v2098, %v2230
  %v2232 = vpop.f32.mrf.mxu0
  %v2233 = vadd.f32 %v2100, %v2232
  %2234 = vmatmul.bf16.gmra.mxu0 %v1118
  %v2235 = vpop.f32.mrf.mxu0
  %v2236 = vadd.f32 %v2103, %v2235
  %v2237 = vpop.f32.mrf.mxu0
  %2238 = vdwg.mxu0
  %2239 = vmatpush.bf16.msra.mxu0 %v1618
  %2240 = vmatpush.bf16.msra.mxu0 %v1617
  %2241 = vmatpush.bf16.msra.mxu0 %v1616
  %2242 = vmatpush.bf16.msra.mxu0 %v1615
  %2243 = vmatpush.bf16.msra.mxu0 %v1614
  %2244 = vmatpush.bf16.msra.mxu0 %v1613
  %2245 = vmatpush.bf16.msra.mxu0 %v1612
  %2246 = vmatpush.bf16.msra.mxu0 %v1611
  %2247 = vmatmul.bf16.gmra.mxu0 %v927
  %v2248 = vpop.f32.mrf.mxu0
  %v2249 = vadd.f32 %v2116, %v2248
  %v2250 = vpop.f32.mrf.mxu0
  %v2251 = vadd.f32 %v2118, %v2250
  %2252 = vmatmul.bf16.gmra.mxu0 %v935
  %v2253 = vpop.f32.mrf.mxu0
  %v2254 = vadd.f32 %v2121, %v2253
  %v2255 = vpop.f32.mrf.mxu0
  %v2256 = vadd.f32 %v2123, %v2255
  %2257 = vmatmul.bf16.gmra.mxu0 %v943
  %v2258 = vpop.f32.mrf.mxu0
  %v2259 = vadd.f32 %v2126, %v2258
  %v2260 = vpop.f32.mrf.mxu0
  %v2261 = vadd.f32 %v2128, %v2260
  %2262 = vmatmul.bf16.gmra.mxu0 %v951
  %v2263 = vpop.f32.mrf.mxu0
  %v2264 = vadd.f32 %v2131, %v2263
  %v2265 = vpop.f32.mrf.mxu0
  %v2266 = vadd.f32 %v2133, %v2265
  %2267 = vmatmul.bf16.gmra.mxu0 %v959
  %v2268 = vpop.f32.mrf.mxu0
  %v2269 = vadd.f32 %v2136, %v2268
  %v2270 = vpop.f32.mrf.mxu0
  %v2271 = vadd.f32 %v2138, %v2270
  %2272 = vmatmul.bf16.gmra.mxu0 %v967
  %v2273 = vpop.f32.mrf.mxu0
  %v2274 = vadd.f32 %v2141, %v2273
  %v2275 = vpop.f32.mrf.mxu0
  %v2276 = vadd.f32 %v2143, %v2275
  %2277 = vmatmul.bf16.gmra.mxu0 %v975
  %v2278 = vpop.f32.mrf.mxu0
  %v2279 = vadd.f32 %v2146, %v2278
  %v2280 = vpop.f32.mrf.mxu0
  %v2281 = vadd.f32 %v2148, %v2280
  %2282 = vmatmul.bf16.gmra.mxu0 %v983
  %v2283 = vpop.f32.mrf.mxu0
  %v2284 = vadd.f32 %v2151, %v2283
  %v2285 = vpop.f32.mrf.mxu0
  %v2286 = vadd.f32 %v2153, %v2285
  %2287 = vmatmul.bf16.gmra.mxu0 %v991
  %v2288 = vpop.f32.mrf.mxu0
  %v2289 = vadd.f32 %v2156, %v2288
  %v2290 = vpop.f32.mrf.mxu0
  %v2291 = vadd.f32 %v2158, %v2290
  %2292 = vmatmul.bf16.gmra.mxu0 %v999
  %v2293 = vpop.f32.mrf.mxu0
  %v2294 = vadd.f32 %v2161, %v2293
  %v2295 = vpop.f32.mrf.mxu0
  %v2296 = vadd.f32 %v2163, %v2295
  %2297 = vmatmul.bf16.gmra.mxu0 %v1007
  %v2298 = vpop.f32.mrf.mxu0
  %v2299 = vadd.f32 %v2166, %v2298
  %v2300 = vpop.f32.mrf.mxu0
  %v2301 = vadd.f32 %v2168, %v2300
  %2302 = vmatmul.bf16.gmra.mxu0 %v1015
  %v2303 = vpop.f32.mrf.mxu0
  %v2304 = vadd.f32 %v2171, %v2303
  %v2305 = vpop.f32.mrf.mxu0
  %v2306 = vadd.f32 %v2173, %v2305
  %2307 = vmatmul.bf16.gmra.mxu0 %v1023
  %v2308 = vpop.f32.mrf.mxu0
  %v2309 = vadd.f32 %v2176, %v2308
  %v2310 = vpop.f32.mrf.mxu0
  %v2311 = vadd.f32 %v2178, %v2310
  %2312 = vmatmul.bf16.gmra.mxu0 %v1031
  %v2313 = vpop.f32.mrf.mxu0
  %v2314 = vadd.f32 %v2181, %v2313
  %v2315 = vpop.f32.mrf.mxu0
  %v2316 = vadd.f32 %v2183, %v2315
  %2317 = vmatmul.bf16.gmra.mxu0 %v1039
  %v2318 = vpop.f32.mrf.mxu0
  %v2319 = vadd.f32 %v2186, %v2318
  %v2320 = vpop.f32.mrf.mxu0
  %v2321 = vadd.f32 %v2188, %v2320
  %2322 = vmatmul.bf16.gmra.mxu0 %v1047
  %v2323 = vpop.f32.mrf.mxu0
  %v2324 = vadd.f32 %v2191, %v2323
  %v2325 = vpop.f32.mrf.mxu0
  %v2326 = vadd.f32 %v2193, %v2325
  %2327 = vmatmul.bf16.gmra.mxu0 %v1055
  %v2328 = vpop.f32.mrf.mxu0
  %v2329 = vadd.f32 %v2196, %v2328
  %v2330 = vpop.f32.mrf.mxu0
  %v2331 = vadd.f32 %v2198, %v2330
  %2332 = vmatmul.bf16.gmra.mxu0 %v1063
  %v2333 = vpop.f32.mrf.mxu0
  %v2334 = vadd.f32 %v2201, %v2333
  %v2335 = vpop.f32.mrf.mxu0
  %v2336 = vadd.f32 %v2203, %v2335
  %2337 = vmatmul.bf16.gmra.mxu0 %v1071
  %v2338 = vpop.f32.mrf.mxu0
  %v2339 = vadd.f32 %v2206, %v2338
  %v2340 = vpop.f32.mrf.mxu0
  %v2341 = vadd.f32 %v2208, %v2340
  %2342 = vmatmul.bf16.gmra.mxu0 %v1079
  %v2343 = vpop.f32.mrf.mxu0
  %v2344 = vadd.f32 %v2211, %v2343
  %v2345 = vpop.f32.mrf.mxu0
  %v2346 = vadd.f32 %v2213, %v2345
  %2347 = vmatmul.bf16.gmra.mxu0 %v1087
  %v2348 = vpop.f32.mrf.mxu0
  %v2349 = vadd.f32 %v2216, %v2348
  %v2350 = vpop.f32.mrf.mxu0
  %v2351 = vadd.f32 %v2218, %v2350
  %2352 = vmatmul.bf16.gmra.mxu0 %v1095
  %v2353 = vpop.f32.mrf.mxu0
  %v2354 = vadd.f32 %v2221, %v2353
  %v2355 = vpop.f32.mrf.mxu0
  %v2356 = vadd.f32 %v2223, %v2355
  %2357 = vmatmul.bf16.gmra.mxu0 %v1103
  %v2358 = vpop.f32.mrf.mxu0
  %v2359 = vadd.f32 %v2226, %v2358
  %v2360 = vpop.f32.mrf.mxu0
  %v2361 = vadd.f32 %v2228, %v2360
  %2362 = vmatmul.bf16.gmra.mxu0 %v1111
  %v2363 = vpop.f32.mrf.mxu0
  %v2364 = vadd.f32 %v2231, %v2363
  %v2365 = vpop.f32.mrf.mxu0
  %v2366 = vadd.f32 %v2233, %v2365
  %2367 = vmatmul.bf16.gmra.mxu0 %v1119
  %v2368 = vpop.f32.mrf.mxu0
  %v2369 = vadd.f32 %v2236, %v2368
  %v2370 = vpop.f32.mrf.mxu0
  %2371 = vdwg.mxu0
  %2372 = vmatpush.bf16.msra.mxu0 %v1626
  %2373 = vmatpush.bf16.msra.mxu0 %v1625
  %2374 = vmatpush.bf16.msra.mxu0 %v1624
  %2375 = vmatpush.bf16.msra.mxu0 %v1623
  %2376 = vmatpush.bf16.msra.mxu0 %v1622
  %2377 = vmatpush.bf16.msra.mxu0 %v1621
  %2378 = vmatpush.bf16.msra.mxu0 %v1620
  %2379 = vmatpush.bf16.msra.mxu0 %v1619
  %2380 = vmatmul.bf16.gmra.mxu0 %v928
  %v2381 = vpop.f32.mrf.mxu0
  %v2382 = vadd.f32 %v2249, %v2381
  %v2383 = vpop.f32.mrf.mxu0
  %v2384 = vadd.f32 %v2251, %v2383
  %2385 = vmatmul.bf16.gmra.mxu0 %v936
  %v2386 = vpop.f32.mrf.mxu0
  %v2387 = vadd.f32 %v2254, %v2386
  %v2388 = vpop.f32.mrf.mxu0
  %v2389 = vadd.f32 %v2256, %v2388
  %2390 = vmatmul.bf16.gmra.mxu0 %v944
  %v2391 = vpop.f32.mrf.mxu0
  %v2392 = vadd.f32 %v2259, %v2391
  %v2393 = vpop.f32.mrf.mxu0
  %v2394 = vadd.f32 %v2261, %v2393
  %2395 = vmatmul.bf16.gmra.mxu0 %v952
  %v2396 = vpop.f32.mrf.mxu0
  %v2397 = vadd.f32 %v2264, %v2396
  %v2398 = vpop.f32.mrf.mxu0
  %v2399 = vadd.f32 %v2266, %v2398
  %2400 = vmatmul.bf16.gmra.mxu0 %v960
  %v2401 = vpop.f32.mrf.mxu0
  %v2402 = vadd.f32 %v2269, %v2401
  %v2403 = vpop.f32.mrf.mxu0
  %v2404 = vadd.f32 %v2271, %v2403
  %2405 = vmatmul.bf16.gmra.mxu0 %v968
  %v2406 = vpop.f32.mrf.mxu0
  %v2407 = vadd.f32 %v2274, %v2406
  %v2408 = vpop.f32.mrf.mxu0
  %v2409 = vadd.f32 %v2276, %v2408
  %2410 = vmatmul.bf16.gmra.mxu0 %v976
  %v2411 = vpop.f32.mrf.mxu0
  %v2412 = vadd.f32 %v2279, %v2411
  %v2413 = vpop.f32.mrf.mxu0
  %v2414 = vadd.f32 %v2281, %v2413
  %2415 = vmatmul.bf16.gmra.mxu0 %v984
  %v2416 = vpop.f32.mrf.mxu0
  %v2417 = vadd.f32 %v2284, %v2416
  %v2418 = vpop.f32.mrf.mxu0
  %v2419 = vadd.f32 %v2286, %v2418
  %2420 = vmatmul.bf16.gmra.mxu0 %v992
  %v2421 = vpop.f32.mrf.mxu0
  %v2422 = vadd.f32 %v2289, %v2421
  %v2423 = vpop.f32.mrf.mxu0
  %v2424 = vadd.f32 %v2291, %v2423
  %2425 = vmatmul.bf16.gmra.mxu0 %v1000
  %v2426 = vpop.f32.mrf.mxu0
  %v2427 = vadd.f32 %v2294, %v2426
  %v2428 = vpop.f32.mrf.mxu0
  %v2429 = vadd.f32 %v2296, %v2428
  %2430 = vmatmul.bf16.gmra.mxu0 %v1008
  %v2431 = vpop.f32.mrf.mxu0
  %v2432 = vadd.f32 %v2299, %v2431
  %v2433 = vpop.f32.mrf.mxu0
  %v2434 = vadd.f32 %v2301, %v2433
  %2435 = vmatmul.bf16.gmra.mxu0 %v1016
  %v2436 = vpop.f32.mrf.mxu0
  %v2437 = vadd.f32 %v2304, %v2436
  %v2438 = vpop.f32.mrf.mxu0
  %v2439 = vadd.f32 %v2306, %v2438
  %2440 = vmatmul.bf16.gmra.mxu0 %v1024
  %v2441 = vpop.f32.mrf.mxu0
  %v2442 = vadd.f32 %v2309, %v2441
  %v2443 = vpop.f32.mrf.mxu0
  %v2444 = vadd.f32 %v2311, %v2443
  %2445 = vmatmul.bf16.gmra.mxu0 %v1032
  %v2446 = vpop.f32.mrf.mxu0
  %v2447 = vadd.f32 %v2314, %v2446
  %v2448 = vpop.f32.mrf.mxu0
  %v2449 = vadd.f32 %v2316, %v2448
  %2450 = vmatmul.bf16.gmra.mxu0 %v1040
  %v2451 = vpop.f32.mrf.mxu0
  %v2452 = vadd.f32 %v2319, %v2451
  %v2453 = vpop.f32.mrf.mxu0
  %v2454 = vadd.f32 %v2321, %v2453
  %2455 = vmatmul.bf16.gmra.mxu0 %v1048
  %v2456 = vpop.f32.mrf.mxu0
  %v2457 = vadd.f32 %v2324, %v2456
  %v2458 = vpop.f32.mrf.mxu0
  %v2459 = vadd.f32 %v2326, %v2458
  %2460 = vmatmul.bf16.gmra.mxu0 %v1056
  %v2461 = vpop.f32.mrf.mxu0
  %v2462 = vadd.f32 %v2329, %v2461
  %v2463 = vpop.f32.mrf.mxu0
  %v2464 = vadd.f32 %v2331, %v2463
  %2465 = vmatmul.bf16.gmra.mxu0 %v1064
  %v2466 = vpop.f32.mrf.mxu0
  %v2467 = vadd.f32 %v2334, %v2466
  %v2468 = vpop.f32.mrf.mxu0
  %v2469 = vadd.f32 %v2336, %v2468
  %2470 = vmatmul.bf16.gmra.mxu0 %v1072
  %v2471 = vpop.f32.mrf.mxu0
  %v2472 = vadd.f32 %v2339, %v2471
  %v2473 = vpop.f32.mrf.mxu0
  %v2474 = vadd.f32 %v2341, %v2473
  %2475 = vmatmul.bf16.gmra.mxu0 %v1080
  %v2476 = vpop.f32.mrf.mxu0
  %v2477 = vadd.f32 %v2344, %v2476
  %v2478 = vpop.f32.mrf.mxu0
  %v2479 = vadd.f32 %v2346, %v2478
  %2480 = vmatmul.bf16.gmra.mxu0 %v1088
  %v2481 = vpop.f32.mrf.mxu0
  %v2482 = vadd.f32 %v2349, %v2481
  %v2483 = vpop.f32.mrf.mxu0
  %v2484 = vadd.f32 %v2351, %v2483
  %2485 = vmatmul.bf16.gmra.mxu0 %v1096
  %v2486 = vpop.f32.mrf.mxu0
  %v2487 = vadd.f32 %v2354, %v2486
  %v2488 = vpop.f32.mrf.mxu0
  %v2489 = vadd.f32 %v2356, %v2488
  %2490 = vmatmul.bf16.gmra.mxu0 %v1104
  %v2491 = vpop.f32.mrf.mxu0
  %v2492 = vadd.f32 %v2359, %v2491
  %v2493 = vpop.f32.mrf.mxu0
  %v2494 = vadd.f32 %v2361, %v2493
  %2495 = vmatmul.bf16.gmra.mxu0 %v1112
  %v2496 = vpop.f32.mrf.mxu0
  %v2497 = vadd.f32 %v2364, %v2496
  %v2498 = vpop.f32.mrf.mxu0
  %v2499 = vadd.f32 %v2366, %v2498
  %2500 = vmatmul.bf16.gmra.mxu0 %v1120
  %v2501 = vpop.f32.mrf.mxu0
  %v2502 = vadd.f32 %v2369, %v2501
  %v2503 = vpop.f32.mrf.mxu0
  %2504 = vdwg.mxu0
  %2505 = vmatpush.bf16.msra.mxu0 %v1634
  %2506 = vmatpush.bf16.msra.mxu0 %v1633
  %2507 = vmatpush.bf16.msra.mxu0 %v1632
  %2508 = vmatpush.bf16.msra.mxu0 %v1631
  %2509 = vmatpush.bf16.msra.mxu0 %v1630
  %2510 = vmatpush.bf16.msra.mxu0 %v1629
  %2511 = vmatpush.bf16.msra.mxu0 %v1628
  %2512 = vmatpush.bf16.msra.mxu0 %v1627
  %2513 = vmatmul.bf16.gmra.mxu0 %v929
  %v2514 = vpop.f32.mrf.mxu0
  %v2515 = vadd.f32 %v2382, %v2514
  %v2516 = vpop.f32.mrf.mxu0
  %v2517 = vadd.f32 %v2384, %v2516
  %2518 = vmatmul.bf16.gmra.mxu0 %v937
  %v2519 = vpop.f32.mrf.mxu0
  %v2520 = vadd.f32 %v2387, %v2519
  %v2521 = vpop.f32.mrf.mxu0
  %v2522 = vadd.f32 %v2389, %v2521
  %2523 = vmatmul.bf16.gmra.mxu0 %v945
  %v2524 = vpop.f32.mrf.mxu0
  %v2525 = vadd.f32 %v2392, %v2524
  %v2526 = vpop.f32.mrf.mxu0
  %v2527 = vadd.f32 %v2394, %v2526
  %2528 = vmatmul.bf16.gmra.mxu0 %v953
  %v2529 = vpop.f32.mrf.mxu0
  %v2530 = vadd.f32 %v2397, %v2529
  %v2531 = vpop.f32.mrf.mxu0
  %v2532 = vadd.f32 %v2399, %v2531
  %2533 = vmatmul.bf16.gmra.mxu0 %v961
  %v2534 = vpop.f32.mrf.mxu0
  %v2535 = vadd.f32 %v2402, %v2534
  %v2536 = vpop.f32.mrf.mxu0
  %v2537 = vadd.f32 %v2404, %v2536
  %2538 = vmatmul.bf16.gmra.mxu0 %v969
  %v2539 = vpop.f32.mrf.mxu0
  %v2540 = vadd.f32 %v2407, %v2539
  %v2541 = vpop.f32.mrf.mxu0
  %v2542 = vadd.f32 %v2409, %v2541
  %2543 = vmatmul.bf16.gmra.mxu0 %v977
  %v2544 = vpop.f32.mrf.mxu0
  %v2545 = vadd.f32 %v2412, %v2544
  %v2546 = vpop.f32.mrf.mxu0
  %v2547 = vadd.f32 %v2414, %v2546
  %2548 = vmatmul.bf16.gmra.mxu0 %v985
  %v2549 = vpop.f32.mrf.mxu0
  %v2550 = vadd.f32 %v2417, %v2549
  %v2551 = vpop.f32.mrf.mxu0
  %v2552 = vadd.f32 %v2419, %v2551
  %2553 = vmatmul.bf16.gmra.mxu0 %v993
  %v2554 = vpop.f32.mrf.mxu0
  %v2555 = vadd.f32 %v2422, %v2554
  %v2556 = vpop.f32.mrf.mxu0
  %v2557 = vadd.f32 %v2424, %v2556
  %2558 = vmatmul.bf16.gmra.mxu0 %v1001
  %v2559 = vpop.f32.mrf.mxu0
  %v2560 = vadd.f32 %v2427, %v2559
  %v2561 = vpop.f32.mrf.mxu0
  %v2562 = vadd.f32 %v2429, %v2561
  %2563 = vmatmul.bf16.gmra.mxu0 %v1009
  %v2564 = vpop.f32.mrf.mxu0
  %v2565 = vadd.f32 %v2432, %v2564
  %v2566 = vpop.f32.mrf.mxu0
  %v2567 = vadd.f32 %v2434, %v2566
  %2568 = vmatmul.bf16.gmra.mxu0 %v1017
  %v2569 = vpop.f32.mrf.mxu0
  %v2570 = vadd.f32 %v2437, %v2569
  %v2571 = vpop.f32.mrf.mxu0
  %v2572 = vadd.f32 %v2439, %v2571
  %2573 = vmatmul.bf16.gmra.mxu0 %v1025
  %v2574 = vpop.f32.mrf.mxu0
  %v2575 = vadd.f32 %v2442, %v2574
  %v2576 = vpop.f32.mrf.mxu0
  %v2577 = vadd.f32 %v2444, %v2576
  %2578 = vmatmul.bf16.gmra.mxu0 %v1033
  %v2579 = vpop.f32.mrf.mxu0
  %v2580 = vadd.f32 %v2447, %v2579
  %v2581 = vpop.f32.mrf.mxu0
  %v2582 = vadd.f32 %v2449, %v2581
  %2583 = vmatmul.bf16.gmra.mxu0 %v1041
  %v2584 = vpop.f32.mrf.mxu0
  %v2585 = vadd.f32 %v2452, %v2584
  %v2586 = vpop.f32.mrf.mxu0
  %v2587 = vadd.f32 %v2454, %v2586
  %2588 = vmatmul.bf16.gmra.mxu0 %v1049
  %v2589 = vpop.f32.mrf.mxu0
  %v2590 = vadd.f32 %v2457, %v2589
  %v2591 = vpop.f32.mrf.mxu0
  %v2592 = vadd.f32 %v2459, %v2591
  %2593 = vmatmul.bf16.gmra.mxu0 %v1057
  %v2594 = vpop.f32.mrf.mxu0
  %v2595 = vadd.f32 %v2462, %v2594
  %v2596 = vpop.f32.mrf.mxu0
  %v2597 = vadd.f32 %v2464, %v2596
  %2598 = vmatmul.bf16.gmra.mxu0 %v1065
  %v2599 = vpop.f32.mrf.mxu0
  %v2600 = vadd.f32 %v2467, %v2599
  %v2601 = vpop.f32.mrf.mxu0
  %v2602 = vadd.f32 %v2469, %v2601
  %2603 = vmatmul.bf16.gmra.mxu0 %v1073
  %v2604 = vpop.f32.mrf.mxu0
  %v2605 = vadd.f32 %v2472, %v2604
  %v2606 = vpop.f32.mrf.mxu0
  %v2607 = vadd.f32 %v2474, %v2606
  %2608 = vmatmul.bf16.gmra.mxu0 %v1081
  %v2609 = vpop.f32.mrf.mxu0
  %v2610 = vadd.f32 %v2477, %v2609
  %v2611 = vpop.f32.mrf.mxu0
  %v2612 = vadd.f32 %v2479, %v2611
  %2613 = vmatmul.bf16.gmra.mxu0 %v1089
  %v2614 = vpop.f32.mrf.mxu0
  %v2615 = vadd.f32 %v2482, %v2614
  %v2616 = vpop.f32.mrf.mxu0
  %v2617 = vadd.f32 %v2484, %v2616
  %2618 = vmatmul.bf16.gmra.mxu0 %v1097
  %v2619 = vpop.f32.mrf.mxu0
  %v2620 = vadd.f32 %v2487, %v2619
  %v2621 = vpop.f32.mrf.mxu0
  %v2622 = vadd.f32 %v2489, %v2621
  %2623 = vmatmul.bf16.gmra.mxu0 %v1105
  %v2624 = vpop.f32.mrf.mxu0
  %v2625 = vadd.f32 %v2492, %v2624
  %v2626 = vpop.f32.mrf.mxu0
  %v2627 = vadd.f32 %v2494, %v2626
  %2628 = vmatmul.bf16.gmra.mxu0 %v1113
  %v2629 = vpop.f32.mrf.mxu0
  %v2630 = vadd.f32 %v2497, %v2629
  %v2631 = vpop.f32.mrf.mxu0
  %v2632 = vadd.f32 %v2499, %v2631
  %2633 = vmatmul.bf16.gmra.mxu0 %v1121
  %v2634 = vpop.f32.mrf.mxu0
  %v2635 = vadd.f32 %v2502, %v2634
  %v2636 = vpop.f32.mrf.mxu0
  %2637 = vdwg.mxu0
  %2638 = vmatpush.bf16.msra.mxu0 %v1642
  %2639 = vmatpush.bf16.msra.mxu0 %v1641
  %2640 = vmatpush.bf16.msra.mxu0 %v1640
  %2641 = vmatpush.bf16.msra.mxu0 %v1639
  %2642 = vmatpush.bf16.msra.mxu0 %v1638
  %2643 = vmatpush.bf16.msra.mxu0 %v1637
  %2644 = vmatpush.bf16.msra.mxu0 %v1636
  %2645 = vmatpush.bf16.msra.mxu0 %v1635
  %2646 = vmatmul.bf16.gmra.mxu0 %v930
  %v2647 = vpop.f32.mrf.mxu0
  %v2648 = vadd.f32 %v2515, %v2647
  %v2649 = vpop.f32.mrf.mxu0
  %v2650 = vadd.f32 %v2517, %v2649
  %2651 = vmatmul.bf16.gmra.mxu0 %v938
  %v2652 = vpop.f32.mrf.mxu0
  %v2653 = vadd.f32 %v2520, %v2652
  %v2654 = vpop.f32.mrf.mxu0
  %v2655 = vadd.f32 %v2522, %v2654
  %2656 = vmatmul.bf16.gmra.mxu0 %v946
  %v2657 = vpop.f32.mrf.mxu0
  %v2658 = vadd.f32 %v2525, %v2657
  %v2659 = vpop.f32.mrf.mxu0
  %v2660 = vadd.f32 %v2527, %v2659
  %2661 = vmatmul.bf16.gmra.mxu0 %v954
  %v2662 = vpop.f32.mrf.mxu0
  %v2663 = vadd.f32 %v2530, %v2662
  %v2664 = vpop.f32.mrf.mxu0
  %v2665 = vadd.f32 %v2532, %v2664
  %2666 = vmatmul.bf16.gmra.mxu0 %v962
  %v2667 = vpop.f32.mrf.mxu0
  %v2668 = vadd.f32 %v2535, %v2667
  %v2669 = vpop.f32.mrf.mxu0
  %v2670 = vadd.f32 %v2537, %v2669
  %2671 = vmatmul.bf16.gmra.mxu0 %v970
  %v2672 = vpop.f32.mrf.mxu0
  %v2673 = vadd.f32 %v2540, %v2672
  %v2674 = vpop.f32.mrf.mxu0
  %v2675 = vadd.f32 %v2542, %v2674
  %2676 = vmatmul.bf16.gmra.mxu0 %v978
  %v2677 = vpop.f32.mrf.mxu0
  %v2678 = vadd.f32 %v2545, %v2677
  %v2679 = vpop.f32.mrf.mxu0
  %v2680 = vadd.f32 %v2547, %v2679
  %2681 = vmatmul.bf16.gmra.mxu0 %v986
  %v2682 = vpop.f32.mrf.mxu0
  %v2683 = vadd.f32 %v2550, %v2682
  %v2684 = vpop.f32.mrf.mxu0
  %v2685 = vadd.f32 %v2552, %v2684
  %2686 = vmatmul.bf16.gmra.mxu0 %v994
  %v2687 = vpop.f32.mrf.mxu0
  %v2688 = vadd.f32 %v2555, %v2687
  %v2689 = vpop.f32.mrf.mxu0
  %v2690 = vadd.f32 %v2557, %v2689
  %2691 = vmatmul.bf16.gmra.mxu0 %v1002
  %v2692 = vpop.f32.mrf.mxu0
  %v2693 = vadd.f32 %v2560, %v2692
  %v2694 = vpop.f32.mrf.mxu0
  %v2695 = vadd.f32 %v2562, %v2694
  %2696 = vmatmul.bf16.gmra.mxu0 %v1010
  %v2697 = vpop.f32.mrf.mxu0
  %v2698 = vadd.f32 %v2565, %v2697
  %v2699 = vpop.f32.mrf.mxu0
  %v2700 = vadd.f32 %v2567, %v2699
  %2701 = vmatmul.bf16.gmra.mxu0 %v1018
  %v2702 = vpop.f32.mrf.mxu0
  %v2703 = vadd.f32 %v2570, %v2702
  %v2704 = vpop.f32.mrf.mxu0
  %v2705 = vadd.f32 %v2572, %v2704
  %2706 = vmatmul.bf16.gmra.mxu0 %v1026
  %v2707 = vpop.f32.mrf.mxu0
  %v2708 = vadd.f32 %v2575, %v2707
  %v2709 = vpop.f32.mrf.mxu0
  %v2710 = vadd.f32 %v2577, %v2709
  %2711 = vmatmul.bf16.gmra.mxu0 %v1034
  %v2712 = vpop.f32.mrf.mxu0
  %v2713 = vadd.f32 %v2580, %v2712
  %v2714 = vpop.f32.mrf.mxu0
  %v2715 = vadd.f32 %v2582, %v2714
  %2716 = vmatmul.bf16.gmra.mxu0 %v1042
  %v2717 = vpop.f32.mrf.mxu0
  %v2718 = vadd.f32 %v2585, %v2717
  %v2719 = vpop.f32.mrf.mxu0
  %v2720 = vadd.f32 %v2587, %v2719
  %2721 = vmatmul.bf16.gmra.mxu0 %v1050
  %v2722 = vpop.f32.mrf.mxu0
  %v2723 = vadd.f32 %v2590, %v2722
  %v2724 = vpop.f32.mrf.mxu0
  %v2725 = vadd.f32 %v2592, %v2724
  %2726 = vmatmul.bf16.gmra.mxu0 %v1058
  %v2727 = vpop.f32.mrf.mxu0
  %v2728 = vadd.f32 %v2595, %v2727
  %v2729 = vpop.f32.mrf.mxu0
  %v2730 = vadd.f32 %v2597, %v2729
  %2731 = vmatmul.bf16.gmra.mxu0 %v1066
  %v2732 = vpop.f32.mrf.mxu0
  %v2733 = vadd.f32 %v2600, %v2732
  %v2734 = vpop.f32.mrf.mxu0
  %v2735 = vadd.f32 %v2602, %v2734
  %2736 = vmatmul.bf16.gmra.mxu0 %v1074
  %v2737 = vpop.f32.mrf.mxu0
  %v2738 = vadd.f32 %v2605, %v2737
  %v2739 = vpop.f32.mrf.mxu0
  %v2740 = vadd.f32 %v2607, %v2739
  %2741 = vmatmul.bf16.gmra.mxu0 %v1082
  %v2742 = vpop.f32.mrf.mxu0
  %v2743 = vadd.f32 %v2610, %v2742
  %v2744 = vpop.f32.mrf.mxu0
  %v2745 = vadd.f32 %v2612, %v2744
  %2746 = vmatmul.bf16.gmra.mxu0 %v1090
  %v2747 = vpop.f32.mrf.mxu0
  %v2748 = vadd.f32 %v2615, %v2747
  %v2749 = vpop.f32.mrf.mxu0
  %v2750 = vadd.f32 %v2617, %v2749
  %2751 = vmatmul.bf16.gmra.mxu0 %v1098
  %v2752 = vpop.f32.mrf.mxu0
  %v2753 = vadd.f32 %v2620, %v2752
  %v2754 = vpop.f32.mrf.mxu0
  %v2755 = vadd.f32 %v2622, %v2754
  %2756 = vmatmul.bf16.gmra.mxu0 %v1106
  %v2757 = vpop.f32.mrf.mxu0
  %v2758 = vadd.f32 %v2625, %v2757
  %v2759 = vpop.f32.mrf.mxu0
  %v2760 = vadd.f32 %v2627, %v2759
  %2761 = vmatmul.bf16.gmra.mxu0 %v1114
  %v2762 = vpop.f32.mrf.mxu0
  %v2763 = vadd.f32 %v2630, %v2762
  %v2764 = vpop.f32.mrf.mxu0
  %v2765 = vadd.f32 %v2632, %v2764
  %2766 = vmatmul.bf16.gmra.mxu0 %v1122
  %v2767 = vpop.f32.mrf.mxu0
  %v2768 = vadd.f32 %v2635, %v2767
  %v2769 = vpop.f32.mrf.mxu0
  %2770 = vdwg.mxu0
  %2771 = vst [vmem:[%s2] sm:$0xff] %v2648
  %2772 = vst [vmem:[%s2 + $0x8] sm:$0xff] %v2650
  %2773 = vst [vmem:[%s2 + $0x10] sm:$0xff] %v2653
  %2774 = vst [vmem:[%s2 + $0x18] sm:$0xff] %v2655
  %2775 = vst [vmem:[%s2 + $0x20] sm:$0xff] %v2658
  %2776 = vst [vmem:[%s2 + $0x28] sm:$0xff] %v2660
  %2777 = vst [vmem:[%s2 + $0x30] sm:$0xff] %v2663
  %2778 = vst [vmem:[%s2 + $0x38] sm:$0xff] %v2665
  %2779 = vst [vmem:[%s2 + $0x40] sm:$0xff] %v2668
  %2780 = vst [vmem:[%s2 + $0x48] sm:$0xff] %v2670
  %2781 = vst [vmem:[%s2 + $0x50] sm:$0xff] %v2673
  %2782 = vst [vmem:[%s2 + $0x58] sm:$0xff] %v2675
  %2783 = vst [vmem:[%s2 + $0x60] sm:$0xff] %v2678
  %2784 = vst [vmem:[%s2 + $0x68] sm:$0xff] %v2680
  %2785 = vst [vmem:[%s2 + $0x70] sm:$0xff] %v2683
  %2786 = vst [vmem:[%s2 + $0x78] sm:$0xff] %v2685
  %2787 = vst [vmem:[%s2 + $0x80] sm:$0xff] %v2688
  %2788 = vst [vmem:[%s2 + $0x88] sm:$0xff] %v2690
  %2789 = vst [vmem:[%s2 + $0x90] sm:$0xff] %v2693
  %2790 = vst [vmem:[%s2 + $0x98] sm:$0xff] %v2695
  %2791 = vst [vmem:[%s2 + $0xa0] sm:$0xff] %v2698
  %2792 = vst [vmem:[%s2 + $0xa8] sm:$0xff] %v2700
  %2793 = vst [vmem:[%s2 + $0xb0] sm:$0xff] %v2703
  %2794 = vst [vmem:[%s2 + $0xb8] sm:$0xff] %v2705
  %2795 = vst [vmem:[%s2 + $0xc0] sm:$0xff] %v2708
  %2796 = vst [vmem:[%s2 + $0xc8] sm:$0xff] %v2710
  %2797 = vst [vmem:[%s2 + $0xd0] sm:$0xff] %v2713
  %2798 = vst [vmem:[%s2 + $0xd8] sm:$0xff] %v2715
  %2799 = vst [vmem:[%s2 + $0xe0] sm:$0xff] %v2718
  %2800 = vst [vmem:[%s2 + $0xe8] sm:$0xff] %v2720
  %2801 = vst [vmem:[%s2 + $0xf0] sm:$0xff] %v2723
  %2802 = vst [vmem:[%s2 + $0xf8] sm:$0xff] %v2725
  %2803 = vst [vmem:[%s2 + $0x100] sm:$0xff] %v2728
  %2804 = vst [vmem:[%s2 + $0x108] sm:$0xff] %v2730
  %2805 = vst [vmem:[%s2 + $0x110] sm:$0xff] %v2733
  %2806 = vst [vmem:[%s2 + $0x118] sm:$0xff] %v2735
  %2807 = vst [vmem:[%s2 + $0x120] sm:$0xff] %v2738
  %2808 = vst [vmem:[%s2 + $0x128] sm:$0xff] %v2740
  %2809 = vst [vmem:[%s2 + $0x130] sm:$0xff] %v2743
  %2810 = vst [vmem:[%s2 + $0x138] sm:$0xff] %v2745
  %2811 = vst [vmem:[%s2 + $0x140] sm:$0xff] %v2748
  %2812 = vst [vmem:[%s2 + $0x148] sm:$0xff] %v2750
  %2813 = vst [vmem:[%s2 + $0x150] sm:$0xff] %v2753
  %2814 = vst [vmem:[%s2 + $0x158] sm:$0xff] %v2755
  %2815 = vst [vmem:[%s2 + $0x160] sm:$0xff] %v2758
  %2816 = vst [vmem:[%s2 + $0x168] sm:$0xff] %v2760
  %2817 = vst [vmem:[%s2 + $0x170] sm:$0xff] %v2763
  %2818 = vst [vmem:[%s2 + $0x178] sm:$0xff] %v2765
  %2819 = vst [vmem:[%s2 + $0x180] sm:$0xff] %v2768
  // Predicated region
  $region10: #{discriminator_forward.6} parent=0 // pred_check
    _
  $region11: #{discriminator_forward.6} parent=0 // pred_check_branch
    %2821 = sbr.rel (0) target = $region13
  $region12: #{discriminator_forward.6} parent=0 // pred_region
    _
  $region13: #{discriminator_forward.6} parent=0 // pred_fallthru
    _
  // Predicated region
  $region14: #{discriminator_forward.6} parent=0 // pred_check
    _
  $region15: #{discriminator_forward.6} parent=0 // pred_check_branch
    %2823 = sbr.rel (0) target = $region17
  $region16: #{discriminator_forward.6} parent=0 // pred_region
    _
  $region17: #{discriminator_forward.6} parent=0 // pred_fallthru
    _

// kernel: discriminator_forward.8
$region0: #{discriminator_forward.8}
  #allocation0 [shape = 'u32[]', space=smem, size = 0x4, offset = 0x4, fixed_abs, tag = 'smem constant byte address 0x4 - core index']
  #allocation1 [shape = 'u32[72,128]{1,0:T(1,128)}', space=vmem, size = 0x9000, scoped, tag = 'internal scratch']
  %s0 = inlined_call_operand.vmem [shape: bf16[8,6272], index: 0, kind: input, shape index: {}]
  %s1 = inlined_call_operand.vmem [shape: bf16[6272,1024], index: 1, kind: input, shape index: {}]
  %s2 = inlined_call_operand.vmem [shape: f32[8,1024], index: 2, kind: output, shape index: {}]
  %s3 = sld [smem:[#allocation0]]
  $region68: #{discriminator_forward.8} parent=0
    _
  %s5 = ssub.s32 1, %s3
  %s6 = scalar_select 0, %s5, %s3
  $region1: #{discriminator_forward.8} parent=0
    #allocation2 [shape = 'u8[1835008]{0}', space=vmem, size = 0x1c0000, scoped, tag = 'input window, operand 1']
    loop: start=0, step=1, limit=16
    $region2: #{discriminator_forward.8} parent=1 // loop_pre_header
      _
    $region3: #{discriminator_forward.8} parent=1 // loop_header
      %s8 = sphi 0, %s12
      %p9 = scmp.ge.s32.totalorder %s8, 16
      %s15 = sphi 0, %s34
      %s16 = sphi 0, %s30
      %s17 = sphi 0, %s26
      %s18 = sphi 0, %s15
      %s19 = sphi 0, %s16
      %s20 = sphi 0, %s17
      %s21 = sphi 0, %s18
      %s22 = sphi 0, %s19
      %s23 = sphi 0, %s20
      %s39 = sphi 0, %s41
      %s42 = sphi 0, %s39
      %s43 = sphi 0, %s42
      %s59 = sphi 0, %s43
      %s67 = sphi 0, %s69
      %s70 = sphi 0, %s67
      %s71 = sphi 0, %s70
      %s87 = sphi 0, %s71
      %s95 = sphi 0, %s97
      %s98 = sphi 0, %s95
      %s99 = sphi 0, %s98
      %s115 = sphi 0, %s99
    $region4: #{discriminator_forward.8} parent=1 // loop_header_branch
      %11 = sbr.rel (%p9) target = $region8
    $region5: #{discriminator_forward.8} parent=1 // loop_body
      %s13 = ssub.s32 %s8, 1
      %s14 = ssub.s32 %s8, 2
      %s24 = sadd.s32 1, %s17
      %p25 = scmp.ge.s32.totalorder %s24, 7
      %s26 = scalar_select %p25, 0, %s24
      %s27 = sadd.s32 1, %s16
      %s28 = scalar_select %p25, %s27, %s16
      %p29 = scmp.ge.s32.totalorder %s28, 2
      %s30 = scalar_select %p29, 0, %s28
      %s31 = sadd.s32 1, %s15
      %s32 = scalar_select %p29, %s31, %s15
      %p33 = scmp.ge.s32.totalorder %s32, 1
      %s34 = scalar_select %p33, 0, %s32
      %s35 = ssub.s32 %s15, %s34
      %s36 = ssub.s32 %s17, %s26
      %s37 = sor.u32 %s35, %s36
      %p38 = scmp.eq.s32.totalorder %s37, 0
      %s40 = sadd.s32 %s39, 1
      %s41 = scalar_select %p38, %s39, %s40
      %p44 = pneg %p38
      %p45 = scmp.eq.s32.totalorder %s8, 13
      %p46 = por %p44, %p45
      %p47 = scmp.ne.s32.totalorder %s39, %s42
      %p48 = scmp.eq.s32.totalorder %s8, 0
      %p49 = por %p47, %p48
      %p50 = scmp.ne.s32.totalorder %s39, %s42
      %p51 = scmp.eq.s32.totalorder %s13, 13
      %p52 = por %p50, %p51
      %p53 = scmp.ne.s32.totalorder %s42, %s43
      %p54 = scmp.eq.s32.totalorder %s13, 0
      %p55 = por %p53, %p54
      %p56 = scmp.ne.s32.totalorder %s42, %s43
      %p57 = scmp.eq.s32.totalorder %s14, 13
      %p58 = por %p56, %p57
      %p60 = scmp.ne.s32.totalorder %s43, %s59
      %p61 = scmp.eq.s32.totalorder %s14, 0
      %p62 = por %p60, %p61
      %s63 = ssub.s32 %s17, %s26
      %s64 = ssub.s32 %s16, %s30
      %s65 = sor.u32 %s63, %s64
      %p66 = scmp.eq.s32.totalorder %s65, 0
      %s68 = sadd.s32 %s67, 1
      %s69 = scalar_select %p66, %s67, %s68
      %p72 = pneg %p66
      %p73 = scmp.eq.s32.totalorder %s8, 13
      %p74 = por %p72, %p73
      %p75 = scmp.ne.s32.totalorder %s67, %s70
      %p76 = scmp.eq.s32.totalorder %s8, 0
      %p77 = por %p75, %p76
      %p78 = scmp.ne.s32.totalorder %s67, %s70
      %p79 = scmp.eq.s32.totalorder %s13, 13
      %p80 = por %p78, %p79
      %p81 = scmp.ne.s32.totalorder %s70, %s71
      %p82 = scmp.eq.s32.totalorder %s13, 0
      %p83 = por %p81, %p82
      %p84 = scmp.ne.s32.totalorder %s70, %s71
      %p85 = scmp.eq.s32.totalorder %s14, 13
      %p86 = por %p84, %p85
      %p88 = scmp.ne.s32.totalorder %s71, %s87
      %p89 = scmp.eq.s32.totalorder %s14, 0
      %p90 = por %p88, %p89
      %s91 = ssub.s32 %s15, %s34
      %s92 = ssub.s32 %s16, %s30
      %s93 = sor.u32 %s91, %s92
      %p94 = scmp.eq.s32.totalorder %s93, 0
      %s96 = sadd.s32 %s95, 1
      %s97 = scalar_select %p94, %s95, %s96
      %p100 = pneg %p94
      %p101 = scmp.eq.s32.totalorder %s8, 13
      %p102 = por %p100, %p101
      %p103 = scmp.ne.s32.totalorder %s95, %s98
      %p104 = scmp.eq.s32.totalorder %s8, 0
      %p105 = por %p103, %p104
      %p106 = scmp.ne.s32.totalorder %s95, %s98
      %p107 = scmp.eq.s32.totalorder %s13, 13
      %p108 = por %p106, %p107
      %p109 = scmp.ne.s32.totalorder %s98, %s99
      %p110 = scmp.eq.s32.totalorder %s13, 0
      %p111 = por %p109, %p110
      %p112 = scmp.ne.s32.totalorder %s98, %s99
      %p113 = scmp.eq.s32.totalorder %s14, 13
      %p114 = por %p112, %p113
      %p116 = scmp.ne.s32.totalorder %s99, %s115
      %p117 = scmp.eq.s32.totalorder %s14, 0
      %p118 = por %p116, %p117
      %p119 = scmp.le.s32.totalorder 1, %s8
      %p120 = scmp.lt.s32.totalorder %s8, 15
      %p121 = pnand %p119, %p120
      %p122 = pneg %p121
      // Predicated region
      $region9: #{discriminator_forward.8} parent=5 // pred_check
        _
      $region10: #{discriminator_forward.8} parent=5 // pred_check_branch
        %124 = sbr.rel (%p121) target = $region12
      $region11: #{discriminator_forward.8} parent=5 // pred_region
        %s125 = ssub.s32 %s8, 1
      $region12: #{discriminator_forward.8} parent=5 // pred_fallthru
        _
      %p126 = scmp.lt.s32.totalorder %s8, 14
      // Predicated region
      $region13: #{discriminator_forward.8} parent=5 // pred_check
        %p127 = pneg %p126
      $region14: #{discriminator_forward.8} parent=5 // pred_check_branch
        %129 = sbr.rel (%p127) target = $region16
      $region15: #{discriminator_forward.8} parent=5 // pred_region
        // Predicated region
        $region17: #{discriminator_forward.8} parent=15 // pred_check
          %p130 = pneg %p49
        $region18: #{discriminator_forward.8} parent=15 // pred_check_branch
          %132 = sbr.rel (%p130) target = $region20
        $region19: #{discriminator_forward.8} parent=15 // pred_region
          %s133 = smul.u32 7, %s17
          %p134 = scmp.lt.s32.totalorder %s15, 0
          %s135 = scalar_select %p134, %s15, 0
          %p136 = scmp.lt.s32.totalorder %s133, 48
          %s137 = scalar_select %p136, %s133, 48
          %s138 = smul.addr %s135, 49
          %s139 = sadd.s32 %s137, %s138
          %s140 = smul.addr %s139, 4
          %s141 = scalar_lea.vmem %s0, %s140
          %s142 = smul.u32 7, %s17
        $region20: #{discriminator_forward.8} parent=15 // pred_fallthru
          _
        // Predicated region
        $region21: #{discriminator_forward.8} parent=15 // pred_check
          %p143 = pneg %p77
        $region22: #{discriminator_forward.8} parent=15 // pred_check_branch
          %145 = sbr.rel (%p143) target = $region24
        $region23: #{discriminator_forward.8} parent=15 // pred_region
          %s146 = sand.u32 %s67, 1
          %s147 = sand.u32 %s67, 1
          %s148 = smul.addr %s147, 1792
          %s149 = scalar_lea.vmem [#allocation2], %s148
          %s150 = smul.u32 112, %s17
          %s151 = smul.u32 4, %s16
          %s152 = smul.addr %s150, 8
          %s153 = sadd.s32 %s151, %s152
          %s154 = smul.addr %s153, 4
          %s155 = scalar_lea.vmem %s1, %s154
          // Predicated region
          $region25: #{discriminator_forward.8} parent=23 // pred_check
            _
          $region26: #{discriminator_forward.8} parent=23 // pred_check_branch
            %157 = sbr.rel (0) target = $region28
          $region27: #{discriminator_forward.8} parent=23 // pred_region
            // Predicated region
            $region29: #{discriminator_forward.8} parent=27 // pred_check
              _
            $region30: #{discriminator_forward.8} parent=27 // pred_check_branch
              %159 = sbr.rel (0) target = $region32
            $region31: #{discriminator_forward.8} parent=27 // pred_region
              loop: start=0, step=1, limit=1
              $region33: #{discriminator_forward.8} parent=31 // loop_pre_header
                _
              $region34: #{discriminator_forward.8} parent=31 // loop_header
                %s161 = sphi 0, %s165
                %p162 = scmp.ge.s32.totalorder %s161, 1
                %s166 = sphi %s155, %s155
                %s167 = sphi %s149, %s149
              $region35: #{discriminator_forward.8} parent=31 // loop_header_branch
                %164 = sbr.rel (%p162) target = $region39
              $region36: #{discriminator_forward.8} parent=31 // loop_body
                %v168 = vld [vmem:[%s166] sm:$0xff]
                %169 = vst [vmem:[%s167] sm:$0xff] %v168
                %v170 = vld [vmem:[%s166 + $0x8] sm:$0xff]
                %171 = vst [vmem:[%s167 + $0x8] sm:$0xff] %v170
                %v172 = vld [vmem:[%s166 + $0x20] sm:$0xff]
                %173 = vst [vmem:[%s167 + $0x10] sm:$0xff] %v172
                %v174 = vld [vmem:[%s166 + $0x28] sm:$0xff]
                %175 = vst [vmem:[%s167 + $0x18] sm:$0xff] %v174
                %v176 = vld [vmem:[%s166 + $0x40] sm:$0xff]
                %177 = vst [vmem:[%s167 + $0x20] sm:$0xff] %v176
                %v178 = vld [vmem:[%s166 + $0x48] sm:$0xff]
                %179 = vst [vmem:[%s167 + $0x28] sm:$0xff] %v178
                %v180 = vld [vmem:[%s166 + $0x60] sm:$0xff]
                %181 = vst [vmem:[%s167 + $0x30] sm:$0xff] %v180
                %v182 = vld [vmem:[%s166 + $0x68] sm:$0xff]
                %183 = vst [vmem:[%s167 + $0x38] sm:$0xff] %v182
                %v184 = vld [vmem:[%s166 + $0x80] sm:$0xff]
                %185 = vst [vmem:[%s167 + $0x40] sm:$0xff] %v184
                %v186 = vld [vmem:[%s166 + $0x88] sm:$0xff]
                %187 = vst [vmem:[%s167 + $0x48] sm:$0xff] %v186
                %v188 = vld [vmem:[%s166 + $0xa0] sm:$0xff]
                %189 = vst [vmem:[%s167 + $0x50] sm:$0xff] %v188
                %v190 = vld [vmem:[%s166 + $0xa8] sm:$0xff]
                %191 = vst [vmem:[%s167 + $0x58] sm:$0xff] %v190
                %v192 = vld [vmem:[%s166 + $0xc0] sm:$0xff]
                %193 = vst [vmem:[%s167 + $0x60] sm:$0xff] %v192
                %v194 = vld [vmem:[%s166 + $0xc8] sm:$0xff]
                %195 = vst [vmem:[%s167 + $0x68] sm:$0xff] %v194
                %v196 = vld [vmem:[%s166 + $0xe0] sm:$0xff]
                %197 = vst [vmem:[%s167 + $0x70] sm:$0xff] %v196
                %v198 = vld [vmem:[%s166 + $0xe8] sm:$0xff]
                %199 = vst [vmem:[%s167 + $0x78] sm:$0xff] %v198
                %v200 = vld [vmem:[%s166 + $0x100] sm:$0xff]
                %201 = vst [vmem:[%s167 + $0x80] sm:$0xff] %v200
                %v202 = vld [vmem:[%s166 + $0x108] sm:$0xff]
                %203 = vst [vmem:[%s167 + $0x88] sm:$0xff] %v202
                %v204 = vld [vmem:[%s166 + $0x120] sm:$0xff]
                %205 = vst [vmem:[%s167 + $0x90] sm:$0xff] %v204
                %v206 = vld [vmem:[%s166 + $0x128] sm:$0xff]
                %207 = vst [vmem:[%s167 + $0x98] sm:$0xff] %v206
                %v208 = vld [vmem:[%s166 + $0x140] sm:$0xff]
                %209 = vst [vmem:[%s167 + $0xa0] sm:$0xff] %v208
                %v210 = vld [vmem:[%s166 + $0x148] sm:$0xff]
                %211 = vst [vmem:[%s167 + $0xa8] sm:$0xff] %v210
                %v212 = vld [vmem:[%s166 + $0x160] sm:$0xff]
                %213 = vst [vmem:[%s167 + $0xb0] sm:$0xff] %v212
                %v214 = vld [vmem:[%s166 + $0x168] sm:$0xff]
                %215 = vst [vmem:[%s167 + $0xb8] sm:$0xff] %v214
                %v216 = vld [vmem:[%s166 + $0x180] sm:$0xff]
                %217 = vst [vmem:[%s167 + $0xc0] sm:$0xff] %v216
                %v218 = vld [vmem:[%s166 + $0x188] sm:$0xff]
                %219 = vst [vmem:[%s167 + $0xc8] sm:$0xff] %v218
                %v220 = vld [vmem:[%s166 + $0x1a0] sm:$0xff]
                %221 = vst [vmem:[%s167 + $0xd0] sm:$0xff] %v220
                %v222 = vld [vmem:[%s166 + $0x1a8] sm:$0xff]
                %223 = vst [vmem:[%s167 + $0xd8] sm:$0xff] %v222
                %v224 = vld [vmem:[%s166 + $0x1c0] sm:$0xff]
                %225 = vst [vmem:[%s167 + $0xe0] sm:$0xff] %v224
                %v226 = vld [vmem:[%s166 + $0x1c8] sm:$0xff]
                %227 = vst [vmem:[%s167 + $0xe8] sm:$0xff] %v226
                %v228 = vld [vmem:[%s166 + $0x1e0] sm:$0xff]
                %229 = vst [vmem:[%s167 + $0xf0] sm:$0xff] %v228
                %v230 = vld [vmem:[%s166 + $0x1e8] sm:$0xff]
                %231 = vst [vmem:[%s167 + $0xf8] sm:$0xff] %v230
                %v232 = vld [vmem:[%s166 + $0x200] sm:$0xff]
                %233 = vst [vmem:[%s167 + $0x100] sm:$0xff] %v232
                %v234 = vld [vmem:[%s166 + $0x208] sm:$0xff]
                %235 = vst [vmem:[%s167 + $0x108] sm:$0xff] %v234
                %v236 = vld [vmem:[%s166 + $0x220] sm:$0xff]
                %237 = vst [vmem:[%s167 + $0x110] sm:$0xff] %v236
                %v238 = vld [vmem:[%s166 + $0x228] sm:$0xff]
                %239 = vst [vmem:[%s167 + $0x118] sm:$0xff] %v238
                %v240 = vld [vmem:[%s166 + $0x240] sm:$0xff]
                %241 = vst [vmem:[%s167 + $0x120] sm:$0xff] %v240
                %v242 = vld [vmem:[%s166 + $0x248] sm:$0xff]
                %243 = vst [vmem:[%s167 + $0x128] sm:$0xff] %v242
                %v244 = vld [vmem:[%s166 + $0x260] sm:$0xff]
                %245 = vst [vmem:[%s167 + $0x130] sm:$0xff] %v244
                %v246 = vld [vmem:[%s166 + $0x268] sm:$0xff]
                %247 = vst [vmem:[%s167 + $0x138] sm:$0xff] %v246
                %v248 = vld [vmem:[%s166 + $0x280] sm:$0xff]
                %249 = vst [vmem:[%s167 + $0x140] sm:$0xff] %v248
                %v250 = vld [vmem:[%s166 + $0x288] sm:$0xff]
                %251 = vst [vmem:[%s167 + $0x148] sm:$0xff] %v250
                %v252 = vld [vmem:[%s166 + $0x2a0] sm:$0xff]
                %253 = vst [vmem:[%s167 + $0x150] sm:$0xff] %v252
                %v254 = vld [vmem:[%s166 + $0x2a8] sm:$0xff]
                %255 = vst [vmem:[%s167 + $0x158] sm:$0xff] %v254
                %v256 = vld [vmem:[%s166 + $0x2c0] sm:$0xff]
                %257 = vst [vmem:[%s167 + $0x160] sm:$0xff] %v256
                %v258 = vld [vmem:[%s166 + $0x2c8] sm:$0xff]
                %259 = vst [vmem:[%s167 + $0x168] sm:$0xff] %v258
                %v260 = vld [vmem:[%s166 + $0x2e0] sm:$0xff]
                %261 = vst [vmem:[%s167 + $0x170] sm:$0xff] %v260
                %v262 = vld [vmem:[%s166 + $0x2e8] sm:$0xff]
                %263 = vst [vmem:[%s167 + $0x178] sm:$0xff] %v262
                %v264 = vld [vmem:[%s166 + $0x300] sm:$0xff]
                %265 = vst [vmem:[%s167 + $0x180] sm:$0xff] %v264
                %v266 = vld [vmem:[%s166 + $0x308] sm:$0xff]
                %267 = vst [vmem:[%s167 + $0x188] sm:$0xff] %v266
                %v268 = vld [vmem:[%s166 + $0x320] sm:$0xff]
                %269 = vst [vmem:[%s167 + $0x190] sm:$0xff] %v268
                %v270 = vld [vmem:[%s166 + $0x328] sm:$0xff]
                %271 = vst [vmem:[%s167 + $0x198] sm:$0xff] %v270
                %v272 = vld [vmem:[%s166 + $0x340] sm:$0xff]
                %273 = vst [vmem:[%s167 + $0x1a0] sm:$0xff] %v272
                %v274 = vld [vmem:[%s166 + $0x348] sm:$0xff]
                %275 = vst [vmem:[%s167 + $0x1a8] sm:$0xff] %v274
                %v276 = vld [vmem:[%s166 + $0x360] sm:$0xff]
                %277 = vst [vmem:[%s167 + $0x1b0] sm:$0xff] %v276
                %v278 = vld [vmem:[%s166 + $0x368] sm:$0xff]
                %279 = vst [vmem:[%s167 + $0x1b8] sm:$0xff] %v278
                %v280 = vld [vmem:[%s166 + $0x380] sm:$0xff]
                %281 = vst [vmem:[%s167 + $0x1c0] sm:$0xff] %v280
                %v282 = vld [vmem:[%s166 + $0x388] sm:$0xff]
                %283 = vst [vmem:[%s167 + $0x1c8] sm:$0xff] %v282
                %v284 = vld [vmem:[%s166 + $0x3a0] sm:$0xff]
                %285 = vst [vmem:[%s167 + $0x1d0] sm:$0xff] %v284
                %v286 = vld [vmem:[%s166 + $0x3a8] sm:$0xff]
                %287 = vst [vmem:[%s167 + $0x1d8] sm:$0xff] %v286
                %v288 = vld [vmem:[%s166 + $0x3c0] sm:$0xff]
                %289 = vst [vmem:[%s167 + $0x1e0] sm:$0xff] %v288
                %v290 = vld [vmem:[%s166 + $0x3c8] sm:$0xff]
                %291 = vst [vmem:[%s167 + $0x1e8] sm:$0xff] %v290
                %v292 = vld [vmem:[%s166 + $0x3e0] sm:$0xff]
                %293 = vst [vmem:[%s167 + $0x1f0] sm:$0xff] %v292
                %v294 = vld [vmem:[%s166 + $0x3e8] sm:$0xff]
                %295 = vst [vmem:[%s167 + $0x1f8] sm:$0xff] %v294
                %v296 = vld [vmem:[%s166 + $0x400] sm:$0xff]
                %297 = vst [vmem:[%s167 + $0x200] sm:$0xff] %v296
                %v298 = vld [vmem:[%s166 + $0x408] sm:$0xff]
                %299 = vst [vmem:[%s167 + $0x208] sm:$0xff] %v298
                %v300 = vld [vmem:[%s166 + $0x420] sm:$0xff]
                %301 = vst [vmem:[%s167 + $0x210] sm:$0xff] %v300
                %v302 = vld [vmem:[%s166 + $0x428] sm:$0xff]
                %303 = vst [vmem:[%s167 + $0x218] sm:$0xff] %v302
                %v304 = vld [vmem:[%s166 + $0x440] sm:$0xff]
                %305 = vst [vmem:[%s167 + $0x220] sm:$0xff] %v304
                %v306 = vld [vmem:[%s166 + $0x448] sm:$0xff]
                %307 = vst [vmem:[%s167 + $0x228] sm:$0xff] %v306
                %v308 = vld [vmem:[%s166 + $0x460] sm:$0xff]
                %309 = vst [vmem:[%s167 + $0x230] sm:$0xff] %v308
                %v310 = vld [vmem:[%s166 + $0x468] sm:$0xff]
                %311 = vst [vmem:[%s167 + $0x238] sm:$0xff] %v310
                %v312 = vld [vmem:[%s166 + $0x480] sm:$0xff]
                %313 = vst [vmem:[%s167 + $0x240] sm:$0xff] %v312
                %v314 = vld [vmem:[%s166 + $0x488] sm:$0xff]
                %315 = vst [vmem:[%s167 + $0x248] sm:$0xff] %v314
                %v316 = vld [vmem:[%s166 + $0x4a0] sm:$0xff]
                %317 = vst [vmem:[%s167 + $0x250] sm:$0xff] %v316
                %v318 = vld [vmem:[%s166 + $0x4a8] sm:$0xff]
                %319 = vst [vmem:[%s167 + $0x258] sm:$0xff] %v318
                %v320 = vld [vmem:[%s166 + $0x4c0] sm:$0xff]
                %321 = vst [vmem:[%s167 + $0x260] sm:$0xff] %v320
                %v322 = vld [vmem:[%s166 + $0x4c8] sm:$0xff]
                %323 = vst [vmem:[%s167 + $0x268] sm:$0xff] %v322
                %v324 = vld [vmem:[%s166 + $0x4e0] sm:$0xff]
                %325 = vst [vmem:[%s167 + $0x270] sm:$0xff] %v324
                %v326 = vld [vmem:[%s166 + $0x4e8] sm:$0xff]
                %327 = vst [vmem:[%s167 + $0x278] sm:$0xff] %v326
                %v328 = vld [vmem:[%s166 + $0x500] sm:$0xff]
                %329 = vst [vmem:[%s167 + $0x280] sm:$0xff] %v328
                %v330 = vld [vmem:[%s166 + $0x508] sm:$0xff]
                %331 = vst [vmem:[%s167 + $0x288] sm:$0xff] %v330
                %v332 = vld [vmem:[%s166 + $0x520] sm:$0xff]
                %333 = vst [vmem:[%s167 + $0x290] sm:$0xff] %v332
                %v334 = vld [vmem:[%s166 + $0x528] sm:$0xff]
                %335 = vst [vmem:[%s167 + $0x298] sm:$0xff] %v334
                %v336 = vld [vmem:[%s166 + $0x540] sm:$0xff]
                %337 = vst [vmem:[%s167 + $0x2a0] sm:$0xff] %v336
                %v338 = vld [vmem:[%s166 + $0x548] sm:$0xff]
                %339 = vst [vmem:[%s167 + $0x2a8] sm:$0xff] %v338
                %v340 = vld [vmem:[%s166 + $0x560] sm:$0xff]
                %341 = vst [vmem:[%s167 + $0x2b0] sm:$0xff] %v340
                %v342 = vld [vmem:[%s166 + $0x568] sm:$0xff]
                %343 = vst [vmem:[%s167 + $0x2b8] sm:$0xff] %v342
                %v344 = vld [vmem:[%s166 + $0x580] sm:$0xff]
                %345 = vst [vmem:[%s167 + $0x2c0] sm:$0xff] %v344
                %v346 = vld [vmem:[%s166 + $0x588] sm:$0xff]
                %347 = vst [vmem:[%s167 + $0x2c8] sm:$0xff] %v346
                %v348 = vld [vmem:[%s166 + $0x5a0] sm:$0xff]
                %349 = vst [vmem:[%s167 + $0x2d0] sm:$0xff] %v348
                %v350 = vld [vmem:[%s166 + $0x5a8] sm:$0xff]
                %351 = vst [vmem:[%s167 + $0x2d8] sm:$0xff] %v350
                %v352 = vld [vmem:[%s166 + $0x5c0] sm:$0xff]
                %353 = vst [vmem:[%s167 + $0x2e0] sm:$0xff] %v352
                %v354 = vld [vmem:[%s166 + $0x5c8] sm:$0xff]
                %355 = vst [vmem:[%s167 + $0x2e8] sm:$0xff] %v354
                %v356 = vld [vmem:[%s166 + $0x5e0] sm:$0xff]
                %357 = vst [vmem:[%s167 + $0x2f0] sm:$0xff] %v356
                %v358 = vld [vmem:[%s166 + $0x5e8] sm:$0xff]
                %359 = vst [vmem:[%s167 + $0x2f8] sm:$0xff] %v358
                %v360 = vld [vmem:[%s166 + $0x600] sm:$0xff]
                %361 = vst [vmem:[%s167 + $0x300] sm:$0xff] %v360
                %v362 = vld [vmem:[%s166 + $0x608] sm:$0xff]
                %363 = vst [vmem:[%s167 + $0x308] sm:$0xff] %v362
                %v364 = vld [vmem:[%s166 + $0x620] sm:$0xff]
                %365 = vst [vmem:[%s167 + $0x310] sm:$0xff] %v364
                %v366 = vld [vmem:[%s166 + $0x628] sm:$0xff]
                %367 = vst [vmem:[%s167 + $0x318] sm:$0xff] %v366
                %v368 = vld [vmem:[%s166 + $0x640] sm:$0xff]
                %369 = vst [vmem:[%s167 + $0x320] sm:$0xff] %v368
                %v370 = vld [vmem:[%s166 + $0x648] sm:$0xff]
                %371 = vst [vmem:[%s167 + $0x328] sm:$0xff] %v370
                %v372 = vld [vmem:[%s166 + $0x660] sm:$0xff]
                %373 = vst [vmem:[%s167 + $0x330] sm:$0xff] %v372
                %v374 = vld [vmem:[%s166 + $0x668] sm:$0xff]
                %375 = vst [vmem:[%s167 + $0x338] sm:$0xff] %v374
                %v376 = vld [vmem:[%s166 + $0x680] sm:$0xff]
                %377 = vst [vmem:[%s167 + $0x340] sm:$0xff] %v376
                %v378 = vld [vmem:[%s166 + $0x688] sm:$0xff]
                %379 = vst [vmem:[%s167 + $0x348] sm:$0xff] %v378
                %v380 = vld [vmem:[%s166 + $0x6a0] sm:$0xff]
                %381 = vst [vmem:[%s167 + $0x350] sm:$0xff] %v380
                %v382 = vld [vmem:[%s166 + $0x6a8] sm:$0xff]
                %383 = vst [vmem:[%s167 + $0x358] sm:$0xff] %v382
                %v384 = vld [vmem:[%s166 + $0x6c0] sm:$0xff]
                %385 = vst [vmem:[%s167 + $0x360] sm:$0xff] %v384
                %v386 = vld [vmem:[%s166 + $0x6c8] sm:$0xff]
                %387 = vst [vmem:[%s167 + $0x368] sm:$0xff] %v386
                %v388 = vld [vmem:[%s166 + $0x6e0] sm:$0xff]
                %389 = vst [vmem:[%s167 + $0x370] sm:$0xff] %v388
                %v390 = vld [vmem:[%s166 + $0x6e8] sm:$0xff]
                %391 = vst [vmem:[%s167 + $0x378] sm:$0xff] %v390
                %v392 = vld [vmem:[%s166 + $0x700] sm:$0xff]
                %393 = vst [vmem:[%s167 + $0x380] sm:$0xff] %v392
                %v394 = vld [vmem:[%s166 + $0x708] sm:$0xff]
                %395 = vst [vmem:[%s167 + $0x388] sm:$0xff] %v394
                %v396 = vld [vmem:[%s166 + $0x720] sm:$0xff]
                %397 = vst [vmem:[%s167 + $0x390] sm:$0xff] %v396
                %v398 = vld [vmem:[%s166 + $0x728] sm:$0xff]
                %399 = vst [vmem:[%s167 + $0x398] sm:$0xff] %v398
                %v400 = vld [vmem:[%s166 + $0x740] sm:$0xff]
                %401 = vst [vmem:[%s167 + $0x3a0] sm:$0xff] %v400
                %v402 = vld [vmem:[%s166 + $0x748] sm:$0xff]
                %403 = vst [vmem:[%s167 + $0x3a8] sm:$0xff] %v402
                %v404 = vld [vmem:[%s166 + $0x760] sm:$0xff]
                %405 = vst [vmem:[%s167 + $0x3b0] sm:$0xff] %v404
                %v406 = vld [vmem:[%s166 + $0x768] sm:$0xff]
                %407 = vst [vmem:[%s167 + $0x3b8] sm:$0xff] %v406
                %v408 = vld [vmem:[%s166 + $0x780] sm:$0xff]
                %409 = vst [vmem:[%s167 + $0x3c0] sm:$0xff] %v408
                %v410 = vld [vmem:[%s166 + $0x788] sm:$0xff]
                %411 = vst [vmem:[%s167 + $0x3c8] sm:$0xff] %v410
                %v412 = vld [vmem:[%s166 + $0x7a0] sm:$0xff]
                %413 = vst [vmem:[%s167 + $0x3d0] sm:$0xff] %v412
                %v414 = vld [vmem:[%s166 + $0x7a8] sm:$0xff]
                %415 = vst [vmem:[%s167 + $0x3d8] sm:$0xff] %v414
                %v416 = vld [vmem:[%s166 + $0x7c0] sm:$0xff]
                %417 = vst [vmem:[%s167 + $0x3e0] sm:$0xff] %v416
                %v418 = vld [vmem:[%s166 + $0x7c8] sm:$0xff]
                %419 = vst [vmem:[%s167 + $0x3e8] sm:$0xff] %v418
                %v420 = vld [vmem:[%s166 + $0x7e0] sm:$0xff]
                %421 = vst [vmem:[%s167 + $0x3f0] sm:$0xff] %v420
                %v422 = vld [vmem:[%s166 + $0x7e8] sm:$0xff]
                %423 = vst [vmem:[%s167 + $0x3f8] sm:$0xff] %v422
                %v424 = vld [vmem:[%s166 + $0x800] sm:$0xff]
                %425 = vst [vmem:[%s167 + $0x400] sm:$0xff] %v424
                %v426 = vld [vmem:[%s166 + $0x808] sm:$0xff]
                %427 = vst [vmem:[%s167 + $0x408] sm:$0xff] %v426
                %v428 = vld [vmem:[%s166 + $0x820] sm:$0xff]
                %429 = vst [vmem:[%s167 + $0x410] sm:$0xff] %v428
                %v430 = vld [vmem:[%s166 + $0x828] sm:$0xff]
                %431 = vst [vmem:[%s167 + $0x418] sm:$0xff] %v430
                %v432 = vld [vmem:[%s166 + $0x840] sm:$0xff]
                %433 = vst [vmem:[%s167 + $0x420] sm:$0xff] %v432
                %v434 = vld [vmem:[%s166 + $0x848] sm:$0xff]
                %435 = vst [vmem:[%s167 + $0x428] sm:$0xff] %v434
                %v436 = vld [vmem:[%s166 + $0x860] sm:$0xff]
                %437 = vst [vmem:[%s167 + $0x430] sm:$0xff] %v436
                %v438 = vld [vmem:[%s166 + $0x868] sm:$0xff]
                %439 = vst [vmem:[%s167 + $0x438] sm:$0xff] %v438
                %v440 = vld [vmem:[%s166 + $0x880] sm:$0xff]
                %441 = vst [vmem:[%s167 + $0x440] sm:$0xff] %v440
                %v442 = vld [vmem:[%s166 + $0x888] sm:$0xff]
                %443 = vst [vmem:[%s167 + $0x448] sm:$0xff] %v442
                %v444 = vld [vmem:[%s166 + $0x8a0] sm:$0xff]
                %445 = vst [vmem:[%s167 + $0x450] sm:$0xff] %v444
                %v446 = vld [vmem:[%s166 + $0x8a8] sm:$0xff]
                %447 = vst [vmem:[%s167 + $0x458] sm:$0xff] %v446
                %v448 = vld [vmem:[%s166 + $0x8c0] sm:$0xff]
                %449 = vst [vmem:[%s167 + $0x460] sm:$0xff] %v448
                %v450 = vld [vmem:[%s166 + $0x8c8] sm:$0xff]
                %451 = vst [vmem:[%s167 + $0x468] sm:$0xff] %v450
                %v452 = vld [vmem:[%s166 + $0x8e0] sm:$0xff]
                %453 = vst [vmem:[%s167 + $0x470] sm:$0xff] %v452
                %v454 = vld [vmem:[%s166 + $0x8e8] sm:$0xff]
                %455 = vst [vmem:[%s167 + $0x478] sm:$0xff] %v454
                %v456 = vld [vmem:[%s166 + $0x900] sm:$0xff]
                %457 = vst [vmem:[%s167 + $0x480] sm:$0xff] %v456
                %v458 = vld [vmem:[%s166 + $0x908] sm:$0xff]
                %459 = vst [vmem:[%s167 + $0x488] sm:$0xff] %v458
                %v460 = vld [vmem:[%s166 + $0x920] sm:$0xff]
                %461 = vst [vmem:[%s167 + $0x490] sm:$0xff] %v460
                %v462 = vld [vmem:[%s166 + $0x928] sm:$0xff]
                %463 = vst [vmem:[%s167 + $0x498] sm:$0xff] %v462
                %v464 = vld [vmem:[%s166 + $0x940] sm:$0xff]
                %465 = vst [vmem:[%s167 + $0x4a0] sm:$0xff] %v464
                %v466 = vld [vmem:[%s166 + $0x948] sm:$0xff]
                %467 = vst [vmem:[%s167 + $0x4a8] sm:$0xff] %v466
                %v468 = vld [vmem:[%s166 + $0x960] sm:$0xff]
                %469 = vst [vmem:[%s167 + $0x4b0] sm:$0xff] %v468
                %v470 = vld [vmem:[%s166 + $0x968] sm:$0xff]
                %471 = vst [vmem:[%s167 + $0x4b8] sm:$0xff] %v470
                %v472 = vld [vmem:[%s166 + $0x980] sm:$0xff]
                %473 = vst [vmem:[%s167 + $0x4c0] sm:$0xff] %v472
                %v474 = vld [vmem:[%s166 + $0x988] sm:$0xff]
                %475 = vst [vmem:[%s167 + $0x4c8] sm:$0xff] %v474
                %v476 = vld [vmem:[%s166 + $0x9a0] sm:$0xff]
                %477 = vst [vmem:[%s167 + $0x4d0] sm:$0xff] %v476
                %v478 = vld [vmem:[%s166 + $0x9a8] sm:$0xff]
                %479 = vst [vmem:[%s167 + $0x4d8] sm:$0xff] %v478
                %v480 = vld [vmem:[%s166 + $0x9c0] sm:$0xff]
                %481 = vst [vmem:[%s167 + $0x4e0] sm:$0xff] %v480
                %v482 = vld [vmem:[%s166 + $0x9c8] sm:$0xff]
                %483 = vst [vmem:[%s167 + $0x4e8] sm:$0xff] %v482
                %v484 = vld [vmem:[%s166 + $0x9e0] sm:$0xff]
                %485 = vst [vmem:[%s167 + $0x4f0] sm:$0xff] %v484
                %v486 = vld [vmem:[%s166 + $0x9e8] sm:$0xff]
                %487 = vst [vmem:[%s167 + $0x4f8] sm:$0xff] %v486
                %v488 = vld [vmem:[%s166 + $0xa00] sm:$0xff]
                %489 = vst [vmem:[%s167 + $0x500] sm:$0xff] %v488
                %v490 = vld [vmem:[%s166 + $0xa08] sm:$0xff]
                %491 = vst [vmem:[%s167 + $0x508] sm:$0xff] %v490
                %v492 = vld [vmem:[%s166 + $0xa20] sm:$0xff]
                %493 = vst [vmem:[%s167 + $0x510] sm:$0xff] %v492
                %v494 = vld [vmem:[%s166 + $0xa28] sm:$0xff]
                %495 = vst [vmem:[%s167 + $0x518] sm:$0xff] %v494
                %v496 = vld [vmem:[%s166 + $0xa40] sm:$0xff]
                %497 = vst [vmem:[%s167 + $0x520] sm:$0xff] %v496
                %v498 = vld [vmem:[%s166 + $0xa48] sm:$0xff]
                %499 = vst [vmem:[%s167 + $0x528] sm:$0xff] %v498
                %v500 = vld [vmem:[%s166 + $0xa60] sm:$0xff]
                %501 = vst [vmem:[%s167 + $0x530] sm:$0xff] %v500
                %v502 = vld [vmem:[%s166 + $0xa68] sm:$0xff]
                %503 = vst [vmem:[%s167 + $0x538] sm:$0xff] %v502
                %v504 = vld [vmem:[%s166 + $0xa80] sm:$0xff]
                %505 = vst [vmem:[%s167 + $0x540] sm:$0xff] %v504
                %v506 = vld [vmem:[%s166 + $0xa88] sm:$0xff]
                %507 = vst [vmem:[%s167 + $0x548] sm:$0xff] %v506
                %v508 = vld [vmem:[%s166 + $0xaa0] sm:$0xff]
                %509 = vst [vmem:[%s167 + $0x550] sm:$0xff] %v508
                %v510 = vld [vmem:[%s166 + $0xaa8] sm:$0xff]
                %511 = vst [vmem:[%s167 + $0x558] sm:$0xff] %v510
                %v512 = vld [vmem:[%s166 + $0xac0] sm:$0xff]
                %513 = vst [vmem:[%s167 + $0x560] sm:$0xff] %v512
                %v514 = vld [vmem:[%s166 + $0xac8] sm:$0xff]
                %515 = vst [vmem:[%s167 + $0x568] sm:$0xff] %v514
                %v516 = vld [vmem:[%s166 + $0xae0] sm:$0xff]
                %517 = vst [vmem:[%s167 + $0x570] sm:$0xff] %v516
                %v518 = vld [vmem:[%s166 + $0xae8] sm:$0xff]
                %519 = vst [vmem:[%s167 + $0x578] sm:$0xff] %v518
                %v520 = vld [vmem:[%s166 + $0xb00] sm:$0xff]
                %521 = vst [vmem:[%s167 + $0x580] sm:$0xff] %v520
                %v522 = vld [vmem:[%s166 + $0xb08] sm:$0xff]
                %523 = vst [vmem:[%s167 + $0x588] sm:$0xff] %v522
                %v524 = vld [vmem:[%s166 + $0xb20] sm:$0xff]
                %525 = vst [vmem:[%s167 + $0x590] sm:$0xff] %v524
                %v526 = vld [vmem:[%s166 + $0xb28] sm:$0xff]
                %527 = vst [vmem:[%s167 + $0x598] sm:$0xff] %v526
                %v528 = vld [vmem:[%s166 + $0xb40] sm:$0xff]
                %529 = vst [vmem:[%s167 + $0x5a0] sm:$0xff] %v528
                %v530 = vld [vmem:[%s166 + $0xb48] sm:$0xff]
                %531 = vst [vmem:[%s167 + $0x5a8] sm:$0xff] %v530
                %v532 = vld [vmem:[%s166 + $0xb60] sm:$0xff]
                %533 = vst [vmem:[%s167 + $0x5b0] sm:$0xff] %v532
                %v534 = vld [vmem:[%s166 + $0xb68] sm:$0xff]
                %535 = vst [vmem:[%s167 + $0x5b8] sm:$0xff] %v534
                %v536 = vld [vmem:[%s166 + $0xb80] sm:$0xff]
                %537 = vst [vmem:[%s167 + $0x5c0] sm:$0xff] %v536
                %v538 = vld [vmem:[%s166 + $0xb88] sm:$0xff]
                %539 = vst [vmem:[%s167 + $0x5c8] sm:$0xff] %v538
                %v540 = vld [vmem:[%s166 + $0xba0] sm:$0xff]
                %541 = vst [vmem:[%s167 + $0x5d0] sm:$0xff] %v540
                %v542 = vld [vmem:[%s166 + $0xba8] sm:$0xff]
                %543 = vst [vmem:[%s167 + $0x5d8] sm:$0xff] %v542
                %v544 = vld [vmem:[%s166 + $0xbc0] sm:$0xff]
                %545 = vst [vmem:[%s167 + $0x5e0] sm:$0xff] %v544
                %v546 = vld [vmem:[%s166 + $0xbc8] sm:$0xff]
                %547 = vst [vmem:[%s167 + $0x5e8] sm:$0xff] %v546
                %v548 = vld [vmem:[%s166 + $0xbe0] sm:$0xff]
                %549 = vst [vmem:[%s167 + $0x5f0] sm:$0xff] %v548
                %v550 = vld [vmem:[%s166 + $0xbe8] sm:$0xff]
                %551 = vst [vmem:[%s167 + $0x5f8] sm:$0xff] %v550
                %v552 = vld [vmem:[%s166 + $0xc00] sm:$0xff]
                %553 = vst [vmem:[%s167 + $0x600] sm:$0xff] %v552
                %v554 = vld [vmem:[%s166 + $0xc08] sm:$0xff]
                %555 = vst [vmem:[%s167 + $0x608] sm:$0xff] %v554
                %v556 = vld [vmem:[%s166 + $0xc20] sm:$0xff]
                %557 = vst [vmem:[%s167 + $0x610] sm:$0xff] %v556
                %v558 = vld [vmem:[%s166 + $0xc28] sm:$0xff]
                %559 = vst [vmem:[%s167 + $0x618] sm:$0xff] %v558
                %v560 = vld [vmem:[%s166 + $0xc40] sm:$0xff]
                %561 = vst [vmem:[%s167 + $0x620] sm:$0xff] %v560
                %v562 = vld [vmem:[%s166 + $0xc48] sm:$0xff]
                %563 = vst [vmem:[%s167 + $0x628] sm:$0xff] %v562
                %v564 = vld [vmem:[%s166 + $0xc60] sm:$0xff]
                %565 = vst [vmem:[%s167 + $0x630] sm:$0xff] %v564
                %v566 = vld [vmem:[%s166 + $0xc68] sm:$0xff]
                %567 = vst [vmem:[%s167 + $0x638] sm:$0xff] %v566
                %v568 = vld [vmem:[%s166 + $0xc80] sm:$0xff]
                %569 = vst [vmem:[%s167 + $0x640] sm:$0xff] %v568
                %v570 = vld [vmem:[%s166 + $0xc88] sm:$0xff]
                %571 = vst [vmem:[%s167 + $0x648] sm:$0xff] %v570
                %v572 = vld [vmem:[%s166 + $0xca0] sm:$0xff]
                %573 = vst [vmem:[%s167 + $0x650] sm:$0xff] %v572
                %v574 = vld [vmem:[%s166 + $0xca8] sm:$0xff]
                %575 = vst [vmem:[%s167 + $0x658] sm:$0xff] %v574
                %v576 = vld [vmem:[%s166 + $0xcc0] sm:$0xff]
                %577 = vst [vmem:[%s167 + $0x660] sm:$0xff] %v576
                %v578 = vld [vmem:[%s166 + $0xcc8] sm:$0xff]
                %579 = vst [vmem:[%s167 + $0x668] sm:$0xff] %v578
                %v580 = vld [vmem:[%s166 + $0xce0] sm:$0xff]
                %581 = vst [vmem:[%s167 + $0x670] sm:$0xff] %v580
                %v582 = vld [vmem:[%s166 + $0xce8] sm:$0xff]
                %583 = vst [vmem:[%s167 + $0x678] sm:$0xff] %v582
                %v584 = vld [vmem:[%s166 + $0xd00] sm:$0xff]
                %585 = vst [vmem:[%s167 + $0x680] sm:$0xff] %v584
                %v586 = vld [vmem:[%s166 + $0xd08] sm:$0xff]
                %587 = vst [vmem:[%s167 + $0x688] sm:$0xff] %v586
                %v588 = vld [vmem:[%s166 + $0xd20] sm:$0xff]
                %589 = vst [vmem:[%s167 + $0x690] sm:$0xff] %v588
                %v590 = vld [vmem:[%s166 + $0xd28] sm:$0xff]
                %591 = vst [vmem:[%s167 + $0x698] sm:$0xff] %v590
                %v592 = vld [vmem:[%s166 + $0xd40] sm:$0xff]
                %593 = vst [vmem:[%s167 + $0x6a0] sm:$0xff] %v592
                %v594 = vld [vmem:[%s166 + $0xd48] sm:$0xff]
                %595 = vst [vmem:[%s167 + $0x6a8] sm:$0xff] %v594
                %v596 = vld [vmem:[%s166 + $0xd60] sm:$0xff]
                %597 = vst [vmem:[%s167 + $0x6b0] sm:$0xff] %v596
                %v598 = vld [vmem:[%s166 + $0xd68] sm:$0xff]
                %599 = vst [vmem:[%s167 + $0x6b8] sm:$0xff] %v598
                %v600 = vld [vmem:[%s166 + $0xd80] sm:$0xff]
                %601 = vst [vmem:[%s167 + $0x6c0] sm:$0xff] %v600
                %v602 = vld [vmem:[%s166 + $0xd88] sm:$0xff]
                %603 = vst [vmem:[%s167 + $0x6c8] sm:$0xff] %v602
                %v604 = vld [vmem:[%s166 + $0xda0] sm:$0xff]
                %605 = vst [vmem:[%s167 + $0x6d0] sm:$0xff] %v604
                %v606 = vld [vmem:[%s166 + $0xda8] sm:$0xff]
                %607 = vst [vmem:[%s167 + $0x6d8] sm:$0xff] %v606
                %v608 = vld [vmem:[%s166 + $0xdc0] sm:$0xff]
                %609 = vst [vmem:[%s167 + $0x6e0] sm:$0xff] %v608
                %v610 = vld [vmem:[%s166 + $0xdc8] sm:$0xff]
                %611 = vst [vmem:[%s167 + $0x6e8] sm:$0xff] %v610
                %v612 = vld [vmem:[%s166 + $0xde0] sm:$0xff]
                %613 = vst [vmem:[%s167 + $0x6f0] sm:$0xff] %v612
                %v614 = vld [vmem:[%s166 + $0xde8] sm:$0xff]
                %615 = vst [vmem:[%s167 + $0x6f8] sm:$0xff] %v614
              $region37: #{discriminator_forward.8} parent=31 // loop_footer
                %s165 = sadd.s32 1, %s161
              $region38: #{discriminator_forward.8} parent=31 // loop_footer_branch
                %160 = sbr.rel target = $region34
              $region39: #{discriminator_forward.8} parent=31 // loop_exit
                _
            $region32: #{discriminator_forward.8} parent=27 // pred_fallthru
              _
            // Predicated region
            $region40: #{discriminator_forward.8} parent=27 // pred_check
              _
            $region41: #{discriminator_forward.8} parent=27 // pred_check_branch
              %617 = sbr.rel target = $region43
            $region42: #{discriminator_forward.8} parent=27 // pred_region
              _
            $region43: #{discriminator_forward.8} parent=27 // pred_fallthru
              _
          $region28: #{discriminator_forward.8} parent=23 // pred_fallthru
            _
          %618 = vnop
        $region24: #{discriminator_forward.8} parent=15 // pred_fallthru
          _
      $region16: #{discriminator_forward.8} parent=5 // pred_fallthru
        _
      %p619 = scmp.le.s32.totalorder 1, %s8
      %p620 = scmp.lt.s32.totalorder %s8, 15
      %p621 = pnand %p619, %p620
      %p622 = pneg %p621
      // Predicated region
      $region44: #{discriminator_forward.8} parent=5 // pred_check
        _
      $region45: #{discriminator_forward.8} parent=5 // pred_check_branch
        %624 = sbr.rel (%p621) target = $region47
      $region46: #{discriminator_forward.8} parent=5 // pred_region
        %s625 = ssub.s32 %s8, 1
        %s626 = sand.u32 %s70, 1
        %s627 = sand.u32 %s70, 1
        %s628 = smul.addr %s627, 1792
        %s629 = scalar_lea.vmem [#allocation2], %s628
        // Predicated region
        $region48: #{discriminator_forward.8} parent=46 // pred_check
          %p630 = pneg %p83
        $region49: #{discriminator_forward.8} parent=46 // pred_check_branch
          %632 = sbr.rel (%p630) target = $region51
        $region50: #{discriminator_forward.8} parent=46 // pred_region
          _
        $region51: #{discriminator_forward.8} parent=46 // pred_fallthru
          _
        %s633 = smul.u32 7, %s20
        %p634 = scmp.lt.s32.totalorder %s18, 0
        %s635 = scalar_select %p634, %s18, 0
        %p636 = scmp.lt.s32.totalorder %s633, 48
        %s637 = scalar_select %p636, %s633, 48
        %s638 = smul.addr %s635, 49
        %s639 = sadd.s32 %s637, %s638
        %s640 = smul.addr %s639, 4
        %s641 = scalar_lea.vmem %s0, %s640
        %p642 = pneg %p55
        %p643 = pneg %p52
        %s644 = sand.u32 %s70, 1
        %s645 = sand.u32 %s70, 1
        %s646 = smul.addr %s645, 1792
        %s647 = scalar_lea.vmem [#allocation2], %s646
        %p648 = pneg %p83
        %p649 = pneg %p80
        %p650 = pneg %p111
        %p651 = pneg %p108
        %s652 = smul.u32 4, %s19
        %p653 = scmp.lt.s32.totalorder %s18, 0
        %s654 = scalar_select %p653, %s18, 0
        %p655 = scmp.lt.s32.totalorder %s652, 7
        %s656 = scalar_select %p655, %s652, 7
        %s657 = smul.addr %s654, 8
        %s658 = sadd.s32 %s656, %s657
        %s659 = smul.addr %s658, 8
        %s660 = scalar_lea.vmem %s2, %s659
        %s661 = smul.u32 7, %s20
        %p662 = scmp.lt.s32.totalorder %s18, 0
        %s663 = scalar_select %p662, %s18, 0
        %p664 = scmp.lt.s32.totalorder %s661, 48
        %s665 = scalar_select %p664, %s661, 48
        %s666 = smul.addr %s663, 49
        %s667 = sadd.s32 %s665, %s666
        %s668 = smul.addr %s667, 4
        %s669 = scalar_lea.vmem %s0, %s668
        %s670 = smul.u32 7, %s20
        %s671 = smul.u32 112, %s20
        %s672 = smul.u32 4, %s19
        %s673 = smul.u32 4, %s19
        %p674 = scmp.lt.s32.totalorder %s18, 0
        %s675 = scalar_select %p674, %s18, 0
        %p676 = scmp.lt.s32.totalorder %s673, 7
        %s677 = scalar_select %p676, %s673, 7
        %s678 = smul.addr %s675, 8
        %s679 = sadd.s32 %s677, %s678
        %s680 = smul.addr %s679, 8
        %s681 = scalar_lea.vmem %s2, %s680
        %s682 = smul.u32 4, %s19
        %p683 = scmp.eq.s32.totalorder %s20, 0
        // Predicated region
        $region52: #{discriminator_forward.8} parent=46 // pred_check
          %p684 = pneg %p683
        $region53: #{discriminator_forward.8} parent=46 // pred_check_branch
          %686 = sbr.rel (%p684) target = $region55
        $region54: #{discriminator_forward.8} parent=46 // pred_region
          %687 = vst [vmem:[%s681] sm:$0xff] 0.0
          %688 = vst [vmem:[%s681 + $0x8] sm:$0xff] 0.0
          %689 = vst [vmem:[%s681 + $0x10] sm:$0xff] 0.0
          %690 = vst [vmem:[%s681 + $0x18] sm:$0xff] 0.0
        $region55: #{discriminator_forward.8} parent=46 // pred_fallthru
          _
        %v691 = vld [vmem:[%s681] sm:$0xff]
        %v692 = vld [vmem:[%s681 + $0x8] sm:$0xff]
        %v693 = vld [vmem:[%s681 + $0x10] sm:$0xff]
        %v694 = vld [vmem:[%s681 + $0x18] sm:$0xff]
        %v695 = vld [vmem:[%s669] sm:$0xff]
        %v696 = vld [vmem:[%s669 + $0x8] sm:$0xff]
        %v697 = vld [vmem:[%s669 + $0x10] sm:$0xff]
        %v698 = vld [vmem:[%s669 + $0x18] sm:$0xf]
        %v699 = vld [vmem:[%s629] sm:$0xff]
        %v700 = vld [vmem:[%s629 + $0x8] sm:$0xff]
        %v701 = vld [vmem:[%s629 + $0x10] sm:$0xff]
        %v702 = vld [vmem:[%s629 + $0x18] sm:$0xff]
        %v703 = vld [vmem:[%s629 + $0x20] sm:$0xff]
        %v704 = vld [vmem:[%s629 + $0x28] sm:$0xff]
        %v705 = vld [vmem:[%s629 + $0x30] sm:$0xff]
        %v706 = vld [vmem:[%s629 + $0x38] sm:$0xff]
        %v707 = vld [vmem:[%s629 + $0x40] sm:$0xff]
        %v708 = vld [vmem:[%s629 + $0x48] sm:$0xff]
        %v709 = vld [vmem:[%s629 + $0x50] sm:$0xff]
        %v710 = vld [vmem:[%s629 + $0x58] sm:$0xff]
        %v711 = vld [vmem:[%s629 + $0x60] sm:$0xff]
        %v712 = vld [vmem:[%s629 + $0x68] sm:$0xff]
        %v713 = vld [vmem:[%s629 + $0x70] sm:$0xff]
        %v714 = vld [vmem:[%s629 + $0x78] sm:$0xff]
        %v715 = vld [vmem:[%s629 + $0x80] sm:$0xff]
        %v716 = vld [vmem:[%s629 + $0x88] sm:$0xff]
        %v717 = vld [vmem:[%s629 + $0x90] sm:$0xff]
        %v718 = vld [vmem:[%s629 + $0x98] sm:$0xff]
        %v719 = vld [vmem:[%s629 + $0xa0] sm:$0xff]
        %v720 = vld [vmem:[%s629 + $0xa8] sm:$0xff]
        %v721 = vld [vmem:[%s629 + $0xb0] sm:$0xff]
        %v722 = vld [vmem:[%s629 + $0xb8] sm:$0xff]
        %v723 = vld [vmem:[%s629 + $0xc0] sm:$0xff]
        %v724 = vld [vmem:[%s629 + $0xc8] sm:$0xff]
        %v725 = vld [vmem:[%s629 + $0xd0] sm:$0xff]
        %v726 = vld [vmem:[%s629 + $0xd8] sm:$0xff]
        %v727 = vld [vmem:[%s629 + $0xe0] sm:$0xff]
        %v728 = vld [vmem:[%s629 + $0xe8] sm:$0xff]
        %v729 = vld [vmem:[%s629 + $0xf0] sm:$0xff]
        %v730 = vld [vmem:[%s629 + $0xf8] sm:$0xff]
        %v731 = vld [vmem:[%s629 + $0x100] sm:$0xff]
        %v732 = vld [vmem:[%s629 + $0x108] sm:$0xff]
        %v733 = vld [vmem:[%s629 + $0x110] sm:$0xff]
        %v734 = vld [vmem:[%s629 + $0x118] sm:$0xff]
        %v735 = vld [vmem:[%s629 + $0x120] sm:$0xff]
        %v736 = vld [vmem:[%s629 + $0x128] sm:$0xff]
        %v737 = vld [vmem:[%s629 + $0x130] sm:$0xff]
        %v738 = vld [vmem:[%s629 + $0x138] sm:$0xff]
        %v739 = vld [vmem:[%s629 + $0x140] sm:$0xff]
        %v740 = vld [vmem:[%s629 + $0x148] sm:$0xff]
        %v741 = vld [vmem:[%s629 + $0x150] sm:$0xff]
        %v742 = vld [vmem:[%s629 + $0x158] sm:$0xff]
        %v743 = vld [vmem:[%s629 + $0x160] sm:$0xff]
        %v744 = vld [vmem:[%s629 + $0x168] sm:$0xff]
        %v745 = vld [vmem:[%s629 + $0x170] sm:$0xff]
        %v746 = vld [vmem:[%s629 + $0x178] sm:$0xff]
        %v747 = vld [vmem:[%s629 + $0x180] sm:$0xff]
        %v748 = vld [vmem:[%s629 + $0x188] sm:$0xff]
        %v749 = vld [vmem:[%s629 + $0x190] sm:$0xff]
        %v750 = vld [vmem:[%s629 + $0x198] sm:$0xff]
        %v751 = vld [vmem:[%s629 + $0x1a0] sm:$0xff]
        %v752 = vld [vmem:[%s629 + $0x1a8] sm:$0xff]
        %v753 = vld [vmem:[%s629 + $0x1b0] sm:$0xff]
        %v754 = vld [vmem:[%s629 + $0x1b8] sm:$0xff]
        %v755 = vld [vmem:[%s629 + $0x1c0] sm:$0xff]
        %v756 = vld [vmem:[%s629 + $0x1c8] sm:$0xff]
        %v757 = vld [vmem:[%s629 + $0x1d0] sm:$0xff]
        %v758 = vld [vmem:[%s629 + $0x1d8] sm:$0xff]
        %v759 = vld [vmem:[%s629 + $0x1e0] sm:$0xff]
        %v760 = vld [vmem:[%s629 + $0x1e8] sm:$0xff]
        %v761 = vld [vmem:[%s629 + $0x1f0] sm:$0xff]
        %v762 = vld [vmem:[%s629 + $0x1f8] sm:$0xff]
        %v763 = vld [vmem:[%s629 + $0x200] sm:$0xff]
        %v764 = vld [vmem:[%s629 + $0x208] sm:$0xff]
        %v765 = vld [vmem:[%s629 + $0x210] sm:$0xff]
        %v766 = vld [vmem:[%s629 + $0x218] sm:$0xff]
        %v767 = vld [vmem:[%s629 + $0x220] sm:$0xff]
        %v768 = vld [vmem:[%s629 + $0x228] sm:$0xff]
        %v769 = vld [vmem:[%s629 + $0x230] sm:$0xff]
        %v770 = vld [vmem:[%s629 + $0x238] sm:$0xff]
        %v771 = vld [vmem:[%s629 + $0x240] sm:$0xff]
        %v772 = vld [vmem:[%s629 + $0x248] sm:$0xff]
        %v773 = vld [vmem:[%s629 + $0x250] sm:$0xff]
        %v774 = vld [vmem:[%s629 + $0x258] sm:$0xff]
        %v775 = vld [vmem:[%s629 + $0x260] sm:$0xff]
        %v776 = vld [vmem:[%s629 + $0x268] sm:$0xff]
        %v777 = vld [vmem:[%s629 + $0x270] sm:$0xff]
        %v778 = vld [vmem:[%s629 + $0x278] sm:$0xff]
        %v779 = vld [vmem:[%s629 + $0x280] sm:$0xff]
        %v780 = vld [vmem:[%s629 + $0x288] sm:$0xff]
        %v781 = vld [vmem:[%s629 + $0x290] sm:$0xff]
        %v782 = vld [vmem:[%s629 + $0x298] sm:$0xff]
        %v783 = vld [vmem:[%s629 + $0x2a0] sm:$0xff]
        %v784 = vld [vmem:[%s629 + $0x2a8] sm:$0xff]
        %v785 = vld [vmem:[%s629 + $0x2b0] sm:$0xff]
        %v786 = vld [vmem:[%s629 + $0x2b8] sm:$0xff]
        %v787 = vld [vmem:[%s629 + $0x2c0] sm:$0xff]
        %v788 = vld [vmem:[%s629 + $0x2c8] sm:$0xff]
        %v789 = vld [vmem:[%s629 + $0x2d0] sm:$0xff]
        %v790 = vld [vmem:[%s629 + $0x2d8] sm:$0xff]
        %v791 = vld [vmem:[%s629 + $0x2e0] sm:$0xff]
        %v792 = vld [vmem:[%s629 + $0x2e8] sm:$0xff]
        %v793 = vld [vmem:[%s629 + $0x2f0] sm:$0xff]
        %v794 = vld [vmem:[%s629 + $0x2f8] sm:$0xff]
        %v795 = vld [vmem:[%s629 + $0x300] sm:$0xff]
        %v796 = vld [vmem:[%s629 + $0x308] sm:$0xff]
        %v797 = vld [vmem:[%s629 + $0x310] sm:$0xff]
        %v798 = vld [vmem:[%s629 + $0x318] sm:$0xff]
        %v799 = vld [vmem:[%s629 + $0x320] sm:$0xff]
        %v800 = vld [vmem:[%s629 + $0x328] sm:$0xff]
        %v801 = vld [vmem:[%s629 + $0x330] sm:$0xff]
        %v802 = vld [vmem:[%s629 + $0x338] sm:$0xff]
        %v803 = vld [vmem:[%s629 + $0x340] sm:$0xff]
        %v804 = vld [vmem:[%s629 + $0x348] sm:$0xff]
        %v805 = vld [vmem:[%s629 + $0x350] sm:$0xff]
        %v806 = vld [vmem:[%s629 + $0x358] sm:$0xff]
        %v807 = vld [vmem:[%s629 + $0x360] sm:$0xff]
        %v808 = vld [vmem:[%s629 + $0x368] sm:$0xff]
        %v809 = vld [vmem:[%s629 + $0x370] sm:$0xff]
        %v810 = vld [vmem:[%s629 + $0x378] sm:$0xff]
        %v811 = vld [vmem:[%s629 + $0x380] sm:$0xff]
        %v812 = vld [vmem:[%s629 + $0x388] sm:$0xff]
        %v813 = vld [vmem:[%s629 + $0x390] sm:$0xff]
        %v814 = vld [vmem:[%s629 + $0x398] sm:$0xff]
        %v815 = vld [vmem:[%s629 + $0x3a0] sm:$0xff]
        %v816 = vld [vmem:[%s629 + $0x3a8] sm:$0xff]
        %v817 = vld [vmem:[%s629 + $0x3b0] sm:$0xff]
        %v818 = vld [vmem:[%s629 + $0x3b8] sm:$0xff]
        %v819 = vld [vmem:[%s629 + $0x3c0] sm:$0xff]
        %v820 = vld [vmem:[%s629 + $0x3c8] sm:$0xff]
        %v821 = vld [vmem:[%s629 + $0x3d0] sm:$0xff]
        %v822 = vld [vmem:[%s629 + $0x3d8] sm:$0xff]
        %v823 = vld [vmem:[%s629 + $0x3e0] sm:$0xff]
        %v824 = vld [vmem:[%s629 + $0x3e8] sm:$0xff]
        %v825 = vld [vmem:[%s629 + $0x3f0] sm:$0xff]
        %v826 = vld [vmem:[%s629 + $0x3f8] sm:$0xff]
        %v827 = vld [vmem:[%s629 + $0x400] sm:$0xff]
        %v828 = vld [vmem:[%s629 + $0x408] sm:$0xff]
        %v829 = vld [vmem:[%s629 + $0x410] sm:$0xff]
        %v830 = vld [vmem:[%s629 + $0x418] sm:$0xff]
        %v831 = vld [vmem:[%s629 + $0x420] sm:$0xff]
        %v832 = vld [vmem:[%s629 + $0x428] sm:$0xff]
        %v833 = vld [vmem:[%s629 + $0x430] sm:$0xff]
        %v834 = vld [vmem:[%s629 + $0x438] sm:$0xff]
        %v835 = vld [vmem:[%s629 + $0x440] sm:$0xff]
        %v836 = vld [vmem:[%s629 + $0x448] sm:$0xff]
        %v837 = vld [vmem:[%s629 + $0x450] sm:$0xff]
        %v838 = vld [vmem:[%s629 + $0x458] sm:$0xff]
        %v839 = vld [vmem:[%s629 + $0x460] sm:$0xff]
        %v840 = vld [vmem:[%s629 + $0x468] sm:$0xff]
        %v841 = vld [vmem:[%s629 + $0x470] sm:$0xff]
        %v842 = vld [vmem:[%s629 + $0x478] sm:$0xff]
        %v843 = vld [vmem:[%s629 + $0x480] sm:$0xff]
        %v844 = vld [vmem:[%s629 + $0x488] sm:$0xff]
        %v845 = vld [vmem:[%s629 + $0x490] sm:$0xff]
        %v846 = vld [vmem:[%s629 + $0x498] sm:$0xff]
        %v847 = vld [vmem:[%s629 + $0x4a0] sm:$0xff]
        %v848 = vld [vmem:[%s629 + $0x4a8] sm:$0xff]
        %v849 = vld [vmem:[%s629 + $0x4b0] sm:$0xff]
        %v850 = vld [vmem:[%s629 + $0x4b8] sm:$0xff]
        %v851 = vld [vmem:[%s629 + $0x4c0] sm:$0xff]
        %v852 = vld [vmem:[%s629 + $0x4c8] sm:$0xff]
        %v853 = vld [vmem:[%s629 + $0x4d0] sm:$0xff]
        %v854 = vld [vmem:[%s629 + $0x4d8] sm:$0xff]
        %v855 = vld [vmem:[%s629 + $0x4e0] sm:$0xff]
        %v856 = vld [vmem:[%s629 + $0x4e8] sm:$0xff]
        %v857 = vld [vmem:[%s629 + $0x4f0] sm:$0xff]
        %v858 = vld [vmem:[%s629 + $0x4f8] sm:$0xff]
        %v859 = vld [vmem:[%s629 + $0x500] sm:$0xff]
        %v860 = vld [vmem:[%s629 + $0x508] sm:$0xff]
        %v861 = vld [vmem:[%s629 + $0x510] sm:$0xff]
        %v862 = vld [vmem:[%s629 + $0x518] sm:$0xff]
        %v863 = vld [vmem:[%s629 + $0x520] sm:$0xff]
        %v864 = vld [vmem:[%s629 + $0x528] sm:$0xff]
        %v865 = vld [vmem:[%s629 + $0x530] sm:$0xff]
        %v866 = vld [vmem:[%s629 + $0x538] sm:$0xff]
        %v867 = vld [vmem:[%s629 + $0x540] sm:$0xff]
        %v868 = vld [vmem:[%s629 + $0x548] sm:$0xff]
        %v869 = vld [vmem:[%s629 + $0x550] sm:$0xff]
        %v870 = vld [vmem:[%s629 + $0x558] sm:$0xff]
        %v871 = vld [vmem:[%s629 + $0x560] sm:$0xff]
        %v872 = vld [vmem:[%s629 + $0x568] sm:$0xff]
        %v873 = vld [vmem:[%s629 + $0x570] sm:$0xff]
        %v874 = vld [vmem:[%s629 + $0x578] sm:$0xff]
        %v875 = vld [vmem:[%s629 + $0x580] sm:$0xff]
        %v876 = vld [vmem:[%s629 + $0x588] sm:$0xff]
        %v877 = vld [vmem:[%s629 + $0x590] sm:$0xff]
        %v878 = vld [vmem:[%s629 + $0x598] sm:$0xff]
        %v879 = vld [vmem:[%s629 + $0x5a0] sm:$0xff]
        %v880 = vld [vmem:[%s629 + $0x5a8] sm:$0xff]
        %v881 = vld [vmem:[%s629 + $0x5b0] sm:$0xff]
        %v882 = vld [vmem:[%s629 + $0x5b8] sm:$0xff]
        %v883 = vld [vmem:[%s629 + $0x5c0] sm:$0xff]
        %v884 = vld [vmem:[%s629 + $0x5c8] sm:$0xff]
        %v885 = vld [vmem:[%s629 + $0x5d0] sm:$0xff]
        %v886 = vld [vmem:[%s629 + $0x5d8] sm:$0xff]
        %v887 = vld [vmem:[%s629 + $0x5e0] sm:$0xff]
        %v888 = vld [vmem:[%s629 + $0x5e8] sm:$0xff]
        %v889 = vld [vmem:[%s629 + $0x5f0] sm:$0xff]
        %v890 = vld [vmem:[%s629 + $0x5f8] sm:$0xff]
        %v891 = vld [vmem:[%s629 + $0x600] sm:$0xff]
        %v892 = vld [vmem:[%s629 + $0x608] sm:$0xff]
        %v893 = vld [vmem:[%s629 + $0x610] sm:$0xff]
        %v894 = vld [vmem:[%s629 + $0x618] sm:$0xff]
        %v895 = vld [vmem:[%s629 + $0x620] sm:$0xff]
        %v896 = vld [vmem:[%s629 + $0x628] sm:$0xff]
        %v897 = vld [vmem:[%s629 + $0x630] sm:$0xff]
        %v898 = vld [vmem:[%s629 + $0x638] sm:$0xff]
        %v899 = vld [vmem:[%s629 + $0x640] sm:$0xff]
        %v900 = vld [vmem:[%s629 + $0x648] sm:$0xff]
        %v901 = vld [vmem:[%s629 + $0x650] sm:$0xff]
        %v902 = vld [vmem:[%s629 + $0x658] sm:$0xff]
        %v903 = vld [vmem:[%s629 + $0x660] sm:$0xff]
        %v904 = vld [vmem:[%s629 + $0x668] sm:$0xff]
        %v905 = vld [vmem:[%s629 + $0x670] sm:$0xff]
        %v906 = vld [vmem:[%s629 + $0x678] sm:$0xff]
        %v907 = vld [vmem:[%s629 + $0x680] sm:$0xff]
        %v908 = vld [vmem:[%s629 + $0x688] sm:$0xff]
        %v909 = vld [vmem:[%s629 + $0x690] sm:$0xff]
        %v910 = vld [vmem:[%s629 + $0x698] sm:$0xff]
        %v911 = vld [vmem:[%s629 + $0x6a0] sm:$0xff]
        %v912 = vld [vmem:[%s629 + $0x6a8] sm:$0xff]
        %v913 = vld [vmem:[%s629 + $0x6b0] sm:$0xff]
        %v914 = vld [vmem:[%s629 + $0x6b8] sm:$0xff]
        %v915 = vld [vmem:[%s629 + $0x6c0] sm:$0xff]
        %v916 = vld [vmem:[%s629 + $0x6c8] sm:$0xff]
        %v917 = vld [vmem:[%s629 + $0x6d0] sm:$0xff]
        %v918 = vld [vmem:[%s629 + $0x6d8] sm:$0xff]
        %v919 = vld [vmem:[%s629 + $0x6e0] sm:$0xff]
        %v920 = vld [vmem:[%s629 + $0x6e8] sm:$0xff]
        %v921 = vld [vmem:[%s629 + $0x6f0] sm:$0xff]
        %v922 = vld [vmem:[%s629 + $0x6f8] sm:$0xff]
        %v927 = vunpack.c.l.b16 %v695
        %v928 = vunpack.c.h.b16 %v695
        %v929 = vunpack.c.l.b16 %v696
        %v930 = vunpack.c.h.b16 %v696
        %v931 = vunpack.c.l.b16 %v697
        %v932 = vunpack.c.h.b16 %v697
        %v933 = vunpack.c.l.b16 %v698
        %v934 = vpack.c.b16 %v927, %v927
        %v935 = vpack.c.b16 %v928, %v928
        %v936 = vpack.c.b16 %v929, %v929
        %v937 = vpack.c.b16 %v930, %v930
        %v938 = vpack.c.b16 %v931, %v931
        %v939 = vpack.c.b16 %v932, %v932
        %v940 = vpack.c.b16 %v933, %v933
        %v1172 = vunpack.c.l.b16 %v699
        %v1173 = vunpack.c.h.b16 %v699
        %v1174 = vunpack.c.l.b16 %v700
        %v1175 = vunpack.c.h.b16 %v700
        %v1176 = vunpack.c.l.b16 %v701
        %v1177 = vunpack.c.h.b16 %v701
        %v1178 = vunpack.c.l.b16 %v702
        %v1179 = vunpack.c.h.b16 %v702
        %v1180 = vunpack.c.l.b16 %v703
        %v1181 = vunpack.c.h.b16 %v703
        %v1182 = vunpack.c.l.b16 %v704
        %v1183 = vunpack.c.h.b16 %v704
        %v1184 = vunpack.c.l.b16 %v705
        %v1185 = vunpack.c.h.b16 %v705
        %v1186 = vunpack.c.l.b16 %v706
        %v1187 = vunpack.c.h.b16 %v706
        %v1188 = vunpack.c.l.b16 %v707
        %v1189 = vunpack.c.h.b16 %v707
        %v1190 = vunpack.c.l.b16 %v708
        %v1191 = vunpack.c.h.b16 %v708
        %v1192 = vunpack.c.l.b16 %v709
        %v1193 = vunpack.c.h.b16 %v709
        %v1194 = vunpack.c.l.b16 %v710
        %v1195 = vunpack.c.h.b16 %v710
        %v1196 = vunpack.c.l.b16 %v711
        %v1197 = vunpack.c.h.b16 %v711
        %v1198 = vunpack.c.l.b16 %v712
        %v1199 = vunpack.c.h.b16 %v712
        %v1200 = vunpack.c.l.b16 %v713
        %v1201 = vunpack.c.h.b16 %v713
        %v1202 = vunpack.c.l.b16 %v714
        %v1203 = vunpack.c.h.b16 %v714
        %v1204 = vunpack.c.l.b16 %v715
        %v1205 = vunpack.c.h.b16 %v715
        %v1206 = vunpack.c.l.b16 %v716
        %v1207 = vunpack.c.h.b16 %v716
        %v1208 = vunpack.c.l.b16 %v717
        %v1209 = vunpack.c.h.b16 %v717
        %v1210 = vunpack.c.l.b16 %v718
        %v1211 = vunpack.c.h.b16 %v718
        %v1212 = vunpack.c.l.b16 %v719
        %v1213 = vunpack.c.h.b16 %v719
        %v1214 = vunpack.c.l.b16 %v720
        %v1215 = vunpack.c.h.b16 %v720
        %v1216 = vunpack.c.l.b16 %v721
        %v1217 = vunpack.c.h.b16 %v721
        %v1218 = vunpack.c.l.b16 %v722
        %v1219 = vunpack.c.h.b16 %v722
        %v1220 = vunpack.c.l.b16 %v723
        %v1221 = vunpack.c.h.b16 %v723
        %v1222 = vunpack.c.l.b16 %v724
        %v1223 = vunpack.c.h.b16 %v724
        %v1224 = vunpack.c.l.b16 %v725
        %v1225 = vunpack.c.h.b16 %v725
        %v1226 = vunpack.c.l.b16 %v726
        %v1227 = vunpack.c.h.b16 %v726
        %v1228 = vunpack.c.l.b16 %v727
        %v1229 = vunpack.c.h.b16 %v727
        %v1230 = vunpack.c.l.b16 %v728
        %v1231 = vunpack.c.h.b16 %v728
        %v1232 = vunpack.c.l.b16 %v729
        %v1233 = vunpack.c.h.b16 %v729
        %v1234 = vunpack.c.l.b16 %v730
        %v1235 = vunpack.c.h.b16 %v730
        %v1236 = vunpack.c.l.b16 %v731
        %v1237 = vunpack.c.h.b16 %v731
        %v1238 = vunpack.c.l.b16 %v732
        %v1239 = vunpack.c.h.b16 %v732
        %v1240 = vunpack.c.l.b16 %v733
        %v1241 = vunpack.c.h.b16 %v733
        %v1242 = vunpack.c.l.b16 %v734
        %v1243 = vunpack.c.h.b16 %v734
        %v1244 = vunpack.c.l.b16 %v735
        %v1245 = vunpack.c.h.b16 %v735
        %v1246 = vunpack.c.l.b16 %v736
        %v1247 = vunpack.c.h.b16 %v736
        %v1248 = vunpack.c.l.b16 %v737
        %v1249 = vunpack.c.h.b16 %v737
        %v1250 = vunpack.c.l.b16 %v738
        %v1251 = vunpack.c.h.b16 %v738
        %v1252 = vunpack.c.l.b16 %v739
        %v1253 = vunpack.c.h.b16 %v739
        %v1254 = vunpack.c.l.b16 %v740
        %v1255 = vunpack.c.h.b16 %v740
        %v1256 = vunpack.c.l.b16 %v741
        %v1257 = vunpack.c.h.b16 %v741
        %v1258 = vunpack.c.l.b16 %v742
        %v1259 = vunpack.c.h.b16 %v742
        %v1260 = vunpack.c.l.b16 %v743
        %v1261 = vunpack.c.h.b16 %v743
        %v1262 = vunpack.c.l.b16 %v744
        %v1263 = vunpack.c.h.b16 %v744
        %v1264 = vunpack.c.l.b16 %v745
        %v1265 = vunpack.c.h.b16 %v745
        %v1266 = vunpack.c.l.b16 %v746
        %v1267 = vunpack.c.h.b16 %v746
        %v1268 = vunpack.c.l.b16 %v747
        %v1269 = vunpack.c.h.b16 %v747
        %v1270 = vunpack.c.l.b16 %v748
        %v1271 = vunpack.c.h.b16 %v748
        %v1272 = vunpack.c.l.b16 %v749
        %v1273 = vunpack.c.h.b16 %v749
        %v1274 = vunpack.c.l.b16 %v750
        %v1275 = vunpack.c.h.b16 %v750
        %v1276 = vunpack.c.l.b16 %v751
        %v1277 = vunpack.c.h.b16 %v751
        %v1278 = vunpack.c.l.b16 %v752
        %v1279 = vunpack.c.h.b16 %v752
        %v1280 = vunpack.c.l.b16 %v753
        %v1281 = vunpack.c.h.b16 %v753
        %v1282 = vunpack.c.l.b16 %v754
        %v1283 = vunpack.c.h.b16 %v754
        %v1284 = vunpack.c.l.b16 %v755
        %v1285 = vunpack.c.h.b16 %v755
        %v1286 = vunpack.c.l.b16 %v756
        %v1287 = vunpack.c.h.b16 %v756
        %v1288 = vunpack.c.l.b16 %v757
        %v1289 = vunpack.c.h.b16 %v757
        %v1290 = vunpack.c.l.b16 %v758
        %v1291 = vunpack.c.h.b16 %v758
        %v1292 = vunpack.c.l.b16 %v759
        %v1293 = vunpack.c.h.b16 %v759
        %v1294 = vunpack.c.l.b16 %v760
        %v1295 = vunpack.c.h.b16 %v760
        %v1296 = vunpack.c.l.b16 %v761
        %v1297 = vunpack.c.h.b16 %v761
        %v1298 = vunpack.c.l.b16 %v762
        %v1299 = vunpack.c.h.b16 %v762
        %v1300 = vunpack.c.l.b16 %v763
        %v1301 = vunpack.c.h.b16 %v763
        %v1302 = vunpack.c.l.b16 %v764
        %v1303 = vunpack.c.h.b16 %v764
        %v1304 = vunpack.c.l.b16 %v765
        %v1305 = vunpack.c.h.b16 %v765
        %v1306 = vunpack.c.l.b16 %v766
        %v1307 = vunpack.c.h.b16 %v766
        %v1308 = vunpack.c.l.b16 %v767
        %v1309 = vunpack.c.h.b16 %v767
        %v1310 = vunpack.c.l.b16 %v768
        %v1311 = vunpack.c.h.b16 %v768
        %v1312 = vunpack.c.l.b16 %v769
        %v1313 = vunpack.c.h.b16 %v769
        %v1314 = vunpack.c.l.b16 %v770
        %v1315 = vunpack.c.h.b16 %v770
        %v1316 = vunpack.c.l.b16 %v771
        %v1317 = vunpack.c.h.b16 %v771
        %v1318 = vunpack.c.l.b16 %v772
        %v1319 = vunpack.c.h.b16 %v772
        %v1320 = vunpack.c.l.b16 %v773
        %v1321 = vunpack.c.h.b16 %v773
        %v1322 = vunpack.c.l.b16 %v774
        %v1323 = vunpack.c.h.b16 %v774
        %v1324 = vunpack.c.l.b16 %v775
        %v1325 = vunpack.c.h.b16 %v775
        %v1326 = vunpack.c.l.b16 %v776
        %v1327 = vunpack.c.h.b16 %v776
        %v1328 = vunpack.c.l.b16 %v777
        %v1329 = vunpack.c.h.b16 %v777
        %v1330 = vunpack.c.l.b16 %v778
        %v1331 = vunpack.c.h.b16 %v778
        %v1332 = vunpack.c.l.b16 %v779
        %v1333 = vunpack.c.h.b16 %v779
        %v1334 = vunpack.c.l.b16 %v780
        %v1335 = vunpack.c.h.b16 %v780
        %v1336 = vunpack.c.l.b16 %v781
        %v1337 = vunpack.c.h.b16 %v781
        %v1338 = vunpack.c.l.b16 %v782
        %v1339 = vunpack.c.h.b16 %v782
        %v1340 = vunpack.c.l.b16 %v783
        %v1341 = vunpack.c.h.b16 %v783
        %v1342 = vunpack.c.l.b16 %v784
        %v1343 = vunpack.c.h.b16 %v784
        %v1344 = vunpack.c.l.b16 %v785
        %v1345 = vunpack.c.h.b16 %v785
        %v1346 = vunpack.c.l.b16 %v786
        %v1347 = vunpack.c.h.b16 %v786
        %v1348 = vunpack.c.l.b16 %v787
        %v1349 = vunpack.c.h.b16 %v787
        %v1350 = vunpack.c.l.b16 %v788
        %v1351 = vunpack.c.h.b16 %v788
        %v1352 = vunpack.c.l.b16 %v789
        %v1353 = vunpack.c.h.b16 %v789
        %v1354 = vunpack.c.l.b16 %v790
        %v1355 = vunpack.c.h.b16 %v790
        %v1356 = vunpack.c.l.b16 %v791
        %v1357 = vunpack.c.h.b16 %v791
        %v1358 = vunpack.c.l.b16 %v792
        %v1359 = vunpack.c.h.b16 %v792
        %v1360 = vunpack.c.l.b16 %v793
        %v1361 = vunpack.c.h.b16 %v793
        %v1362 = vunpack.c.l.b16 %v794
        %v1363 = vunpack.c.h.b16 %v794
        %v1364 = vunpack.c.l.b16 %v795
        %v1365 = vunpack.c.h.b16 %v795
        %v1366 = vunpack.c.l.b16 %v796
        %v1367 = vunpack.c.h.b16 %v796
        %v1368 = vunpack.c.l.b16 %v797
        %v1369 = vunpack.c.h.b16 %v797
        %v1370 = vunpack.c.l.b16 %v798
        %v1371 = vunpack.c.h.b16 %v798
        %v1372 = vunpack.c.l.b16 %v799
        %v1373 = vunpack.c.h.b16 %v799
        %v1374 = vunpack.c.l.b16 %v800
        %v1375 = vunpack.c.h.b16 %v800
        %v1376 = vunpack.c.l.b16 %v801
        %v1377 = vunpack.c.h.b16 %v801
        %v1378 = vunpack.c.l.b16 %v802
        %v1379 = vunpack.c.h.b16 %v802
        %v1380 = vunpack.c.l.b16 %v803
        %v1381 = vunpack.c.h.b16 %v803
        %v1382 = vunpack.c.l.b16 %v804
        %v1383 = vunpack.c.h.b16 %v804
        %v1384 = vunpack.c.l.b16 %v805
        %v1385 = vunpack.c.h.b16 %v805
        %v1386 = vunpack.c.l.b16 %v806
        %v1387 = vunpack.c.h.b16 %v806
        %v1388 = vunpack.c.l.b16 %v807
        %v1389 = vunpack.c.h.b16 %v807
        %v1390 = vunpack.c.l.b16 %v808
        %v1391 = vunpack.c.h.b16 %v808
        %v1392 = vunpack.c.l.b16 %v809
        %v1393 = vunpack.c.h.b16 %v809
        %v1394 = vunpack.c.l.b16 %v810
        %v1395 = vunpack.c.h.b16 %v810
        %v1396 = vunpack.c.l.b16 %v811
        %v1397 = vunpack.c.h.b16 %v811
        %v1398 = vunpack.c.l.b16 %v812
        %v1399 = vunpack.c.h.b16 %v812
        %v1400 = vunpack.c.l.b16 %v813
        %v1401 = vunpack.c.h.b16 %v813
        %v1402 = vunpack.c.l.b16 %v814
        %v1403 = vunpack.c.h.b16 %v814
        %v1404 = vunpack.c.l.b16 %v815
        %v1405 = vunpack.c.h.b16 %v815
        %v1406 = vunpack.c.l.b16 %v816
        %v1407 = vunpack.c.h.b16 %v816
        %v1408 = vunpack.c.l.b16 %v817
        %v1409 = vunpack.c.h.b16 %v817
        %v1410 = vunpack.c.l.b16 %v818
        %v1411 = vunpack.c.h.b16 %v818
        %v1412 = vunpack.c.l.b16 %v819
        %v1413 = vunpack.c.h.b16 %v819
        %v1414 = vunpack.c.l.b16 %v820
        %v1415 = vunpack.c.h.b16 %v820
        %v1416 = vunpack.c.l.b16 %v821
        %v1417 = vunpack.c.h.b16 %v821
        %v1418 = vunpack.c.l.b16 %v822
        %v1419 = vunpack.c.h.b16 %v822
        %v1420 = vunpack.c.l.b16 %v823
        %v1421 = vunpack.c.h.b16 %v823
        %v1422 = vunpack.c.l.b16 %v824
        %v1423 = vunpack.c.h.b16 %v824
        %v1424 = vunpack.c.l.b16 %v825
        %v1425 = vunpack.c.h.b16 %v825
        %v1426 = vunpack.c.l.b16 %v826
        %v1427 = vunpack.c.h.b16 %v826
        %v1428 = vunpack.c.l.b16 %v827
        %v1429 = vunpack.c.h.b16 %v827
        %v1430 = vunpack.c.l.b16 %v828
        %v1431 = vunpack.c.h.b16 %v828
        %v1432 = vunpack.c.l.b16 %v829
        %v1433 = vunpack.c.h.b16 %v829
        %v1434 = vunpack.c.l.b16 %v830
        %v1435 = vunpack.c.h.b16 %v830
        %v1436 = vunpack.c.l.b16 %v831
        %v1437 = vunpack.c.h.b16 %v831
        %v1438 = vunpack.c.l.b16 %v832
        %v1439 = vunpack.c.h.b16 %v832
        %v1440 = vunpack.c.l.b16 %v833
        %v1441 = vunpack.c.h.b16 %v833
        %v1442 = vunpack.c.l.b16 %v834
        %v1443 = vunpack.c.h.b16 %v834
        %v1444 = vunpack.c.l.b16 %v835
        %v1445 = vunpack.c.h.b16 %v835
        %v1446 = vunpack.c.l.b16 %v836
        %v1447 = vunpack.c.h.b16 %v836
        %v1448 = vunpack.c.l.b16 %v837
        %v1449 = vunpack.c.h.b16 %v837
        %v1450 = vunpack.c.l.b16 %v838
        %v1451 = vunpack.c.h.b16 %v838
        %v1452 = vunpack.c.l.b16 %v839
        %v1453 = vunpack.c.h.b16 %v839
        %v1454 = vunpack.c.l.b16 %v840
        %v1455 = vunpack.c.h.b16 %v840
        %v1456 = vunpack.c.l.b16 %v841
        %v1457 = vunpack.c.h.b16 %v841
        %v1458 = vunpack.c.l.b16 %v842
        %v1459 = vunpack.c.h.b16 %v842
        %v1460 = vunpack.c.l.b16 %v843
        %v1461 = vunpack.c.h.b16 %v843
        %v1462 = vunpack.c.l.b16 %v844
        %v1463 = vunpack.c.h.b16 %v844
        %v1464 = vunpack.c.l.b16 %v845
        %v1465 = vunpack.c.h.b16 %v845
        %v1466 = vunpack.c.l.b16 %v846
        %v1467 = vunpack.c.h.b16 %v846
        %v1468 = vunpack.c.l.b16 %v847
        %v1469 = vunpack.c.h.b16 %v847
        %v1470 = vunpack.c.l.b16 %v848
        %v1471 = vunpack.c.h.b16 %v848
        %v1472 = vunpack.c.l.b16 %v849
        %v1473 = vunpack.c.h.b16 %v849
        %v1474 = vunpack.c.l.b16 %v850
        %v1475 = vunpack.c.h.b16 %v850
        %v1476 = vunpack.c.l.b16 %v851
        %v1477 = vunpack.c.h.b16 %v851
        %v1478 = vunpack.c.l.b16 %v852
        %v1479 = vunpack.c.h.b16 %v852
        %v1480 = vunpack.c.l.b16 %v853
        %v1481 = vunpack.c.h.b16 %v853
        %v1482 = vunpack.c.l.b16 %v854
        %v1483 = vunpack.c.h.b16 %v854
        %v1484 = vunpack.c.l.b16 %v855
        %v1485 = vunpack.c.h.b16 %v855
        %v1486 = vunpack.c.l.b16 %v856
        %v1487 = vunpack.c.h.b16 %v856
        %v1488 = vunpack.c.l.b16 %v857
        %v1489 = vunpack.c.h.b16 %v857
        %v1490 = vunpack.c.l.b16 %v858
        %v1491 = vunpack.c.h.b16 %v858
        %v1492 = vunpack.c.l.b16 %v859
        %v1493 = vunpack.c.h.b16 %v859
        %v1494 = vunpack.c.l.b16 %v860
        %v1495 = vunpack.c.h.b16 %v860
        %v1496 = vunpack.c.l.b16 %v861
        %v1497 = vunpack.c.h.b16 %v861
        %v1498 = vunpack.c.l.b16 %v862
        %v1499 = vunpack.c.h.b16 %v862
        %v1500 = vunpack.c.l.b16 %v863
        %v1501 = vunpack.c.h.b16 %v863
        %v1502 = vunpack.c.l.b16 %v864
        %v1503 = vunpack.c.h.b16 %v864
        %v1504 = vunpack.c.l.b16 %v865
        %v1505 = vunpack.c.h.b16 %v865
        %v1506 = vunpack.c.l.b16 %v866
        %v1507 = vunpack.c.h.b16 %v866
        %v1508 = vunpack.c.l.b16 %v867
        %v1509 = vunpack.c.h.b16 %v867
        %v1510 = vunpack.c.l.b16 %v868
        %v1511 = vunpack.c.h.b16 %v868
        %v1512 = vunpack.c.l.b16 %v869
        %v1513 = vunpack.c.h.b16 %v869
        %v1514 = vunpack.c.l.b16 %v870
        %v1515 = vunpack.c.h.b16 %v870
        %v1516 = vunpack.c.l.b16 %v871
        %v1517 = vunpack.c.h.b16 %v871
        %v1518 = vunpack.c.l.b16 %v872
        %v1519 = vunpack.c.h.b16 %v872
        %v1520 = vunpack.c.l.b16 %v873
        %v1521 = vunpack.c.h.b16 %v873
        %v1522 = vunpack.c.l.b16 %v874
        %v1523 = vunpack.c.h.b16 %v874
        %v1524 = vunpack.c.l.b16 %v875
        %v1525 = vunpack.c.h.b16 %v875
        %v1526 = vunpack.c.l.b16 %v876
        %v1527 = vunpack.c.h.b16 %v876
        %v1528 = vunpack.c.l.b16 %v877
        %v1529 = vunpack.c.h.b16 %v877
        %v1530 = vunpack.c.l.b16 %v878
        %v1531 = vunpack.c.h.b16 %v878
        %v1532 = vunpack.c.l.b16 %v879
        %v1533 = vunpack.c.h.b16 %v879
        %v1534 = vunpack.c.l.b16 %v880
        %v1535 = vunpack.c.h.b16 %v880
        %v1536 = vunpack.c.l.b16 %v881
        %v1537 = vunpack.c.h.b16 %v881
        %v1538 = vunpack.c.l.b16 %v882
        %v1539 = vunpack.c.h.b16 %v882
        %v1540 = vunpack.c.l.b16 %v883
        %v1541 = vunpack.c.h.b16 %v883
        %v1542 = vunpack.c.l.b16 %v884
        %v1543 = vunpack.c.h.b16 %v884
        %v1544 = vunpack.c.l.b16 %v885
        %v1545 = vunpack.c.h.b16 %v885
        %v1546 = vunpack.c.l.b16 %v886
        %v1547 = vunpack.c.h.b16 %v886
        %v1548 = vunpack.c.l.b16 %v887
        %v1549 = vunpack.c.h.b16 %v887
        %v1550 = vunpack.c.l.b16 %v888
        %v1551 = vunpack.c.h.b16 %v888
        %v1552 = vunpack.c.l.b16 %v889
        %v1553 = vunpack.c.h.b16 %v889
        %v1554 = vunpack.c.l.b16 %v890
        %v1555 = vunpack.c.h.b16 %v890
        %v1556 = vunpack.c.l.b16 %v891
        %v1557 = vunpack.c.h.b16 %v891
        %v1558 = vunpack.c.l.b16 %v892
        %v1559 = vunpack.c.h.b16 %v892
        %v1560 = vunpack.c.l.b16 %v893
        %v1561 = vunpack.c.h.b16 %v893
        %v1562 = vunpack.c.l.b16 %v894
        %v1563 = vunpack.c.h.b16 %v894
        %v1564 = vunpack.c.l.b16 %v895
        %v1565 = vunpack.c.h.b16 %v895
        %v1566 = vunpack.c.l.b16 %v896
        %v1567 = vunpack.c.h.b16 %v896
        %v1568 = vunpack.c.l.b16 %v897
        %v1569 = vunpack.c.h.b16 %v897
        %v1570 = vunpack.c.l.b16 %v898
        %v1571 = vunpack.c.h.b16 %v898
        %v1572 = vunpack.c.l.b16 %v899
        %v1573 = vunpack.c.h.b16 %v899
        %v1574 = vunpack.c.l.b16 %v900
        %v1575 = vunpack.c.h.b16 %v900
        %v1576 = vunpack.c.l.b16 %v901
        %v1577 = vunpack.c.h.b16 %v901
        %v1578 = vunpack.c.l.b16 %v902
        %v1579 = vunpack.c.h.b16 %v902
        %v1580 = vunpack.c.l.b16 %v903
        %v1581 = vunpack.c.h.b16 %v903
        %v1582 = vunpack.c.l.b16 %v904
        %v1583 = vunpack.c.h.b16 %v904
        %v1584 = vunpack.c.l.b16 %v905
        %v1585 = vunpack.c.h.b16 %v905
        %v1586 = vunpack.c.l.b16 %v906
        %v1587 = vunpack.c.h.b16 %v906
        %v1588 = vunpack.c.l.b16 %v907
        %v1589 = vunpack.c.h.b16 %v907
        %v1590 = vunpack.c.l.b16 %v908
        %v1591 = vunpack.c.h.b16 %v908
        %v1592 = vunpack.c.l.b16 %v909
        %v1593 = vunpack.c.h.b16 %v909
        %v1594 = vunpack.c.l.b16 %v910
        %v1595 = vunpack.c.h.b16 %v910
        %v1596 = vunpack.c.l.b16 %v911
        %v1597 = vunpack.c.h.b16 %v911
        %v1598 = vunpack.c.l.b16 %v912
        %v1599 = vunpack.c.h.b16 %v912
        %v1600 = vunpack.c.l.b16 %v913
        %v1601 = vunpack.c.h.b16 %v913
        %v1602 = vunpack.c.l.b16 %v914
        %v1603 = vunpack.c.h.b16 %v914
        %v1604 = vunpack.c.l.b16 %v915
        %v1605 = vunpack.c.h.b16 %v915
        %v1606 = vunpack.c.l.b16 %v916
        %v1607 = vunpack.c.h.b16 %v916
        %v1608 = vunpack.c.l.b16 %v917
        %v1609 = vunpack.c.h.b16 %v917
        %v1610 = vunpack.c.l.b16 %v918
        %v1611 = vunpack.c.h.b16 %v918
        %v1612 = vunpack.c.l.b16 %v919
        %v1613 = vunpack.c.h.b16 %v919
        %v1614 = vunpack.c.l.b16 %v920
        %v1615 = vunpack.c.h.b16 %v920
        %v1616 = vunpack.c.l.b16 %v921
        %v1617 = vunpack.c.h.b16 %v921
        %v1618 = vunpack.c.l.b16 %v922
        %v1619 = vunpack.c.h.b16 %v922
        %v1620 = vpack.c.b16 %v1176, %v1172
        %v1621 = vpack.c.b16 %v1177, %v1173
        %v1622 = vpack.c.b16 %v1178, %v1174
        %v1623 = vpack.c.b16 %v1179, %v1175
        %v1624 = vpack.c.b16 %v1184, %v1180
        %v1625 = vpack.c.b16 %v1185, %v1181
        %v1626 = vpack.c.b16 %v1186, %v1182
        %v1627 = vpack.c.b16 %v1187, %v1183
        %v1628 = vpack.c.b16 %v1192, %v1188
        %v1629 = vpack.c.b16 %v1193, %v1189
        %v1630 = vpack.c.b16 %v1194, %v1190
        %v1631 = vpack.c.b16 %v1195, %v1191
        %v1632 = vpack.c.b16 %v1200, %v1196
        %v1633 = vpack.c.b16 %v1201, %v1197
        %v1634 = vpack.c.b16 %v1202, %v1198
        %v1635 = vpack.c.b16 %v1203, %v1199
        %v1636 = vpack.c.b16 %v1208, %v1204
        %v1637 = vpack.c.b16 %v1209, %v1205
        %v1638 = vpack.c.b16 %v1210, %v1206
        %v1639 = vpack.c.b16 %v1211, %v1207
        %v1640 = vpack.c.b16 %v1216, %v1212
        %v1641 = vpack.c.b16 %v1217, %v1213
        %v1642 = vpack.c.b16 %v1218, %v1214
        %v1643 = vpack.c.b16 %v1219, %v1215
        %v1644 = vpack.c.b16 %v1224, %v1220
        %v1645 = vpack.c.b16 %v1225, %v1221
        %v1646 = vpack.c.b16 %v1226, %v1222
        %v1647 = vpack.c.b16 %v1227, %v1223
        %v1648 = vpack.c.b16 %v1232, %v1228
        %v1649 = vpack.c.b16 %v1233, %v1229
        %v1650 = vpack.c.b16 %v1234, %v1230
        %v1651 = vpack.c.b16 %v1235, %v1231
        %v1652 = vpack.c.b16 %v1240, %v1236
        %v1653 = vpack.c.b16 %v1241, %v1237
        %v1654 = vpack.c.b16 %v1242, %v1238
        %v1655 = vpack.c.b16 %v1243, %v1239
        %v1656 = vpack.c.b16 %v1248, %v1244
        %v1657 = vpack.c.b16 %v1249, %v1245
        %v1658 = vpack.c.b16 %v1250, %v1246
        %v1659 = vpack.c.b16 %v1251, %v1247
        %v1660 = vpack.c.b16 %v1256, %v1252
        %v1661 = vpack.c.b16 %v1257, %v1253
        %v1662 = vpack.c.b16 %v1258, %v1254
        %v1663 = vpack.c.b16 %v1259, %v1255
        %v1664 = vpack.c.b16 %v1264, %v1260
        %v1665 = vpack.c.b16 %v1265, %v1261
        %v1666 = vpack.c.b16 %v1266, %v1262
        %v1667 = vpack.c.b16 %v1267, %v1263
        %v1668 = vpack.c.b16 %v1272, %v1268
        %v1669 = vpack.c.b16 %v1273, %v1269
        %v1670 = vpack.c.b16 %v1274, %v1270
        %v1671 = vpack.c.b16 %v1275, %v1271
        %v1672 = vpack.c.b16 %v1280, %v1276
        %v1673 = vpack.c.b16 %v1281, %v1277
        %v1674 = vpack.c.b16 %v1282, %v1278
        %v1675 = vpack.c.b16 %v1283, %v1279
        %v1676 = vpack.c.b16 %v1288, %v1284
        %v1677 = vpack.c.b16 %v1289, %v1285
        %v1678 = vpack.c.b16 %v1290, %v1286
        %v1679 = vpack.c.b16 %v1291, %v1287
        %v1680 = vpack.c.b16 %v1296, %v1292
        %v1681 = vpack.c.b16 %v1297, %v1293
        %v1682 = vpack.c.b16 %v1298, %v1294
        %v1683 = vpack.c.b16 %v1299, %v1295
        %v1684 = vpack.c.b16 %v1304, %v1300
        %v1685 = vpack.c.b16 %v1305, %v1301
        %v1686 = vpack.c.b16 %v1306, %v1302
        %v1687 = vpack.c.b16 %v1307, %v1303
        %v1688 = vpack.c.b16 %v1312, %v1308
        %v1689 = vpack.c.b16 %v1313, %v1309
        %v1690 = vpack.c.b16 %v1314, %v1310
        %v1691 = vpack.c.b16 %v1315, %v1311
        %v1692 = vpack.c.b16 %v1320, %v1316
        %v1693 = vpack.c.b16 %v1321, %v1317
        %v1694 = vpack.c.b16 %v1322, %v1318
        %v1695 = vpack.c.b16 %v1323, %v1319
        %v1696 = vpack.c.b16 %v1328, %v1324
        %v1697 = vpack.c.b16 %v1329, %v1325
        %v1698 = vpack.c.b16 %v1330, %v1326
        %v1699 = vpack.c.b16 %v1331, %v1327
        %v1700 = vpack.c.b16 %v1336, %v1332
        %v1701 = vpack.c.b16 %v1337, %v1333
        %v1702 = vpack.c.b16 %v1338, %v1334
        %v1703 = vpack.c.b16 %v1339, %v1335
        %v1704 = vpack.c.b16 %v1344, %v1340
        %v1705 = vpack.c.b16 %v1345, %v1341
        %v1706 = vpack.c.b16 %v1346, %v1342
        %v1707 = vpack.c.b16 %v1347, %v1343
        %v1708 = vpack.c.b16 %v1352, %v1348
        %v1709 = vpack.c.b16 %v1353, %v1349
        %v1710 = vpack.c.b16 %v1354, %v1350
        %v1711 = vpack.c.b16 %v1355, %v1351
        %v1712 = vpack.c.b16 %v1360, %v1356
        %v1713 = vpack.c.b16 %v1361, %v1357
        %v1714 = vpack.c.b16 %v1362, %v1358
        %v1715 = vpack.c.b16 %v1363, %v1359
        %v1716 = vpack.c.b16 %v1368, %v1364
        %v1717 = vpack.c.b16 %v1369, %v1365
        %v1718 = vpack.c.b16 %v1370, %v1366
        %v1719 = vpack.c.b16 %v1371, %v1367
        %v1720 = vpack.c.b16 %v1376, %v1372
        %v1721 = vpack.c.b16 %v1377, %v1373
        %v1722 = vpack.c.b16 %v1378, %v1374
        %v1723 = vpack.c.b16 %v1379, %v1375
        %v1724 = vpack.c.b16 %v1384, %v1380
        %v1725 = vpack.c.b16 %v1385, %v1381
        %v1726 = vpack.c.b16 %v1386, %v1382
        %v1727 = vpack.c.b16 %v1387, %v1383
        %v1728 = vpack.c.b16 %v1392, %v1388
        %v1729 = vpack.c.b16 %v1393, %v1389
        %v1730 = vpack.c.b16 %v1394, %v1390
        %v1731 = vpack.c.b16 %v1395, %v1391
        %v1732 = vpack.c.b16 %v1400, %v1396
        %v1733 = vpack.c.b16 %v1401, %v1397
        %v1734 = vpack.c.b16 %v1402, %v1398
        %v1735 = vpack.c.b16 %v1403, %v1399
        %v1736 = vpack.c.b16 %v1408, %v1404
        %v1737 = vpack.c.b16 %v1409, %v1405
        %v1738 = vpack.c.b16 %v1410, %v1406
        %v1739 = vpack.c.b16 %v1411, %v1407
        %v1740 = vpack.c.b16 %v1416, %v1412
        %v1741 = vpack.c.b16 %v1417, %v1413
        %v1742 = vpack.c.b16 %v1418, %v1414
        %v1743 = vpack.c.b16 %v1419, %v1415
        %v1744 = vpack.c.b16 %v1424, %v1420
        %v1745 = vpack.c.b16 %v1425, %v1421
        %v1746 = vpack.c.b16 %v1426, %v1422
        %v1747 = vpack.c.b16 %v1427, %v1423
        %v1748 = vpack.c.b16 %v1432, %v1428
        %v1749 = vpack.c.b16 %v1433, %v1429
        %v1750 = vpack.c.b16 %v1434, %v1430
        %v1751 = vpack.c.b16 %v1435, %v1431
        %v1752 = vpack.c.b16 %v1440, %v1436
        %v1753 = vpack.c.b16 %v1441, %v1437
        %v1754 = vpack.c.b16 %v1442, %v1438
        %v1755 = vpack.c.b16 %v1443, %v1439
        %v1756 = vpack.c.b16 %v1448, %v1444
        %v1757 = vpack.c.b16 %v1449, %v1445
        %v1758 = vpack.c.b16 %v1450, %v1446
        %v1759 = vpack.c.b16 %v1451, %v1447
        %v1760 = vpack.c.b16 %v1456, %v1452
        %v1761 = vpack.c.b16 %v1457, %v1453
        %v1762 = vpack.c.b16 %v1458, %v1454
        %v1763 = vpack.c.b16 %v1459, %v1455
        %v1764 = vpack.c.b16 %v1464, %v1460
        %v1765 = vpack.c.b16 %v1465, %v1461
        %v1766 = vpack.c.b16 %v1466, %v1462
        %v1767 = vpack.c.b16 %v1467, %v1463
        %v1768 = vpack.c.b16 %v1472, %v1468
        %v1769 = vpack.c.b16 %v1473, %v1469
        %v1770 = vpack.c.b16 %v1474, %v1470
        %v1771 = vpack.c.b16 %v1475, %v1471
        %v1772 = vpack.c.b16 %v1480, %v1476
        %v1773 = vpack.c.b16 %v1481, %v1477
        %v1774 = vpack.c.b16 %v1482, %v1478
        %v1775 = vpack.c.b16 %v1483, %v1479
        %v1776 = vpack.c.b16 %v1488, %v1484
        %v1777 = vpack.c.b16 %v1489, %v1485
        %v1778 = vpack.c.b16 %v1490, %v1486
        %v1779 = vpack.c.b16 %v1491, %v1487
        %v1780 = vpack.c.b16 %v1496, %v1492
        %v1781 = vpack.c.b16 %v1497, %v1493
        %v1782 = vpack.c.b16 %v1498, %v1494
        %v1783 = vpack.c.b16 %v1499, %v1495
        %v1784 = vpack.c.b16 %v1504, %v1500
        %v1785 = vpack.c.b16 %v1505, %v1501
        %v1786 = vpack.c.b16 %v1506, %v1502
        %v1787 = vpack.c.b16 %v1507, %v1503
        %v1788 = vpack.c.b16 %v1512, %v1508
        %v1789 = vpack.c.b16 %v1513, %v1509
        %v1790 = vpack.c.b16 %v1514, %v1510
        %v1791 = vpack.c.b16 %v1515, %v1511
        %v1792 = vpack.c.b16 %v1520, %v1516
        %v1793 = vpack.c.b16 %v1521, %v1517
        %v1794 = vpack.c.b16 %v1522, %v1518
        %v1795 = vpack.c.b16 %v1523, %v1519
        %v1796 = vpack.c.b16 %v1528, %v1524
        %v1797 = vpack.c.b16 %v1529, %v1525
        %v1798 = vpack.c.b16 %v1530, %v1526
        %v1799 = vpack.c.b16 %v1531, %v1527
        %v1800 = vpack.c.b16 %v1536, %v1532
        %v1801 = vpack.c.b16 %v1537, %v1533
        %v1802 = vpack.c.b16 %v1538, %v1534
        %v1803 = vpack.c.b16 %v1539, %v1535
        %v1804 = vpack.c.b16 %v1544, %v1540
        %v1805 = vpack.c.b16 %v1545, %v1541
        %v1806 = vpack.c.b16 %v1546, %v1542
        %v1807 = vpack.c.b16 %v1547, %v1543
        %v1808 = vpack.c.b16 %v1552, %v1548
        %v1809 = vpack.c.b16 %v1553, %v1549
        %v1810 = vpack.c.b16 %v1554, %v1550
        %v1811 = vpack.c.b16 %v1555, %v1551
        %v1812 = vpack.c.b16 %v1560, %v1556
        %v1813 = vpack.c.b16 %v1561, %v1557
        %v1814 = vpack.c.b16 %v1562, %v1558
        %v1815 = vpack.c.b16 %v1563, %v1559
        %v1816 = vpack.c.b16 %v1568, %v1564
        %v1817 = vpack.c.b16 %v1569, %v1565
        %v1818 = vpack.c.b16 %v1570, %v1566
        %v1819 = vpack.c.b16 %v1571, %v1567
        %v1820 = vpack.c.b16 %v1576, %v1572
        %v1821 = vpack.c.b16 %v1577, %v1573
        %v1822 = vpack.c.b16 %v1578, %v1574
        %v1823 = vpack.c.b16 %v1579, %v1575
        %v1824 = vpack.c.b16 %v1584, %v1580
        %v1825 = vpack.c.b16 %v1585, %v1581
        %v1826 = vpack.c.b16 %v1586, %v1582
        %v1827 = vpack.c.b16 %v1587, %v1583
        %v1828 = vpack.c.b16 %v1592, %v1588
        %v1829 = vpack.c.b16 %v1593, %v1589
        %v1830 = vpack.c.b16 %v1594, %v1590
        %v1831 = vpack.c.b16 %v1595, %v1591
        %v1832 = vpack.c.b16 %v1600, %v1596
        %v1833 = vpack.c.b16 %v1601, %v1597
        %v1834 = vpack.c.b16 %v1602, %v1598
        %v1835 = vpack.c.b16 %v1603, %v1599
        %v1836 = vpack.c.b16 %v1608, %v1604
        %v1837 = vpack.c.b16 %v1609, %v1605
        %v1838 = vpack.c.b16 %v1610, %v1606
        %v1839 = vpack.c.b16 %v1611, %v1607
        %v1840 = vpack.c.b16 %v1616, %v1612
        %v1841 = vpack.c.b16 %v1617, %v1613
        %v1842 = vpack.c.b16 %v1618, %v1614
        %v1843 = vpack.c.b16 %v1619, %v1615
        %2068 = vmatpush.bf16.msra.mxu0 %v1648
        %2069 = vmatpush.bf16.msra.mxu0 %v1644
        %2070 = vmatpush.bf16.msra.mxu0 %v1640
        %2071 = vmatpush.bf16.msra.mxu0 %v1636
        %2072 = vmatpush.bf16.msra.mxu0 %v1632
        %2073 = vmatpush.bf16.msra.mxu0 %v1628
        %2074 = vmatpush.bf16.msra.mxu0 %v1624
        %2075 = vmatpush.bf16.msra.mxu0 %v1620
        %2076 = vmatmul.bf16.gmra.mxu0 %v934
        %v2077 = vpop.f32.mrf.mxu0
        %v2078 = vadd.f32 0.0, %v2077
        %v2079 = vpop.f32.mrf.mxu0
        %2080 = vdwg.mxu0
        %2081 = vmatpush.bf16.msra.mxu0 %v1680
        %2082 = vmatpush.bf16.msra.mxu0 %v1676
        %2083 = vmatpush.bf16.msra.mxu0 %v1672
        %2084 = vmatpush.bf16.msra.mxu0 %v1668
        %2085 = vmatpush.bf16.msra.mxu0 %v1664
        %2086 = vmatpush.bf16.msra.mxu0 %v1660
        %2087 = vmatpush.bf16.msra.mxu0 %v1656
        %2088 = vmatpush.bf16.msra.mxu0 %v1652
        %2089 = vmatmul.bf16.gmra.mxu0 %v935
        %v2090 = vpop.f32.mrf.mxu0
        %v2091 = vadd.f32 %v2078, %v2090
        %v2092 = vpop.f32.mrf.mxu0
        %2093 = vdwg.mxu0
        %2094 = vmatpush.bf16.msra.mxu0 %v1712
        %2095 = vmatpush.bf16.msra.mxu0 %v1708
        %2096 = vmatpush.bf16.msra.mxu0 %v1704
        %2097 = vmatpush.bf16.msra.mxu0 %v1700
        %2098 = vmatpush.bf16.msra.mxu0 %v1696
        %2099 = vmatpush.bf16.msra.mxu0 %v1692
        %2100 = vmatpush.bf16.msra.mxu0 %v1688
        %2101 = vmatpush.bf16.msra.mxu0 %v1684
        %2102 = vmatmul.bf16.gmra.mxu0 %v936
        %v2103 = vpop.f32.mrf.mxu0
        %v2104 = vadd.f32 %v2091, %v2103
        %v2105 = vpop.f32.mrf.mxu0
        %2106 = vdwg.mxu0
        %2107 = vmatpush.bf16.msra.mxu0 %v1744
        %2108 = vmatpush.bf16.msra.mxu0 %v1740
        %2109 = vmatpush.bf16.msra.mxu0 %v1736
        %2110 = vmatpush.bf16.msra.mxu0 %v1732
        %2111 = vmatpush.bf16.msra.mxu0 %v1728
        %2112 = vmatpush.bf16.msra.mxu0 %v1724
        %2113 = vmatpush.bf16.msra.mxu0 %v1720
        %2114 = vmatpush.bf16.msra.mxu0 %v1716
        %2115 = vmatmul.bf16.gmra.mxu0 %v937
        %v2116 = vpop.f32.mrf.mxu0
        %v2117 = vadd.f32 %v2104, %v2116
        %v2118 = vpop.f32.mrf.mxu0
        %2119 = vdwg.mxu0
        %2120 = vmatpush.bf16.msra.mxu0 %v1776
        %2121 = vmatpush.bf16.msra.mxu0 %v1772
        %2122 = vmatpush.bf16.msra.mxu0 %v1768
        %2123 = vmatpush.bf16.msra.mxu0 %v1764
        %2124 = vmatpush.bf16.msra.mxu0 %v1760
        %2125 = vmatpush.bf16.msra.mxu0 %v1756
        %2126 = vmatpush.bf16.msra.mxu0 %v1752
        %2127 = vmatpush.bf16.msra.mxu0 %v1748
        %2128 = vmatmul.bf16.gmra.mxu0 %v938
        %v2129 = vpop.f32.mrf.mxu0
        %v2130 = vadd.f32 %v2117, %v2129
        %v2131 = vpop.f32.mrf.mxu0
        %2132 = vdwg.mxu0
        %2133 = vmatpush.bf16.msra.mxu0 %v1808
        %2134 = vmatpush.bf16.msra.mxu0 %v1804
        %2135 = vmatpush.bf16.msra.mxu0 %v1800
        %2136 = vmatpush.bf16.msra.mxu0 %v1796
        %2137 = vmatpush.bf16.msra.mxu0 %v1792
        %2138 = vmatpush.bf16.msra.mxu0 %v1788
        %2139 = vmatpush.bf16.msra.mxu0 %v1784
        %2140 = vmatpush.bf16.msra.mxu0 %v1780
        %2141 = vmatmul.bf16.gmra.mxu0 %v939
        %v2142 = vpop.f32.mrf.mxu0
        %v2143 = vadd.f32 %v2130, %v2142
        %v2144 = vpop.f32.mrf.mxu0
        %2145 = vdwg.mxu0
        %2146 = vmatpush.bf16.msra.mxu0 %v1840
        %2147 = vmatpush.bf16.msra.mxu0 %v1836
        %2148 = vmatpush.bf16.msra.mxu0 %v1832
        %2149 = vmatpush.bf16.msra.mxu0 %v1828
        %2150 = vmatpush.bf16.msra.mxu0 %v1824
        %2151 = vmatpush.bf16.msra.mxu0 %v1820
        %2152 = vmatpush.bf16.msra.mxu0 %v1816
        %2153 = vmatpush.bf16.msra.mxu0 %v1812
        %2154 = vmatmul.bf16.gmra.mxu0 %v940
        %v2155 = vpop.f32.mrf.mxu0
        %v2156 = vadd.f32 %v2143, %v2155
        %v2157 = vpop.f32.mrf.mxu0
        %2158 = vdwg.mxu0
        %2159 = vmatpush.bf16.msra.mxu0 %v1649
        %2160 = vmatpush.bf16.msra.mxu0 %v1645
        %2161 = vmatpush.bf16.msra.mxu0 %v1641
        %2162 = vmatpush.bf16.msra.mxu0 %v1637
        %2163 = vmatpush.bf16.msra.mxu0 %v1633
        %2164 = vmatpush.bf16.msra.mxu0 %v1629
        %2165 = vmatpush.bf16.msra.mxu0 %v1625
        %2166 = vmatpush.bf16.msra.mxu0 %v1621
        %2167 = vmatmul.bf16.gmra.mxu0 %v934
        %v2168 = vpop.f32.mrf.mxu0
        %v2169 = vadd.f32 0.0, %v2168
        %v2170 = vpop.f32.mrf.mxu0
        %2171 = vdwg.mxu0
        %2172 = vmatpush.bf16.msra.mxu0 %v1681
        %2173 = vmatpush.bf16.msra.mxu0 %v1677
        %2174 = vmatpush.bf16.msra.mxu0 %v1673
        %2175 = vmatpush.bf16.msra.mxu0 %v1669
        %2176 = vmatpush.bf16.msra.mxu0 %v1665
        %2177 = vmatpush.bf16.msra.mxu0 %v1661
        %2178 = vmatpush.bf16.msra.mxu0 %v1657
        %2179 = vmatpush.bf16.msra.mxu0 %v1653
        %2180 = vmatmul.bf16.gmra.mxu0 %v935
        %v2181 = vpop.f32.mrf.mxu0
        %v2182 = vadd.f32 %v2169, %v2181
        %v2183 = vpop.f32.mrf.mxu0
        %2184 = vdwg.mxu0
        %2185 = vmatpush.bf16.msra.mxu0 %v1713
        %2186 = vmatpush.bf16.msra.mxu0 %v1709
        %2187 = vmatpush.bf16.msra.mxu0 %v1705
        %2188 = vmatpush.bf16.msra.mxu0 %v1701
        %2189 = vmatpush.bf16.msra.mxu0 %v1697
        %2190 = vmatpush.bf16.msra.mxu0 %v1693
        %2191 = vmatpush.bf16.msra.mxu0 %v1689
        %2192 = vmatpush.bf16.msra.mxu0 %v1685
        %2193 = vmatmul.bf16.gmra.mxu0 %v936
        %v2194 = vpop.f32.mrf.mxu0
        %v2195 = vadd.f32 %v2182, %v2194
        %v2196 = vpop.f32.mrf.mxu0
        %2197 = vdwg.mxu0
        %2198 = vmatpush.bf16.msra.mxu0 %v1745
        %2199 = vmatpush.bf16.msra.mxu0 %v1741
        %2200 = vmatpush.bf16.msra.mxu0 %v1737
        %2201 = vmatpush.bf16.msra.mxu0 %v1733
        %2202 = vmatpush.bf16.msra.mxu0 %v1729
        %2203 = vmatpush.bf16.msra.mxu0 %v1725
        %2204 = vmatpush.bf16.msra.mxu0 %v1721
        %2205 = vmatpush.bf16.msra.mxu0 %v1717
        %2206 = vmatmul.bf16.gmra.mxu0 %v937
        %v2207 = vpop.f32.mrf.mxu0
        %v2208 = vadd.f32 %v2195, %v2207
        %v2209 = vpop.f32.mrf.mxu0
        %2210 = vdwg.mxu0
        %2211 = vmatpush.bf16.msra.mxu0 %v1777
        %2212 = vmatpush.bf16.msra.mxu0 %v1773
        %2213 = vmatpush.bf16.msra.mxu0 %v1769
        %2214 = vmatpush.bf16.msra.mxu0 %v1765
        %2215 = vmatpush.bf16.msra.mxu0 %v1761
        %2216 = vmatpush.bf16.msra.mxu0 %v1757
        %2217 = vmatpush.bf16.msra.mxu0 %v1753
        %2218 = vmatpush.bf16.msra.mxu0 %v1749
        %2219 = vmatmul.bf16.gmra.mxu0 %v938
        %v2220 = vpop.f32.mrf.mxu0
        %v2221 = vadd.f32 %v2208, %v2220
        %v2222 = vpop.f32.mrf.mxu0
        %2223 = vdwg.mxu0
        %2224 = vmatpush.bf16.msra.mxu0 %v1809
        %2225 = vmatpush.bf16.msra.mxu0 %v1805
        %2226 = vmatpush.bf16.msra.mxu0 %v1801
        %2227 = vmatpush.bf16.msra.mxu0 %v1797
        %2228 = vmatpush.bf16.msra.mxu0 %v1793
        %2229 = vmatpush.bf16.msra.mxu0 %v1789
        %2230 = vmatpush.bf16.msra.mxu0 %v1785
        %2231 = vmatpush.bf16.msra.mxu0 %v1781
        %2232 = vmatmul.bf16.gmra.mxu0 %v939
        %v2233 = vpop.f32.mrf.mxu0
        %v2234 = vadd.f32 %v2221, %v2233
        %v2235 = vpop.f32.mrf.mxu0
        %2236 = vdwg.mxu0
        %2237 = vmatpush.bf16.msra.mxu0 %v1841
        %2238 = vmatpush.bf16.msra.mxu0 %v1837
        %2239 = vmatpush.bf16.msra.mxu0 %v1833
        %2240 = vmatpush.bf16.msra.mxu0 %v1829
        %2241 = vmatpush.bf16.msra.mxu0 %v1825
        %2242 = vmatpush.bf16.msra.mxu0 %v1821
        %2243 = vmatpush.bf16.msra.mxu0 %v1817
        %2244 = vmatpush.bf16.msra.mxu0 %v1813
        %2245 = vmatmul.bf16.gmra.mxu0 %v940
        %v2246 = vpop.f32.mrf.mxu0
        %v2247 = vadd.f32 %v2234, %v2246
        %v2248 = vpop.f32.mrf.mxu0
        %2249 = vdwg.mxu0
        %2250 = vmatpush.bf16.msra.mxu0 %v1650
        %2251 = vmatpush.bf16.msra.mxu0 %v1646
        %2252 = vmatpush.bf16.msra.mxu0 %v1642
        %2253 = vmatpush.bf16.msra.mxu0 %v1638
        %2254 = vmatpush.bf16.msra.mxu0 %v1634
        %2255 = vmatpush.bf16.msra.mxu0 %v1630
        %2256 = vmatpush.bf16.msra.mxu0 %v1626
        %2257 = vmatpush.bf16.msra.mxu0 %v1622
        %2258 = vmatmul.bf16.gmra.mxu0 %v934
        %v2259 = vpop.f32.mrf.mxu0
        %v2260 = vadd.f32 0.0, %v2259
        %v2261 = vpop.f32.mrf.mxu0
        %2262 = vdwg.mxu0
        %2263 = vmatpush.bf16.msra.mxu0 %v1682
        %2264 = vmatpush.bf16.msra.mxu0 %v1678
        %2265 = vmatpush.bf16.msra.mxu0 %v1674
        %2266 = vmatpush.bf16.msra.mxu0 %v1670
        %2267 = vmatpush.bf16.msra.mxu0 %v1666
        %2268 = vmatpush.bf16.msra.mxu0 %v1662
        %2269 = vmatpush.bf16.msra.mxu0 %v1658
        %2270 = vmatpush.bf16.msra.mxu0 %v1654
        %2271 = vmatmul.bf16.gmra.mxu0 %v935
        %v2272 = vpop.f32.mrf.mxu0
        %v2273 = vadd.f32 %v2260, %v2272
        %v2274 = vpop.f32.mrf.mxu0
        %2275 = vdwg.mxu0
        %2276 = vmatpush.bf16.msra.mxu0 %v1714
        %2277 = vmatpush.bf16.msra.mxu0 %v1710
        %2278 = vmatpush.bf16.msra.mxu0 %v1706
        %2279 = vmatpush.bf16.msra.mxu0 %v1702
        %2280 = vmatpush.bf16.msra.mxu0 %v1698
        %2281 = vmatpush.bf16.msra.mxu0 %v1694
        %2282 = vmatpush.bf16.msra.mxu0 %v1690
        %2283 = vmatpush.bf16.msra.mxu0 %v1686
        %2284 = vmatmul.bf16.gmra.mxu0 %v936
        %v2285 = vpop.f32.mrf.mxu0
        %v2286 = vadd.f32 %v2273, %v2285
        %v2287 = vpop.f32.mrf.mxu0
        %2288 = vdwg.mxu0
        %2289 = vmatpush.bf16.msra.mxu0 %v1746
        %2290 = vmatpush.bf16.msra.mxu0 %v1742
        %2291 = vmatpush.bf16.msra.mxu0 %v1738
        %2292 = vmatpush.bf16.msra.mxu0 %v1734
        %2293 = vmatpush.bf16.msra.mxu0 %v1730
        %2294 = vmatpush.bf16.msra.mxu0 %v1726
        %2295 = vmatpush.bf16.msra.mxu0 %v1722
        %2296 = vmatpush.bf16.msra.mxu0 %v1718
        %2297 = vmatmul.bf16.gmra.mxu0 %v937
        %v2298 = vpop.f32.mrf.mxu0
        %v2299 = vadd.f32 %v2286, %v2298
        %v2300 = vpop.f32.mrf.mxu0
        %2301 = vdwg.mxu0
        %2302 = vmatpush.bf16.msra.mxu0 %v1778
        %2303 = vmatpush.bf16.msra.mxu0 %v1774
        %2304 = vmatpush.bf16.msra.mxu0 %v1770
        %2305 = vmatpush.bf16.msra.mxu0 %v1766
        %2306 = vmatpush.bf16.msra.mxu0 %v1762
        %2307 = vmatpush.bf16.msra.mxu0 %v1758
        %2308 = vmatpush.bf16.msra.mxu0 %v1754
        %2309 = vmatpush.bf16.msra.mxu0 %v1750
        %2310 = vmatmul.bf16.gmra.mxu0 %v938
        %v2311 = vpop.f32.mrf.mxu0
        %v2312 = vadd.f32 %v2299, %v2311
        %v2313 = vpop.f32.mrf.mxu0
        %2314 = vdwg.mxu0
        %2315 = vmatpush.bf16.msra.mxu0 %v1810
        %2316 = vmatpush.bf16.msra.mxu0 %v1806
        %2317 = vmatpush.bf16.msra.mxu0 %v1802
        %2318 = vmatpush.bf16.msra.mxu0 %v1798
        %2319 = vmatpush.bf16.msra.mxu0 %v1794
        %2320 = vmatpush.bf16.msra.mxu0 %v1790
        %2321 = vmatpush.bf16.msra.mxu0 %v1786
        %2322 = vmatpush.bf16.msra.mxu0 %v1782
        %2323 = vmatmul.bf16.gmra.mxu0 %v939
        %v2324 = vpop.f32.mrf.mxu0
        %v2325 = vadd.f32 %v2312, %v2324
        %v2326 = vpop.f32.mrf.mxu0
        %2327 = vdwg.mxu0
        %2328 = vmatpush.bf16.msra.mxu0 %v1842
        %2329 = vmatpush.bf16.msra.mxu0 %v1838
        %2330 = vmatpush.bf16.msra.mxu0 %v1834
        %2331 = vmatpush.bf16.msra.mxu0 %v1830
        %2332 = vmatpush.bf16.msra.mxu0 %v1826
        %2333 = vmatpush.bf16.msra.mxu0 %v1822
        %2334 = vmatpush.bf16.msra.mxu0 %v1818
        %2335 = vmatpush.bf16.msra.mxu0 %v1814
        %2336 = vmatmul.bf16.gmra.mxu0 %v940
        %v2337 = vpop.f32.mrf.mxu0
        %v2338 = vadd.f32 %v2325, %v2337
        %v2339 = vpop.f32.mrf.mxu0
        %2340 = vdwg.mxu0
        %2341 = vmatpush.bf16.msra.mxu0 %v1651
        %2342 = vmatpush.bf16.msra.mxu0 %v1647
        %2343 = vmatpush.bf16.msra.mxu0 %v1643
        %2344 = vmatpush.bf16.msra.mxu0 %v1639
        %2345 = vmatpush.bf16.msra.mxu0 %v1635
        %2346 = vmatpush.bf16.msra.mxu0 %v1631
        %2347 = vmatpush.bf16.msra.mxu0 %v1627
        %2348 = vmatpush.bf16.msra.mxu0 %v1623
        %2349 = vmatmul.bf16.gmra.mxu0 %v934
        %v2350 = vpop.f32.mrf.mxu0
        %v2351 = vadd.f32 0.0, %v2350
        %v2352 = vpop.f32.mrf.mxu0
        %2353 = vdwg.mxu0
        %2354 = vmatpush.bf16.msra.mxu0 %v1683
        %2355 = vmatpush.bf16.msra.mxu0 %v1679
        %2356 = vmatpush.bf16.msra.mxu0 %v1675
        %2357 = vmatpush.bf16.msra.mxu0 %v1671
        %2358 = vmatpush.bf16.msra.mxu0 %v1667
        %2359 = vmatpush.bf16.msra.mxu0 %v1663
        %2360 = vmatpush.bf16.msra.mxu0 %v1659
        %2361 = vmatpush.bf16.msra.mxu0 %v1655
        %2362 = vmatmul.bf16.gmra.mxu0 %v935
        %v2363 = vpop.f32.mrf.mxu0
        %v2364 = vadd.f32 %v2351, %v2363
        %v2365 = vpop.f32.mrf.mxu0
        %2366 = vdwg.mxu0
        %2367 = vmatpush.bf16.msra.mxu0 %v1715
        %2368 = vmatpush.bf16.msra.mxu0 %v1711
        %2369 = vmatpush.bf16.msra.mxu0 %v1707
        %2370 = vmatpush.bf16.msra.mxu0 %v1703
        %2371 = vmatpush.bf16.msra.mxu0 %v1699
        %2372 = vmatpush.bf16.msra.mxu0 %v1695
        %2373 = vmatpush.bf16.msra.mxu0 %v1691
        %2374 = vmatpush.bf16.msra.mxu0 %v1687
        %2375 = vmatmul.bf16.gmra.mxu0 %v936
        %v2376 = vpop.f32.mrf.mxu0
        %v2377 = vadd.f32 %v2364, %v2376
        %v2378 = vpop.f32.mrf.mxu0
        %2379 = vdwg.mxu0
        %2380 = vmatpush.bf16.msra.mxu0 %v1747
        %2381 = vmatpush.bf16.msra.mxu0 %v1743
        %2382 = vmatpush.bf16.msra.mxu0 %v1739
        %2383 = vmatpush.bf16.msra.mxu0 %v1735
        %2384 = vmatpush.bf16.msra.mxu0 %v1731
        %2385 = vmatpush.bf16.msra.mxu0 %v1727
        %2386 = vmatpush.bf16.msra.mxu0 %v1723
        %2387 = vmatpush.bf16.msra.mxu0 %v1719
        %2388 = vmatmul.bf16.gmra.mxu0 %v937
        %v2389 = vpop.f32.mrf.mxu0
        %v2390 = vadd.f32 %v2377, %v2389
        %v2391 = vpop.f32.mrf.mxu0
        %2392 = vdwg.mxu0
        %2393 = vmatpush.bf16.msra.mxu0 %v1779
        %2394 = vmatpush.bf16.msra.mxu0 %v1775
        %2395 = vmatpush.bf16.msra.mxu0 %v1771
        %2396 = vmatpush.bf16.msra.mxu0 %v1767
        %2397 = vmatpush.bf16.msra.mxu0 %v1763
        %2398 = vmatpush.bf16.msra.mxu0 %v1759
        %2399 = vmatpush.bf16.msra.mxu0 %v1755
        %2400 = vmatpush.bf16.msra.mxu0 %v1751
        %2401 = vmatmul.bf16.gmra.mxu0 %v938
        %v2402 = vpop.f32.mrf.mxu0
        %v2403 = vadd.f32 %v2390, %v2402
        %v2404 = vpop.f32.mrf.mxu0
        %2405 = vdwg.mxu0
        %2406 = vmatpush.bf16.msra.mxu0 %v1811
        %2407 = vmatpush.bf16.msra.mxu0 %v1807
        %2408 = vmatpush.bf16.msra.mxu0 %v1803
        %2409 = vmatpush.bf16.msra.mxu0 %v1799
        %2410 = vmatpush.bf16.msra.mxu0 %v1795
        %2411 = vmatpush.bf16.msra.mxu0 %v1791
        %2412 = vmatpush.bf16.msra.mxu0 %v1787
        %2413 = vmatpush.bf16.msra.mxu0 %v1783
        %2414 = vmatmul.bf16.gmra.mxu0 %v939
        %v2415 = vpop.f32.mrf.mxu0
        %v2416 = vadd.f32 %v2403, %v2415
        %v2417 = vpop.f32.mrf.mxu0
        %2418 = vdwg.mxu0
        %2419 = vmatpush.bf16.msra.mxu0 %v1843
        %2420 = vmatpush.bf16.msra.mxu0 %v1839
        %2421 = vmatpush.bf16.msra.mxu0 %v1835
        %2422 = vmatpush.bf16.msra.mxu0 %v1831
        %2423 = vmatpush.bf16.msra.mxu0 %v1827
        %2424 = vmatpush.bf16.msra.mxu0 %v1823
        %2425 = vmatpush.bf16.msra.mxu0 %v1819
        %2426 = vmatpush.bf16.msra.mxu0 %v1815
        %2427 = vmatmul.bf16.gmra.mxu0 %v940
        %v2428 = vpop.f32.mrf.mxu0
        %v2429 = vadd.f32 %v2416, %v2428
        %v2430 = vpop.f32.mrf.mxu0
        %2431 = vdwg.mxu0
        %v2432 = vadd.f32 %v691, %v2156
        %v2433 = vadd.f32 %v692, %v2247
        %v2434 = vadd.f32 %v693, %v2338
        %v2435 = vadd.f32 %v694, %v2429
        %2436 = vst [vmem:[%s681] sm:$0xff] %v2432
        %2437 = vst [vmem:[%s681 + $0x8] sm:$0xff] %v2433
        %2438 = vst [vmem:[%s681 + $0x10] sm:$0xff] %v2434
        %2439 = vst [vmem:[%s681 + $0x18] sm:$0xff] %v2435
        %s2440 = smul.u32 4, %s19
        %p2441 = scmp.lt.s32.totalorder %s18, 0
        %s2442 = scalar_select %p2441, %s18, 0
        %p2443 = scmp.lt.s32.totalorder %s2440, 7
        %s2444 = scalar_select %p2443, %s2440, 7
        %s2445 = smul.addr %s2442, 8
        %s2446 = sadd.s32 %s2444, %s2445
        %s2447 = smul.addr %s2446, 8
        %s2448 = scalar_lea.vmem %s2, %s2447
        // Predicated region
        $region56: #{discriminator_forward.8} parent=46 // pred_check
          %p2449 = pneg %p108
        $region57: #{discriminator_forward.8} parent=46 // pred_check_branch
          %2451 = sbr.rel (%p2449) target = $region59
        $region58: #{discriminator_forward.8} parent=46 // pred_region
          %s2452 = smul.u32 4, %s19
        $region59: #{discriminator_forward.8} parent=46 // pred_fallthru
          _
      $region47: #{discriminator_forward.8} parent=5 // pred_fallthru
        _
      %p2453 = scmp.le.s32.totalorder 2, %s8
      // Predicated region
      $region60: #{discriminator_forward.8} parent=5 // pred_check
        %p2454 = pneg %p2453
      $region61: #{discriminator_forward.8} parent=5 // pred_check_branch
        %2456 = sbr.rel (%p2454) target = $region63
      $region62: #{discriminator_forward.8} parent=5 // pred_region
        %s2457 = ssub.s32 %s8, 2
        // Predicated region
        $region64: #{discriminator_forward.8} parent=62 // pred_check
          %p2458 = pneg %p114
        $region65: #{discriminator_forward.8} parent=62 // pred_check_branch
          %2460 = sbr.rel (%p2458) target = $region67
        $region66: #{discriminator_forward.8} parent=62 // pred_region
          %s2461 = smul.u32 4, %s22
          %p2462 = scmp.lt.s32.totalorder %s21, 0
          %s2463 = scalar_select %p2462, %s21, 0
          %p2464 = scmp.lt.s32.totalorder %s2461, 7
          %s2465 = scalar_select %p2464, %s2461, 7
          %s2466 = smul.addr %s2463, 8
          %s2467 = sadd.s32 %s2465, %s2466
          %s2468 = smul.addr %s2467, 8
          %s2469 = scalar_lea.vmem %s2, %s2468
        $region67: #{discriminator_forward.8} parent=62 // pred_fallthru
          _
      $region63: #{discriminator_forward.8} parent=5 // pred_fallthru
        _
    $region6: #{discriminator_forward.8} parent=1 // loop_footer
      %s12 = sadd.s32 1, %s8
    $region7: #{discriminator_forward.8} parent=1 // loop_footer_branch
      %7 = sbr.rel target = $region3
    $region8: #{discriminator_forward.8} parent=1 // loop_exit
      _

// kernel: discriminator_forward.9
$region0: #{discriminator_forward.9}
  #allocation0 [shape = 'u32[]', space=smem, size = 0x4, offset = 0x4, fixed_abs, tag = 'smem constant byte address 0x4 - core index']
  #allocation1 [shape = 'u32[72,128]{1,0:T(1,128)}', space=vmem, size = 0x9000, scoped, tag = 'internal scratch']
  #allocation2 [shape = 'f32[1,1]{1,0:T(1,128)S(1)}', space=vmem, size = 0x200, scoped, tag = 'scoped memory for discriminator_forward.9']
  %s0 = inlined_call_operand.vmem [shape: f32[8,1024], index: 0, kind: input, shape index: {}]
  %s1 = inlined_call_operand.vmem [shape: f32[1,1024], index: 1, kind: input, shape index: {}]
  %s2 = inlined_call_operand.vmem [shape: f32[1,1024], index: 2, kind: input, shape index: {}]
  %s3 = inlined_call_operand.vmem [shape: f32[1,1024], index: 3, kind: input, shape index: {}]
  %s4 = inlined_call_operand.<no memory space> [shape: f32[1,1], index: 4, kind: input, shape index: {}]
  %s5 = inlined_call_operand.vmem [shape: f32[8,1], index: 5, kind: output, shape index: {}]
  %s6 = sld [smem:[#allocation0]]
  $region30: #{discriminator_forward.9} parent=0
    _
  %s8 = ssub.s32 1, %s6
  %s9 = scalar_select 0, %s8, %s6
  %v10 = vstv %s4
  %11 = vst [vmem:[#allocation2] sm:$0x1] %v10
  // Predicated region
  $region2: #{discriminator_forward.9} parent=0 // pred_check
    _
  $region3: #{discriminator_forward.9} parent=0 // pred_check_branch
    %13 = sbr.rel (0) target = $region5
  $region4: #{discriminator_forward.9} parent=0 // pred_region
    _
  $region5: #{discriminator_forward.9} parent=0 // pred_fallthru
    _
  // Predicated region
  $region6: #{discriminator_forward.9} parent=0 // pred_check
    _
  $region7: #{discriminator_forward.9} parent=0 // pred_check_branch
    %15 = sbr.rel (0) target = $region9
  $region8: #{discriminator_forward.9} parent=0 // pred_region
    _
  $region9: #{discriminator_forward.9} parent=0 // pred_fallthru
    _
  // Predicated region
  $region10: #{discriminator_forward.9} parent=0 // pred_check
    _
  $region11: #{discriminator_forward.9} parent=0 // pred_check_branch
    %17 = sbr.rel (0) target = $region13
  $region12: #{discriminator_forward.9} parent=0 // pred_region
    _
  $region13: #{discriminator_forward.9} parent=0 // pred_fallthru
    _
  // Predicated region
  $region14: #{discriminator_forward.9} parent=0 // pred_check
    _
  $region15: #{discriminator_forward.9} parent=0 // pred_check_branch
    %19 = sbr.rel (0) target = $region17
  $region16: #{discriminator_forward.9} parent=0 // pred_region
    _
  $region17: #{discriminator_forward.9} parent=0 // pred_fallthru
    _
  // Predicated region
  $region18: #{discriminator_forward.9} parent=0 // pred_check
    _
  $region19: #{discriminator_forward.9} parent=0 // pred_check_branch
    %21 = sbr.rel (0) target = $region21
  $region20: #{discriminator_forward.9} parent=0 // pred_region
    _
  $region21: #{discriminator_forward.9} parent=0 // pred_fallthru
    _
  %v22 = vld [vmem:[%s0] sm:$0xff]
  %v23 = vld [vmem:[%s0 + $0x8] sm:$0xff]
  %v24 = vld [vmem:[%s0 + $0x10] sm:$0xff]
  %v25 = vld [vmem:[%s0 + $0x18] sm:$0xff]
  %v26 = vld [vmem:[%s0 + $0x20] sm:$0xff]
  %v27 = vld [vmem:[%s0 + $0x28] sm:$0xff]
  %v28 = vld [vmem:[%s0 + $0x30] sm:$0xff]
  %v29 = vld [vmem:[%s0 + $0x38] sm:$0xff]
  %v30 = vrot.slane %v22, 4
  %v31 = vadd.f32 %v22, %v30
  %v32 = vrot.slane %v31, 2
  %v33 = vadd.f32 %v31, %v32
  %v34 = vrot.slane %v33, 1
  %v35 = vadd.f32 %v33, %v34
  %v36 = vrot.slane %v23, 4
  %v37 = vadd.f32 %v23, %v36
  %v38 = vrot.slane %v37, 2
  %v39 = vadd.f32 %v37, %v38
  %v40 = vrot.slane %v39, 1
  %v41 = vadd.f32 %v39, %v40
  %v42 = vrot.slane %v24, 4
  %v43 = vadd.f32 %v24, %v42
  %v44 = vrot.slane %v43, 2
  %v45 = vadd.f32 %v43, %v44
  %v46 = vrot.slane %v45, 1
  %v47 = vadd.f32 %v45, %v46
  %v48 = vrot.slane %v25, 4
  %v49 = vadd.f32 %v25, %v48
  %v50 = vrot.slane %v49, 2
  %v51 = vadd.f32 %v49, %v50
  %v52 = vrot.slane %v51, 1
  %v53 = vadd.f32 %v51, %v52
  %v54 = vrot.slane %v26, 4
  %v55 = vadd.f32 %v26, %v54
  %v56 = vrot.slane %v55, 2
  %v57 = vadd.f32 %v55, %v56
  %v58 = vrot.slane %v57, 1
  %v59 = vadd.f32 %v57, %v58
  %v60 = vrot.slane %v27, 4
  %v61 = vadd.f32 %v27, %v60
  %v62 = vrot.slane %v61, 2
  %v63 = vadd.f32 %v61, %v62
  %v64 = vrot.slane %v63, 1
  %v65 = vadd.f32 %v63, %v64
  %v66 = vrot.slane %v28, 4
  %v67 = vadd.f32 %v28, %v66
  %v68 = vrot.slane %v67, 2
  %v69 = vadd.f32 %v67, %v68
  %v70 = vrot.slane %v69, 1
  %v71 = vadd.f32 %v69, %v70
  %v72 = vrot.slane %v29, 4
  %v73 = vadd.f32 %v29, %v72
  %v74 = vrot.slane %v73, 2
  %v75 = vadd.f32 %v73, %v74
  %v76 = vrot.slane %v75, 1
  %v77 = vadd.f32 %v75, %v76
  %v78 = vrcp.pop 8.0
  %v79 = vmul.f32 8.0, %v78
  %v80 = vsub.f32 1.0, %v79
  %v81 = vmul.f32 %v78, %v80
  %v82 = vadd.f32 %v78, %v81
  %vm83 = vweird.f32 %v78
  %v84 = vsel %vm83, %v78, %v82
  %v85 = vmul.f32 %v35, %v84
  %v86 = vmul.f32 %v41, %v84
  %v87 = vmul.f32 %v47, %v84
  %v88 = vmul.f32 %v53, %v84
  %v89 = vmul.f32 %v59, %v84
  %v90 = vmul.f32 %v65, %v84
  %v91 = vmul.f32 %v71, %v84
  %v92 = vmul.f32 %v77, %v84
  %v93 = vsub.f32 %v22, %v85
  %v94 = vsub.f32 %v23, %v86
  %v95 = vsub.f32 %v24, %v87
  %v96 = vsub.f32 %v25, %v88
  %v97 = vsub.f32 %v26, %v89
  %v98 = vsub.f32 %v27, %v90
  %v99 = vsub.f32 %v28, %v91
  %v100 = vsub.f32 %v29, %v92
  %v101 = vmul.f32 %v93, %v93
  %v102 = vmul.f32 %v94, %v94
  %v103 = vmul.f32 %v95, %v95
  %v104 = vmul.f32 %v96, %v96
  %v105 = vmul.f32 %v97, %v97
  %v106 = vmul.f32 %v98, %v98
  %v107 = vmul.f32 %v99, %v99
  %v108 = vmul.f32 %v100, %v100
  %v109 = vrot.slane %v101, 4
  %v110 = vadd.f32 %v101, %v109
  %v111 = vrot.slane %v110, 2
  %v112 = vadd.f32 %v110, %v111
  %v113 = vrot.slane %v112, 1
  %v114 = vadd.f32 %v112, %v113
  %v115 = vrot.slane %v102, 4
  %v116 = vadd.f32 %v102, %v115
  %v117 = vrot.slane %v116, 2
  %v118 = vadd.f32 %v116, %v117
  %v119 = vrot.slane %v118, 1
  %v120 = vadd.f32 %v118, %v119
  %v121 = vrot.slane %v103, 4
  %v122 = vadd.f32 %v103, %v121
  %v123 = vrot.slane %v122, 2
  %v124 = vadd.f32 %v122, %v123
  %v125 = vrot.slane %v124, 1
  %v126 = vadd.f32 %v124, %v125
  %v127 = vrot.slane %v104, 4
  %v128 = vadd.f32 %v104, %v127
  %v129 = vrot.slane %v128, 2
  %v130 = vadd.f32 %v128, %v129
  %v131 = vrot.slane %v130, 1
  %v132 = vadd.f32 %v130, %v131
  %v133 = vrot.slane %v105, 4
  %v134 = vadd.f32 %v105, %v133
  %v135 = vrot.slane %v134, 2
  %v136 = vadd.f32 %v134, %v135
  %v137 = vrot.slane %v136, 1
  %v138 = vadd.f32 %v136, %v137
  %v139 = vrot.slane %v106, 4
  %v140 = vadd.f32 %v106, %v139
  %v141 = vrot.slane %v140, 2
  %v142 = vadd.f32 %v140, %v141
  %v143 = vrot.slane %v142, 1
  %v144 = vadd.f32 %v142, %v143
  %v145 = vrot.slane %v107, 4
  %v146 = vadd.f32 %v107, %v145
  %v147 = vrot.slane %v146, 2
  %v148 = vadd.f32 %v146, %v147
  %v149 = vrot.slane %v148, 1
  %v150 = vadd.f32 %v148, %v149
  %v151 = vrot.slane %v108, 4
  %v152 = vadd.f32 %v108, %v151
  %v153 = vrot.slane %v152, 2
  %v154 = vadd.f32 %v152, %v153
  %v155 = vrot.slane %v154, 1
  %v156 = vadd.f32 %v154, %v155
  %v157 = vmul.f32 %v114, %v84
  %v158 = vmul.f32 %v120, %v84
  %v159 = vmul.f32 %v126, %v84
  %v160 = vmul.f32 %v132, %v84
  %v161 = vmul.f32 %v138, %v84
  %v162 = vmul.f32 %v144, %v84
  %v163 = vmul.f32 %v150, %v84
  %v164 = vmul.f32 %v156, %v84
  %v165 = vadd.f32 %v157, 1e-05
  %v166 = vadd.f32 %v158, 1e-05
  %v167 = vadd.f32 %v159, 1e-05
  %v168 = vadd.f32 %v160, 1e-05
  %v169 = vadd.f32 %v161, 1e-05
  %v170 = vadd.f32 %v162, 1e-05
  %v171 = vadd.f32 %v163, 1e-05
  %v172 = vadd.f32 %v164, 1e-05
  %v173 = vrsqrt.pop %v165
  %v174 = vmul.f32 %v173, %v165
  %v175 = vmul.f32 %v174, %v173
  %v176 = vmul.f32 0.5, %v175
  %v177 = vsub.f32 1.5, %v176
  %v178 = vmul.f32 %v173, %v177
  %vm179 = vweird.f32 %v165
  %vm180 = vweird.f32 %v173
  %vm181 = vmor %vm179, %vm180
  %v182 = vsel %vm181, %v173, %v178
  %v183 = vrsqrt.pop %v166
  %v184 = vmul.f32 %v183, %v166
  %v185 = vmul.f32 %v184, %v183
  %v186 = vmul.f32 0.5, %v185
  %v187 = vsub.f32 1.5, %v186
  %v188 = vmul.f32 %v183, %v187
  %vm189 = vweird.f32 %v166
  %vm190 = vweird.f32 %v183
  %vm191 = vmor %vm189, %vm190
  %v192 = vsel %vm191, %v183, %v188
  %v193 = vrsqrt.pop %v167
  %v194 = vmul.f32 %v193, %v167
  %v195 = vmul.f32 %v194, %v193
  %v196 = vmul.f32 0.5, %v195
  %v197 = vsub.f32 1.5, %v196
  %v198 = vmul.f32 %v193, %v197
  %vm199 = vweird.f32 %v167
  %vm200 = vweird.f32 %v193
  %vm201 = vmor %vm199, %vm200
  %v202 = vsel %vm201, %v193, %v198
  %v203 = vrsqrt.pop %v168
  %v204 = vmul.f32 %v203, %v168
  %v205 = vmul.f32 %v204, %v203
  %v206 = vmul.f32 0.5, %v205
  %v207 = vsub.f32 1.5, %v206
  %v208 = vmul.f32 %v203, %v207
  %vm209 = vweird.f32 %v168
  %vm210 = vweird.f32 %v203
  %vm211 = vmor %vm209, %vm210
  %v212 = vsel %vm211, %v203, %v208
  %v213 = vrsqrt.pop %v169
  %v214 = vmul.f32 %v213, %v169
  %v215 = vmul.f32 %v214, %v213
  %v216 = vmul.f32 0.5, %v215
  %v217 = vsub.f32 1.5, %v216
  %v218 = vmul.f32 %v213, %v217
  %vm219 = vweird.f32 %v169
  %vm220 = vweird.f32 %v213
  %vm221 = vmor %vm219, %vm220
  %v222 = vsel %vm221, %v213, %v218
  %v223 = vrsqrt.pop %v170
  %v224 = vmul.f32 %v223, %v170
  %v225 = vmul.f32 %v224, %v223
  %v226 = vmul.f32 0.5, %v225
  %v227 = vsub.f32 1.5, %v226
  %v228 = vmul.f32 %v223, %v227
  %vm229 = vweird.f32 %v170
  %vm230 = vweird.f32 %v223
  %vm231 = vmor %vm229, %vm230
  %v232 = vsel %vm231, %v223, %v228
  %v233 = vrsqrt.pop %v171
  %v234 = vmul.f32 %v233, %v171
  %v235 = vmul.f32 %v234, %v233
  %v236 = vmul.f32 0.5, %v235
  %v237 = vsub.f32 1.5, %v236
  %v238 = vmul.f32 %v233, %v237
  %vm239 = vweird.f32 %v171
  %vm240 = vweird.f32 %v233
  %vm241 = vmor %vm239, %vm240
  %v242 = vsel %vm241, %v233, %v238
  %v243 = vrsqrt.pop %v172
  %v244 = vmul.f32 %v243, %v172
  %v245 = vmul.f32 %v244, %v243
  %v246 = vmul.f32 0.5, %v245
  %v247 = vsub.f32 1.5, %v246
  %v248 = vmul.f32 %v243, %v247
  %vm249 = vweird.f32 %v172
  %vm250 = vweird.f32 %v243
  %vm251 = vmor %vm249, %vm250
  %v252 = vsel %vm251, %v243, %v248
  %v253 = vmul.f32 %v93, %v182
  %v254 = vmul.f32 %v94, %v192
  %v255 = vmul.f32 %v95, %v202
  %v256 = vmul.f32 %v96, %v212
  %v257 = vmul.f32 %v97, %v222
  %v258 = vmul.f32 %v98, %v232
  %v259 = vmul.f32 %v99, %v242
  %v260 = vmul.f32 %v100, %v252
  %v261 = vld [vmem:[%s1] sm:$0xff]
  %v263 = vperm.slane %v261, 0
  %v264 = vperm.slane %v261, 1
  %v265 = vperm.slane %v261, 2
  %v266 = vperm.slane %v261, 3
  %v267 = vperm.slane %v261, 4
  %v268 = vperm.slane %v261, 5
  %v269 = vperm.slane %v261, 6
  %v270 = vperm.slane %v261, 7
  %v279 = vmul.f32 %v253, %v263
  %v280 = vmul.f32 %v254, %v264
  %v281 = vmul.f32 %v255, %v265
  %v282 = vmul.f32 %v256, %v266
  %v283 = vmul.f32 %v257, %v267
  %v284 = vmul.f32 %v258, %v268
  %v285 = vmul.f32 %v259, %v269
  %v286 = vmul.f32 %v260, %v270
  %v287 = vld [vmem:[%s2] sm:$0xff]
  %v289 = vperm.slane %v287, 0
  %v290 = vperm.slane %v287, 1
  %v291 = vperm.slane %v287, 2
  %v292 = vperm.slane %v287, 3
  %v293 = vperm.slane %v287, 4
  %v294 = vperm.slane %v287, 5
  %v295 = vperm.slane %v287, 6
  %v296 = vperm.slane %v287, 7
  %v305 = vadd.f32 %v279, %v289
  %v306 = vadd.f32 %v280, %v290
  %v307 = vadd.f32 %v281, %v291
  %v308 = vadd.f32 %v282, %v292
  %v309 = vadd.f32 %v283, %v293
  %v310 = vadd.f32 %v284, %v294
  %v311 = vadd.f32 %v285, %v295
  %v312 = vadd.f32 %v286, %v296
  %vm313 = vcmp.gt.f32.partialorder %v305, 0.0
  %vm314 = vcmp.gt.f32.partialorder %v306, 0.0
  %vm315 = vcmp.gt.f32.partialorder %v307, 0.0
  %vm316 = vcmp.gt.f32.partialorder %v308, 0.0
  %vm317 = vcmp.gt.f32.partialorder %v309, 0.0
  %vm318 = vcmp.gt.f32.partialorder %v310, 0.0
  %vm319 = vcmp.gt.f32.partialorder %v311, 0.0
  %vm320 = vcmp.gt.f32.partialorder %v312, 0.0
  %v321 = vmul.f32 %v305, 0.2
  %v322 = vmul.f32 %v306, 0.2
  %v323 = vmul.f32 %v307, 0.2
  %v324 = vmul.f32 %v308, 0.2
  %v325 = vmul.f32 %v309, 0.2
  %v326 = vmul.f32 %v310, 0.2
  %v327 = vmul.f32 %v311, 0.2
  %v328 = vmul.f32 %v312, 0.2
  %v329 = vsel %vm313, %v305, %v321
  %v330 = vsel %vm314, %v306, %v322
  %v331 = vsel %vm315, %v307, %v323
  %v332 = vsel %vm316, %v308, %v324
  %v333 = vsel %vm317, %v309, %v325
  %v334 = vsel %vm318, %v310, %v326
  %v335 = vsel %vm319, %v311, %v327
  %v336 = vsel %vm320, %v312, %v328
  %v337 = vld [vmem:[%s3] sm:$0xff]
  %v339 = vperm.slane %v337, 0
  %v340 = vperm.slane %v337, 1
  %v341 = vperm.slane %v337, 2
  %v342 = vperm.slane %v337, 3
  %v343 = vperm.slane %v337, 4
  %v344 = vperm.slane %v337, 5
  %v345 = vperm.slane %v337, 6
  %v346 = vperm.slane %v337, 7
  %v355 = vmul.f32 %v329, %v339
  %v356 = vmul.f32 %v330, %v340
  %v357 = vmul.f32 %v331, %v341
  %v358 = vmul.f32 %v332, %v342
  %v359 = vmul.f32 %v333, %v343
  %v360 = vmul.f32 %v334, %v344
  %v361 = vmul.f32 %v335, %v345
  %v362 = vmul.f32 %v336, %v346
  %v363 = vadd.f32 %v355, %v356
  %v364 = vadd.f32 %v363, %v357
  %v365 = vadd.f32 %v364, %v358
  %v366 = vadd.f32 %v365, %v359
  %v367 = vadd.f32 %v366, %v360
  %v368 = vadd.f32 %v367, %v361
  %v369 = vadd.f32 %v368, %v362
  %370 = vadd.xlane.f32.xlu0 %v369
  %v371 = vpop.xlane.xlu0 %370
  %v372 = vld [vmem:[#allocation2] sm:$0x1]
  %v374 = vperm.slane %v372, 0
  %v376 = vadd.f32 %v371, %v374
  %v377 = vmul.f32 %v376, 0.5
  %v378 = vtanh.pop %v377
  %v379 = vadd.f32 %v378, 1.0
  %v380 = vmul.f32 %v379, 0.5
  %vm381 = vcmask 7168
  %382 = vst.msk [vmem:[%s5] sm:$0xff] %vm381, %v380
  // Predicated region
  $region22: #{discriminator_forward.9} parent=0 // pred_check
    _
  $region23: #{discriminator_forward.9} parent=0 // pred_check_branch
    %384 = sbr.rel (0) target = $region25
  $region24: #{discriminator_forward.9} parent=0 // pred_region
    _
  $region25: #{discriminator_forward.9} parent=0 // pred_fallthru
    _
  // Predicated region
  $region26: #{discriminator_forward.9} parent=0 // pred_check
    _
  $region27: #{discriminator_forward.9} parent=0 // pred_check_branch
    %386 = sbr.rel (0) target = $region29
  $region28: #{discriminator_forward.9} parent=0 // pred_region
    _
  $region29: #{discriminator_forward.9} parent=0 // pred_fallthru
    _

</llo_original>
